<compile_context>
chip_gen: v5e
topology: v5e:2x2
jax: 0.10.0
libtpu: 0.0.40
codegen_flags: <defaults>
</compile_context>

<pallas_src>
import numpy as np
import jax
import jax.numpy as jnp
from jax.experimental import pallas as pl
from jax.experimental.pallas import tpu as pltpu


def _round_up(x, m):
    return ((x + m - 1) // m) * m


# ----------------------------------------------------------------------------
# Fused kernel: VertexConv over every (edge, slot) vertex set, EdgeConv
# attention over the Mp slots of each edge, final Linear(D,2) + Sigmoid.
# Layout: the edge-block axis Eb is on the lanes, the slot axis Mp on the
# sublanes, so every temporary is a dense (8,128)-tiled vreg.
#   gf_ref    : [D, K, Mp, Eb]  gathered vertex features (f32)
#   mask_ref  : [K, Mp, Eb]     1.0 = valid vertex in the set
#   fb_ref    : [D, Mp, Eb]     singleton-set fallback feature
#   smask_ref : [Mp, Eb]        1.0 = valid hyperedge slot
#   SMEM: wqkv [3,D], bqkv [3], w1 [D,H], b1 [H], w2 [H], b2 [1],
#         wfc [D,2], bfc [2]
#   out_ref   : [2, Eb]  sigmoid(fc(edge_conv(vertex_conv(...))))
# ----------------------------------------------------------------------------
def dhg_fused_kernel(gf_ref, mask_ref, fb_ref, smask_ref,
                     wqkv_ref, bqkv_ref, w1_ref, b1_ref, w2_ref, b2_ref,
                     wfc_ref, bfc_ref, out_ref):
    f32 = jnp.float32
    D = gf_ref.shape[0]
    K, Mp, Eb = mask_ref.shape
    H = w1_ref.shape[1]
    NEG = jnp.float32(-1e30)

    m = mask_ref[...]                               # [K, Mp, Eb]
    mask_b = m > 0.5

    # ---- VertexConv scalar projections q/k/v: scalar*vector FMAs over D ----
    q = jnp.full((K, Mp, Eb), bqkv_ref[0], f32)
    k = jnp.full((K, Mp, Eb), bqkv_ref[1], f32)
    v = jnp.full((K, Mp, Eb), bqkv_ref[2], f32)
    for d in range(D):
        g_d = gf_ref[d]                             # [K, Mp, Eb]
        q = q + g_d * wqkv_ref[0, d]
        k = k + g_d * wqkv_ref[1, d]
        v = v + g_d * wqkv_ref[2, d]

    # ---- per-query-slot self-excluding masked softmax + tanh aggregate ----
    kidx = jax.lax.broadcasted_iota(jnp.int32, (K, Mp, Eb), 0)
    w_rows = []
    for j in range(K):
        valid_j = jnp.logical_and(mask_b, kidx != j)           # [K, Mp, Eb]
        e_j = q[j][None, :, :] * k                             # [K, Mp, Eb]
        e_msk = jnp.where(valid_j, e_j, NEG)
        e_max = jnp.max(e_msk, axis=0, keepdims=True)          # [1, Mp, Eb]
        p_j = jnp.exp(jnp.where(valid_j, e_j - e_max, NEG))    # [K, Mp, Eb]
        den = jnp.maximum(jnp.sum(p_j, axis=0), 1e-30)         # [Mp, Eb]
        num = jnp.sum(p_j * v, axis=0)                         # [Mp, Eb]
        d_j = jnp.tanh(num / den)                              # exact division
        w_rows.append(m[j] * d_j)                              # [Mp, Eb]
    w = jnp.stack(w_rows, axis=0)                              # [K, Mp, Eb]

    n_valid = jnp.sum(m, axis=0)                               # [Mp, Eb]
    use_fb = n_valid <= 1.5   # n_point <= 1 -> fallback feats[loop index]

    # ---- weighted vertex aggregation fused with the EdgeConv first FC and
    #      the (softmax-commuting) classifier projection, one D-slice at a time
    hpre = [jnp.full((Mp, Eb), b1_ref[h], f32) for h in range(H)]
    zfc0 = jnp.zeros((Mp, Eb), f32)
    zfc1 = jnp.zeros((Mp, Eb), f32)
    for d in range(D):
        g_d = gf_ref[d]                                        # [K, Mp, Eb]
        he_d = jnp.sum(w * g_d, axis=0)                        # [Mp, Eb]
        he_d = jnp.where(use_fb, fb_ref[d], he_d)              # hyperedge feat, dim d
        for h in range(H):
            hpre[h] = hpre[h] + he_d * w1_ref[d, h]
        zfc0 = zfc0 + he_d * wfc_ref[d, 0]
        zfc1 = zfc1 + he_d * wfc_ref[d, 1]

    # ---- EdgeConv score MLP (ReLU + H VPU FMAs) + masked softmax over Mp ----
    s = jnp.full((Mp, Eb), b2_ref[0], f32)
    for h in range(H):
        s = s + jnp.maximum(hpre[h], 0.0) * w2_ref[h]
    sm_b = smask_ref[...] > 0.5                                # [Mp, Eb]
    s_msk = jnp.where(sm_b, s, NEG)
    s_max = jnp.max(s_msk, axis=0, keepdims=True)              # [1, Eb]
    p_s = jnp.exp(jnp.where(sm_b, s - s_max, NEG))             # [Mp, Eb]
    den_s = jnp.maximum(jnp.sum(p_s, axis=0, keepdims=True), 1e-30)   # [1, Eb]

    # logits_c = sum_m softmax_m * (h_m . wfc[:,c]) + bfc[c]   (fc folded in)
    logit0 = jnp.sum(p_s * zfc0, axis=0, keepdims=True) / den_s + bfc_ref[0]
    logit1 = jnp.sum(p_s * zfc1, axis=0, keepdims=True) / den_s + bfc_ref[1]
    out_ref[0:1, :] = jax.nn.sigmoid(logit0)                   # lane-dense stores
    out_ref[1:2, :] = jax.nn.sigmoid(logit1)


def _pick_edge_block(E, max_single=256, block=128):
    """Last block dim must be a multiple of 128 or equal the full extent."""
    single = _round_up(max(E, 1), 8)
    if single <= max_single:
        return single, single            # one grid step, minimal padding
    ep = _round_up(E, block)
    return block, ep                     # lane-dense 128-wide blocks


def dhg_fused_pallas(gf_t, mask_t, fbf_t, smask_t, pp, block_e):
    D, K, Mp, Ep = gf_t.shape
    assert Ep % block_e == 0
    smem = pl.BlockSpec(memory_space=pltpu.MemorySpace.SMEM)
    out = pl.pallas_call(
        dhg_fused_kernel,
        out_shape=jax.ShapeDtypeStruct((2, Ep), jnp.float32),
        grid=(Ep // block_e,),
        in_specs=[
            pl.BlockSpec((D, K, Mp, block_e), lambda e: (0, 0, 0, e)),
            pl.BlockSpec((K, Mp, block_e), lambda e: (0, 0, e)),
            pl.BlockSpec((D, Mp, block_e), lambda e: (0, 0, e)),
            pl.BlockSpec((Mp, block_e), lambda e: (0, e)),
            smem, smem, smem, smem, smem, smem, smem, smem,
        ],
        out_specs=pl.BlockSpec((2, block_e), lambda e: (0, e)),
        compiler_params=pltpu.CompilerParams(
            dimension_semantics=("parallel",)),
    )(gf_t, mask_t, fbf_t, smask_t,
      pp["wqkv"], pp["bqkv"], pp["w1"], pp["b1"],
      pp["w2"], pp["b2"], pp["wfc"], pp["bfc"])
    return out                              # [2, Ep]


def _prep_params(params):
    return {
        "wqkv": params["wqkv"].astype(jnp.float32),              # [3, D]
        "bqkv": params["bqkv"].astype(jnp.float32),              # [3]
        "w1":   params["w1"].astype(jnp.float32),                # [D, H]
        "b1":   params["b1"].reshape(-1).astype(jnp.float32),    # [H]
        "w2":   params["w2"].reshape(-1).astype(jnp.float32),    # [H]
        "b2":   params["b2"].reshape(-1).astype(jnp.float32),    # [1]
        "wfc":  params["wfc"].astype(jnp.float32),               # [D, 2]
        "bfc":  params["bfc"].reshape(-1).astype(jnp.float32),   # [2]
    }


# ----------------------------------------------------------------------------
# Glue: ragged edge_dict / adj  ->  interleaved, padded index + mask arrays
# (edge e's slot 0 = its own vertex set, slots 1..A = its adjacency sets,
#  slots A+1..Mp-1 = empty padding -> the kernel sees one [Mp, .] stack/edge)
# ----------------------------------------------------------------------------
def _build_padded_sets(ids, edge_dict, adj, kmax):
    lo, hi = ids[0], ids[-1] + 1
    edge_sets = [list(s) for s in edge_dict[lo:hi]]
    adj_sets = [[list(t) for t in a] for a in adj[lo:hi]]
    E = len(edge_sets)
    A = max(len(a) for a in adj_sets)
    Mp = _round_up(1 + A, 8)          # stack depth padded -> dense (8,128) tiles

    idx = np.zeros((E, Mp, kmax), np.int32)
    msk = np.zeros((E, Mp, kmax), np.float32)
    fb = np.zeros((E, Mp), np.int32)
    smask = np.zeros((E, Mp), np.float32)
    for e in range(E):
        s = edge_sets[e]
        assert len(s) <= kmax
        idx[e, 0, :len(s)] = s
        msk[e, 0, :len(s)] = 1.0
        fb[e, 0] = e                  # PyTorch singleton fallback: feats[loop index]
        smask[e, 0] = 1.0
        for a, t in enumerate(adj_sets[e]):
            assert len(t) <= kmax
            idx[e, 1 + a, :len(t)] = t
            msk[e, 1 + a, :len(t)] = 1.0
            fb[e, 1 + a] = a          # faithful: feats[position-within-adj[e]]
            smask[e, 1 + a] = 1.0
    return idx, msk, fb, smask, E, Mp


def dhg_layer_v1_forward(ids, feats, edge_dict, adj, epoch, params, kmax=8):
    # wu_e == 0, so the VertexConv(edge_dict) branch always runs.
    if epoch < 5:
        # TODO(synk): warm-up path (epoch < wu_a=5) feeds a degenerately nested
        # list into EdgeConv; not reproduced here.
        raise NotImplementedError("only the epoch >= wu_a (=5) path is implemented")

    idx, msk, fb, smask, E, Mp = _build_padded_sets(ids, edge_dict, adj, kmax)
    block_e, Ep = _pick_edge_block(E)
    pad = Ep - E

    # Host-side relayout to batch-on-lanes ([..., Mp, E]) + edge padding.
    idx_t = np.pad(np.transpose(idx, (2, 1, 0)), ((0, 0), (0, 0), (0, pad)))
    msk_t = np.pad(np.transpose(msk, (2, 1, 0)), ((0, 0), (0, 0), (0, pad)))
    fbi_t = np.pad(np.transpose(fb, (1, 0)), ((0, 0), (0, pad)))
    smask_t = np.pad(np.transpose(smask, (1, 0)), ((0, 0), (0, pad)))

    # TODO(synk): gather kept as plain-JAX glue; an in-kernel gather would
    # remove one HBM pass of the duplicated [D, K, Mp, E] tensor.
    featsT = jnp.asarray(feats, jnp.float32).T                 # [D, N]
    gf_t = featsT[:, jnp.asarray(idx_t)]                       # [D, K, Mp, Ep]
    fbf_t = featsT[:, jnp.asarray(fbi_t)]                      # [D, Mp, Ep]

    pp = _prep_params(params)
    out_t = dhg_fused_pallas(gf_t, jnp.asarray(msk_t), fbf_t,
                             jnp.asarray(smask_t), pp, block_e)    # [2, Ep]
    # TODO(synk): nn.Dropout(p=0.5) treated as eval-mode identity.
    return out_t[:, :E].T                                      # [E, 2]


# ----------------------------------------------------------------------------
# Pure-JAX reference (same masked vectorized math, standard layout)
# ----------------------------------------------------------------------------
def _vertex_conv_ref(gf, mask, fbf, wqkv, bqkv):
    q = jnp.einsum("emkd,d->emk", gf, wqkv[0]) + bqkv[0]
    k = jnp.einsum("emkd,d->emk", gf, wqkv[1]) + bqkv[1]
    v = jnp.einsum("emkd,d->emk", gf, wqkv[2]) + bqkv[2]
    K = gf.shape[2]
    e = q[..., :, None] * k[..., None, :]
    pmask = mask[..., None, :] * (1.0 - jnp.eye(K, dtype=jnp.float32))
    e_m = jnp.where(pmask > 0, e, -1e30)
    p = jnp.exp(e_m - jnp.max(e_m, -1, keepdims=True)) * pmask
    attn = p / jnp.maximum(p.sum(-1, keepdims=True), 1e-30)
    d_ = jnp.tanh(jnp.sum(attn * v[..., None, :], -1))
    out = jnp.einsum("emk,emkd->emd", mask * d_, gf)
    nv = mask.sum(-1, keepdims=True)
    return jnp.where(nv <= 1.5, fbf, out)                      # [E, Mp, D]


def _edge_conv_fc_ref(stack, smask, p):
    h1 = jnp.maximum(jnp.einsum("emd,dh->emh", stack, p["w1"]) + p["b1"][None], 0.0)
    s = jnp.einsum("emh,h->em", h1, p["w2"][0]) + p["b2"][0]
    s_m = jnp.where(smask > 0, s, -1e30)
    num = jnp.exp(s_m - jnp.max(s_m, -1, keepdims=True)) * smask
    attn = num / jnp.maximum(num.sum(-1, keepdims=True), 1e-30)
    h = jnp.einsum("em,emd->ed", attn, stack)
    return jax.nn.sigmoid(h @ p["wfc"] + p["bfc"])


def dhg_layer_v1_ref(ids, feats, edge_dict, adj, epoch, params, kmax=8):
    idx, msk, fb, smask, E, Mp = _build_padded_sets(ids, edge_dict, adj, kmax)
    feats = jnp.asarray(feats, jnp.float32)
    stack = _vertex_conv_ref(feats[jnp.asarray(idx)], jnp.asarray(msk),
                             feats[jnp.asarray(fb)],
                             params["wqkv"], params["bqkv"])
    return _edge_conv_fc_ref(stack, jnp.asarray(smask), params)


# ----------------------------------------------------------------------------
# Deterministic parameter init (shapes follow DHGLayerV1.__init__)
# ----------------------------------------------------------------------------
def init_params(key, dim_in):
    hidden = dim_in // 4
    ks = jax.random.split(key, 8)
    return {
        "wqkv": 0.2 * jax.random.normal(ks[0], (3, dim_in), jnp.float32),  # w_q,w_k,w_v
        "bqkv": 0.1 * jax.random.normal(ks[1], (3,), jnp.float32),
        "w1":   0.2 * jax.random.normal(ks[2], (dim_in, hidden), jnp.float32),
        "b1":   0.1 * jax.random.normal(ks[3], (1, hidden), jnp.float32),
        "w2":   0.2 * jax.random.normal(ks[4], (1, hidden), jnp.float32),  # hidden -> 1
        "b2":   0.1 * jax.random.normal(ks[5], (1,), jnp.float32),
        "wfc":  0.2 * jax.random.normal(ks[6], (dim_in, 2), jnp.float32),
        "bfc":  0.1 * jax.random.normal(ks[7], (1, 2), jnp.float32),
    }


if __name__ == "__main__":
    N, D = 16, 32
    key = jax.random.PRNGKey(0)
    kp, kf = jax.random.split(key)
    params = init_params(kp, D)
    feats = jax.random.normal(kf, (N, D), jnp.float32)

    ids = [0, 1, 2, 3, 4, 5]
    edge_dict = [
        [0, 3, 5],
        [1, 7, 9, 11],
        [2],                       # singleton -> fallback path exercised
        [3, 0, 4, 8, 12],
        [4, 2, 6],
        [5, 10, 13, 15],
    ] + [[i] for i in range(6, N)]
    adj = [
        [[0, 3, 5], [3, 0, 4, 8], [5, 10, 13]],
        [[1, 7, 9, 11], [7, 1, 2], [9, 1, 14], [11, 1, 5, 6]],
        [[2], [4, 2, 6]],
        [[3, 0, 4, 8, 12], [0, 3, 5]],
        [[4, 2, 6], [2], [6, 4, 7]],
        [[5, 10, 13, 15], [10, 5, 11], [13, 5, 0, 2]],
    ] + [[[i]] for i in range(6, N)]
    epoch = 6  # >= wu_a, full path

    out = dhg_layer_v1_forward(ids, feats, edge_dict, adj, epoch, params)
    out = jax.block_until_ready(out)

    ref = dhg_layer_v1_ref(ids, feats, edge_dict, adj, epoch, params)
    assert out.shape == (len(ids), 2)
    # exact softmax divisions in-kernel -> only fp summation-order differences
    np.testing.assert_allclose(np.asarray(out), np.asarray(ref),
                               rtol=1e-3, atol=1e-4)
    print("KERNEL_OK")
</pallas_src>

<mosaic_0001>
module attributes {stable_mosaic.version = 11 : i64} {
  func.func @dhg_fused_kernel(%arg0: i32, %arg1: memref<32x8x8x8xf32, #tpu.memory_space<vmem>>, %arg2: memref<8x8x8xf32, #tpu.memory_space<vmem>>, %arg3: memref<32x8x8xf32, #tpu.memory_space<vmem>>, %arg4: memref<8x8xf32, #tpu.memory_space<vmem>>, %arg5: memref<3x32xf32, #tpu.memory_space<smem>>, %arg6: memref<3xf32, #tpu.memory_space<smem>>, %arg7: memref<32x8xf32, #tpu.memory_space<smem>>, %arg8: memref<8xf32, #tpu.memory_space<smem>>, %arg9: memref<8xf32, #tpu.memory_space<smem>>, %arg10: memref<1xf32, #tpu.memory_space<smem>>, %arg11: memref<32x2xf32, #tpu.memory_space<smem>>, %arg12: memref<2xf32, #tpu.memory_space<smem>>, %arg13: memref<2x8xf32, #tpu.memory_space<vmem>>) attributes {dimension_semantics = [#tpu.dimension_semantics<parallel>], iteration_bounds = array<i64: 1>, scalar_prefetch = 0 : i64, scratch_operands = 0 : i64, tpu.core_type = #tpu.core_type<tc>, window_params = [{transform_indices = @transform_0, window_bounds = array<i64: 32, 8, 8, 8>}, {transform_indices = @transform_1, window_bounds = array<i64: 8, 8, 8>}, {transform_indices = @transform_2, window_bounds = array<i64: 32, 8, 8>}, {transform_indices = @transform_3, window_bounds = array<i64: 8, 8>}, {transform_indices = @transform_4, window_bounds = array<i64: 3, 32>}, {transform_indices = @transform_5, window_bounds = array<i64: 3>}, {transform_indices = @transform_6, window_bounds = array<i64: 32, 8>}, {transform_indices = @transform_7, window_bounds = array<i64: 8>}, {transform_indices = @transform_8, window_bounds = array<i64: 8>}, {transform_indices = @transform_9, window_bounds = array<i64: 1>}, {transform_indices = @transform_10, window_bounds = array<i64: 32, 2>}, {transform_indices = @transform_11, window_bounds = array<i64: 2>}, {transform_indices = @transform_12, window_bounds = array<i64: 2, 8>}]} {
    %c0 = arith.constant 0 : index
    %c0_0 = arith.constant 0 : index
    %c0_1 = arith.constant 0 : index
    %0 = vector.load %arg2[%c0, %c0_0, %c0_1] : memref<8x8x8xf32, #tpu.memory_space<vmem>>, vector<8x8x8xf32>
    %cst = arith.constant 5.000000e-01 : f32
    %1 = vector.broadcast %cst : f32 to vector<8x8x8xf32>
    %2 = arith.cmpf ogt, %0, %1 : vector<8x8x8xf32>
    %c0_2 = arith.constant 0 : index
    %3 = memref.load %arg6[%c0_2] : memref<3xf32, #tpu.memory_space<smem>>
    %4 = vector.broadcast %3 : f32 to vector<8x8x8xf32>
    %c1 = arith.constant 1 : index
    %5 = memref.load %arg6[%c1] : memref<3xf32, #tpu.memory_space<smem>>
    %6 = vector.broadcast %5 : f32 to vector<8x8x8xf32>
    %c2 = arith.constant 2 : index
    %7 = memref.load %arg6[%c2] : memref<3xf32, #tpu.memory_space<smem>>
    %8 = vector.broadcast %7 : f32 to vector<8x8x8xf32>
    %c0_3 = arith.constant 0 : index
    %c0_4 = arith.constant 0 : index
    %c0_5 = arith.constant 0 : index
    %c0_6 = arith.constant 0 : index
    %9 = vector.load %arg1[%c0_3, %c0_4, %c0_5, %c0_6] : memref<32x8x8x8xf32, #tpu.memory_space<vmem>>, vector<1x8x8x8xf32>
    %10 = vector.shape_cast %9 : vector<1x8x8x8xf32> to vector<8x8x8xf32>
    %c0_7 = arith.constant 0 : index
    %c0_8 = arith.constant 0 : index
    %11 = memref.load %arg5[%c0_7, %c0_8] : memref<3x32xf32, #tpu.memory_space<smem>>
    %12 = vector.broadcast %11 : f32 to vector<8x8x8xf32>
    %13 = arith.mulf %10, %12 : vector<8x8x8xf32>
    %14 = arith.addf %4, %13 : vector<8x8x8xf32>
    %c1_9 = arith.constant 1 : index
    %c0_10 = arith.constant 0 : index
    %15 = memref.load %arg5[%c1_9, %c0_10] : memref<3x32xf32, #tpu.memory_space<smem>>
    %16 = vector.broadcast %15 : f32 to vector<8x8x8xf32>
    %17 = arith.mulf %10, %16 : vector<8x8x8xf32>
    %18 = arith.addf %6, %17 : vector<8x8x8xf32>
    %c2_11 = arith.constant 2 : index
    %c0_12 = arith.constant 0 : index
    %19 = memref.load %arg5[%c2_11, %c0_12] : memref<3x32xf32, #tpu.memory_space<smem>>
    %20 = vector.broadcast %19 : f32 to vector<8x8x8xf32>
    %21 = arith.mulf %10, %20 : vector<8x8x8xf32>
    %22 = arith.addf %8, %21 : vector<8x8x8xf32>
    %c1_13 = arith.constant 1 : index
    %c0_14 = arith.constant 0 : index
    %c0_15 = arith.constant 0 : index
    %c0_16 = arith.constant 0 : index
    %23 = vector.load %arg1[%c1_13, %c0_14, %c0_15, %c0_16] : memref<32x8x8x8xf32, #tpu.memory_space<vmem>>, vector<1x8x8x8xf32>
    %24 = vector.shape_cast %23 : vector<1x8x8x8xf32> to vector<8x8x8xf32>
    %c0_17 = arith.constant 0 : index
    %c1_18 = arith.constant 1 : index
    %25 = memref.load %arg5[%c0_17, %c1_18] : memref<3x32xf32, #tpu.memory_space<smem>>
    %26 = vector.broadcast %25 : f32 to vector<8x8x8xf32>
    %27 = arith.mulf %24, %26 : vector<8x8x8xf32>
    %28 = arith.addf %14, %27 : vector<8x8x8xf32>
    %c1_19 = arith.constant 1 : index
    %c1_20 = arith.constant 1 : index
    %29 = memref.load %arg5[%c1_19, %c1_20] : memref<3x32xf32, #tpu.memory_space<smem>>
    %30 = vector.broadcast %29 : f32 to vector<8x8x8xf32>
    %31 = arith.mulf %24, %30 : vector<8x8x8xf32>
    %32 = arith.addf %18, %31 : vector<8x8x8xf32>
    %c2_21 = arith.constant 2 : index
    %c1_22 = arith.constant 1 : index
    %33 = memref.load %arg5[%c2_21, %c1_22] : memref<3x32xf32, #tpu.memory_space<smem>>
    %34 = vector.broadcast %33 : f32 to vector<8x8x8xf32>
    %35 = arith.mulf %24, %34 : vector<8x8x8xf32>
    %36 = arith.addf %22, %35 : vector<8x8x8xf32>
    %c2_23 = arith.constant 2 : index
    %c0_24 = arith.constant 0 : index
    %c0_25 = arith.constant 0 : index
    %c0_26 = arith.constant 0 : index
    %37 = vector.load %arg1[%c2_23, %c0_24, %c0_25, %c0_26] : memref<32x8x8x8xf32, #tpu.memory_space<vmem>>, vector<1x8x8x8xf32>
    %38 = vector.shape_cast %37 : vector<1x8x8x8xf32> to vector<8x8x8xf32>
    %c0_27 = arith.constant 0 : index
    %c2_28 = arith.constant 2 : index
    %39 = memref.load %arg5[%c0_27, %c2_28] : memref<3x32xf32, #tpu.memory_space<smem>>
    %40 = vector.broadcast %39 : f32 to vector<8x8x8xf32>
    %41 = arith.mulf %38, %40 : vector<8x8x8xf32>
    %42 = arith.addf %28, %41 : vector<8x8x8xf32>
    %c1_29 = arith.constant 1 : index
    %c2_30 = arith.constant 2 : index
    %43 = memref.load %arg5[%c1_29, %c2_30] : memref<3x32xf32, #tpu.memory_space<smem>>
    %44 = vector.broadcast %43 : f32 to vector<8x8x8xf32>
    %45 = arith.mulf %38, %44 : vector<8x8x8xf32>
    %46 = arith.addf %32, %45 : vector<8x8x8xf32>
    %c2_31 = arith.constant 2 : index
    %c2_32 = arith.constant 2 : index
    %47 = memref.load %arg5[%c2_31, %c2_32] : memref<3x32xf32, #tpu.memory_space<smem>>
    %48 = vector.broadcast %47 : f32 to vector<8x8x8xf32>
    %49 = arith.mulf %38, %48 : vector<8x8x8xf32>
    %50 = arith.addf %36, %49 : vector<8x8x8xf32>
    %c3 = arith.constant 3 : index
    %c0_33 = arith.constant 0 : index
    %c0_34 = arith.constant 0 : index
    %c0_35 = arith.constant 0 : index
    %51 = vector.load %arg1[%c3, %c0_33, %c0_34, %c0_35] : memref<32x8x8x8xf32, #tpu.memory_space<vmem>>, vector<1x8x8x8xf32>
    %52 = vector.shape_cast %51 : vector<1x8x8x8xf32> to vector<8x8x8xf32>
    %c0_36 = arith.constant 0 : index
    %c3_37 = arith.constant 3 : index
    %53 = memref.load %arg5[%c0_36, %c3_37] : memref<3x32xf32, #tpu.memory_space<smem>>
    %54 = vector.broadcast %53 : f32 to vector<8x8x8xf32>
    %55 = arith.mulf %52, %54 : vector<8x8x8xf32>
    %56 = arith.addf %42, %55 : vector<8x8x8xf32>
    %c1_38 = arith.constant 1 : index
    %c3_39 = arith.constant 3 : index
    %57 = memref.load %arg5[%c1_38, %c3_39] : memref<3x32xf32, #tpu.memory_space<smem>>
    %58 = vector.broadcast %57 : f32 to vector<8x8x8xf32>
    %59 = arith.mulf %52, %58 : vector<8x8x8xf32>
    %60 = arith.addf %46, %59 : vector<8x8x8xf32>
    %c2_40 = arith.constant 2 : index
    %c3_41 = arith.constant 3 : index
    %61 = memref.load %arg5[%c2_40, %c3_41] : memref<3x32xf32, #tpu.memory_space<smem>>
    %62 = vector.broadcast %61 : f32 to vector<8x8x8xf32>
    %63 = arith.mulf %52, %62 : vector<8x8x8xf32>
    %64 = arith.addf %50, %63 : vector<8x8x8xf32>
    %c4 = arith.constant 4 : index
    %c0_42 = arith.constant 0 : index
    %c0_43 = arith.constant 0 : index
    %c0_44 = arith.constant 0 : index
    %65 = vector.load %arg1[%c4, %c0_42, %c0_43, %c0_44] : memref<32x8x8x8xf32, #tpu.memory_space<vmem>>, vector<1x8x8x8xf32>
    %66 = vector.shape_cast %65 : vector<1x8x8x8xf32> to vector<8x8x8xf32>
    %c0_45 = arith.constant 0 : index
    %c4_46 = arith.constant 4 : index
    %67 = memref.load %arg5[%c0_45, %c4_46] : memref<3x32xf32, #tpu.memory_space<smem>>
    %68 = vector.broadcast %67 : f32 to vector<8x8x8xf32>
    %69 = arith.mulf %66, %68 : vector<8x8x8xf32>
    %70 = arith.addf %56, %69 : vector<8x8x8xf32>
    %c1_47 = arith.constant 1 : index
    %c4_48 = arith.constant 4 : index
    %71 = memref.load %arg5[%c1_47, %c4_48] : memref<3x32xf32, #tpu.memory_space<smem>>
    %72 = vector.broadcast %71 : f32 to vector<8x8x8xf32>
    %73 = arith.mulf %66, %72 : vector<8x8x8xf32>
    %74 = arith.addf %60, %73 : vector<8x8x8xf32>
    %c2_49 = arith.constant 2 : index
    %c4_50 = arith.constant 4 : index
    %75 = memref.load %arg5[%c2_49, %c4_50] : memref<3x32xf32, #tpu.memory_space<smem>>
    %76 = vector.broadcast %75 : f32 to vector<8x8x8xf32>
    %77 = arith.mulf %66, %76 : vector<8x8x8xf32>
    %78 = arith.addf %64, %77 : vector<8x8x8xf32>
    %c5 = arith.constant 5 : index
    %c0_51 = arith.constant 0 : index
    %c0_52 = arith.constant 0 : index
    %c0_53 = arith.constant 0 : index
    %79 = vector.load %arg1[%c5, %c0_51, %c0_52, %c0_53] : memref<32x8x8x8xf32, #tpu.memory_space<vmem>>, vector<1x8x8x8xf32>
    %80 = vector.shape_cast %79 : vector<1x8x8x8xf32> to vector<8x8x8xf32>
    %c0_54 = arith.constant 0 : index
    %c5_55 = arith.constant 5 : index
    %81 = memref.load %arg5[%c0_54, %c5_55] : memref<3x32xf32, #tpu.memory_space<smem>>
    %82 = vector.broadcast %81 : f32 to vector<8x8x8xf32>
    %83 = arith.mulf %80, %82 : vector<8x8x8xf32>
    %84 = arith.addf %70, %83 : vector<8x8x8xf32>
    %c1_56 = arith.constant 1 : index
    %c5_57 = arith.constant 5 : index
    %85 = memref.load %arg5[%c1_56, %c5_57] : memref<3x32xf32, #tpu.memory_space<smem>>
    %86 = vector.broadcast %85 : f32 to vector<8x8x8xf32>
    %87 = arith.mulf %80, %86 : vector<8x8x8xf32>
    %88 = arith.addf %74, %87 : vector<8x8x8xf32>
    %c2_58 = arith.constant 2 : index
    %c5_59 = arith.constant 5 : index
    %89 = memref.load %arg5[%c2_58, %c5_59] : memref<3x32xf32, #tpu.memory_space<smem>>
    %90 = vector.broadcast %89 : f32 to vector<8x8x8xf32>
    %91 = arith.mulf %80, %90 : vector<8x8x8xf32>
    %92 = arith.addf %78, %91 : vector<8x8x8xf32>
    %c6 = arith.constant 6 : index
    %c0_60 = arith.constant 0 : index
    %c0_61 = arith.constant 0 : index
    %c0_62 = arith.constant 0 : index
    %93 = vector.load %arg1[%c6, %c0_60, %c0_61, %c0_62] : memref<32x8x8x8xf32, #tpu.memory_space<vmem>>, vector<1x8x8x8xf32>
    %94 = vector.shape_cast %93 : vector<1x8x8x8xf32> to vector<8x8x8xf32>
    %c0_63 = arith.constant 0 : index
    %c6_64 = arith.constant 6 : index
    %95 = memref.load %arg5[%c0_63, %c6_64] : memref<3x32xf32, #tpu.memory_space<smem>>
    %96 = vector.broadcast %95 : f32 to vector<8x8x8xf32>
    %97 = arith.mulf %94, %96 : vector<8x8x8xf32>
    %98 = arith.addf %84, %97 : vector<8x8x8xf32>
    %c1_65 = arith.constant 1 : index
    %c6_66 = arith.constant 6 : index
    %99 = memref.load %arg5[%c1_65, %c6_66] : memref<3x32xf32, #tpu.memory_space<smem>>
    %100 = vector.broadcast %99 : f32 to vector<8x8x8xf32>
    %101 = arith.mulf %94, %100 : vector<8x8x8xf32>
    %102 = arith.addf %88, %101 : vector<8x8x8xf32>
    %c2_67 = arith.constant 2 : index
    %c6_68 = arith.constant 6 : index
    %103 = memref.load %arg5[%c2_67, %c6_68] : memref<3x32xf32, #tpu.memory_space<smem>>
    %104 = vector.broadcast %103 : f32 to vector<8x8x8xf32>
    %105 = arith.mulf %94, %104 : vector<8x8x8xf32>
    %106 = arith.addf %92, %105 : vector<8x8x8xf32>
    %c7 = arith.constant 7 : index
    %c0_69 = arith.constant 0 : index
    %c0_70 = arith.constant 0 : index
    %c0_71 = arith.constant 0 : index
    %107 = vector.load %arg1[%c7, %c0_69, %c0_70, %c0_71] : memref<32x8x8x8xf32, #tpu.memory_space<vmem>>, vector<1x8x8x8xf32>
    %108 = vector.shape_cast %107 : vector<1x8x8x8xf32> to vector<8x8x8xf32>
    %c0_72 = arith.constant 0 : index
    %c7_73 = arith.constant 7 : index
    %109 = memref.load %arg5[%c0_72, %c7_73] : memref<3x32xf32, #tpu.memory_space<smem>>
    %110 = vector.broadcast %109 : f32 to vector<8x8x8xf32>
    %111 = arith.mulf %108, %110 : vector<8x8x8xf32>
    %112 = arith.addf %98, %111 : vector<8x8x8xf32>
    %c1_74 = arith.constant 1 : index
    %c7_75 = arith.constant 7 : index
    %113 = memref.load %arg5[%c1_74, %c7_75] : memref<3x32xf32, #tpu.memory_space<smem>>
    %114 = vector.broadcast %113 : f32 to vector<8x8x8xf32>
    %115 = arith.mulf %108, %114 : vector<8x8x8xf32>
    %116 = arith.addf %102, %115 : vector<8x8x8xf32>
    %c2_76 = arith.constant 2 : index
    %c7_77 = arith.constant 7 : index
    %117 = memref.load %arg5[%c2_76, %c7_77] : memref<3x32xf32, #tpu.memory_space<smem>>
    %118 = vector.broadcast %117 : f32 to vector<8x8x8xf32>
    %119 = arith.mulf %108, %118 : vector<8x8x8xf32>
    %120 = arith.addf %106, %119 : vector<8x8x8xf32>
    %c8 = arith.constant 8 : index
    %c0_78 = arith.constant 0 : index
    %c0_79 = arith.constant 0 : index
    %c0_80 = arith.constant 0 : index
    %121 = vector.load %arg1[%c8, %c0_78, %c0_79, %c0_80] : memref<32x8x8x8xf32, #tpu.memory_space<vmem>>, vector<1x8x8x8xf32>
    %122 = vector.shape_cast %121 : vector<1x8x8x8xf32> to vector<8x8x8xf32>
    %c0_81 = arith.constant 0 : index
    %c8_82 = arith.constant 8 : index
    %123 = memref.load %arg5[%c0_81, %c8_82] : memref<3x32xf32, #tpu.memory_space<smem>>
    %124 = vector.broadcast %123 : f32 to vector<8x8x8xf32>
    %125 = arith.mulf %122, %124 : vector<8x8x8xf32>
    %126 = arith.addf %112, %125 : vector<8x8x8xf32>
    %c1_83 = arith.constant 1 : index
    %c8_84 = arith.constant 8 : index
    %127 = memref.load %arg5[%c1_83, %c8_84] : memref<3x32xf32, #tpu.memory_space<smem>>
    %128 = vector.broadcast %127 : f32 to vector<8x8x8xf32>
    %129 = arith.mulf %122, %128 : vector<8x8x8xf32>
    %130 = arith.addf %116, %129 : vector<8x8x8xf32>
    %c2_85 = arith.constant 2 : index
    %c8_86 = arith.constant 8 : index
    %131 = memref.load %arg5[%c2_85, %c8_86] : memref<3x32xf32, #tpu.memory_space<smem>>
    %132 = vector.broadcast %131 : f32 to vector<8x8x8xf32>
    %133 = arith.mulf %122, %132 : vector<8x8x8xf32>
    %134 = arith.addf %120, %133 : vector<8x8x8xf32>
    %c9 = arith.constant 9 : index
    %c0_87 = arith.constant 0 : index
    %c0_88 = arith.constant 0 : index
    %c0_89 = arith.constant 0 : index
    %135 = vector.load %arg1[%c9, %c0_87, %c0_88, %c0_89] : memref<32x8x8x8xf32, #tpu.memory_space<vmem>>, vector<1x8x8x8xf32>
    %136 = vector.shape_cast %135 : vector<1x8x8x8xf32> to vector<8x8x8xf32>
    %c0_90 = arith.constant 0 : index
    %c9_91 = arith.constant 9 : index
    %137 = memref.load %arg5[%c0_90, %c9_91] : memref<3x32xf32, #tpu.memory_space<smem>>
    %138 = vector.broadcast %137 : f32 to vector<8x8x8xf32>
    %139 = arith.mulf %136, %138 : vector<8x8x8xf32>
    %140 = arith.addf %126, %139 : vector<8x8x8xf32>
    %c1_92 = arith.constant 1 : index
    %c9_93 = arith.constant 9 : index
    %141 = memref.load %arg5[%c1_92, %c9_93] : memref<3x32xf32, #tpu.memory_space<smem>>
    %142 = vector.broadcast %141 : f32 to vector<8x8x8xf32>
    %143 = arith.mulf %136, %142 : vector<8x8x8xf32>
    %144 = arith.addf %130, %143 : vector<8x8x8xf32>
    %c2_94 = arith.constant 2 : index
    %c9_95 = arith.constant 9 : index
    %145 = memref.load %arg5[%c2_94, %c9_95] : memref<3x32xf32, #tpu.memory_space<smem>>
    %146 = vector.broadcast %145 : f32 to vector<8x8x8xf32>
    %147 = arith.mulf %136, %146 : vector<8x8x8xf32>
    %148 = arith.addf %134, %147 : vector<8x8x8xf32>
    %c10 = arith.constant 10 : index
    %c0_96 = arith.constant 0 : index
    %c0_97 = arith.constant 0 : index
    %c0_98 = arith.constant 0 : index
    %149 = vector.load %arg1[%c10, %c0_96, %c0_97, %c0_98] : memref<32x8x8x8xf32, #tpu.memory_space<vmem>>, vector<1x8x8x8xf32>
    %150 = vector.shape_cast %149 : vector<1x8x8x8xf32> to vector<8x8x8xf32>
    %c0_99 = arith.constant 0 : index
    %c10_100 = arith.constant 10 : index
    %151 = memref.load %arg5[%c0_99, %c10_100] : memref<3x32xf32, #tpu.memory_space<smem>>
    %152 = vector.broadcast %151 : f32 to vector<8x8x8xf32>
    %153 = arith.mulf %150, %152 : vector<8x8x8xf32>
    %154 = arith.addf %140, %153 : vector<8x8x8xf32>
    %c1_101 = arith.constant 1 : index
    %c10_102 = arith.constant 10 : index
    %155 = memref.load %arg5[%c1_101, %c10_102] : memref<3x32xf32, #tpu.memory_space<smem>>
    %156 = vector.broadcast %155 : f32 to vector<8x8x8xf32>
    %157 = arith.mulf %150, %156 : vector<8x8x8xf32>
    %158 = arith.addf %144, %157 : vector<8x8x8xf32>
    %c2_103 = arith.constant 2 : index
    %c10_104 = arith.constant 10 : index
    %159 = memref.load %arg5[%c2_103, %c10_104] : memref<3x32xf32, #tpu.memory_space<smem>>
    %160 = vector.broadcast %159 : f32 to vector<8x8x8xf32>
    %161 = arith.mulf %150, %160 : vector<8x8x8xf32>
    %162 = arith.addf %148, %161 : vector<8x8x8xf32>
    %c11 = arith.constant 11 : index
    %c0_105 = arith.constant 0 : index
    %c0_106 = arith.constant 0 : index
    %c0_107 = arith.constant 0 : index
    %163 = vector.load %arg1[%c11, %c0_105, %c0_106, %c0_107] : memref<32x8x8x8xf32, #tpu.memory_space<vmem>>, vector<1x8x8x8xf32>
    %164 = vector.shape_cast %163 : vector<1x8x8x8xf32> to vector<8x8x8xf32>
    %c0_108 = arith.constant 0 : index
    %c11_109 = arith.constant 11 : index
    %165 = memref.load %arg5[%c0_108, %c11_109] : memref<3x32xf32, #tpu.memory_space<smem>>
    %166 = vector.broadcast %165 : f32 to vector<8x8x8xf32>
    %167 = arith.mulf %164, %166 : vector<8x8x8xf32>
    %168 = arith.addf %154, %167 : vector<8x8x8xf32>
    %c1_110 = arith.constant 1 : index
    %c11_111 = arith.constant 11 : index
    %169 = memref.load %arg5[%c1_110, %c11_111] : memref<3x32xf32, #tpu.memory_space<smem>>
    %170 = vector.broadcast %169 : f32 to vector<8x8x8xf32>
    %171 = arith.mulf %164, %170 : vector<8x8x8xf32>
    %172 = arith.addf %158, %171 : vector<8x8x8xf32>
    %c2_112 = arith.constant 2 : index
    %c11_113 = arith.constant 11 : index
    %173 = memref.load %arg5[%c2_112, %c11_113] : memref<3x32xf32, #tpu.memory_space<smem>>
    %174 = vector.broadcast %173 : f32 to vector<8x8x8xf32>
    %175 = arith.mulf %164, %174 : vector<8x8x8xf32>
    %176 = arith.addf %162, %175 : vector<8x8x8xf32>
    %c12 = arith.constant 12 : index
    %c0_114 = arith.constant 0 : index
    %c0_115 = arith.constant 0 : index
    %c0_116 = arith.constant 0 : index
    %177 = vector.load %arg1[%c12, %c0_114, %c0_115, %c0_116] : memref<32x8x8x8xf32, #tpu.memory_space<vmem>>, vector<1x8x8x8xf32>
    %178 = vector.shape_cast %177 : vector<1x8x8x8xf32> to vector<8x8x8xf32>
    %c0_117 = arith.constant 0 : index
    %c12_118 = arith.constant 12 : index
    %179 = memref.load %arg5[%c0_117, %c12_118] : memref<3x32xf32, #tpu.memory_space<smem>>
    %180 = vector.broadcast %179 : f32 to vector<8x8x8xf32>
    %181 = arith.mulf %178, %180 : vector<8x8x8xf32>
    %182 = arith.addf %168, %181 : vector<8x8x8xf32>
    %c1_119 = arith.constant 1 : index
    %c12_120 = arith.constant 12 : index
    %183 = memref.load %arg5[%c1_119, %c12_120] : memref<3x32xf32, #tpu.memory_space<smem>>
    %184 = vector.broadcast %183 : f32 to vector<8x8x8xf32>
    %185 = arith.mulf %178, %184 : vector<8x8x8xf32>
    %186 = arith.addf %172, %185 : vector<8x8x8xf32>
    %c2_121 = arith.constant 2 : index
    %c12_122 = arith.constant 12 : index
    %187 = memref.load %arg5[%c2_121, %c12_122] : memref<3x32xf32, #tpu.memory_space<smem>>
    %188 = vector.broadcast %187 : f32 to vector<8x8x8xf32>
    %189 = arith.mulf %178, %188 : vector<8x8x8xf32>
    %190 = arith.addf %176, %189 : vector<8x8x8xf32>
    %c13 = arith.constant 13 : index
    %c0_123 = arith.constant 0 : index
    %c0_124 = arith.constant 0 : index
    %c0_125 = arith.constant 0 : index
    %191 = vector.load %arg1[%c13, %c0_123, %c0_124, %c0_125] : memref<32x8x8x8xf32, #tpu.memory_space<vmem>>, vector<1x8x8x8xf32>
    %192 = vector.shape_cast %191 : vector<1x8x8x8xf32> to vector<8x8x8xf32>
    %c0_126 = arith.constant 0 : index
    %c13_127 = arith.constant 13 : index
    %193 = memref.load %arg5[%c0_126, %c13_127] : memref<3x32xf32, #tpu.memory_space<smem>>
    %194 = vector.broadcast %193 : f32 to vector<8x8x8xf32>
    %195 = arith.mulf %192, %194 : vector<8x8x8xf32>
    %196 = arith.addf %182, %195 : vector<8x8x8xf32>
    %c1_128 = arith.constant 1 : index
    %c13_129 = arith.constant 13 : index
    %197 = memref.load %arg5[%c1_128, %c13_129] : memref<3x32xf32, #tpu.memory_space<smem>>
    %198 = vector.broadcast %197 : f32 to vector<8x8x8xf32>
    %199 = arith.mulf %192, %198 : vector<8x8x8xf32>
    %200 = arith.addf %186, %199 : vector<8x8x8xf32>
    %c2_130 = arith.constant 2 : index
    %c13_131 = arith.constant 13 : index
    %201 = memref.load %arg5[%c2_130, %c13_131] : memref<3x32xf32, #tpu.memory_space<smem>>
    %202 = vector.broadcast %201 : f32 to vector<8x8x8xf32>
    %203 = arith.mulf %192, %202 : vector<8x8x8xf32>
    %204 = arith.addf %190, %203 : vector<8x8x8xf32>
    %c14 = arith.constant 14 : index
    %c0_132 = arith.constant 0 : index
    %c0_133 = arith.constant 0 : index
    %c0_134 = arith.constant 0 : index
    %205 = vector.load %arg1[%c14, %c0_132, %c0_133, %c0_134] : memref<32x8x8x8xf32, #tpu.memory_space<vmem>>, vector<1x8x8x8xf32>
    %206 = vector.shape_cast %205 : vector<1x8x8x8xf32> to vector<8x8x8xf32>
    %c0_135 = arith.constant 0 : index
    %c14_136 = arith.constant 14 : index
    %207 = memref.load %arg5[%c0_135, %c14_136] : memref<3x32xf32, #tpu.memory_space<smem>>
    %208 = vector.broadcast %207 : f32 to vector<8x8x8xf32>
    %209 = arith.mulf %206, %208 : vector<8x8x8xf32>
    %210 = arith.addf %196, %209 : vector<8x8x8xf32>
    %c1_137 = arith.constant 1 : index
    %c14_138 = arith.constant 14 : index
    %211 = memref.load %arg5[%c1_137, %c14_138] : memref<3x32xf32, #tpu.memory_space<smem>>
    %212 = vector.broadcast %211 : f32 to vector<8x8x8xf32>
    %213 = arith.mulf %206, %212 : vector<8x8x8xf32>
    %214 = arith.addf %200, %213 : vector<8x8x8xf32>
    %c2_139 = arith.constant 2 : index
    %c14_140 = arith.constant 14 : index
    %215 = memref.load %arg5[%c2_139, %c14_140] : memref<3x32xf32, #tpu.memory_space<smem>>
    %216 = vector.broadcast %215 : f32 to vector<8x8x8xf32>
    %217 = arith.mulf %206, %216 : vector<8x8x8xf32>
    %218 = arith.addf %204, %217 : vector<8x8x8xf32>
    %c15 = arith.constant 15 : index
    %c0_141 = arith.constant 0 : index
    %c0_142 = arith.constant 0 : index
    %c0_143 = arith.constant 0 : index
    %219 = vector.load %arg1[%c15, %c0_141, %c0_142, %c0_143] : memref<32x8x8x8xf32, #tpu.memory_space<vmem>>, vector<1x8x8x8xf32>
    %220 = vector.shape_cast %219 : vector<1x8x8x8xf32> to vector<8x8x8xf32>
    %c0_144 = arith.constant 0 : index
    %c15_145 = arith.constant 15 : index
    %221 = memref.load %arg5[%c0_144, %c15_145] : memref<3x32xf32, #tpu.memory_space<smem>>
    %222 = vector.broadcast %221 : f32 to vector<8x8x8xf32>
    %223 = arith.mulf %220, %222 : vector<8x8x8xf32>
    %224 = arith.addf %210, %223 : vector<8x8x8xf32>
    %c1_146 = arith.constant 1 : index
    %c15_147 = arith.constant 15 : index
    %225 = memref.load %arg5[%c1_146, %c15_147] : memref<3x32xf32, #tpu.memory_space<smem>>
    %226 = vector.broadcast %225 : f32 to vector<8x8x8xf32>
    %227 = arith.mulf %220, %226 : vector<8x8x8xf32>
    %228 = arith.addf %214, %227 : vector<8x8x8xf32>
    %c2_148 = arith.constant 2 : index
    %c15_149 = arith.constant 15 : index
    %229 = memref.load %arg5[%c2_148, %c15_149] : memref<3x32xf32, #tpu.memory_space<smem>>
    %230 = vector.broadcast %229 : f32 to vector<8x8x8xf32>
    %231 = arith.mulf %220, %230 : vector<8x8x8xf32>
    %232 = arith.addf %218, %231 : vector<8x8x8xf32>
    %c16 = arith.constant 16 : index
    %c0_150 = arith.constant 0 : index
    %c0_151 = arith.constant 0 : index
    %c0_152 = arith.constant 0 : index
    %233 = vector.load %arg1[%c16, %c0_150, %c0_151, %c0_152] : memref<32x8x8x8xf32, #tpu.memory_space<vmem>>, vector<1x8x8x8xf32>
    %234 = vector.shape_cast %233 : vector<1x8x8x8xf32> to vector<8x8x8xf32>
    %c0_153 = arith.constant 0 : index
    %c16_154 = arith.constant 16 : index
    %235 = memref.load %arg5[%c0_153, %c16_154] : memref<3x32xf32, #tpu.memory_space<smem>>
    %236 = vector.broadcast %235 : f32 to vector<8x8x8xf32>
    %237 = arith.mulf %234, %236 : vector<8x8x8xf32>
    %238 = arith.addf %224, %237 : vector<8x8x8xf32>
    %c1_155 = arith.constant 1 : index
    %c16_156 = arith.constant 16 : index
    %239 = memref.load %arg5[%c1_155, %c16_156] : memref<3x32xf32, #tpu.memory_space<smem>>
    %240 = vector.broadcast %239 : f32 to vector<8x8x8xf32>
    %241 = arith.mulf %234, %240 : vector<8x8x8xf32>
    %242 = arith.addf %228, %241 : vector<8x8x8xf32>
    %c2_157 = arith.constant 2 : index
    %c16_158 = arith.constant 16 : index
    %243 = memref.load %arg5[%c2_157, %c16_158] : memref<3x32xf32, #tpu.memory_space<smem>>
    %244 = vector.broadcast %243 : f32 to vector<8x8x8xf32>
    %245 = arith.mulf %234, %244 : vector<8x8x8xf32>
    %246 = arith.addf %232, %245 : vector<8x8x8xf32>
    %c17 = arith.constant 17 : index
    %c0_159 = arith.constant 0 : index
    %c0_160 = arith.constant 0 : index
    %c0_161 = arith.constant 0 : index
    %247 = vector.load %arg1[%c17, %c0_159, %c0_160, %c0_161] : memref<32x8x8x8xf32, #tpu.memory_space<vmem>>, vector<1x8x8x8xf32>
    %248 = vector.shape_cast %247 : vector<1x8x8x8xf32> to vector<8x8x8xf32>
    %c0_162 = arith.constant 0 : index
    %c17_163 = arith.constant 17 : index
    %249 = memref.load %arg5[%c0_162, %c17_163] : memref<3x32xf32, #tpu.memory_space<smem>>
    %250 = vector.broadcast %249 : f32 to vector<8x8x8xf32>
    %251 = arith.mulf %248, %250 : vector<8x8x8xf32>
    %252 = arith.addf %238, %251 : vector<8x8x8xf32>
    %c1_164 = arith.constant 1 : index
    %c17_165 = arith.constant 17 : index
    %253 = memref.load %arg5[%c1_164, %c17_165] : memref<3x32xf32, #tpu.memory_space<smem>>
    %254 = vector.broadcast %253 : f32 to vector<8x8x8xf32>
    %255 = arith.mulf %248, %254 : vector<8x8x8xf32>
    %256 = arith.addf %242, %255 : vector<8x8x8xf32>
    %c2_166 = arith.constant 2 : index
    %c17_167 = arith.constant 17 : index
    %257 = memref.load %arg5[%c2_166, %c17_167] : memref<3x32xf32, #tpu.memory_space<smem>>
    %258 = vector.broadcast %257 : f32 to vector<8x8x8xf32>
    %259 = arith.mulf %248, %258 : vector<8x8x8xf32>
    %260 = arith.addf %246, %259 : vector<8x8x8xf32>
    %c18 = arith.constant 18 : index
    %c0_168 = arith.constant 0 : index
    %c0_169 = arith.constant 0 : index
    %c0_170 = arith.constant 0 : index
    %261 = vector.load %arg1[%c18, %c0_168, %c0_169, %c0_170] : memref<32x8x8x8xf32, #tpu.memory_space<vmem>>, vector<1x8x8x8xf32>
    %262 = vector.shape_cast %261 : vector<1x8x8x8xf32> to vector<8x8x8xf32>
    %c0_171 = arith.constant 0 : index
    %c18_172 = arith.constant 18 : index
    %263 = memref.load %arg5[%c0_171, %c18_172] : memref<3x32xf32, #tpu.memory_space<smem>>
    %264 = vector.broadcast %263 : f32 to vector<8x8x8xf32>
    %265 = arith.mulf %262, %264 : vector<8x8x8xf32>
    %266 = arith.addf %252, %265 : vector<8x8x8xf32>
    %c1_173 = arith.constant 1 : index
    %c18_174 = arith.constant 18 : index
    %267 = memref.load %arg5[%c1_173, %c18_174] : memref<3x32xf32, #tpu.memory_space<smem>>
    %268 = vector.broadcast %267 : f32 to vector<8x8x8xf32>
    %269 = arith.mulf %262, %268 : vector<8x8x8xf32>
    %270 = arith.addf %256, %269 : vector<8x8x8xf32>
    %c2_175 = arith.constant 2 : index
    %c18_176 = arith.constant 18 : index
    %271 = memref.load %arg5[%c2_175, %c18_176] : memref<3x32xf32, #tpu.memory_space<smem>>
    %272 = vector.broadcast %271 : f32 to vector<8x8x8xf32>
    %273 = arith.mulf %262, %272 : vector<8x8x8xf32>
    %274 = arith.addf %260, %273 : vector<8x8x8xf32>
    %c19 = arith.constant 19 : index
    %c0_177 = arith.constant 0 : index
    %c0_178 = arith.constant 0 : index
    %c0_179 = arith.constant 0 : index
    %275 = vector.load %arg1[%c19, %c0_177, %c0_178, %c0_179] : memref<32x8x8x8xf32, #tpu.memory_space<vmem>>, vector<1x8x8x8xf32>
    %276 = vector.shape_cast %275 : vector<1x8x8x8xf32> to vector<8x8x8xf32>
    %c0_180 = arith.constant 0 : index
    %c19_181 = arith.constant 19 : index
    %277 = memref.load %arg5[%c0_180, %c19_181] : memref<3x32xf32, #tpu.memory_space<smem>>
    %278 = vector.broadcast %277 : f32 to vector<8x8x8xf32>
    %279 = arith.mulf %276, %278 : vector<8x8x8xf32>
    %280 = arith.addf %266, %279 : vector<8x8x8xf32>
    %c1_182 = arith.constant 1 : index
    %c19_183 = arith.constant 19 : index
    %281 = memref.load %arg5[%c1_182, %c19_183] : memref<3x32xf32, #tpu.memory_space<smem>>
    %282 = vector.broadcast %281 : f32 to vector<8x8x8xf32>
    %283 = arith.mulf %276, %282 : vector<8x8x8xf32>
    %284 = arith.addf %270, %283 : vector<8x8x8xf32>
    %c2_184 = arith.constant 2 : index
    %c19_185 = arith.constant 19 : index
    %285 = memref.load %arg5[%c2_184, %c19_185] : memref<3x32xf32, #tpu.memory_space<smem>>
    %286 = vector.broadcast %285 : f32 to vector<8x8x8xf32>
    %287 = arith.mulf %276, %286 : vector<8x8x8xf32>
    %288 = arith.addf %274, %287 : vector<8x8x8xf32>
    %c20 = arith.constant 20 : index
    %c0_186 = arith.constant 0 : index
    %c0_187 = arith.constant 0 : index
    %c0_188 = arith.constant 0 : index
    %289 = vector.load %arg1[%c20, %c0_186, %c0_187, %c0_188] : memref<32x8x8x8xf32, #tpu.memory_space<vmem>>, vector<1x8x8x8xf32>
    %290 = vector.shape_cast %289 : vector<1x8x8x8xf32> to vector<8x8x8xf32>
    %c0_189 = arith.constant 0 : index
    %c20_190 = arith.constant 20 : index
    %291 = memref.load %arg5[%c0_189, %c20_190] : memref<3x32xf32, #tpu.memory_space<smem>>
    %292 = vector.broadcast %291 : f32 to vector<8x8x8xf32>
    %293 = arith.mulf %290, %292 : vector<8x8x8xf32>
    %294 = arith.addf %280, %293 : vector<8x8x8xf32>
    %c1_191 = arith.constant 1 : index
    %c20_192 = arith.constant 20 : index
    %295 = memref.load %arg5[%c1_191, %c20_192] : memref<3x32xf32, #tpu.memory_space<smem>>
    %296 = vector.broadcast %295 : f32 to vector<8x8x8xf32>
    %297 = arith.mulf %290, %296 : vector<8x8x8xf32>
    %298 = arith.addf %284, %297 : vector<8x8x8xf32>
    %c2_193 = arith.constant 2 : index
    %c20_194 = arith.constant 20 : index
    %299 = memref.load %arg5[%c2_193, %c20_194] : memref<3x32xf32, #tpu.memory_space<smem>>
    %300 = vector.broadcast %299 : f32 to vector<8x8x8xf32>
    %301 = arith.mulf %290, %300 : vector<8x8x8xf32>
    %302 = arith.addf %288, %301 : vector<8x8x8xf32>
    %c21 = arith.constant 21 : index
    %c0_195 = arith.constant 0 : index
    %c0_196 = arith.constant 0 : index
    %c0_197 = arith.constant 0 : index
    %303 = vector.load %arg1[%c21, %c0_195, %c0_196, %c0_197] : memref<32x8x8x8xf32, #tpu.memory_space<vmem>>, vector<1x8x8x8xf32>
    %304 = vector.shape_cast %303 : vector<1x8x8x8xf32> to vector<8x8x8xf32>
    %c0_198 = arith.constant 0 : index
    %c21_199 = arith.constant 21 : index
    %305 = memref.load %arg5[%c0_198, %c21_199] : memref<3x32xf32, #tpu.memory_space<smem>>
    %306 = vector.broadcast %305 : f32 to vector<8x8x8xf32>
    %307 = arith.mulf %304, %306 : vector<8x8x8xf32>
    %308 = arith.addf %294, %307 : vector<8x8x8xf32>
    %c1_200 = arith.constant 1 : index
    %c21_201 = arith.constant 21 : index
    %309 = memref.load %arg5[%c1_200, %c21_201] : memref<3x32xf32, #tpu.memory_space<smem>>
    %310 = vector.broadcast %309 : f32 to vector<8x8x8xf32>
    %311 = arith.mulf %304, %310 : vector<8x8x8xf32>
    %312 = arith.addf %298, %311 : vector<8x8x8xf32>
    %c2_202 = arith.constant 2 : index
    %c21_203 = arith.constant 21 : index
    %313 = memref.load %arg5[%c2_202, %c21_203] : memref<3x32xf32, #tpu.memory_space<smem>>
    %314 = vector.broadcast %313 : f32 to vector<8x8x8xf32>
    %315 = arith.mulf %304, %314 : vector<8x8x8xf32>
    %316 = arith.addf %302, %315 : vector<8x8x8xf32>
    %c22 = arith.constant 22 : index
    %c0_204 = arith.constant 0 : index
    %c0_205 = arith.constant 0 : index
    %c0_206 = arith.constant 0 : index
    %317 = vector.load %arg1[%c22, %c0_204, %c0_205, %c0_206] : memref<32x8x8x8xf32, #tpu.memory_space<vmem>>, vector<1x8x8x8xf32>
    %318 = vector.shape_cast %317 : vector<1x8x8x8xf32> to vector<8x8x8xf32>
    %c0_207 = arith.constant 0 : index
    %c22_208 = arith.constant 22 : index
    %319 = memref.load %arg5[%c0_207, %c22_208] : memref<3x32xf32, #tpu.memory_space<smem>>
    %320 = vector.broadcast %319 : f32 to vector<8x8x8xf32>
    %321 = arith.mulf %318, %320 : vector<8x8x8xf32>
    %322 = arith.addf %308, %321 : vector<8x8x8xf32>
    %c1_209 = arith.constant 1 : index
    %c22_210 = arith.constant 22 : index
    %323 = memref.load %arg5[%c1_209, %c22_210] : memref<3x32xf32, #tpu.memory_space<smem>>
    %324 = vector.broadcast %323 : f32 to vector<8x8x8xf32>
    %325 = arith.mulf %318, %324 : vector<8x8x8xf32>
    %326 = arith.addf %312, %325 : vector<8x8x8xf32>
    %c2_211 = arith.constant 2 : index
    %c22_212 = arith.constant 22 : index
    %327 = memref.load %arg5[%c2_211, %c22_212] : memref<3x32xf32, #tpu.memory_space<smem>>
    %328 = vector.broadcast %327 : f32 to vector<8x8x8xf32>
    %329 = arith.mulf %318, %328 : vector<8x8x8xf32>
    %330 = arith.addf %316, %329 : vector<8x8x8xf32>
    %c23 = arith.constant 23 : index
    %c0_213 = arith.constant 0 : index
    %c0_214 = arith.constant 0 : index
    %c0_215 = arith.constant 0 : index
    %331 = vector.load %arg1[%c23, %c0_213, %c0_214, %c0_215] : memref<32x8x8x8xf32, #tpu.memory_space<vmem>>, vector<1x8x8x8xf32>
    %332 = vector.shape_cast %331 : vector<1x8x8x8xf32> to vector<8x8x8xf32>
    %c0_216 = arith.constant 0 : index
    %c23_217 = arith.constant 23 : index
    %333 = memref.load %arg5[%c0_216, %c23_217] : memref<3x32xf32, #tpu.memory_space<smem>>
    %334 = vector.broadcast %333 : f32 to vector<8x8x8xf32>
    %335 = arith.mulf %332, %334 : vector<8x8x8xf32>
    %336 = arith.addf %322, %335 : vector<8x8x8xf32>
    %c1_218 = arith.constant 1 : index
    %c23_219 = arith.constant 23 : index
    %337 = memref.load %arg5[%c1_218, %c23_219] : memref<3x32xf32, #tpu.memory_space<smem>>
    %338 = vector.broadcast %337 : f32 to vector<8x8x8xf32>
    %339 = arith.mulf %332, %338 : vector<8x8x8xf32>
    %340 = arith.addf %326, %339 : vector<8x8x8xf32>
    %c2_220 = arith.constant 2 : index
    %c23_221 = arith.constant 23 : index
    %341 = memref.load %arg5[%c2_220, %c23_221] : memref<3x32xf32, #tpu.memory_space<smem>>
    %342 = vector.broadcast %341 : f32 to vector<8x8x8xf32>
    %343 = arith.mulf %332, %342 : vector<8x8x8xf32>
    %344 = arith.addf %330, %343 : vector<8x8x8xf32>
    %c24 = arith.constant 24 : index
    %c0_222 = arith.constant 0 : index
    %c0_223 = arith.constant 0 : index
    %c0_224 = arith.constant 0 : index
    %345 = vector.load %arg1[%c24, %c0_222, %c0_223, %c0_224] : memref<32x8x8x8xf32, #tpu.memory_space<vmem>>, vector<1x8x8x8xf32>
    %346 = vector.shape_cast %345 : vector<1x8x8x8xf32> to vector<8x8x8xf32>
    %c0_225 = arith.constant 0 : index
    %c24_226 = arith.constant 24 : index
    %347 = memref.load %arg5[%c0_225, %c24_226] : memref<3x32xf32, #tpu.memory_space<smem>>
    %348 = vector.broadcast %347 : f32 to vector<8x8x8xf32>
    %349 = arith.mulf %346, %348 : vector<8x8x8xf32>
    %350 = arith.addf %336, %349 : vector<8x8x8xf32>
    %c1_227 = arith.constant 1 : index
    %c24_228 = arith.constant 24 : index
    %351 = memref.load %arg5[%c1_227, %c24_228] : memref<3x32xf32, #tpu.memory_space<smem>>
    %352 = vector.broadcast %351 : f32 to vector<8x8x8xf32>
    %353 = arith.mulf %346, %352 : vector<8x8x8xf32>
    %354 = arith.addf %340, %353 : vector<8x8x8xf32>
    %c2_229 = arith.constant 2 : index
    %c24_230 = arith.constant 24 : index
    %355 = memref.load %arg5[%c2_229, %c24_230] : memref<3x32xf32, #tpu.memory_space<smem>>
    %356 = vector.broadcast %355 : f32 to vector<8x8x8xf32>
    %357 = arith.mulf %346, %356 : vector<8x8x8xf32>
    %358 = arith.addf %344, %357 : vector<8x8x8xf32>
    %c25 = arith.constant 25 : index
    %c0_231 = arith.constant 0 : index
    %c0_232 = arith.constant 0 : index
    %c0_233 = arith.constant 0 : index
    %359 = vector.load %arg1[%c25, %c0_231, %c0_232, %c0_233] : memref<32x8x8x8xf32, #tpu.memory_space<vmem>>, vector<1x8x8x8xf32>
    %360 = vector.shape_cast %359 : vector<1x8x8x8xf32> to vector<8x8x8xf32>
    %c0_234 = arith.constant 0 : index
    %c25_235 = arith.constant 25 : index
    %361 = memref.load %arg5[%c0_234, %c25_235] : memref<3x32xf32, #tpu.memory_space<smem>>
    %362 = vector.broadcast %361 : f32 to vector<8x8x8xf32>
    %363 = arith.mulf %360, %362 : vector<8x8x8xf32>
    %364 = arith.addf %350, %363 : vector<8x8x8xf32>
    %c1_236 = arith.constant 1 : index
    %c25_237 = arith.constant 25 : index
    %365 = memref.load %arg5[%c1_236, %c25_237] : memref<3x32xf32, #tpu.memory_space<smem>>
    %366 = vector.broadcast %365 : f32 to vector<8x8x8xf32>
    %367 = arith.mulf %360, %366 : vector<8x8x8xf32>
    %368 = arith.addf %354, %367 : vector<8x8x8xf32>
    %c2_238 = arith.constant 2 : index
    %c25_239 = arith.constant 25 : index
    %369 = memref.load %arg5[%c2_238, %c25_239] : memref<3x32xf32, #tpu.memory_space<smem>>
    %370 = vector.broadcast %369 : f32 to vector<8x8x8xf32>
    %371 = arith.mulf %360, %370 : vector<8x8x8xf32>
    %372 = arith.addf %358, %371 : vector<8x8x8xf32>
    %c26 = arith.constant 26 : index
    %c0_240 = arith.constant 0 : index
    %c0_241 = arith.constant 0 : index
    %c0_242 = arith.constant 0 : index
    %373 = vector.load %arg1[%c26, %c0_240, %c0_241, %c0_242] : memref<32x8x8x8xf32, #tpu.memory_space<vmem>>, vector<1x8x8x8xf32>
    %374 = vector.shape_cast %373 : vector<1x8x8x8xf32> to vector<8x8x8xf32>
    %c0_243 = arith.constant 0 : index
    %c26_244 = arith.constant 26 : index
    %375 = memref.load %arg5[%c0_243, %c26_244] : memref<3x32xf32, #tpu.memory_space<smem>>
    %376 = vector.broadcast %375 : f32 to vector<8x8x8xf32>
    %377 = arith.mulf %374, %376 : vector<8x8x8xf32>
    %378 = arith.addf %364, %377 : vector<8x8x8xf32>
    %c1_245 = arith.constant 1 : index
    %c26_246 = arith.constant 26 : index
    %379 = memref.load %arg5[%c1_245, %c26_246] : memref<3x32xf32, #tpu.memory_space<smem>>
    %380 = vector.broadcast %379 : f32 to vector<8x8x8xf32>
    %381 = arith.mulf %374, %380 : vector<8x8x8xf32>
    %382 = arith.addf %368, %381 : vector<8x8x8xf32>
    %c2_247 = arith.constant 2 : index
    %c26_248 = arith.constant 26 : index
    %383 = memref.load %arg5[%c2_247, %c26_248] : memref<3x32xf32, #tpu.memory_space<smem>>
    %384 = vector.broadcast %383 : f32 to vector<8x8x8xf32>
    %385 = arith.mulf %374, %384 : vector<8x8x8xf32>
    %386 = arith.addf %372, %385 : vector<8x8x8xf32>
    %c27 = arith.constant 27 : index
    %c0_249 = arith.constant 0 : index
    %c0_250 = arith.constant 0 : index
    %c0_251 = arith.constant 0 : index
    %387 = vector.load %arg1[%c27, %c0_249, %c0_250, %c0_251] : memref<32x8x8x8xf32, #tpu.memory_space<vmem>>, vector<1x8x8x8xf32>
    %388 = vector.shape_cast %387 : vector<1x8x8x8xf32> to vector<8x8x8xf32>
    %c0_252 = arith.constant 0 : index
    %c27_253 = arith.constant 27 : index
    %389 = memref.load %arg5[%c0_252, %c27_253] : memref<3x32xf32, #tpu.memory_space<smem>>
    %390 = vector.broadcast %389 : f32 to vector<8x8x8xf32>
    %391 = arith.mulf %388, %390 : vector<8x8x8xf32>
    %392 = arith.addf %378, %391 : vector<8x8x8xf32>
    %c1_254 = arith.constant 1 : index
    %c27_255 = arith.constant 27 : index
    %393 = memref.load %arg5[%c1_254, %c27_255] : memref<3x32xf32, #tpu.memory_space<smem>>
    %394 = vector.broadcast %393 : f32 to vector<8x8x8xf32>
    %395 = arith.mulf %388, %394 : vector<8x8x8xf32>
    %396 = arith.addf %382, %395 : vector<8x8x8xf32>
    %c2_256 = arith.constant 2 : index
    %c27_257 = arith.constant 27 : index
    %397 = memref.load %arg5[%c2_256, %c27_257] : memref<3x32xf32, #tpu.memory_space<smem>>
    %398 = vector.broadcast %397 : f32 to vector<8x8x8xf32>
    %399 = arith.mulf %388, %398 : vector<8x8x8xf32>
    %400 = arith.addf %386, %399 : vector<8x8x8xf32>
    %c28 = arith.constant 28 : index
    %c0_258 = arith.constant 0 : index
    %c0_259 = arith.constant 0 : index
    %c0_260 = arith.constant 0 : index
    %401 = vector.load %arg1[%c28, %c0_258, %c0_259, %c0_260] : memref<32x8x8x8xf32, #tpu.memory_space<vmem>>, vector<1x8x8x8xf32>
    %402 = vector.shape_cast %401 : vector<1x8x8x8xf32> to vector<8x8x8xf32>
    %c0_261 = arith.constant 0 : index
    %c28_262 = arith.constant 28 : index
    %403 = memref.load %arg5[%c0_261, %c28_262] : memref<3x32xf32, #tpu.memory_space<smem>>
    %404 = vector.broadcast %403 : f32 to vector<8x8x8xf32>
    %405 = arith.mulf %402, %404 : vector<8x8x8xf32>
    %406 = arith.addf %392, %405 : vector<8x8x8xf32>
    %c1_263 = arith.constant 1 : index
    %c28_264 = arith.constant 28 : index
    %407 = memref.load %arg5[%c1_263, %c28_264] : memref<3x32xf32, #tpu.memory_space<smem>>
    %408 = vector.broadcast %407 : f32 to vector<8x8x8xf32>
    %409 = arith.mulf %402, %408 : vector<8x8x8xf32>
    %410 = arith.addf %396, %409 : vector<8x8x8xf32>
    %c2_265 = arith.constant 2 : index
    %c28_266 = arith.constant 28 : index
    %411 = memref.load %arg5[%c2_265, %c28_266] : memref<3x32xf32, #tpu.memory_space<smem>>
    %412 = vector.broadcast %411 : f32 to vector<8x8x8xf32>
    %413 = arith.mulf %402, %412 : vector<8x8x8xf32>
    %414 = arith.addf %400, %413 : vector<8x8x8xf32>
    %c29 = arith.constant 29 : index
    %c0_267 = arith.constant 0 : index
    %c0_268 = arith.constant 0 : index
    %c0_269 = arith.constant 0 : index
    %415 = vector.load %arg1[%c29, %c0_267, %c0_268, %c0_269] : memref<32x8x8x8xf32, #tpu.memory_space<vmem>>, vector<1x8x8x8xf32>
    %416 = vector.shape_cast %415 : vector<1x8x8x8xf32> to vector<8x8x8xf32>
    %c0_270 = arith.constant 0 : index
    %c29_271 = arith.constant 29 : index
    %417 = memref.load %arg5[%c0_270, %c29_271] : memref<3x32xf32, #tpu.memory_space<smem>>
    %418 = vector.broadcast %417 : f32 to vector<8x8x8xf32>
    %419 = arith.mulf %416, %418 : vector<8x8x8xf32>
    %420 = arith.addf %406, %419 : vector<8x8x8xf32>
    %c1_272 = arith.constant 1 : index
    %c29_273 = arith.constant 29 : index
    %421 = memref.load %arg5[%c1_272, %c29_273] : memref<3x32xf32, #tpu.memory_space<smem>>
    %422 = vector.broadcast %421 : f32 to vector<8x8x8xf32>
    %423 = arith.mulf %416, %422 : vector<8x8x8xf32>
    %424 = arith.addf %410, %423 : vector<8x8x8xf32>
    %c2_274 = arith.constant 2 : index
    %c29_275 = arith.constant 29 : index
    %425 = memref.load %arg5[%c2_274, %c29_275] : memref<3x32xf32, #tpu.memory_space<smem>>
    %426 = vector.broadcast %425 : f32 to vector<8x8x8xf32>
    %427 = arith.mulf %416, %426 : vector<8x8x8xf32>
    %428 = arith.addf %414, %427 : vector<8x8x8xf32>
    %c30 = arith.constant 30 : index
    %c0_276 = arith.constant 0 : index
    %c0_277 = arith.constant 0 : index
    %c0_278 = arith.constant 0 : index
    %429 = vector.load %arg1[%c30, %c0_276, %c0_277, %c0_278] : memref<32x8x8x8xf32, #tpu.memory_space<vmem>>, vector<1x8x8x8xf32>
    %430 = vector.shape_cast %429 : vector<1x8x8x8xf32> to vector<8x8x8xf32>
    %c0_279 = arith.constant 0 : index
    %c30_280 = arith.constant 30 : index
    %431 = memref.load %arg5[%c0_279, %c30_280] : memref<3x32xf32, #tpu.memory_space<smem>>
    %432 = vector.broadcast %431 : f32 to vector<8x8x8xf32>
    %433 = arith.mulf %430, %432 : vector<8x8x8xf32>
    %434 = arith.addf %420, %433 : vector<8x8x8xf32>
    %c1_281 = arith.constant 1 : index
    %c30_282 = arith.constant 30 : index
    %435 = memref.load %arg5[%c1_281, %c30_282] : memref<3x32xf32, #tpu.memory_space<smem>>
    %436 = vector.broadcast %435 : f32 to vector<8x8x8xf32>
    %437 = arith.mulf %430, %436 : vector<8x8x8xf32>
    %438 = arith.addf %424, %437 : vector<8x8x8xf32>
    %c2_283 = arith.constant 2 : index
    %c30_284 = arith.constant 30 : index
    %439 = memref.load %arg5[%c2_283, %c30_284] : memref<3x32xf32, #tpu.memory_space<smem>>
    %440 = vector.broadcast %439 : f32 to vector<8x8x8xf32>
    %441 = arith.mulf %430, %440 : vector<8x8x8xf32>
    %442 = arith.addf %428, %441 : vector<8x8x8xf32>
    %c31 = arith.constant 31 : index
    %c0_285 = arith.constant 0 : index
    %c0_286 = arith.constant 0 : index
    %c0_287 = arith.constant 0 : index
    %443 = vector.load %arg1[%c31, %c0_285, %c0_286, %c0_287] : memref<32x8x8x8xf32, #tpu.memory_space<vmem>>, vector<1x8x8x8xf32>
    %444 = vector.shape_cast %443 : vector<1x8x8x8xf32> to vector<8x8x8xf32>
    %c0_288 = arith.constant 0 : index
    %c31_289 = arith.constant 31 : index
    %445 = memref.load %arg5[%c0_288, %c31_289] : memref<3x32xf32, #tpu.memory_space<smem>>
    %446 = vector.broadcast %445 : f32 to vector<8x8x8xf32>
    %447 = arith.mulf %444, %446 : vector<8x8x8xf32>
    %448 = arith.addf %434, %447 : vector<8x8x8xf32>
    %c1_290 = arith.constant 1 : index
    %c31_291 = arith.constant 31 : index
    %449 = memref.load %arg5[%c1_290, %c31_291] : memref<3x32xf32, #tpu.memory_space<smem>>
    %450 = vector.broadcast %449 : f32 to vector<8x8x8xf32>
    %451 = arith.mulf %444, %450 : vector<8x8x8xf32>
    %452 = arith.addf %438, %451 : vector<8x8x8xf32>
    %c2_292 = arith.constant 2 : index
    %c31_293 = arith.constant 31 : index
    %453 = memref.load %arg5[%c2_292, %c31_293] : memref<3x32xf32, #tpu.memory_space<smem>>
    %454 = vector.broadcast %453 : f32 to vector<8x8x8xf32>
    %455 = arith.mulf %444, %454 : vector<8x8x8xf32>
    %456 = arith.addf %442, %455 : vector<8x8x8xf32>
    %457 = tpu.iota {dimensions = array<i32: 0>} : vector<8x8x8xi32>
    %c0_i32 = arith.constant 0 : i32
    %458 = vector.broadcast %c0_i32 : i32 to vector<8x8x8xi32>
    %459 = arith.cmpi ne, %457, %458 : vector<8x8x8xi32>
    %460 = arith.andi %2, %459 : vector<8x8x8xi1>
    %461 = vector.extract_strided_slice %448 {offsets = [0, 0, 0], sizes = [1, 8, 8], strides = [1, 1, 1]} : vector<8x8x8xf32> to vector<1x8x8xf32>
    %462 = vector.shape_cast %461 : vector<1x8x8xf32> to vector<8x8xf32>
    %463 = vector.shape_cast %462 : vector<8x8xf32> to vector<1x8x8xf32>
    %464 = vector.broadcast %463 : vector<1x8x8xf32> to vector<8x8x8xf32>
    %465 = arith.mulf %464, %452 : vector<8x8x8xf32>
    %cst_294 = arith.constant -1.000000e+30 : f32
    %466 = vector.broadcast %cst_294 : f32 to vector<8x8x8xf32>
    %467 = arith.select %460, %465, %466 : vector<8x8x8xi1>, vector<8x8x8xf32>
    %cst_295 = arith.constant dense<0xFF800000> : vector<8x8xf32>
    %468 = vector.multi_reduction <maximumf>, %467, %cst_295 [0] : vector<8x8x8xf32> to vector<8x8xf32>
    %469 = vector.shape_cast %468 : vector<8x8xf32> to vector<1x8x8xf32>
    %470 = vector.broadcast %469 : vector<1x8x8xf32> to vector<8x8x8xf32>
    %471 = arith.subf %465, %470 : vector<8x8x8xf32>
    %cst_296 = arith.constant -1.000000e+30 : f32
    %472 = vector.broadcast %cst_296 : f32 to vector<8x8x8xf32>
    %473 = arith.select %460, %471, %472 : vector<8x8x8xi1>, vector<8x8x8xf32>
    %474 = math.exp %473 : vector<8x8x8xf32>
    %cst_297 = arith.constant dense<0.000000e+00> : vector<8x8xf32>
    %475 = vector.multi_reduction <add>, %474, %cst_297 [0] : vector<8x8x8xf32> to vector<8x8xf32>
    %cst_298 = arith.constant 1.000000e-30 : f32
    %476 = vector.broadcast %cst_298 : f32 to vector<8x8xf32>
    %477 = arith.maximumf %475, %476 : vector<8x8xf32>
    %478 = arith.mulf %474, %456 : vector<8x8x8xf32>
    %cst_299 = arith.constant dense<0.000000e+00> : vector<8x8xf32>
    %479 = vector.multi_reduction <add>, %478, %cst_299 [0] : vector<8x8x8xf32> to vector<8x8xf32>
    %480 = arith.divf %479, %477 : vector<8x8xf32>
    %481 = math.tanh %480 : vector<8x8xf32>
    %482 = vector.extract_strided_slice %0 {offsets = [0, 0, 0], sizes = [1, 8, 8], strides = [1, 1, 1]} : vector<8x8x8xf32> to vector<1x8x8xf32>
    %483 = vector.shape_cast %482 : vector<1x8x8xf32> to vector<8x8xf32>
    %484 = arith.mulf %483, %481 : vector<8x8xf32>
    %c1_i32 = arith.constant 1 : i32
    %485 = vector.broadcast %c1_i32 : i32 to vector<8x8x8xi32>
    %486 = arith.cmpi ne, %457, %485 : vector<8x8x8xi32>
    %487 = arith.andi %2, %486 : vector<8x8x8xi1>
    %488 = vector.extract_strided_slice %448 {offsets = [1, 0, 0], sizes = [1, 8, 8], strides = [1, 1, 1]} : vector<8x8x8xf32> to vector<1x8x8xf32>
    %489 = vector.shape_cast %488 : vector<1x8x8xf32> to vector<8x8xf32>
    %490 = vector.shape_cast %489 : vector<8x8xf32> to vector<1x8x8xf32>
    %491 = vector.broadcast %490 : vector<1x8x8xf32> to vector<8x8x8xf32>
    %492 = arith.mulf %491, %452 : vector<8x8x8xf32>
    %cst_300 = arith.constant -1.000000e+30 : f32
    %493 = vector.broadcast %cst_300 : f32 to vector<8x8x8xf32>
    %494 = arith.select %487, %492, %493 : vector<8x8x8xi1>, vector<8x8x8xf32>
    %cst_301 = arith.constant dense<0xFF800000> : vector<8x8xf32>
    %495 = vector.multi_reduction <maximumf>, %494, %cst_301 [0] : vector<8x8x8xf32> to vector<8x8xf32>
    %496 = vector.shape_cast %495 : vector<8x8xf32> to vector<1x8x8xf32>
    %497 = vector.broadcast %496 : vector<1x8x8xf32> to vector<8x8x8xf32>
    %498 = arith.subf %492, %497 : vector<8x8x8xf32>
    %cst_302 = arith.constant -1.000000e+30 : f32
    %499 = vector.broadcast %cst_302 : f32 to vector<8x8x8xf32>
    %500 = arith.select %487, %498, %499 : vector<8x8x8xi1>, vector<8x8x8xf32>
    %501 = math.exp %500 : vector<8x8x8xf32>
    %cst_303 = arith.constant dense<0.000000e+00> : vector<8x8xf32>
    %502 = vector.multi_reduction <add>, %501, %cst_303 [0] : vector<8x8x8xf32> to vector<8x8xf32>
    %cst_304 = arith.constant 1.000000e-30 : f32
    %503 = vector.broadcast %cst_304 : f32 to vector<8x8xf32>
    %504 = arith.maximumf %502, %503 : vector<8x8xf32>
    %505 = arith.mulf %501, %456 : vector<8x8x8xf32>
    %cst_305 = arith.constant dense<0.000000e+00> : vector<8x8xf32>
    %506 = vector.multi_reduction <add>, %505, %cst_305 [0] : vector<8x8x8xf32> to vector<8x8xf32>
    %507 = arith.divf %506, %504 : vector<8x8xf32>
    %508 = math.tanh %507 : vector<8x8xf32>
    %509 = vector.extract_strided_slice %0 {offsets = [1, 0, 0], sizes = [1, 8, 8], strides = [1, 1, 1]} : vector<8x8x8xf32> to vector<1x8x8xf32>
    %510 = vector.shape_cast %509 : vector<1x8x8xf32> to vector<8x8xf32>
    %511 = arith.mulf %510, %508 : vector<8x8xf32>
    %c2_i32 = arith.constant 2 : i32
    %512 = vector.broadcast %c2_i32 : i32 to vector<8x8x8xi32>
    %513 = arith.cmpi ne, %457, %512 : vector<8x8x8xi32>
    %514 = arith.andi %2, %513 : vector<8x8x8xi1>
    %515 = vector.extract_strided_slice %448 {offsets = [2, 0, 0], sizes = [1, 8, 8], strides = [1, 1, 1]} : vector<8x8x8xf32> to vector<1x8x8xf32>
    %516 = vector.shape_cast %515 : vector<1x8x8xf32> to vector<8x8xf32>
    %517 = vector.shape_cast %516 : vector<8x8xf32> to vector<1x8x8xf32>
    %518 = vector.broadcast %517 : vector<1x8x8xf32> to vector<8x8x8xf32>
    %519 = arith.mulf %518, %452 : vector<8x8x8xf32>
    %cst_306 = arith.constant -1.000000e+30 : f32
    %520 = vector.broadcast %cst_306 : f32 to vector<8x8x8xf32>
    %521 = arith.select %514, %519, %520 : vector<8x8x8xi1>, vector<8x8x8xf32>
    %cst_307 = arith.constant dense<0xFF800000> : vector<8x8xf32>
    %522 = vector.multi_reduction <maximumf>, %521, %cst_307 [0] : vector<8x8x8xf32> to vector<8x8xf32>
    %523 = vector.shape_cast %522 : vector<8x8xf32> to vector<1x8x8xf32>
    %524 = vector.broadcast %523 : vector<1x8x8xf32> to vector<8x8x8xf32>
    %525 = arith.subf %519, %524 : vector<8x8x8xf32>
    %cst_308 = arith.constant -1.000000e+30 : f32
    %526 = vector.broadcast %cst_308 : f32 to vector<8x8x8xf32>
    %527 = arith.select %514, %525, %526 : vector<8x8x8xi1>, vector<8x8x8xf32>
    %528 = math.exp %527 : vector<8x8x8xf32>
    %cst_309 = arith.constant dense<0.000000e+00> : vector<8x8xf32>
    %529 = vector.multi_reduction <add>, %528, %cst_309 [0] : vector<8x8x8xf32> to vector<8x8xf32>
    %cst_310 = arith.constant 1.000000e-30 : f32
    %530 = vector.broadcast %cst_310 : f32 to vector<8x8xf32>
    %531 = arith.maximumf %529, %530 : vector<8x8xf32>
    %532 = arith.mulf %528, %456 : vector<8x8x8xf32>
    %cst_311 = arith.constant dense<0.000000e+00> : vector<8x8xf32>
    %533 = vector.multi_reduction <add>, %532, %cst_311 [0] : vector<8x8x8xf32> to vector<8x8xf32>
    %534 = arith.divf %533, %531 : vector<8x8xf32>
    %535 = math.tanh %534 : vector<8x8xf32>
    %536 = vector.extract_strided_slice %0 {offsets = [2, 0, 0], sizes = [1, 8, 8], strides = [1, 1, 1]} : vector<8x8x8xf32> to vector<1x8x8xf32>
    %537 = vector.shape_cast %536 : vector<1x8x8xf32> to vector<8x8xf32>
    %538 = arith.mulf %537, %535 : vector<8x8xf32>
    %c3_i32 = arith.constant 3 : i32
    %539 = vector.broadcast %c3_i32 : i32 to vector<8x8x8xi32>
    %540 = arith.cmpi ne, %457, %539 : vector<8x8x8xi32>
    %541 = arith.andi %2, %540 : vector<8x8x8xi1>
    %542 = vector.extract_strided_slice %448 {offsets = [3, 0, 0], sizes = [1, 8, 8], strides = [1, 1, 1]} : vector<8x8x8xf32> to vector<1x8x8xf32>
    %543 = vector.shape_cast %542 : vector<1x8x8xf32> to vector<8x8xf32>
    %544 = vector.shape_cast %543 : vector<8x8xf32> to vector<1x8x8xf32>
    %545 = vector.broadcast %544 : vector<1x8x8xf32> to vector<8x8x8xf32>
    %546 = arith.mulf %545, %452 : vector<8x8x8xf32>
    %cst_312 = arith.constant -1.000000e+30 : f32
    %547 = vector.broadcast %cst_312 : f32 to vector<8x8x8xf32>
    %548 = arith.select %541, %546, %547 : vector<8x8x8xi1>, vector<8x8x8xf32>
    %cst_313 = arith.constant dense<0xFF800000> : vector<8x8xf32>
    %549 = vector.multi_reduction <maximumf>, %548, %cst_313 [0] : vector<8x8x8xf32> to vector<8x8xf32>
    %550 = vector.shape_cast %549 : vector<8x8xf32> to vector<1x8x8xf32>
    %551 = vector.broadcast %550 : vector<1x8x8xf32> to vector<8x8x8xf32>
    %552 = arith.subf %546, %551 : vector<8x8x8xf32>
    %cst_314 = arith.constant -1.000000e+30 : f32
    %553 = vector.broadcast %cst_314 : f32 to vector<8x8x8xf32>
    %554 = arith.select %541, %552, %553 : vector<8x8x8xi1>, vector<8x8x8xf32>
    %555 = math.exp %554 : vector<8x8x8xf32>
    %cst_315 = arith.constant dense<0.000000e+00> : vector<8x8xf32>
    %556 = vector.multi_reduction <add>, %555, %cst_315 [0] : vector<8x8x8xf32> to vector<8x8xf32>
    %cst_316 = arith.constant 1.000000e-30 : f32
    %557 = vector.broadcast %cst_316 : f32 to vector<8x8xf32>
    %558 = arith.maximumf %556, %557 : vector<8x8xf32>
    %559 = arith.mulf %555, %456 : vector<8x8x8xf32>
    %cst_317 = arith.constant dense<0.000000e+00> : vector<8x8xf32>
    %560 = vector.multi_reduction <add>, %559, %cst_317 [0] : vector<8x8x8xf32> to vector<8x8xf32>
    %561 = arith.divf %560, %558 : vector<8x8xf32>
    %562 = math.tanh %561 : vector<8x8xf32>
    %563 = vector.extract_strided_slice %0 {offsets = [3, 0, 0], sizes = [1, 8, 8], strides = [1, 1, 1]} : vector<8x8x8xf32> to vector<1x8x8xf32>
    %564 = vector.shape_cast %563 : vector<1x8x8xf32> to vector<8x8xf32>
    %565 = arith.mulf %564, %562 : vector<8x8xf32>
    %c4_i32 = arith.constant 4 : i32
    %566 = vector.broadcast %c4_i32 : i32 to vector<8x8x8xi32>
    %567 = arith.cmpi ne, %457, %566 : vector<8x8x8xi32>
    %568 = arith.andi %2, %567 : vector<8x8x8xi1>
    %569 = vector.extract_strided_slice %448 {offsets = [4, 0, 0], sizes = [1, 8, 8], strides = [1, 1, 1]} : vector<8x8x8xf32> to vector<1x8x8xf32>
    %570 = vector.shape_cast %569 : vector<1x8x8xf32> to vector<8x8xf32>
    %571 = vector.shape_cast %570 : vector<8x8xf32> to vector<1x8x8xf32>
    %572 = vector.broadcast %571 : vector<1x8x8xf32> to vector<8x8x8xf32>
    %573 = arith.mulf %572, %452 : vector<8x8x8xf32>
    %cst_318 = arith.constant -1.000000e+30 : f32
    %574 = vector.broadcast %cst_318 : f32 to vector<8x8x8xf32>
    %575 = arith.select %568, %573, %574 : vector<8x8x8xi1>, vector<8x8x8xf32>
    %cst_319 = arith.constant dense<0xFF800000> : vector<8x8xf32>
    %576 = vector.multi_reduction <maximumf>, %575, %cst_319 [0] : vector<8x8x8xf32> to vector<8x8xf32>
    %577 = vector.shape_cast %576 : vector<8x8xf32> to vector<1x8x8xf32>
    %578 = vector.broadcast %577 : vector<1x8x8xf32> to vector<8x8x8xf32>
    %579 = arith.subf %573, %578 : vector<8x8x8xf32>
    %cst_320 = arith.constant -1.000000e+30 : f32
    %580 = vector.broadcast %cst_320 : f32 to vector<8x8x8xf32>
    %581 = arith.select %568, %579, %580 : vector<8x8x8xi1>, vector<8x8x8xf32>
    %582 = math.exp %581 : vector<8x8x8xf32>
    %cst_321 = arith.constant dense<0.000000e+00> : vector<8x8xf32>
    %583 = vector.multi_reduction <add>, %582, %cst_321 [0] : vector<8x8x8xf32> to vector<8x8xf32>
    %cst_322 = arith.constant 1.000000e-30 : f32
    %584 = vector.broadcast %cst_322 : f32 to vector<8x8xf32>
    %585 = arith.maximumf %583, %584 : vector<8x8xf32>
    %586 = arith.mulf %582, %456 : vector<8x8x8xf32>
    %cst_323 = arith.constant dense<0.000000e+00> : vector<8x8xf32>
    %587 = vector.multi_reduction <add>, %586, %cst_323 [0] : vector<8x8x8xf32> to vector<8x8xf32>
    %588 = arith.divf %587, %585 : vector<8x8xf32>
    %589 = math.tanh %588 : vector<8x8xf32>
    %590 = vector.extract_strided_slice %0 {offsets = [4, 0, 0], sizes = [1, 8, 8], strides = [1, 1, 1]} : vector<8x8x8xf32> to vector<1x8x8xf32>
    %591 = vector.shape_cast %590 : vector<1x8x8xf32> to vector<8x8xf32>
    %592 = arith.mulf %591, %589 : vector<8x8xf32>
    %c5_i32 = arith.constant 5 : i32
    %593 = vector.broadcast %c5_i32 : i32 to vector<8x8x8xi32>
    %594 = arith.cmpi ne, %457, %593 : vector<8x8x8xi32>
    %595 = arith.andi %2, %594 : vector<8x8x8xi1>
    %596 = vector.extract_strided_slice %448 {offsets = [5, 0, 0], sizes = [1, 8, 8], strides = [1, 1, 1]} : vector<8x8x8xf32> to vector<1x8x8xf32>
    %597 = vector.shape_cast %596 : vector<1x8x8xf32> to vector<8x8xf32>
    %598 = vector.shape_cast %597 : vector<8x8xf32> to vector<1x8x8xf32>
    %599 = vector.broadcast %598 : vector<1x8x8xf32> to vector<8x8x8xf32>
    %600 = arith.mulf %599, %452 : vector<8x8x8xf32>
    %cst_324 = arith.constant -1.000000e+30 : f32
    %601 = vector.broadcast %cst_324 : f32 to vector<8x8x8xf32>
    %602 = arith.select %595, %600, %601 : vector<8x8x8xi1>, vector<8x8x8xf32>
    %cst_325 = arith.constant dense<0xFF800000> : vector<8x8xf32>
    %603 = vector.multi_reduction <maximumf>, %602, %cst_325 [0] : vector<8x8x8xf32> to vector<8x8xf32>
    %604 = vector.shape_cast %603 : vector<8x8xf32> to vector<1x8x8xf32>
    %605 = vector.broadcast %604 : vector<1x8x8xf32> to vector<8x8x8xf32>
    %606 = arith.subf %600, %605 : vector<8x8x8xf32>
    %cst_326 = arith.constant -1.000000e+30 : f32
    %607 = vector.broadcast %cst_326 : f32 to vector<8x8x8xf32>
    %608 = arith.select %595, %606, %607 : vector<8x8x8xi1>, vector<8x8x8xf32>
    %609 = math.exp %608 : vector<8x8x8xf32>
    %cst_327 = arith.constant dense<0.000000e+00> : vector<8x8xf32>
    %610 = vector.multi_reduction <add>, %609, %cst_327 [0] : vector<8x8x8xf32> to vector<8x8xf32>
    %cst_328 = arith.constant 1.000000e-30 : f32
    %611 = vector.broadcast %cst_328 : f32 to vector<8x8xf32>
    %612 = arith.maximumf %610, %611 : vector<8x8xf32>
    %613 = arith.mulf %609, %456 : vector<8x8x8xf32>
    %cst_329 = arith.constant dense<0.000000e+00> : vector<8x8xf32>
    %614 = vector.multi_reduction <add>, %613, %cst_329 [0] : vector<8x8x8xf32> to vector<8x8xf32>
    %615 = arith.divf %614, %612 : vector<8x8xf32>
    %616 = math.tanh %615 : vector<8x8xf32>
    %617 = vector.extract_strided_slice %0 {offsets = [5, 0, 0], sizes = [1, 8, 8], strides = [1, 1, 1]} : vector<8x8x8xf32> to vector<1x8x8xf32>
    %618 = vector.shape_cast %617 : vector<1x8x8xf32> to vector<8x8xf32>
    %619 = arith.mulf %618, %616 : vector<8x8xf32>
    %c6_i32 = arith.constant 6 : i32
    %620 = vector.broadcast %c6_i32 : i32 to vector<8x8x8xi32>
    %621 = arith.cmpi ne, %457, %620 : vector<8x8x8xi32>
    %622 = arith.andi %2, %621 : vector<8x8x8xi1>
    %623 = vector.extract_strided_slice %448 {offsets = [6, 0, 0], sizes = [1, 8, 8], strides = [1, 1, 1]} : vector<8x8x8xf32> to vector<1x8x8xf32>
    %624 = vector.shape_cast %623 : vector<1x8x8xf32> to vector<8x8xf32>
    %625 = vector.shape_cast %624 : vector<8x8xf32> to vector<1x8x8xf32>
    %626 = vector.broadcast %625 : vector<1x8x8xf32> to vector<8x8x8xf32>
    %627 = arith.mulf %626, %452 : vector<8x8x8xf32>
    %cst_330 = arith.constant -1.000000e+30 : f32
    %628 = vector.broadcast %cst_330 : f32 to vector<8x8x8xf32>
    %629 = arith.select %622, %627, %628 : vector<8x8x8xi1>, vector<8x8x8xf32>
    %cst_331 = arith.constant dense<0xFF800000> : vector<8x8xf32>
    %630 = vector.multi_reduction <maximumf>, %629, %cst_331 [0] : vector<8x8x8xf32> to vector<8x8xf32>
    %631 = vector.shape_cast %630 : vector<8x8xf32> to vector<1x8x8xf32>
    %632 = vector.broadcast %631 : vector<1x8x8xf32> to vector<8x8x8xf32>
    %633 = arith.subf %627, %632 : vector<8x8x8xf32>
    %cst_332 = arith.constant -1.000000e+30 : f32
    %634 = vector.broadcast %cst_332 : f32 to vector<8x8x8xf32>
    %635 = arith.select %622, %633, %634 : vector<8x8x8xi1>, vector<8x8x8xf32>
    %636 = math.exp %635 : vector<8x8x8xf32>
    %cst_333 = arith.constant dense<0.000000e+00> : vector<8x8xf32>
    %637 = vector.multi_reduction <add>, %636, %cst_333 [0] : vector<8x8x8xf32> to vector<8x8xf32>
    %cst_334 = arith.constant 1.000000e-30 : f32
    %638 = vector.broadcast %cst_334 : f32 to vector<8x8xf32>
    %639 = arith.maximumf %637, %638 : vector<8x8xf32>
    %640 = arith.mulf %636, %456 : vector<8x8x8xf32>
    %cst_335 = arith.constant dense<0.000000e+00> : vector<8x8xf32>
    %641 = vector.multi_reduction <add>, %640, %cst_335 [0] : vector<8x8x8xf32> to vector<8x8xf32>
    %642 = arith.divf %641, %639 : vector<8x8xf32>
    %643 = math.tanh %642 : vector<8x8xf32>
    %644 = vector.extract_strided_slice %0 {offsets = [6, 0, 0], sizes = [1, 8, 8], strides = [1, 1, 1]} : vector<8x8x8xf32> to vector<1x8x8xf32>
    %645 = vector.shape_cast %644 : vector<1x8x8xf32> to vector<8x8xf32>
    %646 = arith.mulf %645, %643 : vector<8x8xf32>
    %c7_i32 = arith.constant 7 : i32
    %647 = vector.broadcast %c7_i32 : i32 to vector<8x8x8xi32>
    %648 = arith.cmpi ne, %457, %647 : vector<8x8x8xi32>
    %649 = arith.andi %2, %648 : vector<8x8x8xi1>
    %650 = vector.extract_strided_slice %448 {offsets = [7, 0, 0], sizes = [1, 8, 8], strides = [1, 1, 1]} : vector<8x8x8xf32> to vector<1x8x8xf32>
    %651 = vector.shape_cast %650 : vector<1x8x8xf32> to vector<8x8xf32>
    %652 = vector.shape_cast %651 : vector<8x8xf32> to vector<1x8x8xf32>
    %653 = vector.broadcast %652 : vector<1x8x8xf32> to vector<8x8x8xf32>
    %654 = arith.mulf %653, %452 : vector<8x8x8xf32>
    %cst_336 = arith.constant -1.000000e+30 : f32
    %655 = vector.broadcast %cst_336 : f32 to vector<8x8x8xf32>
    %656 = arith.select %649, %654, %655 : vector<8x8x8xi1>, vector<8x8x8xf32>
    %cst_337 = arith.constant dense<0xFF800000> : vector<8x8xf32>
    %657 = vector.multi_reduction <maximumf>, %656, %cst_337 [0] : vector<8x8x8xf32> to vector<8x8xf32>
    %658 = vector.shape_cast %657 : vector<8x8xf32> to vector<1x8x8xf32>
    %659 = vector.broadcast %658 : vector<1x8x8xf32> to vector<8x8x8xf32>
    %660 = arith.subf %654, %659 : vector<8x8x8xf32>
    %cst_338 = arith.constant -1.000000e+30 : f32
    %661 = vector.broadcast %cst_338 : f32 to vector<8x8x8xf32>
    %662 = arith.select %649, %660, %661 : vector<8x8x8xi1>, vector<8x8x8xf32>
    %663 = math.exp %662 : vector<8x8x8xf32>
    %cst_339 = arith.constant dense<0.000000e+00> : vector<8x8xf32>
    %664 = vector.multi_reduction <add>, %663, %cst_339 [0] : vector<8x8x8xf32> to vector<8x8xf32>
    %cst_340 = arith.constant 1.000000e-30 : f32
    %665 = vector.broadcast %cst_340 : f32 to vector<8x8xf32>
    %666 = arith.maximumf %664, %665 : vector<8x8xf32>
    %667 = arith.mulf %663, %456 : vector<8x8x8xf32>
    %cst_341 = arith.constant dense<0.000000e+00> : vector<8x8xf32>
    %668 = vector.multi_reduction <add>, %667, %cst_341 [0] : vector<8x8x8xf32> to vector<8x8xf32>
    %669 = arith.divf %668, %666 : vector<8x8xf32>
    %670 = math.tanh %669 : vector<8x8xf32>
    %671 = vector.extract_strided_slice %0 {offsets = [7, 0, 0], sizes = [1, 8, 8], strides = [1, 1, 1]} : vector<8x8x8xf32> to vector<1x8x8xf32>
    %672 = vector.shape_cast %671 : vector<1x8x8xf32> to vector<8x8xf32>
    %673 = arith.mulf %672, %670 : vector<8x8xf32>
    %674 = vector.shape_cast %484 : vector<8x8xf32> to vector<1x8x8xf32>
    %675 = vector.shape_cast %511 : vector<8x8xf32> to vector<1x8x8xf32>
    %676 = vector.shape_cast %538 : vector<8x8xf32> to vector<1x8x8xf32>
    %677 = vector.shape_cast %565 : vector<8x8xf32> to vector<1x8x8xf32>
    %678 = vector.shape_cast %592 : vector<8x8xf32> to vector<1x8x8xf32>
    %679 = vector.shape_cast %619 : vector<8x8xf32> to vector<1x8x8xf32>
    %680 = vector.shape_cast %646 : vector<8x8xf32> to vector<1x8x8xf32>
    %681 = vector.shape_cast %673 : vector<8x8xf32> to vector<1x8x8xf32>
    %682 = tpu.concatenate %674, %675, %676, %677, %678, %679, %680, %681 in 0 : vector<1x8x8xf32>, vector<1x8x8xf32>, vector<1x8x8xf32>, vector<1x8x8xf32>, vector<1x8x8xf32>, vector<1x8x8xf32>, vector<1x8x8xf32>, vector<1x8x8xf32> -> vector<8x8x8xf32>
    %cst_342 = arith.constant dense<0.000000e+00> : vector<8x8xf32>
    %683 = vector.multi_reduction <add>, %0, %cst_342 [0] : vector<8x8x8xf32> to vector<8x8xf32>
    %cst_343 = arith.constant 1.500000e+00 : f32
    %684 = vector.broadcast %cst_343 : f32 to vector<8x8xf32>
    %685 = arith.cmpf ole, %683, %684 : vector<8x8xf32>
    %c0_344 = arith.constant 0 : index
    %686 = memref.load %arg8[%c0_344] : memref<8xf32, #tpu.memory_space<smem>>
    %687 = vector.broadcast %686 : f32 to vector<8x8xf32>
    %c1_345 = arith.constant 1 : index
    %688 = memref.load %arg8[%c1_345] : memref<8xf32, #tpu.memory_space<smem>>
    %689 = vector.broadcast %688 : f32 to vector<8x8xf32>
    %c2_346 = arith.constant 2 : index
    %690 = memref.load %arg8[%c2_346] : memref<8xf32, #tpu.memory_space<smem>>
    %691 = vector.broadcast %690 : f32 to vector<8x8xf32>
    %c3_347 = arith.constant 3 : index
    %692 = memref.load %arg8[%c3_347] : memref<8xf32, #tpu.memory_space<smem>>
    %693 = vector.broadcast %692 : f32 to vector<8x8xf32>
    %c4_348 = arith.constant 4 : index
    %694 = memref.load %arg8[%c4_348] : memref<8xf32, #tpu.memory_space<smem>>
    %695 = vector.broadcast %694 : f32 to vector<8x8xf32>
    %c5_349 = arith.constant 5 : index
    %696 = memref.load %arg8[%c5_349] : memref<8xf32, #tpu.memory_space<smem>>
    %697 = vector.broadcast %696 : f32 to vector<8x8xf32>
    %c6_350 = arith.constant 6 : index
    %698 = memref.load %arg8[%c6_350] : memref<8xf32, #tpu.memory_space<smem>>
    %699 = vector.broadcast %698 : f32 to vector<8x8xf32>
    %c7_351 = arith.constant 7 : index
    %700 = memref.load %arg8[%c7_351] : memref<8xf32, #tpu.memory_space<smem>>
    %701 = vector.broadcast %700 : f32 to vector<8x8xf32>
    %cst_352 = arith.constant 0.000000e+00 : f32
    %702 = vector.broadcast %cst_352 : f32 to vector<8x8xf32>
    %cst_353 = arith.constant 0.000000e+00 : f32
    %703 = vector.broadcast %cst_353 : f32 to vector<8x8xf32>
    %c0_354 = arith.constant 0 : index
    %c0_355 = arith.constant 0 : index
    %c0_356 = arith.constant 0 : index
    %c0_357 = arith.constant 0 : index
    %704 = vector.load %arg1[%c0_354, %c0_355, %c0_356, %c0_357] : memref<32x8x8x8xf32, #tpu.memory_space<vmem>>, vector<1x8x8x8xf32>
    %705 = vector.shape_cast %704 : vector<1x8x8x8xf32> to vector<8x8x8xf32>
    %706 = arith.mulf %682, %705 : vector<8x8x8xf32>
    %cst_358 = arith.constant dense<0.000000e+00> : vector<8x8xf32>
    %707 = vector.multi_reduction <add>, %706, %cst_358 [0] : vector<8x8x8xf32> to vector<8x8xf32>
    %c0_359 = arith.constant 0 : index
    %c0_360 = arith.constant 0 : index
    %c0_361 = arith.constant 0 : index
    %708 = vector.load %arg3[%c0_359, %c0_360, %c0_361] : memref<32x8x8xf32, #tpu.memory_space<vmem>>, vector<1x8x8xf32>
    %709 = vector.shape_cast %708 : vector<1x8x8xf32> to vector<8x8xf32>
    %710 = arith.select %685, %709, %707 : vector<8x8xi1>, vector<8x8xf32>
    %c0_362 = arith.constant 0 : index
    %c0_363 = arith.constant 0 : index
    %711 = memref.load %arg7[%c0_362, %c0_363] : memref<32x8xf32, #tpu.memory_space<smem>>
    %712 = vector.broadcast %711 : f32 to vector<8x8xf32>
    %713 = arith.mulf %710, %712 : vector<8x8xf32>
    %714 = arith.addf %687, %713 : vector<8x8xf32>
    %c0_364 = arith.constant 0 : index
    %c1_365 = arith.constant 1 : index
    %715 = memref.load %arg7[%c0_364, %c1_365] : memref<32x8xf32, #tpu.memory_space<smem>>
    %716 = vector.broadcast %715 : f32 to vector<8x8xf32>
    %717 = arith.mulf %710, %716 : vector<8x8xf32>
    %718 = arith.addf %689, %717 : vector<8x8xf32>
    %c0_366 = arith.constant 0 : index
    %c2_367 = arith.constant 2 : index
    %719 = memref.load %arg7[%c0_366, %c2_367] : memref<32x8xf32, #tpu.memory_space<smem>>
    %720 = vector.broadcast %719 : f32 to vector<8x8xf32>
    %721 = arith.mulf %710, %720 : vector<8x8xf32>
    %722 = arith.addf %691, %721 : vector<8x8xf32>
    %c0_368 = arith.constant 0 : index
    %c3_369 = arith.constant 3 : index
    %723 = memref.load %arg7[%c0_368, %c3_369] : memref<32x8xf32, #tpu.memory_space<smem>>
    %724 = vector.broadcast %723 : f32 to vector<8x8xf32>
    %725 = arith.mulf %710, %724 : vector<8x8xf32>
    %726 = arith.addf %693, %725 : vector<8x8xf32>
    %c0_370 = arith.constant 0 : index
    %c4_371 = arith.constant 4 : index
    %727 = memref.load %arg7[%c0_370, %c4_371] : memref<32x8xf32, #tpu.memory_space<smem>>
    %728 = vector.broadcast %727 : f32 to vector<8x8xf32>
    %729 = arith.mulf %710, %728 : vector<8x8xf32>
    %730 = arith.addf %695, %729 : vector<8x8xf32>
    %c0_372 = arith.constant 0 : index
    %c5_373 = arith.constant 5 : index
    %731 = memref.load %arg7[%c0_372, %c5_373] : memref<32x8xf32, #tpu.memory_space<smem>>
    %732 = vector.broadcast %731 : f32 to vector<8x8xf32>
    %733 = arith.mulf %710, %732 : vector<8x8xf32>
    %734 = arith.addf %697, %733 : vector<8x8xf32>
    %c0_374 = arith.constant 0 : index
    %c6_375 = arith.constant 6 : index
    %735 = memref.load %arg7[%c0_374, %c6_375] : memref<32x8xf32, #tpu.memory_space<smem>>
    %736 = vector.broadcast %735 : f32 to vector<8x8xf32>
    %737 = arith.mulf %710, %736 : vector<8x8xf32>
    %738 = arith.addf %699, %737 : vector<8x8xf32>
    %c0_376 = arith.constant 0 : index
    %c7_377 = arith.constant 7 : index
    %739 = memref.load %arg7[%c0_376, %c7_377] : memref<32x8xf32, #tpu.memory_space<smem>>
    %740 = vector.broadcast %739 : f32 to vector<8x8xf32>
    %741 = arith.mulf %710, %740 : vector<8x8xf32>
    %742 = arith.addf %701, %741 : vector<8x8xf32>
    %c0_378 = arith.constant 0 : index
    %c0_379 = arith.constant 0 : index
    %743 = memref.load %arg11[%c0_378, %c0_379] : memref<32x2xf32, #tpu.memory_space<smem>>
    %744 = vector.broadcast %743 : f32 to vector<8x8xf32>
    %745 = arith.mulf %710, %744 : vector<8x8xf32>
    %746 = arith.addf %702, %745 : vector<8x8xf32>
    %c0_380 = arith.constant 0 : index
    %c1_381 = arith.constant 1 : index
    %747 = memref.load %arg11[%c0_380, %c1_381] : memref<32x2xf32, #tpu.memory_space<smem>>
    %748 = vector.broadcast %747 : f32 to vector<8x8xf32>
    %749 = arith.mulf %710, %748 : vector<8x8xf32>
    %750 = arith.addf %703, %749 : vector<8x8xf32>
    %c1_382 = arith.constant 1 : index
    %c0_383 = arith.constant 0 : index
    %c0_384 = arith.constant 0 : index
    %c0_385 = arith.constant 0 : index
    %751 = vector.load %arg1[%c1_382, %c0_383, %c0_384, %c0_385] : memref<32x8x8x8xf32, #tpu.memory_space<vmem>>, vector<1x8x8x8xf32>
    %752 = vector.shape_cast %751 : vector<1x8x8x8xf32> to vector<8x8x8xf32>
    %753 = arith.mulf %682, %752 : vector<8x8x8xf32>
    %cst_386 = arith.constant dense<0.000000e+00> : vector<8x8xf32>
    %754 = vector.multi_reduction <add>, %753, %cst_386 [0] : vector<8x8x8xf32> to vector<8x8xf32>
    %c1_387 = arith.constant 1 : index
    %c0_388 = arith.constant 0 : index
    %c0_389 = arith.constant 0 : index
    %755 = vector.load %arg3[%c1_387, %c0_388, %c0_389] : memref<32x8x8xf32, #tpu.memory_space<vmem>>, vector<1x8x8xf32>
    %756 = vector.shape_cast %755 : vector<1x8x8xf32> to vector<8x8xf32>
    %757 = arith.select %685, %756, %754 : vector<8x8xi1>, vector<8x8xf32>
    %c1_390 = arith.constant 1 : index
    %c0_391 = arith.constant 0 : index
    %758 = memref.load %arg7[%c1_390, %c0_391] : memref<32x8xf32, #tpu.memory_space<smem>>
    %759 = vector.broadcast %758 : f32 to vector<8x8xf32>
    %760 = arith.mulf %757, %759 : vector<8x8xf32>
    %761 = arith.addf %714, %760 : vector<8x8xf32>
    %c1_392 = arith.constant 1 : index
    %c1_393 = arith.constant 1 : index
    %762 = memref.load %arg7[%c1_392, %c1_393] : memref<32x8xf32, #tpu.memory_space<smem>>
    %763 = vector.broadcast %762 : f32 to vector<8x8xf32>
    %764 = arith.mulf %757, %763 : vector<8x8xf32>
    %765 = arith.addf %718, %764 : vector<8x8xf32>
    %c1_394 = arith.constant 1 : index
    %c2_395 = arith.constant 2 : index
    %766 = memref.load %arg7[%c1_394, %c2_395] : memref<32x8xf32, #tpu.memory_space<smem>>
    %767 = vector.broadcast %766 : f32 to vector<8x8xf32>
    %768 = arith.mulf %757, %767 : vector<8x8xf32>
    %769 = arith.addf %722, %768 : vector<8x8xf32>
    %c1_396 = arith.constant 1 : index
    %c3_397 = arith.constant 3 : index
    %770 = memref.load %arg7[%c1_396, %c3_397] : memref<32x8xf32, #tpu.memory_space<smem>>
    %771 = vector.broadcast %770 : f32 to vector<8x8xf32>
    %772 = arith.mulf %757, %771 : vector<8x8xf32>
    %773 = arith.addf %726, %772 : vector<8x8xf32>
    %c1_398 = arith.constant 1 : index
    %c4_399 = arith.constant 4 : index
    %774 = memref.load %arg7[%c1_398, %c4_399] : memref<32x8xf32, #tpu.memory_space<smem>>
    %775 = vector.broadcast %774 : f32 to vector<8x8xf32>
    %776 = arith.mulf %757, %775 : vector<8x8xf32>
    %777 = arith.addf %730, %776 : vector<8x8xf32>
    %c1_400 = arith.constant 1 : index
    %c5_401 = arith.constant 5 : index
    %778 = memref.load %arg7[%c1_400, %c5_401] : memref<32x8xf32, #tpu.memory_space<smem>>
    %779 = vector.broadcast %778 : f32 to vector<8x8xf32>
    %780 = arith.mulf %757, %779 : vector<8x8xf32>
    %781 = arith.addf %734, %780 : vector<8x8xf32>
    %c1_402 = arith.constant 1 : index
    %c6_403 = arith.constant 6 : index
    %782 = memref.load %arg7[%c1_402, %c6_403] : memref<32x8xf32, #tpu.memory_space<smem>>
    %783 = vector.broadcast %782 : f32 to vector<8x8xf32>
    %784 = arith.mulf %757, %783 : vector<8x8xf32>
    %785 = arith.addf %738, %784 : vector<8x8xf32>
    %c1_404 = arith.constant 1 : index
    %c7_405 = arith.constant 7 : index
    %786 = memref.load %arg7[%c1_404, %c7_405] : memref<32x8xf32, #tpu.memory_space<smem>>
    %787 = vector.broadcast %786 : f32 to vector<8x8xf32>
    %788 = arith.mulf %757, %787 : vector<8x8xf32>
    %789 = arith.addf %742, %788 : vector<8x8xf32>
    %c1_406 = arith.constant 1 : index
    %c0_407 = arith.constant 0 : index
    %790 = memref.load %arg11[%c1_406, %c0_407] : memref<32x2xf32, #tpu.memory_space<smem>>
    %791 = vector.broadcast %790 : f32 to vector<8x8xf32>
    %792 = arith.mulf %757, %791 : vector<8x8xf32>
    %793 = arith.addf %746, %792 : vector<8x8xf32>
    %c1_408 = arith.constant 1 : index
    %c1_409 = arith.constant 1 : index
    %794 = memref.load %arg11[%c1_408, %c1_409] : memref<32x2xf32, #tpu.memory_space<smem>>
    %795 = vector.broadcast %794 : f32 to vector<8x8xf32>
    %796 = arith.mulf %757, %795 : vector<8x8xf32>
    %797 = arith.addf %750, %796 : vector<8x8xf32>
    %c2_410 = arith.constant 2 : index
    %c0_411 = arith.constant 0 : index
    %c0_412 = arith.constant 0 : index
    %c0_413 = arith.constant 0 : index
    %798 = vector.load %arg1[%c2_410, %c0_411, %c0_412, %c0_413] : memref<32x8x8x8xf32, #tpu.memory_space<vmem>>, vector<1x8x8x8xf32>
    %799 = vector.shape_cast %798 : vector<1x8x8x8xf32> to vector<8x8x8xf32>
    %800 = arith.mulf %682, %799 : vector<8x8x8xf32>
    %cst_414 = arith.constant dense<0.000000e+00> : vector<8x8xf32>
    %801 = vector.multi_reduction <add>, %800, %cst_414 [0] : vector<8x8x8xf32> to vector<8x8xf32>
    %c2_415 = arith.constant 2 : index
    %c0_416 = arith.constant 0 : index
    %c0_417 = arith.constant 0 : index
    %802 = vector.load %arg3[%c2_415, %c0_416, %c0_417] : memref<32x8x8xf32, #tpu.memory_space<vmem>>, vector<1x8x8xf32>
    %803 = vector.shape_cast %802 : vector<1x8x8xf32> to vector<8x8xf32>
    %804 = arith.select %685, %803, %801 : vector<8x8xi1>, vector<8x8xf32>
    %c2_418 = arith.constant 2 : index
    %c0_419 = arith.constant 0 : index
    %805 = memref.load %arg7[%c2_418, %c0_419] : memref<32x8xf32, #tpu.memory_space<smem>>
    %806 = vector.broadcast %805 : f32 to vector<8x8xf32>
    %807 = arith.mulf %804, %806 : vector<8x8xf32>
    %808 = arith.addf %761, %807 : vector<8x8xf32>
    %c2_420 = arith.constant 2 : index
    %c1_421 = arith.constant 1 : index
    %809 = memref.load %arg7[%c2_420, %c1_421] : memref<32x8xf32, #tpu.memory_space<smem>>
    %810 = vector.broadcast %809 : f32 to vector<8x8xf32>
    %811 = arith.mulf %804, %810 : vector<8x8xf32>
    %812 = arith.addf %765, %811 : vector<8x8xf32>
    %c2_422 = arith.constant 2 : index
    %c2_423 = arith.constant 2 : index
    %813 = memref.load %arg7[%c2_422, %c2_423] : memref<32x8xf32, #tpu.memory_space<smem>>
    %814 = vector.broadcast %813 : f32 to vector<8x8xf32>
    %815 = arith.mulf %804, %814 : vector<8x8xf32>
    %816 = arith.addf %769, %815 : vector<8x8xf32>
    %c2_424 = arith.constant 2 : index
    %c3_425 = arith.constant 3 : index
    %817 = memref.load %arg7[%c2_424, %c3_425] : memref<32x8xf32, #tpu.memory_space<smem>>
    %818 = vector.broadcast %817 : f32 to vector<8x8xf32>
    %819 = arith.mulf %804, %818 : vector<8x8xf32>
    %820 = arith.addf %773, %819 : vector<8x8xf32>
    %c2_426 = arith.constant 2 : index
    %c4_427 = arith.constant 4 : index
    %821 = memref.load %arg7[%c2_426, %c4_427] : memref<32x8xf32, #tpu.memory_space<smem>>
    %822 = vector.broadcast %821 : f32 to vector<8x8xf32>
    %823 = arith.mulf %804, %822 : vector<8x8xf32>
    %824 = arith.addf %777, %823 : vector<8x8xf32>
    %c2_428 = arith.constant 2 : index
    %c5_429 = arith.constant 5 : index
    %825 = memref.load %arg7[%c2_428, %c5_429] : memref<32x8xf32, #tpu.memory_space<smem>>
    %826 = vector.broadcast %825 : f32 to vector<8x8xf32>
    %827 = arith.mulf %804, %826 : vector<8x8xf32>
    %828 = arith.addf %781, %827 : vector<8x8xf32>
    %c2_430 = arith.constant 2 : index
    %c6_431 = arith.constant 6 : index
    %829 = memref.load %arg7[%c2_430, %c6_431] : memref<32x8xf32, #tpu.memory_space<smem>>
    %830 = vector.broadcast %829 : f32 to vector<8x8xf32>
    %831 = arith.mulf %804, %830 : vector<8x8xf32>
    %832 = arith.addf %785, %831 : vector<8x8xf32>
    %c2_432 = arith.constant 2 : index
    %c7_433 = arith.constant 7 : index
    %833 = memref.load %arg7[%c2_432, %c7_433] : memref<32x8xf32, #tpu.memory_space<smem>>
    %834 = vector.broadcast %833 : f32 to vector<8x8xf32>
    %835 = arith.mulf %804, %834 : vector<8x8xf32>
    %836 = arith.addf %789, %835 : vector<8x8xf32>
    %c2_434 = arith.constant 2 : index
    %c0_435 = arith.constant 0 : index
    %837 = memref.load %arg11[%c2_434, %c0_435] : memref<32x2xf32, #tpu.memory_space<smem>>
    %838 = vector.broadcast %837 : f32 to vector<8x8xf32>
    %839 = arith.mulf %804, %838 : vector<8x8xf32>
    %840 = arith.addf %793, %839 : vector<8x8xf32>
    %c2_436 = arith.constant 2 : index
    %c1_437 = arith.constant 1 : index
    %841 = memref.load %arg11[%c2_436, %c1_437] : memref<32x2xf32, #tpu.memory_space<smem>>
    %842 = vector.broadcast %841 : f32 to vector<8x8xf32>
    %843 = arith.mulf %804, %842 : vector<8x8xf32>
    %844 = arith.addf %797, %843 : vector<8x8xf32>
    %c3_438 = arith.constant 3 : index
    %c0_439 = arith.constant 0 : index
    %c0_440 = arith.constant 0 : index
    %c0_441 = arith.constant 0 : index
    %845 = vector.load %arg1[%c3_438, %c0_439, %c0_440, %c0_441] : memref<32x8x8x8xf32, #tpu.memory_space<vmem>>, vector<1x8x8x8xf32>
    %846 = vector.shape_cast %845 : vector<1x8x8x8xf32> to vector<8x8x8xf32>
    %847 = arith.mulf %682, %846 : vector<8x8x8xf32>
    %cst_442 = arith.constant dense<0.000000e+00> : vector<8x8xf32>
    %848 = vector.multi_reduction <add>, %847, %cst_442 [0] : vector<8x8x8xf32> to vector<8x8xf32>
    %c3_443 = arith.constant 3 : index
    %c0_444 = arith.constant 0 : index
    %c0_445 = arith.constant 0 : index
    %849 = vector.load %arg3[%c3_443, %c0_444, %c0_445] : memref<32x8x8xf32, #tpu.memory_space<vmem>>, vector<1x8x8xf32>
    %850 = vector.shape_cast %849 : vector<1x8x8xf32> to vector<8x8xf32>
    %851 = arith.select %685, %850, %848 : vector<8x8xi1>, vector<8x8xf32>
    %c3_446 = arith.constant 3 : index
    %c0_447 = arith.constant 0 : index
    %852 = memref.load %arg7[%c3_446, %c0_447] : memref<32x8xf32, #tpu.memory_space<smem>>
    %853 = vector.broadcast %852 : f32 to vector<8x8xf32>
    %854 = arith.mulf %851, %853 : vector<8x8xf32>
    %855 = arith.addf %808, %854 : vector<8x8xf32>
    %c3_448 = arith.constant 3 : index
    %c1_449 = arith.constant 1 : index
    %856 = memref.load %arg7[%c3_448, %c1_449] : memref<32x8xf32, #tpu.memory_space<smem>>
    %857 = vector.broadcast %856 : f32 to vector<8x8xf32>
    %858 = arith.mulf %851, %857 : vector<8x8xf32>
    %859 = arith.addf %812, %858 : vector<8x8xf32>
    %c3_450 = arith.constant 3 : index
    %c2_451 = arith.constant 2 : index
    %860 = memref.load %arg7[%c3_450, %c2_451] : memref<32x8xf32, #tpu.memory_space<smem>>
    %861 = vector.broadcast %860 : f32 to vector<8x8xf32>
    %862 = arith.mulf %851, %861 : vector<8x8xf32>
    %863 = arith.addf %816, %862 : vector<8x8xf32>
    %c3_452 = arith.constant 3 : index
    %c3_453 = arith.constant 3 : index
    %864 = memref.load %arg7[%c3_452, %c3_453] : memref<32x8xf32, #tpu.memory_space<smem>>
    %865 = vector.broadcast %864 : f32 to vector<8x8xf32>
    %866 = arith.mulf %851, %865 : vector<8x8xf32>
    %867 = arith.addf %820, %866 : vector<8x8xf32>
    %c3_454 = arith.constant 3 : index
    %c4_455 = arith.constant 4 : index
    %868 = memref.load %arg7[%c3_454, %c4_455] : memref<32x8xf32, #tpu.memory_space<smem>>
    %869 = vector.broadcast %868 : f32 to vector<8x8xf32>
    %870 = arith.mulf %851, %869 : vector<8x8xf32>
    %871 = arith.addf %824, %870 : vector<8x8xf32>
    %c3_456 = arith.constant 3 : index
    %c5_457 = arith.constant 5 : index
    %872 = memref.load %arg7[%c3_456, %c5_457] : memref<32x8xf32, #tpu.memory_space<smem>>
    %873 = vector.broadcast %872 : f32 to vector<8x8xf32>
    %874 = arith.mulf %851, %873 : vector<8x8xf32>
    %875 = arith.addf %828, %874 : vector<8x8xf32>
    %c3_458 = arith.constant 3 : index
    %c6_459 = arith.constant 6 : index
    %876 = memref.load %arg7[%c3_458, %c6_459] : memref<32x8xf32, #tpu.memory_space<smem>>
    %877 = vector.broadcast %876 : f32 to vector<8x8xf32>
    %878 = arith.mulf %851, %877 : vector<8x8xf32>
    %879 = arith.addf %832, %878 : vector<8x8xf32>
    %c3_460 = arith.constant 3 : index
    %c7_461 = arith.constant 7 : index
    %880 = memref.load %arg7[%c3_460, %c7_461] : memref<32x8xf32, #tpu.memory_space<smem>>
    %881 = vector.broadcast %880 : f32 to vector<8x8xf32>
    %882 = arith.mulf %851, %881 : vector<8x8xf32>
    %883 = arith.addf %836, %882 : vector<8x8xf32>
    %c3_462 = arith.constant 3 : index
    %c0_463 = arith.constant 0 : index
    %884 = memref.load %arg11[%c3_462, %c0_463] : memref<32x2xf32, #tpu.memory_space<smem>>
    %885 = vector.broadcast %884 : f32 to vector<8x8xf32>
    %886 = arith.mulf %851, %885 : vector<8x8xf32>
    %887 = arith.addf %840, %886 : vector<8x8xf32>
    %c3_464 = arith.constant 3 : index
    %c1_465 = arith.constant 1 : index
    %888 = memref.load %arg11[%c3_464, %c1_465] : memref<32x2xf32, #tpu.memory_space<smem>>
    %889 = vector.broadcast %888 : f32 to vector<8x8xf32>
    %890 = arith.mulf %851, %889 : vector<8x8xf32>
    %891 = arith.addf %844, %890 : vector<8x8xf32>
    %c4_466 = arith.constant 4 : index
    %c0_467 = arith.constant 0 : index
    %c0_468 = arith.constant 0 : index
    %c0_469 = arith.constant 0 : index
    %892 = vector.load %arg1[%c4_466, %c0_467, %c0_468, %c0_469] : memref<32x8x8x8xf32, #tpu.memory_space<vmem>>, vector<1x8x8x8xf32>
    %893 = vector.shape_cast %892 : vector<1x8x8x8xf32> to vector<8x8x8xf32>
    %894 = arith.mulf %682, %893 : vector<8x8x8xf32>
    %cst_470 = arith.constant dense<0.000000e+00> : vector<8x8xf32>
    %895 = vector.multi_reduction <add>, %894, %cst_470 [0] : vector<8x8x8xf32> to vector<8x8xf32>
    %c4_471 = arith.constant 4 : index
    %c0_472 = arith.constant 0 : index
    %c0_473 = arith.constant 0 : index
    %896 = vector.load %arg3[%c4_471, %c0_472, %c0_473] : memref<32x8x8xf32, #tpu.memory_space<vmem>>, vector<1x8x8xf32>
    %897 = vector.shape_cast %896 : vector<1x8x8xf32> to vector<8x8xf32>
    %898 = arith.select %685, %897, %895 : vector<8x8xi1>, vector<8x8xf32>
    %c4_474 = arith.constant 4 : index
    %c0_475 = arith.constant 0 : index
    %899 = memref.load %arg7[%c4_474, %c0_475] : memref<32x8xf32, #tpu.memory_space<smem>>
    %900 = vector.broadcast %899 : f32 to vector<8x8xf32>
    %901 = arith.mulf %898, %900 : vector<8x8xf32>
    %902 = arith.addf %855, %901 : vector<8x8xf32>
    %c4_476 = arith.constant 4 : index
    %c1_477 = arith.constant 1 : index
    %903 = memref.load %arg7[%c4_476, %c1_477] : memref<32x8xf32, #tpu.memory_space<smem>>
    %904 = vector.broadcast %903 : f32 to vector<8x8xf32>
    %905 = arith.mulf %898, %904 : vector<8x8xf32>
    %906 = arith.addf %859, %905 : vector<8x8xf32>
    %c4_478 = arith.constant 4 : index
    %c2_479 = arith.constant 2 : index
    %907 = memref.load %arg7[%c4_478, %c2_479] : memref<32x8xf32, #tpu.memory_space<smem>>
    %908 = vector.broadcast %907 : f32 to vector<8x8xf32>
    %909 = arith.mulf %898, %908 : vector<8x8xf32>
    %910 = arith.addf %863, %909 : vector<8x8xf32>
    %c4_480 = arith.constant 4 : index
    %c3_481 = arith.constant 3 : index
    %911 = memref.load %arg7[%c4_480, %c3_481] : memref<32x8xf32, #tpu.memory_space<smem>>
    %912 = vector.broadcast %911 : f32 to vector<8x8xf32>
    %913 = arith.mulf %898, %912 : vector<8x8xf32>
    %914 = arith.addf %867, %913 : vector<8x8xf32>
    %c4_482 = arith.constant 4 : index
    %c4_483 = arith.constant 4 : index
    %915 = memref.load %arg7[%c4_482, %c4_483] : memref<32x8xf32, #tpu.memory_space<smem>>
    %916 = vector.broadcast %915 : f32 to vector<8x8xf32>
    %917 = arith.mulf %898, %916 : vector<8x8xf32>
    %918 = arith.addf %871, %917 : vector<8x8xf32>
    %c4_484 = arith.constant 4 : index
    %c5_485 = arith.constant 5 : index
    %919 = memref.load %arg7[%c4_484, %c5_485] : memref<32x8xf32, #tpu.memory_space<smem>>
    %920 = vector.broadcast %919 : f32 to vector<8x8xf32>
    %921 = arith.mulf %898, %920 : vector<8x8xf32>
    %922 = arith.addf %875, %921 : vector<8x8xf32>
    %c4_486 = arith.constant 4 : index
    %c6_487 = arith.constant 6 : index
    %923 = memref.load %arg7[%c4_486, %c6_487] : memref<32x8xf32, #tpu.memory_space<smem>>
    %924 = vector.broadcast %923 : f32 to vector<8x8xf32>
    %925 = arith.mulf %898, %924 : vector<8x8xf32>
    %926 = arith.addf %879, %925 : vector<8x8xf32>
    %c4_488 = arith.constant 4 : index
    %c7_489 = arith.constant 7 : index
    %927 = memref.load %arg7[%c4_488, %c7_489] : memref<32x8xf32, #tpu.memory_space<smem>>
    %928 = vector.broadcast %927 : f32 to vector<8x8xf32>
    %929 = arith.mulf %898, %928 : vector<8x8xf32>
    %930 = arith.addf %883, %929 : vector<8x8xf32>
    %c4_490 = arith.constant 4 : index
    %c0_491 = arith.constant 0 : index
    %931 = memref.load %arg11[%c4_490, %c0_491] : memref<32x2xf32, #tpu.memory_space<smem>>
    %932 = vector.broadcast %931 : f32 to vector<8x8xf32>
    %933 = arith.mulf %898, %932 : vector<8x8xf32>
    %934 = arith.addf %887, %933 : vector<8x8xf32>
    %c4_492 = arith.constant 4 : index
    %c1_493 = arith.constant 1 : index
    %935 = memref.load %arg11[%c4_492, %c1_493] : memref<32x2xf32, #tpu.memory_space<smem>>
    %936 = vector.broadcast %935 : f32 to vector<8x8xf32>
    %937 = arith.mulf %898, %936 : vector<8x8xf32>
    %938 = arith.addf %891, %937 : vector<8x8xf32>
    %c5_494 = arith.constant 5 : index
    %c0_495 = arith.constant 0 : index
    %c0_496 = arith.constant 0 : index
    %c0_497 = arith.constant 0 : index
    %939 = vector.load %arg1[%c5_494, %c0_495, %c0_496, %c0_497] : memref<32x8x8x8xf32, #tpu.memory_space<vmem>>, vector<1x8x8x8xf32>
    %940 = vector.shape_cast %939 : vector<1x8x8x8xf32> to vector<8x8x8xf32>
    %941 = arith.mulf %682, %940 : vector<8x8x8xf32>
    %cst_498 = arith.constant dense<0.000000e+00> : vector<8x8xf32>
    %942 = vector.multi_reduction <add>, %941, %cst_498 [0] : vector<8x8x8xf32> to vector<8x8xf32>
    %c5_499 = arith.constant 5 : index
    %c0_500 = arith.constant 0 : index
    %c0_501 = arith.constant 0 : index
    %943 = vector.load %arg3[%c5_499, %c0_500, %c0_501] : memref<32x8x8xf32, #tpu.memory_space<vmem>>, vector<1x8x8xf32>
    %944 = vector.shape_cast %943 : vector<1x8x8xf32> to vector<8x8xf32>
    %945 = arith.select %685, %944, %942 : vector<8x8xi1>, vector<8x8xf32>
    %c5_502 = arith.constant 5 : index
    %c0_503 = arith.constant 0 : index
    %946 = memref.load %arg7[%c5_502, %c0_503] : memref<32x8xf32, #tpu.memory_space<smem>>
    %947 = vector.broadcast %946 : f32 to vector<8x8xf32>
    %948 = arith.mulf %945, %947 : vector<8x8xf32>
    %949 = arith.addf %902, %948 : vector<8x8xf32>
    %c5_504 = arith.constant 5 : index
    %c1_505 = arith.constant 1 : index
    %950 = memref.load %arg7[%c5_504, %c1_505] : memref<32x8xf32, #tpu.memory_space<smem>>
    %951 = vector.broadcast %950 : f32 to vector<8x8xf32>
    %952 = arith.mulf %945, %951 : vector<8x8xf32>
    %953 = arith.addf %906, %952 : vector<8x8xf32>
    %c5_506 = arith.constant 5 : index
    %c2_507 = arith.constant 2 : index
    %954 = memref.load %arg7[%c5_506, %c2_507] : memref<32x8xf32, #tpu.memory_space<smem>>
    %955 = vector.broadcast %954 : f32 to vector<8x8xf32>
    %956 = arith.mulf %945, %955 : vector<8x8xf32>
    %957 = arith.addf %910, %956 : vector<8x8xf32>
    %c5_508 = arith.constant 5 : index
    %c3_509 = arith.constant 3 : index
    %958 = memref.load %arg7[%c5_508, %c3_509] : memref<32x8xf32, #tpu.memory_space<smem>>
    %959 = vector.broadcast %958 : f32 to vector<8x8xf32>
    %960 = arith.mulf %945, %959 : vector<8x8xf32>
    %961 = arith.addf %914, %960 : vector<8x8xf32>
    %c5_510 = arith.constant 5 : index
    %c4_511 = arith.constant 4 : index
    %962 = memref.load %arg7[%c5_510, %c4_511] : memref<32x8xf32, #tpu.memory_space<smem>>
    %963 = vector.broadcast %962 : f32 to vector<8x8xf32>
    %964 = arith.mulf %945, %963 : vector<8x8xf32>
    %965 = arith.addf %918, %964 : vector<8x8xf32>
    %c5_512 = arith.constant 5 : index
    %c5_513 = arith.constant 5 : index
    %966 = memref.load %arg7[%c5_512, %c5_513] : memref<32x8xf32, #tpu.memory_space<smem>>
    %967 = vector.broadcast %966 : f32 to vector<8x8xf32>
    %968 = arith.mulf %945, %967 : vector<8x8xf32>
    %969 = arith.addf %922, %968 : vector<8x8xf32>
    %c5_514 = arith.constant 5 : index
    %c6_515 = arith.constant 6 : index
    %970 = memref.load %arg7[%c5_514, %c6_515] : memref<32x8xf32, #tpu.memory_space<smem>>
    %971 = vector.broadcast %970 : f32 to vector<8x8xf32>
    %972 = arith.mulf %945, %971 : vector<8x8xf32>
    %973 = arith.addf %926, %972 : vector<8x8xf32>
    %c5_516 = arith.constant 5 : index
    %c7_517 = arith.constant 7 : index
    %974 = memref.load %arg7[%c5_516, %c7_517] : memref<32x8xf32, #tpu.memory_space<smem>>
    %975 = vector.broadcast %974 : f32 to vector<8x8xf32>
    %976 = arith.mulf %945, %975 : vector<8x8xf32>
    %977 = arith.addf %930, %976 : vector<8x8xf32>
    %c5_518 = arith.constant 5 : index
    %c0_519 = arith.constant 0 : index
    %978 = memref.load %arg11[%c5_518, %c0_519] : memref<32x2xf32, #tpu.memory_space<smem>>
    %979 = vector.broadcast %978 : f32 to vector<8x8xf32>
    %980 = arith.mulf %945, %979 : vector<8x8xf32>
    %981 = arith.addf %934, %980 : vector<8x8xf32>
    %c5_520 = arith.constant 5 : index
    %c1_521 = arith.constant 1 : index
    %982 = memref.load %arg11[%c5_520, %c1_521] : memref<32x2xf32, #tpu.memory_space<smem>>
    %983 = vector.broadcast %982 : f32 to vector<8x8xf32>
    %984 = arith.mulf %945, %983 : vector<8x8xf32>
    %985 = arith.addf %938, %984 : vector<8x8xf32>
    %c6_522 = arith.constant 6 : index
    %c0_523 = arith.constant 0 : index
    %c0_524 = arith.constant 0 : index
    %c0_525 = arith.constant 0 : index
    %986 = vector.load %arg1[%c6_522, %c0_523, %c0_524, %c0_525] : memref<32x8x8x8xf32, #tpu.memory_space<vmem>>, vector<1x8x8x8xf32>
    %987 = vector.shape_cast %986 : vector<1x8x8x8xf32> to vector<8x8x8xf32>
    %988 = arith.mulf %682, %987 : vector<8x8x8xf32>
    %cst_526 = arith.constant dense<0.000000e+00> : vector<8x8xf32>
    %989 = vector.multi_reduction <add>, %988, %cst_526 [0] : vector<8x8x8xf32> to vector<8x8xf32>
    %c6_527 = arith.constant 6 : index
    %c0_528 = arith.constant 0 : index
    %c0_529 = arith.constant 0 : index
    %990 = vector.load %arg3[%c6_527, %c0_528, %c0_529] : memref<32x8x8xf32, #tpu.memory_space<vmem>>, vector<1x8x8xf32>
    %991 = vector.shape_cast %990 : vector<1x8x8xf32> to vector<8x8xf32>
    %992 = arith.select %685, %991, %989 : vector<8x8xi1>, vector<8x8xf32>
    %c6_530 = arith.constant 6 : index
    %c0_531 = arith.constant 0 : index
    %993 = memref.load %arg7[%c6_530, %c0_531] : memref<32x8xf32, #tpu.memory_space<smem>>
    %994 = vector.broadcast %993 : f32 to vector<8x8xf32>
    %995 = arith.mulf %992, %994 : vector<8x8xf32>
    %996 = arith.addf %949, %995 : vector<8x8xf32>
    %c6_532 = arith.constant 6 : index
    %c1_533 = arith.constant 1 : index
    %997 = memref.load %arg7[%c6_532, %c1_533] : memref<32x8xf32, #tpu.memory_space<smem>>
    %998 = vector.broadcast %997 : f32 to vector<8x8xf32>
    %999 = arith.mulf %992, %998 : vector<8x8xf32>
    %1000 = arith.addf %953, %999 : vector<8x8xf32>
    %c6_534 = arith.constant 6 : index
    %c2_535 = arith.constant 2 : index
    %1001 = memref.load %arg7[%c6_534, %c2_535] : memref<32x8xf32, #tpu.memory_space<smem>>
    %1002 = vector.broadcast %1001 : f32 to vector<8x8xf32>
    %1003 = arith.mulf %992, %1002 : vector<8x8xf32>
    %1004 = arith.addf %957, %1003 : vector<8x8xf32>
    %c6_536 = arith.constant 6 : index
    %c3_537 = arith.constant 3 : index
    %1005 = memref.load %arg7[%c6_536, %c3_537] : memref<32x8xf32, #tpu.memory_space<smem>>
    %1006 = vector.broadcast %1005 : f32 to vector<8x8xf32>
    %1007 = arith.mulf %992, %1006 : vector<8x8xf32>
    %1008 = arith.addf %961, %1007 : vector<8x8xf32>
    %c6_538 = arith.constant 6 : index
    %c4_539 = arith.constant 4 : index
    %1009 = memref.load %arg7[%c6_538, %c4_539] : memref<32x8xf32, #tpu.memory_space<smem>>
    %1010 = vector.broadcast %1009 : f32 to vector<8x8xf32>
    %1011 = arith.mulf %992, %1010 : vector<8x8xf32>
    %1012 = arith.addf %965, %1011 : vector<8x8xf32>
    %c6_540 = arith.constant 6 : index
    %c5_541 = arith.constant 5 : index
    %1013 = memref.load %arg7[%c6_540, %c5_541] : memref<32x8xf32, #tpu.memory_space<smem>>
    %1014 = vector.broadcast %1013 : f32 to vector<8x8xf32>
    %1015 = arith.mulf %992, %1014 : vector<8x8xf32>
    %1016 = arith.addf %969, %1015 : vector<8x8xf32>
    %c6_542 = arith.constant 6 : index
    %c6_543 = arith.constant 6 : index
    %1017 = memref.load %arg7[%c6_542, %c6_543] : memref<32x8xf32, #tpu.memory_space<smem>>
    %1018 = vector.broadcast %1017 : f32 to vector<8x8xf32>
    %1019 = arith.mulf %992, %1018 : vector<8x8xf32>
    %1020 = arith.addf %973, %1019 : vector<8x8xf32>
    %c6_544 = arith.constant 6 : index
    %c7_545 = arith.constant 7 : index
    %1021 = memref.load %arg7[%c6_544, %c7_545] : memref<32x8xf32, #tpu.memory_space<smem>>
    %1022 = vector.broadcast %1021 : f32 to vector<8x8xf32>
    %1023 = arith.mulf %992, %1022 : vector<8x8xf32>
    %1024 = arith.addf %977, %1023 : vector<8x8xf32>
    %c6_546 = arith.constant 6 : index
    %c0_547 = arith.constant 0 : index
    %1025 = memref.load %arg11[%c6_546, %c0_547] : memref<32x2xf32, #tpu.memory_space<smem>>
    %1026 = vector.broadcast %1025 : f32 to vector<8x8xf32>
    %1027 = arith.mulf %992, %1026 : vector<8x8xf32>
    %1028 = arith.addf %981, %1027 : vector<8x8xf32>
    %c6_548 = arith.constant 6 : index
    %c1_549 = arith.constant 1 : index
    %1029 = memref.load %arg11[%c6_548, %c1_549] : memref<32x2xf32, #tpu.memory_space<smem>>
    %1030 = vector.broadcast %1029 : f32 to vector<8x8xf32>
    %1031 = arith.mulf %992, %1030 : vector<8x8xf32>
    %1032 = arith.addf %985, %1031 : vector<8x8xf32>
    %c7_550 = arith.constant 7 : index
    %c0_551 = arith.constant 0 : index
    %c0_552 = arith.constant 0 : index
    %c0_553 = arith.constant 0 : index
    %1033 = vector.load %arg1[%c7_550, %c0_551, %c0_552, %c0_553] : memref<32x8x8x8xf32, #tpu.memory_space<vmem>>, vector<1x8x8x8xf32>
    %1034 = vector.shape_cast %1033 : vector<1x8x8x8xf32> to vector<8x8x8xf32>
    %1035 = arith.mulf %682, %1034 : vector<8x8x8xf32>
    %cst_554 = arith.constant dense<0.000000e+00> : vector<8x8xf32>
    %1036 = vector.multi_reduction <add>, %1035, %cst_554 [0] : vector<8x8x8xf32> to vector<8x8xf32>
    %c7_555 = arith.constant 7 : index
    %c0_556 = arith.constant 0 : index
    %c0_557 = arith.constant 0 : index
    %1037 = vector.load %arg3[%c7_555, %c0_556, %c0_557] : memref<32x8x8xf32, #tpu.memory_space<vmem>>, vector<1x8x8xf32>
    %1038 = vector.shape_cast %1037 : vector<1x8x8xf32> to vector<8x8xf32>
    %1039 = arith.select %685, %1038, %1036 : vector<8x8xi1>, vector<8x8xf32>
    %c7_558 = arith.constant 7 : index
    %c0_559 = arith.constant 0 : index
    %1040 = memref.load %arg7[%c7_558, %c0_559] : memref<32x8xf32, #tpu.memory_space<smem>>
    %1041 = vector.broadcast %1040 : f32 to vector<8x8xf32>
    %1042 = arith.mulf %1039, %1041 : vector<8x8xf32>
    %1043 = arith.addf %996, %1042 : vector<8x8xf32>
    %c7_560 = arith.constant 7 : index
    %c1_561 = arith.constant 1 : index
    %1044 = memref.load %arg7[%c7_560, %c1_561] : memref<32x8xf32, #tpu.memory_space<smem>>
    %1045 = vector.broadcast %1044 : f32 to vector<8x8xf32>
    %1046 = arith.mulf %1039, %1045 : vector<8x8xf32>
    %1047 = arith.addf %1000, %1046 : vector<8x8xf32>
    %c7_562 = arith.constant 7 : index
    %c2_563 = arith.constant 2 : index
    %1048 = memref.load %arg7[%c7_562, %c2_563] : memref<32x8xf32, #tpu.memory_space<smem>>
    %1049 = vector.broadcast %1048 : f32 to vector<8x8xf32>
    %1050 = arith.mulf %1039, %1049 : vector<8x8xf32>
    %1051 = arith.addf %1004, %1050 : vector<8x8xf32>
    %c7_564 = arith.constant 7 : index
    %c3_565 = arith.constant 3 : index
    %1052 = memref.load %arg7[%c7_564, %c3_565] : memref<32x8xf32, #tpu.memory_space<smem>>
    %1053 = vector.broadcast %1052 : f32 to vector<8x8xf32>
    %1054 = arith.mulf %1039, %1053 : vector<8x8xf32>
    %1055 = arith.addf %1008, %1054 : vector<8x8xf32>
    %c7_566 = arith.constant 7 : index
    %c4_567 = arith.constant 4 : index
    %1056 = memref.load %arg7[%c7_566, %c4_567] : memref<32x8xf32, #tpu.memory_space<smem>>
    %1057 = vector.broadcast %1056 : f32 to vector<8x8xf32>
    %1058 = arith.mulf %1039, %1057 : vector<8x8xf32>
    %1059 = arith.addf %1012, %1058 : vector<8x8xf32>
    %c7_568 = arith.constant 7 : index
    %c5_569 = arith.constant 5 : index
    %1060 = memref.load %arg7[%c7_568, %c5_569] : memref<32x8xf32, #tpu.memory_space<smem>>
    %1061 = vector.broadcast %1060 : f32 to vector<8x8xf32>
    %1062 = arith.mulf %1039, %1061 : vector<8x8xf32>
    %1063 = arith.addf %1016, %1062 : vector<8x8xf32>
    %c7_570 = arith.constant 7 : index
    %c6_571 = arith.constant 6 : index
    %1064 = memref.load %arg7[%c7_570, %c6_571] : memref<32x8xf32, #tpu.memory_space<smem>>
    %1065 = vector.broadcast %1064 : f32 to vector<8x8xf32>
    %1066 = arith.mulf %1039, %1065 : vector<8x8xf32>
    %1067 = arith.addf %1020, %1066 : vector<8x8xf32>
    %c7_572 = arith.constant 7 : index
    %c7_573 = arith.constant 7 : index
    %1068 = memref.load %arg7[%c7_572, %c7_573] : memref<32x8xf32, #tpu.memory_space<smem>>
    %1069 = vector.broadcast %1068 : f32 to vector<8x8xf32>
    %1070 = arith.mulf %1039, %1069 : vector<8x8xf32>
    %1071 = arith.addf %1024, %1070 : vector<8x8xf32>
    %c7_574 = arith.constant 7 : index
    %c0_575 = arith.constant 0 : index
    %1072 = memref.load %arg11[%c7_574, %c0_575] : memref<32x2xf32, #tpu.memory_space<smem>>
    %1073 = vector.broadcast %1072 : f32 to vector<8x8xf32>
    %1074 = arith.mulf %1039, %1073 : vector<8x8xf32>
    %1075 = arith.addf %1028, %1074 : vector<8x8xf32>
    %c7_576 = arith.constant 7 : index
    %c1_577 = arith.constant 1 : index
    %1076 = memref.load %arg11[%c7_576, %c1_577] : memref<32x2xf32, #tpu.memory_space<smem>>
    %1077 = vector.broadcast %1076 : f32 to vector<8x8xf32>
    %1078 = arith.mulf %1039, %1077 : vector<8x8xf32>
    %1079 = arith.addf %1032, %1078 : vector<8x8xf32>
    %c8_578 = arith.constant 8 : index
    %c0_579 = arith.constant 0 : index
    %c0_580 = arith.constant 0 : index
    %c0_581 = arith.constant 0 : index
    %1080 = vector.load %arg1[%c8_578, %c0_579, %c0_580, %c0_581] : memref<32x8x8x8xf32, #tpu.memory_space<vmem>>, vector<1x8x8x8xf32>
    %1081 = vector.shape_cast %1080 : vector<1x8x8x8xf32> to vector<8x8x8xf32>
    %1082 = arith.mulf %682, %1081 : vector<8x8x8xf32>
    %cst_582 = arith.constant dense<0.000000e+00> : vector<8x8xf32>
    %1083 = vector.multi_reduction <add>, %1082, %cst_582 [0] : vector<8x8x8xf32> to vector<8x8xf32>
    %c8_583 = arith.constant 8 : index
    %c0_584 = arith.constant 0 : index
    %c0_585 = arith.constant 0 : index
    %1084 = vector.load %arg3[%c8_583, %c0_584, %c0_585] : memref<32x8x8xf32, #tpu.memory_space<vmem>>, vector<1x8x8xf32>
    %1085 = vector.shape_cast %1084 : vector<1x8x8xf32> to vector<8x8xf32>
    %1086 = arith.select %685, %1085, %1083 : vector<8x8xi1>, vector<8x8xf32>
    %c8_586 = arith.constant 8 : index
    %c0_587 = arith.constant 0 : index
    %1087 = memref.load %arg7[%c8_586, %c0_587] : memref<32x8xf32, #tpu.memory_space<smem>>
    %1088 = vector.broadcast %1087 : f32 to vector<8x8xf32>
    %1089 = arith.mulf %1086, %1088 : vector<8x8xf32>
    %1090 = arith.addf %1043, %1089 : vector<8x8xf32>
    %c8_588 = arith.constant 8 : index
    %c1_589 = arith.constant 1 : index
    %1091 = memref.load %arg7[%c8_588, %c1_589] : memref<32x8xf32, #tpu.memory_space<smem>>
    %1092 = vector.broadcast %1091 : f32 to vector<8x8xf32>
    %1093 = arith.mulf %1086, %1092 : vector<8x8xf32>
    %1094 = arith.addf %1047, %1093 : vector<8x8xf32>
    %c8_590 = arith.constant 8 : index
    %c2_591 = arith.constant 2 : index
    %1095 = memref.load %arg7[%c8_590, %c2_591] : memref<32x8xf32, #tpu.memory_space<smem>>
    %1096 = vector.broadcast %1095 : f32 to vector<8x8xf32>
    %1097 = arith.mulf %1086, %1096 : vector<8x8xf32>
    %1098 = arith.addf %1051, %1097 : vector<8x8xf32>
    %c8_592 = arith.constant 8 : index
    %c3_593 = arith.constant 3 : index
    %1099 = memref.load %arg7[%c8_592, %c3_593] : memref<32x8xf32, #tpu.memory_space<smem>>
    %1100 = vector.broadcast %1099 : f32 to vector<8x8xf32>
    %1101 = arith.mulf %1086, %1100 : vector<8x8xf32>
    %1102 = arith.addf %1055, %1101 : vector<8x8xf32>
    %c8_594 = arith.constant 8 : index
    %c4_595 = arith.constant 4 : index
    %1103 = memref.load %arg7[%c8_594, %c4_595] : memref<32x8xf32, #tpu.memory_space<smem>>
    %1104 = vector.broadcast %1103 : f32 to vector<8x8xf32>
    %1105 = arith.mulf %1086, %1104 : vector<8x8xf32>
    %1106 = arith.addf %1059, %1105 : vector<8x8xf32>
    %c8_596 = arith.constant 8 : index
    %c5_597 = arith.constant 5 : index
    %1107 = memref.load %arg7[%c8_596, %c5_597] : memref<32x8xf32, #tpu.memory_space<smem>>
    %1108 = vector.broadcast %1107 : f32 to vector<8x8xf32>
    %1109 = arith.mulf %1086, %1108 : vector<8x8xf32>
    %1110 = arith.addf %1063, %1109 : vector<8x8xf32>
    %c8_598 = arith.constant 8 : index
    %c6_599 = arith.constant 6 : index
    %1111 = memref.load %arg7[%c8_598, %c6_599] : memref<32x8xf32, #tpu.memory_space<smem>>
    %1112 = vector.broadcast %1111 : f32 to vector<8x8xf32>
    %1113 = arith.mulf %1086, %1112 : vector<8x8xf32>
    %1114 = arith.addf %1067, %1113 : vector<8x8xf32>
    %c8_600 = arith.constant 8 : index
    %c7_601 = arith.constant 7 : index
    %1115 = memref.load %arg7[%c8_600, %c7_601] : memref<32x8xf32, #tpu.memory_space<smem>>
    %1116 = vector.broadcast %1115 : f32 to vector<8x8xf32>
    %1117 = arith.mulf %1086, %1116 : vector<8x8xf32>
    %1118 = arith.addf %1071, %1117 : vector<8x8xf32>
    %c8_602 = arith.constant 8 : index
    %c0_603 = arith.constant 0 : index
    %1119 = memref.load %arg11[%c8_602, %c0_603] : memref<32x2xf32, #tpu.memory_space<smem>>
    %1120 = vector.broadcast %1119 : f32 to vector<8x8xf32>
    %1121 = arith.mulf %1086, %1120 : vector<8x8xf32>
    %1122 = arith.addf %1075, %1121 : vector<8x8xf32>
    %c8_604 = arith.constant 8 : index
    %c1_605 = arith.constant 1 : index
    %1123 = memref.load %arg11[%c8_604, %c1_605] : memref<32x2xf32, #tpu.memory_space<smem>>
    %1124 = vector.broadcast %1123 : f32 to vector<8x8xf32>
    %1125 = arith.mulf %1086, %1124 : vector<8x8xf32>
    %1126 = arith.addf %1079, %1125 : vector<8x8xf32>
    %c9_606 = arith.constant 9 : index
    %c0_607 = arith.constant 0 : index
    %c0_608 = arith.constant 0 : index
    %c0_609 = arith.constant 0 : index
    %1127 = vector.load %arg1[%c9_606, %c0_607, %c0_608, %c0_609] : memref<32x8x8x8xf32, #tpu.memory_space<vmem>>, vector<1x8x8x8xf32>
    %1128 = vector.shape_cast %1127 : vector<1x8x8x8xf32> to vector<8x8x8xf32>
    %1129 = arith.mulf %682, %1128 : vector<8x8x8xf32>
    %cst_610 = arith.constant dense<0.000000e+00> : vector<8x8xf32>
    %1130 = vector.multi_reduction <add>, %1129, %cst_610 [0] : vector<8x8x8xf32> to vector<8x8xf32>
    %c9_611 = arith.constant 9 : index
    %c0_612 = arith.constant 0 : index
    %c0_613 = arith.constant 0 : index
    %1131 = vector.load %arg3[%c9_611, %c0_612, %c0_613] : memref<32x8x8xf32, #tpu.memory_space<vmem>>, vector<1x8x8xf32>
    %1132 = vector.shape_cast %1131 : vector<1x8x8xf32> to vector<8x8xf32>
    %1133 = arith.select %685, %1132, %1130 : vector<8x8xi1>, vector<8x8xf32>
    %c9_614 = arith.constant 9 : index
    %c0_615 = arith.constant 0 : index
    %1134 = memref.load %arg7[%c9_614, %c0_615] : memref<32x8xf32, #tpu.memory_space<smem>>
    %1135 = vector.broadcast %1134 : f32 to vector<8x8xf32>
    %1136 = arith.mulf %1133, %1135 : vector<8x8xf32>
    %1137 = arith.addf %1090, %1136 : vector<8x8xf32>
    %c9_616 = arith.constant 9 : index
    %c1_617 = arith.constant 1 : index
    %1138 = memref.load %arg7[%c9_616, %c1_617] : memref<32x8xf32, #tpu.memory_space<smem>>
    %1139 = vector.broadcast %1138 : f32 to vector<8x8xf32>
    %1140 = arith.mulf %1133, %1139 : vector<8x8xf32>
    %1141 = arith.addf %1094, %1140 : vector<8x8xf32>
    %c9_618 = arith.constant 9 : index
    %c2_619 = arith.constant 2 : index
    %1142 = memref.load %arg7[%c9_618, %c2_619] : memref<32x8xf32, #tpu.memory_space<smem>>
    %1143 = vector.broadcast %1142 : f32 to vector<8x8xf32>
    %1144 = arith.mulf %1133, %1143 : vector<8x8xf32>
    %1145 = arith.addf %1098, %1144 : vector<8x8xf32>
    %c9_620 = arith.constant 9 : index
    %c3_621 = arith.constant 3 : index
    %1146 = memref.load %arg7[%c9_620, %c3_621] : memref<32x8xf32, #tpu.memory_space<smem>>
    %1147 = vector.broadcast %1146 : f32 to vector<8x8xf32>
    %1148 = arith.mulf %1133, %1147 : vector<8x8xf32>
    %1149 = arith.addf %1102, %1148 : vector<8x8xf32>
    %c9_622 = arith.constant 9 : index
    %c4_623 = arith.constant 4 : index
    %1150 = memref.load %arg7[%c9_622, %c4_623] : memref<32x8xf32, #tpu.memory_space<smem>>
    %1151 = vector.broadcast %1150 : f32 to vector<8x8xf32>
    %1152 = arith.mulf %1133, %1151 : vector<8x8xf32>
    %1153 = arith.addf %1106, %1152 : vector<8x8xf32>
    %c9_624 = arith.constant 9 : index
    %c5_625 = arith.constant 5 : index
    %1154 = memref.load %arg7[%c9_624, %c5_625] : memref<32x8xf32, #tpu.memory_space<smem>>
    %1155 = vector.broadcast %1154 : f32 to vector<8x8xf32>
    %1156 = arith.mulf %1133, %1155 : vector<8x8xf32>
    %1157 = arith.addf %1110, %1156 : vector<8x8xf32>
    %c9_626 = arith.constant 9 : index
    %c6_627 = arith.constant 6 : index
    %1158 = memref.load %arg7[%c9_626, %c6_627] : memref<32x8xf32, #tpu.memory_space<smem>>
    %1159 = vector.broadcast %1158 : f32 to vector<8x8xf32>
    %1160 = arith.mulf %1133, %1159 : vector<8x8xf32>
    %1161 = arith.addf %1114, %1160 : vector<8x8xf32>
    %c9_628 = arith.constant 9 : index
    %c7_629 = arith.constant 7 : index
    %1162 = memref.load %arg7[%c9_628, %c7_629] : memref<32x8xf32, #tpu.memory_space<smem>>
    %1163 = vector.broadcast %1162 : f32 to vector<8x8xf32>
    %1164 = arith.mulf %1133, %1163 : vector<8x8xf32>
    %1165 = arith.addf %1118, %1164 : vector<8x8xf32>
    %c9_630 = arith.constant 9 : index
    %c0_631 = arith.constant 0 : index
    %1166 = memref.load %arg11[%c9_630, %c0_631] : memref<32x2xf32, #tpu.memory_space<smem>>
    %1167 = vector.broadcast %1166 : f32 to vector<8x8xf32>
    %1168 = arith.mulf %1133, %1167 : vector<8x8xf32>
    %1169 = arith.addf %1122, %1168 : vector<8x8xf32>
    %c9_632 = arith.constant 9 : index
    %c1_633 = arith.constant 1 : index
    %1170 = memref.load %arg11[%c9_632, %c1_633] : memref<32x2xf32, #tpu.memory_space<smem>>
    %1171 = vector.broadcast %1170 : f32 to vector<8x8xf32>
    %1172 = arith.mulf %1133, %1171 : vector<8x8xf32>
    %1173 = arith.addf %1126, %1172 : vector<8x8xf32>
    %c10_634 = arith.constant 10 : index
    %c0_635 = arith.constant 0 : index
    %c0_636 = arith.constant 0 : index
    %c0_637 = arith.constant 0 : index
    %1174 = vector.load %arg1[%c10_634, %c0_635, %c0_636, %c0_637] : memref<32x8x8x8xf32, #tpu.memory_space<vmem>>, vector<1x8x8x8xf32>
    %1175 = vector.shape_cast %1174 : vector<1x8x8x8xf32> to vector<8x8x8xf32>
    %1176 = arith.mulf %682, %1175 : vector<8x8x8xf32>
    %cst_638 = arith.constant dense<0.000000e+00> : vector<8x8xf32>
    %1177 = vector.multi_reduction <add>, %1176, %cst_638 [0] : vector<8x8x8xf32> to vector<8x8xf32>
    %c10_639 = arith.constant 10 : index
    %c0_640 = arith.constant 0 : index
    %c0_641 = arith.constant 0 : index
    %1178 = vector.load %arg3[%c10_639, %c0_640, %c0_641] : memref<32x8x8xf32, #tpu.memory_space<vmem>>, vector<1x8x8xf32>
    %1179 = vector.shape_cast %1178 : vector<1x8x8xf32> to vector<8x8xf32>
    %1180 = arith.select %685, %1179, %1177 : vector<8x8xi1>, vector<8x8xf32>
    %c10_642 = arith.constant 10 : index
    %c0_643 = arith.constant 0 : index
    %1181 = memref.load %arg7[%c10_642, %c0_643] : memref<32x8xf32, #tpu.memory_space<smem>>
    %1182 = vector.broadcast %1181 : f32 to vector<8x8xf32>
    %1183 = arith.mulf %1180, %1182 : vector<8x8xf32>
    %1184 = arith.addf %1137, %1183 : vector<8x8xf32>
    %c10_644 = arith.constant 10 : index
    %c1_645 = arith.constant 1 : index
    %1185 = memref.load %arg7[%c10_644, %c1_645] : memref<32x8xf32, #tpu.memory_space<smem>>
    %1186 = vector.broadcast %1185 : f32 to vector<8x8xf32>
    %1187 = arith.mulf %1180, %1186 : vector<8x8xf32>
    %1188 = arith.addf %1141, %1187 : vector<8x8xf32>
    %c10_646 = arith.constant 10 : index
    %c2_647 = arith.constant 2 : index
    %1189 = memref.load %arg7[%c10_646, %c2_647] : memref<32x8xf32, #tpu.memory_space<smem>>
    %1190 = vector.broadcast %1189 : f32 to vector<8x8xf32>
    %1191 = arith.mulf %1180, %1190 : vector<8x8xf32>
    %1192 = arith.addf %1145, %1191 : vector<8x8xf32>
    %c10_648 = arith.constant 10 : index
    %c3_649 = arith.constant 3 : index
    %1193 = memref.load %arg7[%c10_648, %c3_649] : memref<32x8xf32, #tpu.memory_space<smem>>
    %1194 = vector.broadcast %1193 : f32 to vector<8x8xf32>
    %1195 = arith.mulf %1180, %1194 : vector<8x8xf32>
    %1196 = arith.addf %1149, %1195 : vector<8x8xf32>
    %c10_650 = arith.constant 10 : index
    %c4_651 = arith.constant 4 : index
    %1197 = memref.load %arg7[%c10_650, %c4_651] : memref<32x8xf32, #tpu.memory_space<smem>>
    %1198 = vector.broadcast %1197 : f32 to vector<8x8xf32>
    %1199 = arith.mulf %1180, %1198 : vector<8x8xf32>
    %1200 = arith.addf %1153, %1199 : vector<8x8xf32>
    %c10_652 = arith.constant 10 : index
    %c5_653 = arith.constant 5 : index
    %1201 = memref.load %arg7[%c10_652, %c5_653] : memref<32x8xf32, #tpu.memory_space<smem>>
    %1202 = vector.broadcast %1201 : f32 to vector<8x8xf32>
    %1203 = arith.mulf %1180, %1202 : vector<8x8xf32>
    %1204 = arith.addf %1157, %1203 : vector<8x8xf32>
    %c10_654 = arith.constant 10 : index
    %c6_655 = arith.constant 6 : index
    %1205 = memref.load %arg7[%c10_654, %c6_655] : memref<32x8xf32, #tpu.memory_space<smem>>
    %1206 = vector.broadcast %1205 : f32 to vector<8x8xf32>
    %1207 = arith.mulf %1180, %1206 : vector<8x8xf32>
    %1208 = arith.addf %1161, %1207 : vector<8x8xf32>
    %c10_656 = arith.constant 10 : index
    %c7_657 = arith.constant 7 : index
    %1209 = memref.load %arg7[%c10_656, %c7_657] : memref<32x8xf32, #tpu.memory_space<smem>>
    %1210 = vector.broadcast %1209 : f32 to vector<8x8xf32>
    %1211 = arith.mulf %1180, %1210 : vector<8x8xf32>
    %1212 = arith.addf %1165, %1211 : vector<8x8xf32>
    %c10_658 = arith.constant 10 : index
    %c0_659 = arith.constant 0 : index
    %1213 = memref.load %arg11[%c10_658, %c0_659] : memref<32x2xf32, #tpu.memory_space<smem>>
    %1214 = vector.broadcast %1213 : f32 to vector<8x8xf32>
    %1215 = arith.mulf %1180, %1214 : vector<8x8xf32>
    %1216 = arith.addf %1169, %1215 : vector<8x8xf32>
    %c10_660 = arith.constant 10 : index
    %c1_661 = arith.constant 1 : index
    %1217 = memref.load %arg11[%c10_660, %c1_661] : memref<32x2xf32, #tpu.memory_space<smem>>
    %1218 = vector.broadcast %1217 : f32 to vector<8x8xf32>
    %1219 = arith.mulf %1180, %1218 : vector<8x8xf32>
    %1220 = arith.addf %1173, %1219 : vector<8x8xf32>
    %c11_662 = arith.constant 11 : index
    %c0_663 = arith.constant 0 : index
    %c0_664 = arith.constant 0 : index
    %c0_665 = arith.constant 0 : index
    %1221 = vector.load %arg1[%c11_662, %c0_663, %c0_664, %c0_665] : memref<32x8x8x8xf32, #tpu.memory_space<vmem>>, vector<1x8x8x8xf32>
    %1222 = vector.shape_cast %1221 : vector<1x8x8x8xf32> to vector<8x8x8xf32>
    %1223 = arith.mulf %682, %1222 : vector<8x8x8xf32>
    %cst_666 = arith.constant dense<0.000000e+00> : vector<8x8xf32>
    %1224 = vector.multi_reduction <add>, %1223, %cst_666 [0] : vector<8x8x8xf32> to vector<8x8xf32>
    %c11_667 = arith.constant 11 : index
    %c0_668 = arith.constant 0 : index
    %c0_669 = arith.constant 0 : index
    %1225 = vector.load %arg3[%c11_667, %c0_668, %c0_669] : memref<32x8x8xf32, #tpu.memory_space<vmem>>, vector<1x8x8xf32>
    %1226 = vector.shape_cast %1225 : vector<1x8x8xf32> to vector<8x8xf32>
    %1227 = arith.select %685, %1226, %1224 : vector<8x8xi1>, vector<8x8xf32>
    %c11_670 = arith.constant 11 : index
    %c0_671 = arith.constant 0 : index
    %1228 = memref.load %arg7[%c11_670, %c0_671] : memref<32x8xf32, #tpu.memory_space<smem>>
    %1229 = vector.broadcast %1228 : f32 to vector<8x8xf32>
    %1230 = arith.mulf %1227, %1229 : vector<8x8xf32>
    %1231 = arith.addf %1184, %1230 : vector<8x8xf32>
    %c11_672 = arith.constant 11 : index
    %c1_673 = arith.constant 1 : index
    %1232 = memref.load %arg7[%c11_672, %c1_673] : memref<32x8xf32, #tpu.memory_space<smem>>
    %1233 = vector.broadcast %1232 : f32 to vector<8x8xf32>
    %1234 = arith.mulf %1227, %1233 : vector<8x8xf32>
    %1235 = arith.addf %1188, %1234 : vector<8x8xf32>
    %c11_674 = arith.constant 11 : index
    %c2_675 = arith.constant 2 : index
    %1236 = memref.load %arg7[%c11_674, %c2_675] : memref<32x8xf32, #tpu.memory_space<smem>>
    %1237 = vector.broadcast %1236 : f32 to vector<8x8xf32>
    %1238 = arith.mulf %1227, %1237 : vector<8x8xf32>
    %1239 = arith.addf %1192, %1238 : vector<8x8xf32>
    %c11_676 = arith.constant 11 : index
    %c3_677 = arith.constant 3 : index
    %1240 = memref.load %arg7[%c11_676, %c3_677] : memref<32x8xf32, #tpu.memory_space<smem>>
    %1241 = vector.broadcast %1240 : f32 to vector<8x8xf32>
    %1242 = arith.mulf %1227, %1241 : vector<8x8xf32>
    %1243 = arith.addf %1196, %1242 : vector<8x8xf32>
    %c11_678 = arith.constant 11 : index
    %c4_679 = arith.constant 4 : index
    %1244 = memref.load %arg7[%c11_678, %c4_679] : memref<32x8xf32, #tpu.memory_space<smem>>
    %1245 = vector.broadcast %1244 : f32 to vector<8x8xf32>
    %1246 = arith.mulf %1227, %1245 : vector<8x8xf32>
    %1247 = arith.addf %1200, %1246 : vector<8x8xf32>
    %c11_680 = arith.constant 11 : index
    %c5_681 = arith.constant 5 : index
    %1248 = memref.load %arg7[%c11_680, %c5_681] : memref<32x8xf32, #tpu.memory_space<smem>>
    %1249 = vector.broadcast %1248 : f32 to vector<8x8xf32>
    %1250 = arith.mulf %1227, %1249 : vector<8x8xf32>
    %1251 = arith.addf %1204, %1250 : vector<8x8xf32>
    %c11_682 = arith.constant 11 : index
    %c6_683 = arith.constant 6 : index
    %1252 = memref.load %arg7[%c11_682, %c6_683] : memref<32x8xf32, #tpu.memory_space<smem>>
    %1253 = vector.broadcast %1252 : f32 to vector<8x8xf32>
    %1254 = arith.mulf %1227, %1253 : vector<8x8xf32>
    %1255 = arith.addf %1208, %1254 : vector<8x8xf32>
    %c11_684 = arith.constant 11 : index
    %c7_685 = arith.constant 7 : index
    %1256 = memref.load %arg7[%c11_684, %c7_685] : memref<32x8xf32, #tpu.memory_space<smem>>
    %1257 = vector.broadcast %1256 : f32 to vector<8x8xf32>
    %1258 = arith.mulf %1227, %1257 : vector<8x8xf32>
    %1259 = arith.addf %1212, %1258 : vector<8x8xf32>
    %c11_686 = arith.constant 11 : index
    %c0_687 = arith.constant 0 : index
    %1260 = memref.load %arg11[%c11_686, %c0_687] : memref<32x2xf32, #tpu.memory_space<smem>>
    %1261 = vector.broadcast %1260 : f32 to vector<8x8xf32>
    %1262 = arith.mulf %1227, %1261 : vector<8x8xf32>
    %1263 = arith.addf %1216, %1262 : vector<8x8xf32>
    %c11_688 = arith.constant 11 : index
    %c1_689 = arith.constant 1 : index
    %1264 = memref.load %arg11[%c11_688, %c1_689] : memref<32x2xf32, #tpu.memory_space<smem>>
    %1265 = vector.broadcast %1264 : f32 to vector<8x8xf32>
    %1266 = arith.mulf %1227, %1265 : vector<8x8xf32>
    %1267 = arith.addf %1220, %1266 : vector<8x8xf32>
    %c12_690 = arith.constant 12 : index
    %c0_691 = arith.constant 0 : index
    %c0_692 = arith.constant 0 : index
    %c0_693 = arith.constant 0 : index
    %1268 = vector.load %arg1[%c12_690, %c0_691, %c0_692, %c0_693] : memref<32x8x8x8xf32, #tpu.memory_space<vmem>>, vector<1x8x8x8xf32>
    %1269 = vector.shape_cast %1268 : vector<1x8x8x8xf32> to vector<8x8x8xf32>
    %1270 = arith.mulf %682, %1269 : vector<8x8x8xf32>
    %cst_694 = arith.constant dense<0.000000e+00> : vector<8x8xf32>
    %1271 = vector.multi_reduction <add>, %1270, %cst_694 [0] : vector<8x8x8xf32> to vector<8x8xf32>
    %c12_695 = arith.constant 12 : index
    %c0_696 = arith.constant 0 : index
    %c0_697 = arith.constant 0 : index
    %1272 = vector.load %arg3[%c12_695, %c0_696, %c0_697] : memref<32x8x8xf32, #tpu.memory_space<vmem>>, vector<1x8x8xf32>
    %1273 = vector.shape_cast %1272 : vector<1x8x8xf32> to vector<8x8xf32>
    %1274 = arith.select %685, %1273, %1271 : vector<8x8xi1>, vector<8x8xf32>
    %c12_698 = arith.constant 12 : index
    %c0_699 = arith.constant 0 : index
    %1275 = memref.load %arg7[%c12_698, %c0_699] : memref<32x8xf32, #tpu.memory_space<smem>>
    %1276 = vector.broadcast %1275 : f32 to vector<8x8xf32>
    %1277 = arith.mulf %1274, %1276 : vector<8x8xf32>
    %1278 = arith.addf %1231, %1277 : vector<8x8xf32>
    %c12_700 = arith.constant 12 : index
    %c1_701 = arith.constant 1 : index
    %1279 = memref.load %arg7[%c12_700, %c1_701] : memref<32x8xf32, #tpu.memory_space<smem>>
    %1280 = vector.broadcast %1279 : f32 to vector<8x8xf32>
    %1281 = arith.mulf %1274, %1280 : vector<8x8xf32>
    %1282 = arith.addf %1235, %1281 : vector<8x8xf32>
    %c12_702 = arith.constant 12 : index
    %c2_703 = arith.constant 2 : index
    %1283 = memref.load %arg7[%c12_702, %c2_703] : memref<32x8xf32, #tpu.memory_space<smem>>
    %1284 = vector.broadcast %1283 : f32 to vector<8x8xf32>
    %1285 = arith.mulf %1274, %1284 : vector<8x8xf32>
    %1286 = arith.addf %1239, %1285 : vector<8x8xf32>
    %c12_704 = arith.constant 12 : index
    %c3_705 = arith.constant 3 : index
    %1287 = memref.load %arg7[%c12_704, %c3_705] : memref<32x8xf32, #tpu.memory_space<smem>>
    %1288 = vector.broadcast %1287 : f32 to vector<8x8xf32>
    %1289 = arith.mulf %1274, %1288 : vector<8x8xf32>
    %1290 = arith.addf %1243, %1289 : vector<8x8xf32>
    %c12_706 = arith.constant 12 : index
    %c4_707 = arith.constant 4 : index
    %1291 = memref.load %arg7[%c12_706, %c4_707] : memref<32x8xf32, #tpu.memory_space<smem>>
    %1292 = vector.broadcast %1291 : f32 to vector<8x8xf32>
    %1293 = arith.mulf %1274, %1292 : vector<8x8xf32>
    %1294 = arith.addf %1247, %1293 : vector<8x8xf32>
    %c12_708 = arith.constant 12 : index
    %c5_709 = arith.constant 5 : index
    %1295 = memref.load %arg7[%c12_708, %c5_709] : memref<32x8xf32, #tpu.memory_space<smem>>
    %1296 = vector.broadcast %1295 : f32 to vector<8x8xf32>
    %1297 = arith.mulf %1274, %1296 : vector<8x8xf32>
    %1298 = arith.addf %1251, %1297 : vector<8x8xf32>
    %c12_710 = arith.constant 12 : index
    %c6_711 = arith.constant 6 : index
    %1299 = memref.load %arg7[%c12_710, %c6_711] : memref<32x8xf32, #tpu.memory_space<smem>>
    %1300 = vector.broadcast %1299 : f32 to vector<8x8xf32>
    %1301 = arith.mulf %1274, %1300 : vector<8x8xf32>
    %1302 = arith.addf %1255, %1301 : vector<8x8xf32>
    %c12_712 = arith.constant 12 : index
    %c7_713 = arith.constant 7 : index
    %1303 = memref.load %arg7[%c12_712, %c7_713] : memref<32x8xf32, #tpu.memory_space<smem>>
    %1304 = vector.broadcast %1303 : f32 to vector<8x8xf32>
    %1305 = arith.mulf %1274, %1304 : vector<8x8xf32>
    %1306 = arith.addf %1259, %1305 : vector<8x8xf32>
    %c12_714 = arith.constant 12 : index
    %c0_715 = arith.constant 0 : index
    %1307 = memref.load %arg11[%c12_714, %c0_715] : memref<32x2xf32, #tpu.memory_space<smem>>
    %1308 = vector.broadcast %1307 : f32 to vector<8x8xf32>
    %1309 = arith.mulf %1274, %1308 : vector<8x8xf32>
    %1310 = arith.addf %1263, %1309 : vector<8x8xf32>
    %c12_716 = arith.constant 12 : index
    %c1_717 = arith.constant 1 : index
    %1311 = memref.load %arg11[%c12_716, %c1_717] : memref<32x2xf32, #tpu.memory_space<smem>>
    %1312 = vector.broadcast %1311 : f32 to vector<8x8xf32>
    %1313 = arith.mulf %1274, %1312 : vector<8x8xf32>
    %1314 = arith.addf %1267, %1313 : vector<8x8xf32>
    %c13_718 = arith.constant 13 : index
    %c0_719 = arith.constant 0 : index
    %c0_720 = arith.constant 0 : index
    %c0_721 = arith.constant 0 : index
    %1315 = vector.load %arg1[%c13_718, %c0_719, %c0_720, %c0_721] : memref<32x8x8x8xf32, #tpu.memory_space<vmem>>, vector<1x8x8x8xf32>
    %1316 = vector.shape_cast %1315 : vector<1x8x8x8xf32> to vector<8x8x8xf32>
    %1317 = arith.mulf %682, %1316 : vector<8x8x8xf32>
    %cst_722 = arith.constant dense<0.000000e+00> : vector<8x8xf32>
    %1318 = vector.multi_reduction <add>, %1317, %cst_722 [0] : vector<8x8x8xf32> to vector<8x8xf32>
    %c13_723 = arith.constant 13 : index
    %c0_724 = arith.constant 0 : index
    %c0_725 = arith.constant 0 : index
    %1319 = vector.load %arg3[%c13_723, %c0_724, %c0_725] : memref<32x8x8xf32, #tpu.memory_space<vmem>>, vector<1x8x8xf32>
    %1320 = vector.shape_cast %1319 : vector<1x8x8xf32> to vector<8x8xf32>
    %1321 = arith.select %685, %1320, %1318 : vector<8x8xi1>, vector<8x8xf32>
    %c13_726 = arith.constant 13 : index
    %c0_727 = arith.constant 0 : index
    %1322 = memref.load %arg7[%c13_726, %c0_727] : memref<32x8xf32, #tpu.memory_space<smem>>
    %1323 = vector.broadcast %1322 : f32 to vector<8x8xf32>
    %1324 = arith.mulf %1321, %1323 : vector<8x8xf32>
    %1325 = arith.addf %1278, %1324 : vector<8x8xf32>
    %c13_728 = arith.constant 13 : index
    %c1_729 = arith.constant 1 : index
    %1326 = memref.load %arg7[%c13_728, %c1_729] : memref<32x8xf32, #tpu.memory_space<smem>>
    %1327 = vector.broadcast %1326 : f32 to vector<8x8xf32>
    %1328 = arith.mulf %1321, %1327 : vector<8x8xf32>
    %1329 = arith.addf %1282, %1328 : vector<8x8xf32>
    %c13_730 = arith.constant 13 : index
    %c2_731 = arith.constant 2 : index
    %1330 = memref.load %arg7[%c13_730, %c2_731] : memref<32x8xf32, #tpu.memory_space<smem>>
    %1331 = vector.broadcast %1330 : f32 to vector<8x8xf32>
    %1332 = arith.mulf %1321, %1331 : vector<8x8xf32>
    %1333 = arith.addf %1286, %1332 : vector<8x8xf32>
    %c13_732 = arith.constant 13 : index
    %c3_733 = arith.constant 3 : index
    %1334 = memref.load %arg7[%c13_732, %c3_733] : memref<32x8xf32, #tpu.memory_space<smem>>
    %1335 = vector.broadcast %1334 : f32 to vector<8x8xf32>
    %1336 = arith.mulf %1321, %1335 : vector<8x8xf32>
    %1337 = arith.addf %1290, %1336 : vector<8x8xf32>
    %c13_734 = arith.constant 13 : index
    %c4_735 = arith.constant 4 : index
    %1338 = memref.load %arg7[%c13_734, %c4_735] : memref<32x8xf32, #tpu.memory_space<smem>>
    %1339 = vector.broadcast %1338 : f32 to vector<8x8xf32>
    %1340 = arith.mulf %1321, %1339 : vector<8x8xf32>
    %1341 = arith.addf %1294, %1340 : vector<8x8xf32>
    %c13_736 = arith.constant 13 : index
    %c5_737 = arith.constant 5 : index
    %1342 = memref.load %arg7[%c13_736, %c5_737] : memref<32x8xf32, #tpu.memory_space<smem>>
    %1343 = vector.broadcast %1342 : f32 to vector<8x8xf32>
    %1344 = arith.mulf %1321, %1343 : vector<8x8xf32>
    %1345 = arith.addf %1298, %1344 : vector<8x8xf32>
    %c13_738 = arith.constant 13 : index
    %c6_739 = arith.constant 6 : index
    %1346 = memref.load %arg7[%c13_738, %c6_739] : memref<32x8xf32, #tpu.memory_space<smem>>
    %1347 = vector.broadcast %1346 : f32 to vector<8x8xf32>
    %1348 = arith.mulf %1321, %1347 : vector<8x8xf32>
    %1349 = arith.addf %1302, %1348 : vector<8x8xf32>
    %c13_740 = arith.constant 13 : index
    %c7_741 = arith.constant 7 : index
    %1350 = memref.load %arg7[%c13_740, %c7_741] : memref<32x8xf32, #tpu.memory_space<smem>>
    %1351 = vector.broadcast %1350 : f32 to vector<8x8xf32>
    %1352 = arith.mulf %1321, %1351 : vector<8x8xf32>
    %1353 = arith.addf %1306, %1352 : vector<8x8xf32>
    %c13_742 = arith.constant 13 : index
    %c0_743 = arith.constant 0 : index
    %1354 = memref.load %arg11[%c13_742, %c0_743] : memref<32x2xf32, #tpu.memory_space<smem>>
    %1355 = vector.broadcast %1354 : f32 to vector<8x8xf32>
    %1356 = arith.mulf %1321, %1355 : vector<8x8xf32>
    %1357 = arith.addf %1310, %1356 : vector<8x8xf32>
    %c13_744 = arith.constant 13 : index
    %c1_745 = arith.constant 1 : index
    %1358 = memref.load %arg11[%c13_744, %c1_745] : memref<32x2xf32, #tpu.memory_space<smem>>
    %1359 = vector.broadcast %1358 : f32 to vector<8x8xf32>
    %1360 = arith.mulf %1321, %1359 : vector<8x8xf32>
    %1361 = arith.addf %1314, %1360 : vector<8x8xf32>
    %c14_746 = arith.constant 14 : index
    %c0_747 = arith.constant 0 : index
    %c0_748 = arith.constant 0 : index
    %c0_749 = arith.constant 0 : index
    %1362 = vector.load %arg1[%c14_746, %c0_747, %c0_748, %c0_749] : memref<32x8x8x8xf32, #tpu.memory_space<vmem>>, vector<1x8x8x8xf32>
    %1363 = vector.shape_cast %1362 : vector<1x8x8x8xf32> to vector<8x8x8xf32>
    %1364 = arith.mulf %682, %1363 : vector<8x8x8xf32>
    %cst_750 = arith.constant dense<0.000000e+00> : vector<8x8xf32>
    %1365 = vector.multi_reduction <add>, %1364, %cst_750 [0] : vector<8x8x8xf32> to vector<8x8xf32>
    %c14_751 = arith.constant 14 : index
    %c0_752 = arith.constant 0 : index
    %c0_753 = arith.constant 0 : index
    %1366 = vector.load %arg3[%c14_751, %c0_752, %c0_753] : memref<32x8x8xf32, #tpu.memory_space<vmem>>, vector<1x8x8xf32>
    %1367 = vector.shape_cast %1366 : vector<1x8x8xf32> to vector<8x8xf32>
    %1368 = arith.select %685, %1367, %1365 : vector<8x8xi1>, vector<8x8xf32>
    %c14_754 = arith.constant 14 : index
    %c0_755 = arith.constant 0 : index
    %1369 = memref.load %arg7[%c14_754, %c0_755] : memref<32x8xf32, #tpu.memory_space<smem>>
    %1370 = vector.broadcast %1369 : f32 to vector<8x8xf32>
    %1371 = arith.mulf %1368, %1370 : vector<8x8xf32>
    %1372 = arith.addf %1325, %1371 : vector<8x8xf32>
    %c14_756 = arith.constant 14 : index
    %c1_757 = arith.constant 1 : index
    %1373 = memref.load %arg7[%c14_756, %c1_757] : memref<32x8xf32, #tpu.memory_space<smem>>
    %1374 = vector.broadcast %1373 : f32 to vector<8x8xf32>
    %1375 = arith.mulf %1368, %1374 : vector<8x8xf32>
    %1376 = arith.addf %1329, %1375 : vector<8x8xf32>
    %c14_758 = arith.constant 14 : index
    %c2_759 = arith.constant 2 : index
    %1377 = memref.load %arg7[%c14_758, %c2_759] : memref<32x8xf32, #tpu.memory_space<smem>>
    %1378 = vector.broadcast %1377 : f32 to vector<8x8xf32>
    %1379 = arith.mulf %1368, %1378 : vector<8x8xf32>
    %1380 = arith.addf %1333, %1379 : vector<8x8xf32>
    %c14_760 = arith.constant 14 : index
    %c3_761 = arith.constant 3 : index
    %1381 = memref.load %arg7[%c14_760, %c3_761] : memref<32x8xf32, #tpu.memory_space<smem>>
    %1382 = vector.broadcast %1381 : f32 to vector<8x8xf32>
    %1383 = arith.mulf %1368, %1382 : vector<8x8xf32>
    %1384 = arith.addf %1337, %1383 : vector<8x8xf32>
    %c14_762 = arith.constant 14 : index
    %c4_763 = arith.constant 4 : index
    %1385 = memref.load %arg7[%c14_762, %c4_763] : memref<32x8xf32, #tpu.memory_space<smem>>
    %1386 = vector.broadcast %1385 : f32 to vector<8x8xf32>
    %1387 = arith.mulf %1368, %1386 : vector<8x8xf32>
    %1388 = arith.addf %1341, %1387 : vector<8x8xf32>
    %c14_764 = arith.constant 14 : index
    %c5_765 = arith.constant 5 : index
    %1389 = memref.load %arg7[%c14_764, %c5_765] : memref<32x8xf32, #tpu.memory_space<smem>>
    %1390 = vector.broadcast %1389 : f32 to vector<8x8xf32>
    %1391 = arith.mulf %1368, %1390 : vector<8x8xf32>
    %1392 = arith.addf %1345, %1391 : vector<8x8xf32>
    %c14_766 = arith.constant 14 : index
    %c6_767 = arith.constant 6 : index
    %1393 = memref.load %arg7[%c14_766, %c6_767] : memref<32x8xf32, #tpu.memory_space<smem>>
    %1394 = vector.broadcast %1393 : f32 to vector<8x8xf32>
    %1395 = arith.mulf %1368, %1394 : vector<8x8xf32>
    %1396 = arith.addf %1349, %1395 : vector<8x8xf32>
    %c14_768 = arith.constant 14 : index
    %c7_769 = arith.constant 7 : index
    %1397 = memref.load %arg7[%c14_768, %c7_769] : memref<32x8xf32, #tpu.memory_space<smem>>
    %1398 = vector.broadcast %1397 : f32 to vector<8x8xf32>
    %1399 = arith.mulf %1368, %1398 : vector<8x8xf32>
    %1400 = arith.addf %1353, %1399 : vector<8x8xf32>
    %c14_770 = arith.constant 14 : index
    %c0_771 = arith.constant 0 : index
    %1401 = memref.load %arg11[%c14_770, %c0_771] : memref<32x2xf32, #tpu.memory_space<smem>>
    %1402 = vector.broadcast %1401 : f32 to vector<8x8xf32>
    %1403 = arith.mulf %1368, %1402 : vector<8x8xf32>
    %1404 = arith.addf %1357, %1403 : vector<8x8xf32>
    %c14_772 = arith.constant 14 : index
    %c1_773 = arith.constant 1 : index
    %1405 = memref.load %arg11[%c14_772, %c1_773] : memref<32x2xf32, #tpu.memory_space<smem>>
    %1406 = vector.broadcast %1405 : f32 to vector<8x8xf32>
    %1407 = arith.mulf %1368, %1406 : vector<8x8xf32>
    %1408 = arith.addf %1361, %1407 : vector<8x8xf32>
    %c15_774 = arith.constant 15 : index
    %c0_775 = arith.constant 0 : index
    %c0_776 = arith.constant 0 : index
    %c0_777 = arith.constant 0 : index
    %1409 = vector.load %arg1[%c15_774, %c0_775, %c0_776, %c0_777] : memref<32x8x8x8xf32, #tpu.memory_space<vmem>>, vector<1x8x8x8xf32>
    %1410 = vector.shape_cast %1409 : vector<1x8x8x8xf32> to vector<8x8x8xf32>
    %1411 = arith.mulf %682, %1410 : vector<8x8x8xf32>
    %cst_778 = arith.constant dense<0.000000e+00> : vector<8x8xf32>
    %1412 = vector.multi_reduction <add>, %1411, %cst_778 [0] : vector<8x8x8xf32> to vector<8x8xf32>
    %c15_779 = arith.constant 15 : index
    %c0_780 = arith.constant 0 : index
    %c0_781 = arith.constant 0 : index
    %1413 = vector.load %arg3[%c15_779, %c0_780, %c0_781] : memref<32x8x8xf32, #tpu.memory_space<vmem>>, vector<1x8x8xf32>
    %1414 = vector.shape_cast %1413 : vector<1x8x8xf32> to vector<8x8xf32>
    %1415 = arith.select %685, %1414, %1412 : vector<8x8xi1>, vector<8x8xf32>
    %c15_782 = arith.constant 15 : index
    %c0_783 = arith.constant 0 : index
    %1416 = memref.load %arg7[%c15_782, %c0_783] : memref<32x8xf32, #tpu.memory_space<smem>>
    %1417 = vector.broadcast %1416 : f32 to vector<8x8xf32>
    %1418 = arith.mulf %1415, %1417 : vector<8x8xf32>
    %1419 = arith.addf %1372, %1418 : vector<8x8xf32>
    %c15_784 = arith.constant 15 : index
    %c1_785 = arith.constant 1 : index
    %1420 = memref.load %arg7[%c15_784, %c1_785] : memref<32x8xf32, #tpu.memory_space<smem>>
    %1421 = vector.broadcast %1420 : f32 to vector<8x8xf32>
    %1422 = arith.mulf %1415, %1421 : vector<8x8xf32>
    %1423 = arith.addf %1376, %1422 : vector<8x8xf32>
    %c15_786 = arith.constant 15 : index
    %c2_787 = arith.constant 2 : index
    %1424 = memref.load %arg7[%c15_786, %c2_787] : memref<32x8xf32, #tpu.memory_space<smem>>
    %1425 = vector.broadcast %1424 : f32 to vector<8x8xf32>
    %1426 = arith.mulf %1415, %1425 : vector<8x8xf32>
    %1427 = arith.addf %1380, %1426 : vector<8x8xf32>
    %c15_788 = arith.constant 15 : index
    %c3_789 = arith.constant 3 : index
    %1428 = memref.load %arg7[%c15_788, %c3_789] : memref<32x8xf32, #tpu.memory_space<smem>>
    %1429 = vector.broadcast %1428 : f32 to vector<8x8xf32>
    %1430 = arith.mulf %1415, %1429 : vector<8x8xf32>
    %1431 = arith.addf %1384, %1430 : vector<8x8xf32>
    %c15_790 = arith.constant 15 : index
    %c4_791 = arith.constant 4 : index
    %1432 = memref.load %arg7[%c15_790, %c4_791] : memref<32x8xf32, #tpu.memory_space<smem>>
    %1433 = vector.broadcast %1432 : f32 to vector<8x8xf32>
    %1434 = arith.mulf %1415, %1433 : vector<8x8xf32>
    %1435 = arith.addf %1388, %1434 : vector<8x8xf32>
    %c15_792 = arith.constant 15 : index
    %c5_793 = arith.constant 5 : index
    %1436 = memref.load %arg7[%c15_792, %c5_793] : memref<32x8xf32, #tpu.memory_space<smem>>
    %1437 = vector.broadcast %1436 : f32 to vector<8x8xf32>
    %1438 = arith.mulf %1415, %1437 : vector<8x8xf32>
    %1439 = arith.addf %1392, %1438 : vector<8x8xf32>
    %c15_794 = arith.constant 15 : index
    %c6_795 = arith.constant 6 : index
    %1440 = memref.load %arg7[%c15_794, %c6_795] : memref<32x8xf32, #tpu.memory_space<smem>>
    %1441 = vector.broadcast %1440 : f32 to vector<8x8xf32>
    %1442 = arith.mulf %1415, %1441 : vector<8x8xf32>
    %1443 = arith.addf %1396, %1442 : vector<8x8xf32>
    %c15_796 = arith.constant 15 : index
    %c7_797 = arith.constant 7 : index
    %1444 = memref.load %arg7[%c15_796, %c7_797] : memref<32x8xf32, #tpu.memory_space<smem>>
    %1445 = vector.broadcast %1444 : f32 to vector<8x8xf32>
    %1446 = arith.mulf %1415, %1445 : vector<8x8xf32>
    %1447 = arith.addf %1400, %1446 : vector<8x8xf32>
    %c15_798 = arith.constant 15 : index
    %c0_799 = arith.constant 0 : index
    %1448 = memref.load %arg11[%c15_798, %c0_799] : memref<32x2xf32, #tpu.memory_space<smem>>
    %1449 = vector.broadcast %1448 : f32 to vector<8x8xf32>
    %1450 = arith.mulf %1415, %1449 : vector<8x8xf32>
    %1451 = arith.addf %1404, %1450 : vector<8x8xf32>
    %c15_800 = arith.constant 15 : index
    %c1_801 = arith.constant 1 : index
    %1452 = memref.load %arg11[%c15_800, %c1_801] : memref<32x2xf32, #tpu.memory_space<smem>>
    %1453 = vector.broadcast %1452 : f32 to vector<8x8xf32>
    %1454 = arith.mulf %1415, %1453 : vector<8x8xf32>
    %1455 = arith.addf %1408, %1454 : vector<8x8xf32>
    %c16_802 = arith.constant 16 : index
    %c0_803 = arith.constant 0 : index
    %c0_804 = arith.constant 0 : index
    %c0_805 = arith.constant 0 : index
    %1456 = vector.load %arg1[%c16_802, %c0_803, %c0_804, %c0_805] : memref<32x8x8x8xf32, #tpu.memory_space<vmem>>, vector<1x8x8x8xf32>
    %1457 = vector.shape_cast %1456 : vector<1x8x8x8xf32> to vector<8x8x8xf32>
    %1458 = arith.mulf %682, %1457 : vector<8x8x8xf32>
    %cst_806 = arith.constant dense<0.000000e+00> : vector<8x8xf32>
    %1459 = vector.multi_reduction <add>, %1458, %cst_806 [0] : vector<8x8x8xf32> to vector<8x8xf32>
    %c16_807 = arith.constant 16 : index
    %c0_808 = arith.constant 0 : index
    %c0_809 = arith.constant 0 : index
    %1460 = vector.load %arg3[%c16_807, %c0_808, %c0_809] : memref<32x8x8xf32, #tpu.memory_space<vmem>>, vector<1x8x8xf32>
    %1461 = vector.shape_cast %1460 : vector<1x8x8xf32> to vector<8x8xf32>
    %1462 = arith.select %685, %1461, %1459 : vector<8x8xi1>, vector<8x8xf32>
    %c16_810 = arith.constant 16 : index
    %c0_811 = arith.constant 0 : index
    %1463 = memref.load %arg7[%c16_810, %c0_811] : memref<32x8xf32, #tpu.memory_space<smem>>
    %1464 = vector.broadcast %1463 : f32 to vector<8x8xf32>
    %1465 = arith.mulf %1462, %1464 : vector<8x8xf32>
    %1466 = arith.addf %1419, %1465 : vector<8x8xf32>
    %c16_812 = arith.constant 16 : index
    %c1_813 = arith.constant 1 : index
    %1467 = memref.load %arg7[%c16_812, %c1_813] : memref<32x8xf32, #tpu.memory_space<smem>>
    %1468 = vector.broadcast %1467 : f32 to vector<8x8xf32>
    %1469 = arith.mulf %1462, %1468 : vector<8x8xf32>
    %1470 = arith.addf %1423, %1469 : vector<8x8xf32>
    %c16_814 = arith.constant 16 : index
    %c2_815 = arith.constant 2 : index
    %1471 = memref.load %arg7[%c16_814, %c2_815] : memref<32x8xf32, #tpu.memory_space<smem>>
    %1472 = vector.broadcast %1471 : f32 to vector<8x8xf32>
    %1473 = arith.mulf %1462, %1472 : vector<8x8xf32>
    %1474 = arith.addf %1427, %1473 : vector<8x8xf32>
    %c16_816 = arith.constant 16 : index
    %c3_817 = arith.constant 3 : index
    %1475 = memref.load %arg7[%c16_816, %c3_817] : memref<32x8xf32, #tpu.memory_space<smem>>
    %1476 = vector.broadcast %1475 : f32 to vector<8x8xf32>
    %1477 = arith.mulf %1462, %1476 : vector<8x8xf32>
    %1478 = arith.addf %1431, %1477 : vector<8x8xf32>
    %c16_818 = arith.constant 16 : index
    %c4_819 = arith.constant 4 : index
    %1479 = memref.load %arg7[%c16_818, %c4_819] : memref<32x8xf32, #tpu.memory_space<smem>>
    %1480 = vector.broadcast %1479 : f32 to vector<8x8xf32>
    %1481 = arith.mulf %1462, %1480 : vector<8x8xf32>
    %1482 = arith.addf %1435, %1481 : vector<8x8xf32>
    %c16_820 = arith.constant 16 : index
    %c5_821 = arith.constant 5 : index
    %1483 = memref.load %arg7[%c16_820, %c5_821] : memref<32x8xf32, #tpu.memory_space<smem>>
    %1484 = vector.broadcast %1483 : f32 to vector<8x8xf32>
    %1485 = arith.mulf %1462, %1484 : vector<8x8xf32>
    %1486 = arith.addf %1439, %1485 : vector<8x8xf32>
    %c16_822 = arith.constant 16 : index
    %c6_823 = arith.constant 6 : index
    %1487 = memref.load %arg7[%c16_822, %c6_823] : memref<32x8xf32, #tpu.memory_space<smem>>
    %1488 = vector.broadcast %1487 : f32 to vector<8x8xf32>
    %1489 = arith.mulf %1462, %1488 : vector<8x8xf32>
    %1490 = arith.addf %1443, %1489 : vector<8x8xf32>
    %c16_824 = arith.constant 16 : index
    %c7_825 = arith.constant 7 : index
    %1491 = memref.load %arg7[%c16_824, %c7_825] : memref<32x8xf32, #tpu.memory_space<smem>>
    %1492 = vector.broadcast %1491 : f32 to vector<8x8xf32>
    %1493 = arith.mulf %1462, %1492 : vector<8x8xf32>
    %1494 = arith.addf %1447, %1493 : vector<8x8xf32>
    %c16_826 = arith.constant 16 : index
    %c0_827 = arith.constant 0 : index
    %1495 = memref.load %arg11[%c16_826, %c0_827] : memref<32x2xf32, #tpu.memory_space<smem>>
    %1496 = vector.broadcast %1495 : f32 to vector<8x8xf32>
    %1497 = arith.mulf %1462, %1496 : vector<8x8xf32>
    %1498 = arith.addf %1451, %1497 : vector<8x8xf32>
    %c16_828 = arith.constant 16 : index
    %c1_829 = arith.constant 1 : index
    %1499 = memref.load %arg11[%c16_828, %c1_829] : memref<32x2xf32, #tpu.memory_space<smem>>
    %1500 = vector.broadcast %1499 : f32 to vector<8x8xf32>
    %1501 = arith.mulf %1462, %1500 : vector<8x8xf32>
    %1502 = arith.addf %1455, %1501 : vector<8x8xf32>
    %c17_830 = arith.constant 17 : index
    %c0_831 = arith.constant 0 : index
    %c0_832 = arith.constant 0 : index
    %c0_833 = arith.constant 0 : index
    %1503 = vector.load %arg1[%c17_830, %c0_831, %c0_832, %c0_833] : memref<32x8x8x8xf32, #tpu.memory_space<vmem>>, vector<1x8x8x8xf32>
    %1504 = vector.shape_cast %1503 : vector<1x8x8x8xf32> to vector<8x8x8xf32>
    %1505 = arith.mulf %682, %1504 : vector<8x8x8xf32>
    %cst_834 = arith.constant dense<0.000000e+00> : vector<8x8xf32>
    %1506 = vector.multi_reduction <add>, %1505, %cst_834 [0] : vector<8x8x8xf32> to vector<8x8xf32>
    %c17_835 = arith.constant 17 : index
    %c0_836 = arith.constant 0 : index
    %c0_837 = arith.constant 0 : index
    %1507 = vector.load %arg3[%c17_835, %c0_836, %c0_837] : memref<32x8x8xf32, #tpu.memory_space<vmem>>, vector<1x8x8xf32>
    %1508 = vector.shape_cast %1507 : vector<1x8x8xf32> to vector<8x8xf32>
    %1509 = arith.select %685, %1508, %1506 : vector<8x8xi1>, vector<8x8xf32>
    %c17_838 = arith.constant 17 : index
    %c0_839 = arith.constant 0 : index
    %1510 = memref.load %arg7[%c17_838, %c0_839] : memref<32x8xf32, #tpu.memory_space<smem>>
    %1511 = vector.broadcast %1510 : f32 to vector<8x8xf32>
    %1512 = arith.mulf %1509, %1511 : vector<8x8xf32>
    %1513 = arith.addf %1466, %1512 : vector<8x8xf32>
    %c17_840 = arith.constant 17 : index
    %c1_841 = arith.constant 1 : index
    %1514 = memref.load %arg7[%c17_840, %c1_841] : memref<32x8xf32, #tpu.memory_space<smem>>
    %1515 = vector.broadcast %1514 : f32 to vector<8x8xf32>
    %1516 = arith.mulf %1509, %1515 : vector<8x8xf32>
    %1517 = arith.addf %1470, %1516 : vector<8x8xf32>
    %c17_842 = arith.constant 17 : index
    %c2_843 = arith.constant 2 : index
    %1518 = memref.load %arg7[%c17_842, %c2_843] : memref<32x8xf32, #tpu.memory_space<smem>>
    %1519 = vector.broadcast %1518 : f32 to vector<8x8xf32>
    %1520 = arith.mulf %1509, %1519 : vector<8x8xf32>
    %1521 = arith.addf %1474, %1520 : vector<8x8xf32>
    %c17_844 = arith.constant 17 : index
    %c3_845 = arith.constant 3 : index
    %1522 = memref.load %arg7[%c17_844, %c3_845] : memref<32x8xf32, #tpu.memory_space<smem>>
    %1523 = vector.broadcast %1522 : f32 to vector<8x8xf32>
    %1524 = arith.mulf %1509, %1523 : vector<8x8xf32>
    %1525 = arith.addf %1478, %1524 : vector<8x8xf32>
    %c17_846 = arith.constant 17 : index
    %c4_847 = arith.constant 4 : index
    %1526 = memref.load %arg7[%c17_846, %c4_847] : memref<32x8xf32, #tpu.memory_space<smem>>
    %1527 = vector.broadcast %1526 : f32 to vector<8x8xf32>
    %1528 = arith.mulf %1509, %1527 : vector<8x8xf32>
    %1529 = arith.addf %1482, %1528 : vector<8x8xf32>
    %c17_848 = arith.constant 17 : index
    %c5_849 = arith.constant 5 : index
    %1530 = memref.load %arg7[%c17_848, %c5_849] : memref<32x8xf32, #tpu.memory_space<smem>>
    %1531 = vector.broadcast %1530 : f32 to vector<8x8xf32>
    %1532 = arith.mulf %1509, %1531 : vector<8x8xf32>
    %1533 = arith.addf %1486, %1532 : vector<8x8xf32>
    %c17_850 = arith.constant 17 : index
    %c6_851 = arith.constant 6 : index
    %1534 = memref.load %arg7[%c17_850, %c6_851] : memref<32x8xf32, #tpu.memory_space<smem>>
    %1535 = vector.broadcast %1534 : f32 to vector<8x8xf32>
    %1536 = arith.mulf %1509, %1535 : vector<8x8xf32>
    %1537 = arith.addf %1490, %1536 : vector<8x8xf32>
    %c17_852 = arith.constant 17 : index
    %c7_853 = arith.constant 7 : index
    %1538 = memref.load %arg7[%c17_852, %c7_853] : memref<32x8xf32, #tpu.memory_space<smem>>
    %1539 = vector.broadcast %1538 : f32 to vector<8x8xf32>
    %1540 = arith.mulf %1509, %1539 : vector<8x8xf32>
    %1541 = arith.addf %1494, %1540 : vector<8x8xf32>
    %c17_854 = arith.constant 17 : index
    %c0_855 = arith.constant 0 : index
    %1542 = memref.load %arg11[%c17_854, %c0_855] : memref<32x2xf32, #tpu.memory_space<smem>>
    %1543 = vector.broadcast %1542 : f32 to vector<8x8xf32>
    %1544 = arith.mulf %1509, %1543 : vector<8x8xf32>
    %1545 = arith.addf %1498, %1544 : vector<8x8xf32>
    %c17_856 = arith.constant 17 : index
    %c1_857 = arith.constant 1 : index
    %1546 = memref.load %arg11[%c17_856, %c1_857] : memref<32x2xf32, #tpu.memory_space<smem>>
    %1547 = vector.broadcast %1546 : f32 to vector<8x8xf32>
    %1548 = arith.mulf %1509, %1547 : vector<8x8xf32>
    %1549 = arith.addf %1502, %1548 : vector<8x8xf32>
    %c18_858 = arith.constant 18 : index
    %c0_859 = arith.constant 0 : index
    %c0_860 = arith.constant 0 : index
    %c0_861 = arith.constant 0 : index
    %1550 = vector.load %arg1[%c18_858, %c0_859, %c0_860, %c0_861] : memref<32x8x8x8xf32, #tpu.memory_space<vmem>>, vector<1x8x8x8xf32>
    %1551 = vector.shape_cast %1550 : vector<1x8x8x8xf32> to vector<8x8x8xf32>
    %1552 = arith.mulf %682, %1551 : vector<8x8x8xf32>
    %cst_862 = arith.constant dense<0.000000e+00> : vector<8x8xf32>
    %1553 = vector.multi_reduction <add>, %1552, %cst_862 [0] : vector<8x8x8xf32> to vector<8x8xf32>
    %c18_863 = arith.constant 18 : index
    %c0_864 = arith.constant 0 : index
    %c0_865 = arith.constant 0 : index
    %1554 = vector.load %arg3[%c18_863, %c0_864, %c0_865] : memref<32x8x8xf32, #tpu.memory_space<vmem>>, vector<1x8x8xf32>
    %1555 = vector.shape_cast %1554 : vector<1x8x8xf32> to vector<8x8xf32>
    %1556 = arith.select %685, %1555, %1553 : vector<8x8xi1>, vector<8x8xf32>
    %c18_866 = arith.constant 18 : index
    %c0_867 = arith.constant 0 : index
    %1557 = memref.load %arg7[%c18_866, %c0_867] : memref<32x8xf32, #tpu.memory_space<smem>>
    %1558 = vector.broadcast %1557 : f32 to vector<8x8xf32>
    %1559 = arith.mulf %1556, %1558 : vector<8x8xf32>
    %1560 = arith.addf %1513, %1559 : vector<8x8xf32>
    %c18_868 = arith.constant 18 : index
    %c1_869 = arith.constant 1 : index
    %1561 = memref.load %arg7[%c18_868, %c1_869] : memref<32x8xf32, #tpu.memory_space<smem>>
    %1562 = vector.broadcast %1561 : f32 to vector<8x8xf32>
    %1563 = arith.mulf %1556, %1562 : vector<8x8xf32>
    %1564 = arith.addf %1517, %1563 : vector<8x8xf32>
    %c18_870 = arith.constant 18 : index
    %c2_871 = arith.constant 2 : index
    %1565 = memref.load %arg7[%c18_870, %c2_871] : memref<32x8xf32, #tpu.memory_space<smem>>
    %1566 = vector.broadcast %1565 : f32 to vector<8x8xf32>
    %1567 = arith.mulf %1556, %1566 : vector<8x8xf32>
    %1568 = arith.addf %1521, %1567 : vector<8x8xf32>
    %c18_872 = arith.constant 18 : index
    %c3_873 = arith.constant 3 : index
    %1569 = memref.load %arg7[%c18_872, %c3_873] : memref<32x8xf32, #tpu.memory_space<smem>>
    %1570 = vector.broadcast %1569 : f32 to vector<8x8xf32>
    %1571 = arith.mulf %1556, %1570 : vector<8x8xf32>
    %1572 = arith.addf %1525, %1571 : vector<8x8xf32>
    %c18_874 = arith.constant 18 : index
    %c4_875 = arith.constant 4 : index
    %1573 = memref.load %arg7[%c18_874, %c4_875] : memref<32x8xf32, #tpu.memory_space<smem>>
    %1574 = vector.broadcast %1573 : f32 to vector<8x8xf32>
    %1575 = arith.mulf %1556, %1574 : vector<8x8xf32>
    %1576 = arith.addf %1529, %1575 : vector<8x8xf32>
    %c18_876 = arith.constant 18 : index
    %c5_877 = arith.constant 5 : index
    %1577 = memref.load %arg7[%c18_876, %c5_877] : memref<32x8xf32, #tpu.memory_space<smem>>
    %1578 = vector.broadcast %1577 : f32 to vector<8x8xf32>
    %1579 = arith.mulf %1556, %1578 : vector<8x8xf32>
    %1580 = arith.addf %1533, %1579 : vector<8x8xf32>
    %c18_878 = arith.constant 18 : index
    %c6_879 = arith.constant 6 : index
    %1581 = memref.load %arg7[%c18_878, %c6_879] : memref<32x8xf32, #tpu.memory_space<smem>>
    %1582 = vector.broadcast %1581 : f32 to vector<8x8xf32>
    %1583 = arith.mulf %1556, %1582 : vector<8x8xf32>
    %1584 = arith.addf %1537, %1583 : vector<8x8xf32>
    %c18_880 = arith.constant 18 : index
    %c7_881 = arith.constant 7 : index
    %1585 = memref.load %arg7[%c18_880, %c7_881] : memref<32x8xf32, #tpu.memory_space<smem>>
    %1586 = vector.broadcast %1585 : f32 to vector<8x8xf32>
    %1587 = arith.mulf %1556, %1586 : vector<8x8xf32>
    %1588 = arith.addf %1541, %1587 : vector<8x8xf32>
    %c18_882 = arith.constant 18 : index
    %c0_883 = arith.constant 0 : index
    %1589 = memref.load %arg11[%c18_882, %c0_883] : memref<32x2xf32, #tpu.memory_space<smem>>
    %1590 = vector.broadcast %1589 : f32 to vector<8x8xf32>
    %1591 = arith.mulf %1556, %1590 : vector<8x8xf32>
    %1592 = arith.addf %1545, %1591 : vector<8x8xf32>
    %c18_884 = arith.constant 18 : index
    %c1_885 = arith.constant 1 : index
    %1593 = memref.load %arg11[%c18_884, %c1_885] : memref<32x2xf32, #tpu.memory_space<smem>>
    %1594 = vector.broadcast %1593 : f32 to vector<8x8xf32>
    %1595 = arith.mulf %1556, %1594 : vector<8x8xf32>
    %1596 = arith.addf %1549, %1595 : vector<8x8xf32>
    %c19_886 = arith.constant 19 : index
    %c0_887 = arith.constant 0 : index
    %c0_888 = arith.constant 0 : index
    %c0_889 = arith.constant 0 : index
    %1597 = vector.load %arg1[%c19_886, %c0_887, %c0_888, %c0_889] : memref<32x8x8x8xf32, #tpu.memory_space<vmem>>, vector<1x8x8x8xf32>
    %1598 = vector.shape_cast %1597 : vector<1x8x8x8xf32> to vector<8x8x8xf32>
    %1599 = arith.mulf %682, %1598 : vector<8x8x8xf32>
    %cst_890 = arith.constant dense<0.000000e+00> : vector<8x8xf32>
    %1600 = vector.multi_reduction <add>, %1599, %cst_890 [0] : vector<8x8x8xf32> to vector<8x8xf32>
    %c19_891 = arith.constant 19 : index
    %c0_892 = arith.constant 0 : index
    %c0_893 = arith.constant 0 : index
    %1601 = vector.load %arg3[%c19_891, %c0_892, %c0_893] : memref<32x8x8xf32, #tpu.memory_space<vmem>>, vector<1x8x8xf32>
    %1602 = vector.shape_cast %1601 : vector<1x8x8xf32> to vector<8x8xf32>
    %1603 = arith.select %685, %1602, %1600 : vector<8x8xi1>, vector<8x8xf32>
    %c19_894 = arith.constant 19 : index
    %c0_895 = arith.constant 0 : index
    %1604 = memref.load %arg7[%c19_894, %c0_895] : memref<32x8xf32, #tpu.memory_space<smem>>
    %1605 = vector.broadcast %1604 : f32 to vector<8x8xf32>
    %1606 = arith.mulf %1603, %1605 : vector<8x8xf32>
    %1607 = arith.addf %1560, %1606 : vector<8x8xf32>
    %c19_896 = arith.constant 19 : index
    %c1_897 = arith.constant 1 : index
    %1608 = memref.load %arg7[%c19_896, %c1_897] : memref<32x8xf32, #tpu.memory_space<smem>>
    %1609 = vector.broadcast %1608 : f32 to vector<8x8xf32>
    %1610 = arith.mulf %1603, %1609 : vector<8x8xf32>
    %1611 = arith.addf %1564, %1610 : vector<8x8xf32>
    %c19_898 = arith.constant 19 : index
    %c2_899 = arith.constant 2 : index
    %1612 = memref.load %arg7[%c19_898, %c2_899] : memref<32x8xf32, #tpu.memory_space<smem>>
    %1613 = vector.broadcast %1612 : f32 to vector<8x8xf32>
    %1614 = arith.mulf %1603, %1613 : vector<8x8xf32>
    %1615 = arith.addf %1568, %1614 : vector<8x8xf32>
    %c19_900 = arith.constant 19 : index
    %c3_901 = arith.constant 3 : index
    %1616 = memref.load %arg7[%c19_900, %c3_901] : memref<32x8xf32, #tpu.memory_space<smem>>
    %1617 = vector.broadcast %1616 : f32 to vector<8x8xf32>
    %1618 = arith.mulf %1603, %1617 : vector<8x8xf32>
    %1619 = arith.addf %1572, %1618 : vector<8x8xf32>
    %c19_902 = arith.constant 19 : index
    %c4_903 = arith.constant 4 : index
    %1620 = memref.load %arg7[%c19_902, %c4_903] : memref<32x8xf32, #tpu.memory_space<smem>>
    %1621 = vector.broadcast %1620 : f32 to vector<8x8xf32>
    %1622 = arith.mulf %1603, %1621 : vector<8x8xf32>
    %1623 = arith.addf %1576, %1622 : vector<8x8xf32>
    %c19_904 = arith.constant 19 : index
    %c5_905 = arith.constant 5 : index
    %1624 = memref.load %arg7[%c19_904, %c5_905] : memref<32x8xf32, #tpu.memory_space<smem>>
    %1625 = vector.broadcast %1624 : f32 to vector<8x8xf32>
    %1626 = arith.mulf %1603, %1625 : vector<8x8xf32>
    %1627 = arith.addf %1580, %1626 : vector<8x8xf32>
    %c19_906 = arith.constant 19 : index
    %c6_907 = arith.constant 6 : index
    %1628 = memref.load %arg7[%c19_906, %c6_907] : memref<32x8xf32, #tpu.memory_space<smem>>
    %1629 = vector.broadcast %1628 : f32 to vector<8x8xf32>
    %1630 = arith.mulf %1603, %1629 : vector<8x8xf32>
    %1631 = arith.addf %1584, %1630 : vector<8x8xf32>
    %c19_908 = arith.constant 19 : index
    %c7_909 = arith.constant 7 : index
    %1632 = memref.load %arg7[%c19_908, %c7_909] : memref<32x8xf32, #tpu.memory_space<smem>>
    %1633 = vector.broadcast %1632 : f32 to vector<8x8xf32>
    %1634 = arith.mulf %1603, %1633 : vector<8x8xf32>
    %1635 = arith.addf %1588, %1634 : vector<8x8xf32>
    %c19_910 = arith.constant 19 : index
    %c0_911 = arith.constant 0 : index
    %1636 = memref.load %arg11[%c19_910, %c0_911] : memref<32x2xf32, #tpu.memory_space<smem>>
    %1637 = vector.broadcast %1636 : f32 to vector<8x8xf32>
    %1638 = arith.mulf %1603, %1637 : vector<8x8xf32>
    %1639 = arith.addf %1592, %1638 : vector<8x8xf32>
    %c19_912 = arith.constant 19 : index
    %c1_913 = arith.constant 1 : index
    %1640 = memref.load %arg11[%c19_912, %c1_913] : memref<32x2xf32, #tpu.memory_space<smem>>
    %1641 = vector.broadcast %1640 : f32 to vector<8x8xf32>
    %1642 = arith.mulf %1603, %1641 : vector<8x8xf32>
    %1643 = arith.addf %1596, %1642 : vector<8x8xf32>
    %c20_914 = arith.constant 20 : index
    %c0_915 = arith.constant 0 : index
    %c0_916 = arith.constant 0 : index
    %c0_917 = arith.constant 0 : index
    %1644 = vector.load %arg1[%c20_914, %c0_915, %c0_916, %c0_917] : memref<32x8x8x8xf32, #tpu.memory_space<vmem>>, vector<1x8x8x8xf32>
    %1645 = vector.shape_cast %1644 : vector<1x8x8x8xf32> to vector<8x8x8xf32>
    %1646 = arith.mulf %682, %1645 : vector<8x8x8xf32>
    %cst_918 = arith.constant dense<0.000000e+00> : vector<8x8xf32>
    %1647 = vector.multi_reduction <add>, %1646, %cst_918 [0] : vector<8x8x8xf32> to vector<8x8xf32>
    %c20_919 = arith.constant 20 : index
    %c0_920 = arith.constant 0 : index
    %c0_921 = arith.constant 0 : index
    %1648 = vector.load %arg3[%c20_919, %c0_920, %c0_921] : memref<32x8x8xf32, #tpu.memory_space<vmem>>, vector<1x8x8xf32>
    %1649 = vector.shape_cast %1648 : vector<1x8x8xf32> to vector<8x8xf32>
    %1650 = arith.select %685, %1649, %1647 : vector<8x8xi1>, vector<8x8xf32>
    %c20_922 = arith.constant 20 : index
    %c0_923 = arith.constant 0 : index
    %1651 = memref.load %arg7[%c20_922, %c0_923] : memref<32x8xf32, #tpu.memory_space<smem>>
    %1652 = vector.broadcast %1651 : f32 to vector<8x8xf32>
    %1653 = arith.mulf %1650, %1652 : vector<8x8xf32>
    %1654 = arith.addf %1607, %1653 : vector<8x8xf32>
    %c20_924 = arith.constant 20 : index
    %c1_925 = arith.constant 1 : index
    %1655 = memref.load %arg7[%c20_924, %c1_925] : memref<32x8xf32, #tpu.memory_space<smem>>
    %1656 = vector.broadcast %1655 : f32 to vector<8x8xf32>
    %1657 = arith.mulf %1650, %1656 : vector<8x8xf32>
    %1658 = arith.addf %1611, %1657 : vector<8x8xf32>
    %c20_926 = arith.constant 20 : index
    %c2_927 = arith.constant 2 : index
    %1659 = memref.load %arg7[%c20_926, %c2_927] : memref<32x8xf32, #tpu.memory_space<smem>>
    %1660 = vector.broadcast %1659 : f32 to vector<8x8xf32>
    %1661 = arith.mulf %1650, %1660 : vector<8x8xf32>
    %1662 = arith.addf %1615, %1661 : vector<8x8xf32>
    %c20_928 = arith.constant 20 : index
    %c3_929 = arith.constant 3 : index
    %1663 = memref.load %arg7[%c20_928, %c3_929] : memref<32x8xf32, #tpu.memory_space<smem>>
    %1664 = vector.broadcast %1663 : f32 to vector<8x8xf32>
    %1665 = arith.mulf %1650, %1664 : vector<8x8xf32>
    %1666 = arith.addf %1619, %1665 : vector<8x8xf32>
    %c20_930 = arith.constant 20 : index
    %c4_931 = arith.constant 4 : index
    %1667 = memref.load %arg7[%c20_930, %c4_931] : memref<32x8xf32, #tpu.memory_space<smem>>
    %1668 = vector.broadcast %1667 : f32 to vector<8x8xf32>
    %1669 = arith.mulf %1650, %1668 : vector<8x8xf32>
    %1670 = arith.addf %1623, %1669 : vector<8x8xf32>
    %c20_932 = arith.constant 20 : index
    %c5_933 = arith.constant 5 : index
    %1671 = memref.load %arg7[%c20_932, %c5_933] : memref<32x8xf32, #tpu.memory_space<smem>>
    %1672 = vector.broadcast %1671 : f32 to vector<8x8xf32>
    %1673 = arith.mulf %1650, %1672 : vector<8x8xf32>
    %1674 = arith.addf %1627, %1673 : vector<8x8xf32>
    %c20_934 = arith.constant 20 : index
    %c6_935 = arith.constant 6 : index
    %1675 = memref.load %arg7[%c20_934, %c6_935] : memref<32x8xf32, #tpu.memory_space<smem>>
    %1676 = vector.broadcast %1675 : f32 to vector<8x8xf32>
    %1677 = arith.mulf %1650, %1676 : vector<8x8xf32>
    %1678 = arith.addf %1631, %1677 : vector<8x8xf32>
    %c20_936 = arith.constant 20 : index
    %c7_937 = arith.constant 7 : index
    %1679 = memref.load %arg7[%c20_936, %c7_937] : memref<32x8xf32, #tpu.memory_space<smem>>
    %1680 = vector.broadcast %1679 : f32 to vector<8x8xf32>
    %1681 = arith.mulf %1650, %1680 : vector<8x8xf32>
    %1682 = arith.addf %1635, %1681 : vector<8x8xf32>
    %c20_938 = arith.constant 20 : index
    %c0_939 = arith.constant 0 : index
    %1683 = memref.load %arg11[%c20_938, %c0_939] : memref<32x2xf32, #tpu.memory_space<smem>>
    %1684 = vector.broadcast %1683 : f32 to vector<8x8xf32>
    %1685 = arith.mulf %1650, %1684 : vector<8x8xf32>
    %1686 = arith.addf %1639, %1685 : vector<8x8xf32>
    %c20_940 = arith.constant 20 : index
    %c1_941 = arith.constant 1 : index
    %1687 = memref.load %arg11[%c20_940, %c1_941] : memref<32x2xf32, #tpu.memory_space<smem>>
    %1688 = vector.broadcast %1687 : f32 to vector<8x8xf32>
    %1689 = arith.mulf %1650, %1688 : vector<8x8xf32>
    %1690 = arith.addf %1643, %1689 : vector<8x8xf32>
    %c21_942 = arith.constant 21 : index
    %c0_943 = arith.constant 0 : index
    %c0_944 = arith.constant 0 : index
    %c0_945 = arith.constant 0 : index
    %1691 = vector.load %arg1[%c21_942, %c0_943, %c0_944, %c0_945] : memref<32x8x8x8xf32, #tpu.memory_space<vmem>>, vector<1x8x8x8xf32>
    %1692 = vector.shape_cast %1691 : vector<1x8x8x8xf32> to vector<8x8x8xf32>
    %1693 = arith.mulf %682, %1692 : vector<8x8x8xf32>
    %cst_946 = arith.constant dense<0.000000e+00> : vector<8x8xf32>
    %1694 = vector.multi_reduction <add>, %1693, %cst_946 [0] : vector<8x8x8xf32> to vector<8x8xf32>
    %c21_947 = arith.constant 21 : index
    %c0_948 = arith.constant 0 : index
    %c0_949 = arith.constant 0 : index
    %1695 = vector.load %arg3[%c21_947, %c0_948, %c0_949] : memref<32x8x8xf32, #tpu.memory_space<vmem>>, vector<1x8x8xf32>
    %1696 = vector.shape_cast %1695 : vector<1x8x8xf32> to vector<8x8xf32>
    %1697 = arith.select %685, %1696, %1694 : vector<8x8xi1>, vector<8x8xf32>
    %c21_950 = arith.constant 21 : index
    %c0_951 = arith.constant 0 : index
    %1698 = memref.load %arg7[%c21_950, %c0_951] : memref<32x8xf32, #tpu.memory_space<smem>>
    %1699 = vector.broadcast %1698 : f32 to vector<8x8xf32>
    %1700 = arith.mulf %1697, %1699 : vector<8x8xf32>
    %1701 = arith.addf %1654, %1700 : vector<8x8xf32>
    %c21_952 = arith.constant 21 : index
    %c1_953 = arith.constant 1 : index
    %1702 = memref.load %arg7[%c21_952, %c1_953] : memref<32x8xf32, #tpu.memory_space<smem>>
    %1703 = vector.broadcast %1702 : f32 to vector<8x8xf32>
    %1704 = arith.mulf %1697, %1703 : vector<8x8xf32>
    %1705 = arith.addf %1658, %1704 : vector<8x8xf32>
    %c21_954 = arith.constant 21 : index
    %c2_955 = arith.constant 2 : index
    %1706 = memref.load %arg7[%c21_954, %c2_955] : memref<32x8xf32, #tpu.memory_space<smem>>
    %1707 = vector.broadcast %1706 : f32 to vector<8x8xf32>
    %1708 = arith.mulf %1697, %1707 : vector<8x8xf32>
    %1709 = arith.addf %1662, %1708 : vector<8x8xf32>
    %c21_956 = arith.constant 21 : index
    %c3_957 = arith.constant 3 : index
    %1710 = memref.load %arg7[%c21_956, %c3_957] : memref<32x8xf32, #tpu.memory_space<smem>>
    %1711 = vector.broadcast %1710 : f32 to vector<8x8xf32>
    %1712 = arith.mulf %1697, %1711 : vector<8x8xf32>
    %1713 = arith.addf %1666, %1712 : vector<8x8xf32>
    %c21_958 = arith.constant 21 : index
    %c4_959 = arith.constant 4 : index
    %1714 = memref.load %arg7[%c21_958, %c4_959] : memref<32x8xf32, #tpu.memory_space<smem>>
    %1715 = vector.broadcast %1714 : f32 to vector<8x8xf32>
    %1716 = arith.mulf %1697, %1715 : vector<8x8xf32>
    %1717 = arith.addf %1670, %1716 : vector<8x8xf32>
    %c21_960 = arith.constant 21 : index
    %c5_961 = arith.constant 5 : index
    %1718 = memref.load %arg7[%c21_960, %c5_961] : memref<32x8xf32, #tpu.memory_space<smem>>
    %1719 = vector.broadcast %1718 : f32 to vector<8x8xf32>
    %1720 = arith.mulf %1697, %1719 : vector<8x8xf32>
    %1721 = arith.addf %1674, %1720 : vector<8x8xf32>
    %c21_962 = arith.constant 21 : index
    %c6_963 = arith.constant 6 : index
    %1722 = memref.load %arg7[%c21_962, %c6_963] : memref<32x8xf32, #tpu.memory_space<smem>>
    %1723 = vector.broadcast %1722 : f32 to vector<8x8xf32>
    %1724 = arith.mulf %1697, %1723 : vector<8x8xf32>
    %1725 = arith.addf %1678, %1724 : vector<8x8xf32>
    %c21_964 = arith.constant 21 : index
    %c7_965 = arith.constant 7 : index
    %1726 = memref.load %arg7[%c21_964, %c7_965] : memref<32x8xf32, #tpu.memory_space<smem>>
    %1727 = vector.broadcast %1726 : f32 to vector<8x8xf32>
    %1728 = arith.mulf %1697, %1727 : vector<8x8xf32>
    %1729 = arith.addf %1682, %1728 : vector<8x8xf32>
    %c21_966 = arith.constant 21 : index
    %c0_967 = arith.constant 0 : index
    %1730 = memref.load %arg11[%c21_966, %c0_967] : memref<32x2xf32, #tpu.memory_space<smem>>
    %1731 = vector.broadcast %1730 : f32 to vector<8x8xf32>
    %1732 = arith.mulf %1697, %1731 : vector<8x8xf32>
    %1733 = arith.addf %1686, %1732 : vector<8x8xf32>
    %c21_968 = arith.constant 21 : index
    %c1_969 = arith.constant 1 : index
    %1734 = memref.load %arg11[%c21_968, %c1_969] : memref<32x2xf32, #tpu.memory_space<smem>>
    %1735 = vector.broadcast %1734 : f32 to vector<8x8xf32>
    %1736 = arith.mulf %1697, %1735 : vector<8x8xf32>
    %1737 = arith.addf %1690, %1736 : vector<8x8xf32>
    %c22_970 = arith.constant 22 : index
    %c0_971 = arith.constant 0 : index
    %c0_972 = arith.constant 0 : index
    %c0_973 = arith.constant 0 : index
    %1738 = vector.load %arg1[%c22_970, %c0_971, %c0_972, %c0_973] : memref<32x8x8x8xf32, #tpu.memory_space<vmem>>, vector<1x8x8x8xf32>
    %1739 = vector.shape_cast %1738 : vector<1x8x8x8xf32> to vector<8x8x8xf32>
    %1740 = arith.mulf %682, %1739 : vector<8x8x8xf32>
    %cst_974 = arith.constant dense<0.000000e+00> : vector<8x8xf32>
    %1741 = vector.multi_reduction <add>, %1740, %cst_974 [0] : vector<8x8x8xf32> to vector<8x8xf32>
    %c22_975 = arith.constant 22 : index
    %c0_976 = arith.constant 0 : index
    %c0_977 = arith.constant 0 : index
    %1742 = vector.load %arg3[%c22_975, %c0_976, %c0_977] : memref<32x8x8xf32, #tpu.memory_space<vmem>>, vector<1x8x8xf32>
    %1743 = vector.shape_cast %1742 : vector<1x8x8xf32> to vector<8x8xf32>
    %1744 = arith.select %685, %1743, %1741 : vector<8x8xi1>, vector<8x8xf32>
    %c22_978 = arith.constant 22 : index
    %c0_979 = arith.constant 0 : index
    %1745 = memref.load %arg7[%c22_978, %c0_979] : memref<32x8xf32, #tpu.memory_space<smem>>
    %1746 = vector.broadcast %1745 : f32 to vector<8x8xf32>
    %1747 = arith.mulf %1744, %1746 : vector<8x8xf32>
    %1748 = arith.addf %1701, %1747 : vector<8x8xf32>
    %c22_980 = arith.constant 22 : index
    %c1_981 = arith.constant 1 : index
    %1749 = memref.load %arg7[%c22_980, %c1_981] : memref<32x8xf32, #tpu.memory_space<smem>>
    %1750 = vector.broadcast %1749 : f32 to vector<8x8xf32>
    %1751 = arith.mulf %1744, %1750 : vector<8x8xf32>
    %1752 = arith.addf %1705, %1751 : vector<8x8xf32>
    %c22_982 = arith.constant 22 : index
    %c2_983 = arith.constant 2 : index
    %1753 = memref.load %arg7[%c22_982, %c2_983] : memref<32x8xf32, #tpu.memory_space<smem>>
    %1754 = vector.broadcast %1753 : f32 to vector<8x8xf32>
    %1755 = arith.mulf %1744, %1754 : vector<8x8xf32>
    %1756 = arith.addf %1709, %1755 : vector<8x8xf32>
    %c22_984 = arith.constant 22 : index
    %c3_985 = arith.constant 3 : index
    %1757 = memref.load %arg7[%c22_984, %c3_985] : memref<32x8xf32, #tpu.memory_space<smem>>
    %1758 = vector.broadcast %1757 : f32 to vector<8x8xf32>
    %1759 = arith.mulf %1744, %1758 : vector<8x8xf32>
    %1760 = arith.addf %1713, %1759 : vector<8x8xf32>
    %c22_986 = arith.constant 22 : index
    %c4_987 = arith.constant 4 : index
    %1761 = memref.load %arg7[%c22_986, %c4_987] : memref<32x8xf32, #tpu.memory_space<smem>>
    %1762 = vector.broadcast %1761 : f32 to vector<8x8xf32>
    %1763 = arith.mulf %1744, %1762 : vector<8x8xf32>
    %1764 = arith.addf %1717, %1763 : vector<8x8xf32>
    %c22_988 = arith.constant 22 : index
    %c5_989 = arith.constant 5 : index
    %1765 = memref.load %arg7[%c22_988, %c5_989] : memref<32x8xf32, #tpu.memory_space<smem>>
    %1766 = vector.broadcast %1765 : f32 to vector<8x8xf32>
    %1767 = arith.mulf %1744, %1766 : vector<8x8xf32>
    %1768 = arith.addf %1721, %1767 : vector<8x8xf32>
    %c22_990 = arith.constant 22 : index
    %c6_991 = arith.constant 6 : index
    %1769 = memref.load %arg7[%c22_990, %c6_991] : memref<32x8xf32, #tpu.memory_space<smem>>
    %1770 = vector.broadcast %1769 : f32 to vector<8x8xf32>
    %1771 = arith.mulf %1744, %1770 : vector<8x8xf32>
    %1772 = arith.addf %1725, %1771 : vector<8x8xf32>
    %c22_992 = arith.constant 22 : index
    %c7_993 = arith.constant 7 : index
    %1773 = memref.load %arg7[%c22_992, %c7_993] : memref<32x8xf32, #tpu.memory_space<smem>>
    %1774 = vector.broadcast %1773 : f32 to vector<8x8xf32>
    %1775 = arith.mulf %1744, %1774 : vector<8x8xf32>
    %1776 = arith.addf %1729, %1775 : vector<8x8xf32>
    %c22_994 = arith.constant 22 : index
    %c0_995 = arith.constant 0 : index
    %1777 = memref.load %arg11[%c22_994, %c0_995] : memref<32x2xf32, #tpu.memory_space<smem>>
    %1778 = vector.broadcast %1777 : f32 to vector<8x8xf32>
    %1779 = arith.mulf %1744, %1778 : vector<8x8xf32>
    %1780 = arith.addf %1733, %1779 : vector<8x8xf32>
    %c22_996 = arith.constant 22 : index
    %c1_997 = arith.constant 1 : index
    %1781 = memref.load %arg11[%c22_996, %c1_997] : memref<32x2xf32, #tpu.memory_space<smem>>
    %1782 = vector.broadcast %1781 : f32 to vector<8x8xf32>
    %1783 = arith.mulf %1744, %1782 : vector<8x8xf32>
    %1784 = arith.addf %1737, %1783 : vector<8x8xf32>
    %c23_998 = arith.constant 23 : index
    %c0_999 = arith.constant 0 : index
    %c0_1000 = arith.constant 0 : index
    %c0_1001 = arith.constant 0 : index
    %1785 = vector.load %arg1[%c23_998, %c0_999, %c0_1000, %c0_1001] : memref<32x8x8x8xf32, #tpu.memory_space<vmem>>, vector<1x8x8x8xf32>
    %1786 = vector.shape_cast %1785 : vector<1x8x8x8xf32> to vector<8x8x8xf32>
    %1787 = arith.mulf %682, %1786 : vector<8x8x8xf32>
    %cst_1002 = arith.constant dense<0.000000e+00> : vector<8x8xf32>
    %1788 = vector.multi_reduction <add>, %1787, %cst_1002 [0] : vector<8x8x8xf32> to vector<8x8xf32>
    %c23_1003 = arith.constant 23 : index
    %c0_1004 = arith.constant 0 : index
    %c0_1005 = arith.constant 0 : index
    %1789 = vector.load %arg3[%c23_1003, %c0_1004, %c0_1005] : memref<32x8x8xf32, #tpu.memory_space<vmem>>, vector<1x8x8xf32>
    %1790 = vector.shape_cast %1789 : vector<1x8x8xf32> to vector<8x8xf32>
    %1791 = arith.select %685, %1790, %1788 : vector<8x8xi1>, vector<8x8xf32>
    %c23_1006 = arith.constant 23 : index
    %c0_1007 = arith.constant 0 : index
    %1792 = memref.load %arg7[%c23_1006, %c0_1007] : memref<32x8xf32, #tpu.memory_space<smem>>
    %1793 = vector.broadcast %1792 : f32 to vector<8x8xf32>
    %1794 = arith.mulf %1791, %1793 : vector<8x8xf32>
    %1795 = arith.addf %1748, %1794 : vector<8x8xf32>
    %c23_1008 = arith.constant 23 : index
    %c1_1009 = arith.constant 1 : index
    %1796 = memref.load %arg7[%c23_1008, %c1_1009] : memref<32x8xf32, #tpu.memory_space<smem>>
    %1797 = vector.broadcast %1796 : f32 to vector<8x8xf32>
    %1798 = arith.mulf %1791, %1797 : vector<8x8xf32>
    %1799 = arith.addf %1752, %1798 : vector<8x8xf32>
    %c23_1010 = arith.constant 23 : index
    %c2_1011 = arith.constant 2 : index
    %1800 = memref.load %arg7[%c23_1010, %c2_1011] : memref<32x8xf32, #tpu.memory_space<smem>>
    %1801 = vector.broadcast %1800 : f32 to vector<8x8xf32>
    %1802 = arith.mulf %1791, %1801 : vector<8x8xf32>
    %1803 = arith.addf %1756, %1802 : vector<8x8xf32>
    %c23_1012 = arith.constant 23 : index
    %c3_1013 = arith.constant 3 : index
    %1804 = memref.load %arg7[%c23_1012, %c3_1013] : memref<32x8xf32, #tpu.memory_space<smem>>
    %1805 = vector.broadcast %1804 : f32 to vector<8x8xf32>
    %1806 = arith.mulf %1791, %1805 : vector<8x8xf32>
    %1807 = arith.addf %1760, %1806 : vector<8x8xf32>
    %c23_1014 = arith.constant 23 : index
    %c4_1015 = arith.constant 4 : index
    %1808 = memref.load %arg7[%c23_1014, %c4_1015] : memref<32x8xf32, #tpu.memory_space<smem>>
    %1809 = vector.broadcast %1808 : f32 to vector<8x8xf32>
    %1810 = arith.mulf %1791, %1809 : vector<8x8xf32>
    %1811 = arith.addf %1764, %1810 : vector<8x8xf32>
    %c23_1016 = arith.constant 23 : index
    %c5_1017 = arith.constant 5 : index
    %1812 = memref.load %arg7[%c23_1016, %c5_1017] : memref<32x8xf32, #tpu.memory_space<smem>>
    %1813 = vector.broadcast %1812 : f32 to vector<8x8xf32>
    %1814 = arith.mulf %1791, %1813 : vector<8x8xf32>
    %1815 = arith.addf %1768, %1814 : vector<8x8xf32>
    %c23_1018 = arith.constant 23 : index
    %c6_1019 = arith.constant 6 : index
    %1816 = memref.load %arg7[%c23_1018, %c6_1019] : memref<32x8xf32, #tpu.memory_space<smem>>
    %1817 = vector.broadcast %1816 : f32 to vector<8x8xf32>
    %1818 = arith.mulf %1791, %1817 : vector<8x8xf32>
    %1819 = arith.addf %1772, %1818 : vector<8x8xf32>
    %c23_1020 = arith.constant 23 : index
    %c7_1021 = arith.constant 7 : index
    %1820 = memref.load %arg7[%c23_1020, %c7_1021] : memref<32x8xf32, #tpu.memory_space<smem>>
    %1821 = vector.broadcast %1820 : f32 to vector<8x8xf32>
    %1822 = arith.mulf %1791, %1821 : vector<8x8xf32>
    %1823 = arith.addf %1776, %1822 : vector<8x8xf32>
    %c23_1022 = arith.constant 23 : index
    %c0_1023 = arith.constant 0 : index
    %1824 = memref.load %arg11[%c23_1022, %c0_1023] : memref<32x2xf32, #tpu.memory_space<smem>>
    %1825 = vector.broadcast %1824 : f32 to vector<8x8xf32>
    %1826 = arith.mulf %1791, %1825 : vector<8x8xf32>
    %1827 = arith.addf %1780, %1826 : vector<8x8xf32>
    %c23_1024 = arith.constant 23 : index
    %c1_1025 = arith.constant 1 : index
    %1828 = memref.load %arg11[%c23_1024, %c1_1025] : memref<32x2xf32, #tpu.memory_space<smem>>
    %1829 = vector.broadcast %1828 : f32 to vector<8x8xf32>
    %1830 = arith.mulf %1791, %1829 : vector<8x8xf32>
    %1831 = arith.addf %1784, %1830 : vector<8x8xf32>
    %c24_1026 = arith.constant 24 : index
    %c0_1027 = arith.constant 0 : index
    %c0_1028 = arith.constant 0 : index
    %c0_1029 = arith.constant 0 : index
    %1832 = vector.load %arg1[%c24_1026, %c0_1027, %c0_1028, %c0_1029] : memref<32x8x8x8xf32, #tpu.memory_space<vmem>>, vector<1x8x8x8xf32>
    %1833 = vector.shape_cast %1832 : vector<1x8x8x8xf32> to vector<8x8x8xf32>
    %1834 = arith.mulf %682, %1833 : vector<8x8x8xf32>
    %cst_1030 = arith.constant dense<0.000000e+00> : vector<8x8xf32>
    %1835 = vector.multi_reduction <add>, %1834, %cst_1030 [0] : vector<8x8x8xf32> to vector<8x8xf32>
    %c24_1031 = arith.constant 24 : index
    %c0_1032 = arith.constant 0 : index
    %c0_1033 = arith.constant 0 : index
    %1836 = vector.load %arg3[%c24_1031, %c0_1032, %c0_1033] : memref<32x8x8xf32, #tpu.memory_space<vmem>>, vector<1x8x8xf32>
    %1837 = vector.shape_cast %1836 : vector<1x8x8xf32> to vector<8x8xf32>
    %1838 = arith.select %685, %1837, %1835 : vector<8x8xi1>, vector<8x8xf32>
    %c24_1034 = arith.constant 24 : index
    %c0_1035 = arith.constant 0 : index
    %1839 = memref.load %arg7[%c24_1034, %c0_1035] : memref<32x8xf32, #tpu.memory_space<smem>>
    %1840 = vector.broadcast %1839 : f32 to vector<8x8xf32>
    %1841 = arith.mulf %1838, %1840 : vector<8x8xf32>
    %1842 = arith.addf %1795, %1841 : vector<8x8xf32>
    %c24_1036 = arith.constant 24 : index
    %c1_1037 = arith.constant 1 : index
    %1843 = memref.load %arg7[%c24_1036, %c1_1037] : memref<32x8xf32, #tpu.memory_space<smem>>
    %1844 = vector.broadcast %1843 : f32 to vector<8x8xf32>
    %1845 = arith.mulf %1838, %1844 : vector<8x8xf32>
    %1846 = arith.addf %1799, %1845 : vector<8x8xf32>
    %c24_1038 = arith.constant 24 : index
    %c2_1039 = arith.constant 2 : index
    %1847 = memref.load %arg7[%c24_1038, %c2_1039] : memref<32x8xf32, #tpu.memory_space<smem>>
    %1848 = vector.broadcast %1847 : f32 to vector<8x8xf32>
    %1849 = arith.mulf %1838, %1848 : vector<8x8xf32>
    %1850 = arith.addf %1803, %1849 : vector<8x8xf32>
    %c24_1040 = arith.constant 24 : index
    %c3_1041 = arith.constant 3 : index
    %1851 = memref.load %arg7[%c24_1040, %c3_1041] : memref<32x8xf32, #tpu.memory_space<smem>>
    %1852 = vector.broadcast %1851 : f32 to vector<8x8xf32>
    %1853 = arith.mulf %1838, %1852 : vector<8x8xf32>
    %1854 = arith.addf %1807, %1853 : vector<8x8xf32>
    %c24_1042 = arith.constant 24 : index
    %c4_1043 = arith.constant 4 : index
    %1855 = memref.load %arg7[%c24_1042, %c4_1043] : memref<32x8xf32, #tpu.memory_space<smem>>
    %1856 = vector.broadcast %1855 : f32 to vector<8x8xf32>
    %1857 = arith.mulf %1838, %1856 : vector<8x8xf32>
    %1858 = arith.addf %1811, %1857 : vector<8x8xf32>
    %c24_1044 = arith.constant 24 : index
    %c5_1045 = arith.constant 5 : index
    %1859 = memref.load %arg7[%c24_1044, %c5_1045] : memref<32x8xf32, #tpu.memory_space<smem>>
    %1860 = vector.broadcast %1859 : f32 to vector<8x8xf32>
    %1861 = arith.mulf %1838, %1860 : vector<8x8xf32>
    %1862 = arith.addf %1815, %1861 : vector<8x8xf32>
    %c24_1046 = arith.constant 24 : index
    %c6_1047 = arith.constant 6 : index
    %1863 = memref.load %arg7[%c24_1046, %c6_1047] : memref<32x8xf32, #tpu.memory_space<smem>>
    %1864 = vector.broadcast %1863 : f32 to vector<8x8xf32>
    %1865 = arith.mulf %1838, %1864 : vector<8x8xf32>
    %1866 = arith.addf %1819, %1865 : vector<8x8xf32>
    %c24_1048 = arith.constant 24 : index
    %c7_1049 = arith.constant 7 : index
    %1867 = memref.load %arg7[%c24_1048, %c7_1049] : memref<32x8xf32, #tpu.memory_space<smem>>
    %1868 = vector.broadcast %1867 : f32 to vector<8x8xf32>
    %1869 = arith.mulf %1838, %1868 : vector<8x8xf32>
    %1870 = arith.addf %1823, %1869 : vector<8x8xf32>
    %c24_1050 = arith.constant 24 : index
    %c0_1051 = arith.constant 0 : index
    %1871 = memref.load %arg11[%c24_1050, %c0_1051] : memref<32x2xf32, #tpu.memory_space<smem>>
    %1872 = vector.broadcast %1871 : f32 to vector<8x8xf32>
    %1873 = arith.mulf %1838, %1872 : vector<8x8xf32>
    %1874 = arith.addf %1827, %1873 : vector<8x8xf32>
    %c24_1052 = arith.constant 24 : index
    %c1_1053 = arith.constant 1 : index
    %1875 = memref.load %arg11[%c24_1052, %c1_1053] : memref<32x2xf32, #tpu.memory_space<smem>>
    %1876 = vector.broadcast %1875 : f32 to vector<8x8xf32>
    %1877 = arith.mulf %1838, %1876 : vector<8x8xf32>
    %1878 = arith.addf %1831, %1877 : vector<8x8xf32>
    %c25_1054 = arith.constant 25 : index
    %c0_1055 = arith.constant 0 : index
    %c0_1056 = arith.constant 0 : index
    %c0_1057 = arith.constant 0 : index
    %1879 = vector.load %arg1[%c25_1054, %c0_1055, %c0_1056, %c0_1057] : memref<32x8x8x8xf32, #tpu.memory_space<vmem>>, vector<1x8x8x8xf32>
    %1880 = vector.shape_cast %1879 : vector<1x8x8x8xf32> to vector<8x8x8xf32>
    %1881 = arith.mulf %682, %1880 : vector<8x8x8xf32>
    %cst_1058 = arith.constant dense<0.000000e+00> : vector<8x8xf32>
    %1882 = vector.multi_reduction <add>, %1881, %cst_1058 [0] : vector<8x8x8xf32> to vector<8x8xf32>
    %c25_1059 = arith.constant 25 : index
    %c0_1060 = arith.constant 0 : index
    %c0_1061 = arith.constant 0 : index
    %1883 = vector.load %arg3[%c25_1059, %c0_1060, %c0_1061] : memref<32x8x8xf32, #tpu.memory_space<vmem>>, vector<1x8x8xf32>
    %1884 = vector.shape_cast %1883 : vector<1x8x8xf32> to vector<8x8xf32>
    %1885 = arith.select %685, %1884, %1882 : vector<8x8xi1>, vector<8x8xf32>
    %c25_1062 = arith.constant 25 : index
    %c0_1063 = arith.constant 0 : index
    %1886 = memref.load %arg7[%c25_1062, %c0_1063] : memref<32x8xf32, #tpu.memory_space<smem>>
    %1887 = vector.broadcast %1886 : f32 to vector<8x8xf32>
    %1888 = arith.mulf %1885, %1887 : vector<8x8xf32>
    %1889 = arith.addf %1842, %1888 : vector<8x8xf32>
    %c25_1064 = arith.constant 25 : index
    %c1_1065 = arith.constant 1 : index
    %1890 = memref.load %arg7[%c25_1064, %c1_1065] : memref<32x8xf32, #tpu.memory_space<smem>>
    %1891 = vector.broadcast %1890 : f32 to vector<8x8xf32>
    %1892 = arith.mulf %1885, %1891 : vector<8x8xf32>
    %1893 = arith.addf %1846, %1892 : vector<8x8xf32>
    %c25_1066 = arith.constant 25 : index
    %c2_1067 = arith.constant 2 : index
    %1894 = memref.load %arg7[%c25_1066, %c2_1067] : memref<32x8xf32, #tpu.memory_space<smem>>
    %1895 = vector.broadcast %1894 : f32 to vector<8x8xf32>
    %1896 = arith.mulf %1885, %1895 : vector<8x8xf32>
    %1897 = arith.addf %1850, %1896 : vector<8x8xf32>
    %c25_1068 = arith.constant 25 : index
    %c3_1069 = arith.constant 3 : index
    %1898 = memref.load %arg7[%c25_1068, %c3_1069] : memref<32x8xf32, #tpu.memory_space<smem>>
    %1899 = vector.broadcast %1898 : f32 to vector<8x8xf32>
    %1900 = arith.mulf %1885, %1899 : vector<8x8xf32>
    %1901 = arith.addf %1854, %1900 : vector<8x8xf32>
    %c25_1070 = arith.constant 25 : index
    %c4_1071 = arith.constant 4 : index
    %1902 = memref.load %arg7[%c25_1070, %c4_1071] : memref<32x8xf32, #tpu.memory_space<smem>>
    %1903 = vector.broadcast %1902 : f32 to vector<8x8xf32>
    %1904 = arith.mulf %1885, %1903 : vector<8x8xf32>
    %1905 = arith.addf %1858, %1904 : vector<8x8xf32>
    %c25_1072 = arith.constant 25 : index
    %c5_1073 = arith.constant 5 : index
    %1906 = memref.load %arg7[%c25_1072, %c5_1073] : memref<32x8xf32, #tpu.memory_space<smem>>
    %1907 = vector.broadcast %1906 : f32 to vector<8x8xf32>
    %1908 = arith.mulf %1885, %1907 : vector<8x8xf32>
    %1909 = arith.addf %1862, %1908 : vector<8x8xf32>
    %c25_1074 = arith.constant 25 : index
    %c6_1075 = arith.constant 6 : index
    %1910 = memref.load %arg7[%c25_1074, %c6_1075] : memref<32x8xf32, #tpu.memory_space<smem>>
    %1911 = vector.broadcast %1910 : f32 to vector<8x8xf32>
    %1912 = arith.mulf %1885, %1911 : vector<8x8xf32>
    %1913 = arith.addf %1866, %1912 : vector<8x8xf32>
    %c25_1076 = arith.constant 25 : index
    %c7_1077 = arith.constant 7 : index
    %1914 = memref.load %arg7[%c25_1076, %c7_1077] : memref<32x8xf32, #tpu.memory_space<smem>>
    %1915 = vector.broadcast %1914 : f32 to vector<8x8xf32>
    %1916 = arith.mulf %1885, %1915 : vector<8x8xf32>
    %1917 = arith.addf %1870, %1916 : vector<8x8xf32>
    %c25_1078 = arith.constant 25 : index
    %c0_1079 = arith.constant 0 : index
    %1918 = memref.load %arg11[%c25_1078, %c0_1079] : memref<32x2xf32, #tpu.memory_space<smem>>
    %1919 = vector.broadcast %1918 : f32 to vector<8x8xf32>
    %1920 = arith.mulf %1885, %1919 : vector<8x8xf32>
    %1921 = arith.addf %1874, %1920 : vector<8x8xf32>
    %c25_1080 = arith.constant 25 : index
    %c1_1081 = arith.constant 1 : index
    %1922 = memref.load %arg11[%c25_1080, %c1_1081] : memref<32x2xf32, #tpu.memory_space<smem>>
    %1923 = vector.broadcast %1922 : f32 to vector<8x8xf32>
    %1924 = arith.mulf %1885, %1923 : vector<8x8xf32>
    %1925 = arith.addf %1878, %1924 : vector<8x8xf32>
    %c26_1082 = arith.constant 26 : index
    %c0_1083 = arith.constant 0 : index
    %c0_1084 = arith.constant 0 : index
    %c0_1085 = arith.constant 0 : index
    %1926 = vector.load %arg1[%c26_1082, %c0_1083, %c0_1084, %c0_1085] : memref<32x8x8x8xf32, #tpu.memory_space<vmem>>, vector<1x8x8x8xf32>
    %1927 = vector.shape_cast %1926 : vector<1x8x8x8xf32> to vector<8x8x8xf32>
    %1928 = arith.mulf %682, %1927 : vector<8x8x8xf32>
    %cst_1086 = arith.constant dense<0.000000e+00> : vector<8x8xf32>
    %1929 = vector.multi_reduction <add>, %1928, %cst_1086 [0] : vector<8x8x8xf32> to vector<8x8xf32>
    %c26_1087 = arith.constant 26 : index
    %c0_1088 = arith.constant 0 : index
    %c0_1089 = arith.constant 0 : index
    %1930 = vector.load %arg3[%c26_1087, %c0_1088, %c0_1089] : memref<32x8x8xf32, #tpu.memory_space<vmem>>, vector<1x8x8xf32>
    %1931 = vector.shape_cast %1930 : vector<1x8x8xf32> to vector<8x8xf32>
    %1932 = arith.select %685, %1931, %1929 : vector<8x8xi1>, vector<8x8xf32>
    %c26_1090 = arith.constant 26 : index
    %c0_1091 = arith.constant 0 : index
    %1933 = memref.load %arg7[%c26_1090, %c0_1091] : memref<32x8xf32, #tpu.memory_space<smem>>
    %1934 = vector.broadcast %1933 : f32 to vector<8x8xf32>
    %1935 = arith.mulf %1932, %1934 : vector<8x8xf32>
    %1936 = arith.addf %1889, %1935 : vector<8x8xf32>
    %c26_1092 = arith.constant 26 : index
    %c1_1093 = arith.constant 1 : index
    %1937 = memref.load %arg7[%c26_1092, %c1_1093] : memref<32x8xf32, #tpu.memory_space<smem>>
    %1938 = vector.broadcast %1937 : f32 to vector<8x8xf32>
    %1939 = arith.mulf %1932, %1938 : vector<8x8xf32>
    %1940 = arith.addf %1893, %1939 : vector<8x8xf32>
    %c26_1094 = arith.constant 26 : index
    %c2_1095 = arith.constant 2 : index
    %1941 = memref.load %arg7[%c26_1094, %c2_1095] : memref<32x8xf32, #tpu.memory_space<smem>>
    %1942 = vector.broadcast %1941 : f32 to vector<8x8xf32>
    %1943 = arith.mulf %1932, %1942 : vector<8x8xf32>
    %1944 = arith.addf %1897, %1943 : vector<8x8xf32>
    %c26_1096 = arith.constant 26 : index
    %c3_1097 = arith.constant 3 : index
    %1945 = memref.load %arg7[%c26_1096, %c3_1097] : memref<32x8xf32, #tpu.memory_space<smem>>
    %1946 = vector.broadcast %1945 : f32 to vector<8x8xf32>
    %1947 = arith.mulf %1932, %1946 : vector<8x8xf32>
    %1948 = arith.addf %1901, %1947 : vector<8x8xf32>
    %c26_1098 = arith.constant 26 : index
    %c4_1099 = arith.constant 4 : index
    %1949 = memref.load %arg7[%c26_1098, %c4_1099] : memref<32x8xf32, #tpu.memory_space<smem>>
    %1950 = vector.broadcast %1949 : f32 to vector<8x8xf32>
    %1951 = arith.mulf %1932, %1950 : vector<8x8xf32>
    %1952 = arith.addf %1905, %1951 : vector<8x8xf32>
    %c26_1100 = arith.constant 26 : index
    %c5_1101 = arith.constant 5 : index
    %1953 = memref.load %arg7[%c26_1100, %c5_1101] : memref<32x8xf32, #tpu.memory_space<smem>>
    %1954 = vector.broadcast %1953 : f32 to vector<8x8xf32>
    %1955 = arith.mulf %1932, %1954 : vector<8x8xf32>
    %1956 = arith.addf %1909, %1955 : vector<8x8xf32>
    %c26_1102 = arith.constant 26 : index
    %c6_1103 = arith.constant 6 : index
    %1957 = memref.load %arg7[%c26_1102, %c6_1103] : memref<32x8xf32, #tpu.memory_space<smem>>
    %1958 = vector.broadcast %1957 : f32 to vector<8x8xf32>
    %1959 = arith.mulf %1932, %1958 : vector<8x8xf32>
    %1960 = arith.addf %1913, %1959 : vector<8x8xf32>
    %c26_1104 = arith.constant 26 : index
    %c7_1105 = arith.constant 7 : index
    %1961 = memref.load %arg7[%c26_1104, %c7_1105] : memref<32x8xf32, #tpu.memory_space<smem>>
    %1962 = vector.broadcast %1961 : f32 to vector<8x8xf32>
    %1963 = arith.mulf %1932, %1962 : vector<8x8xf32>
    %1964 = arith.addf %1917, %1963 : vector<8x8xf32>
    %c26_1106 = arith.constant 26 : index
    %c0_1107 = arith.constant 0 : index
    %1965 = memref.load %arg11[%c26_1106, %c0_1107] : memref<32x2xf32, #tpu.memory_space<smem>>
    %1966 = vector.broadcast %1965 : f32 to vector<8x8xf32>
    %1967 = arith.mulf %1932, %1966 : vector<8x8xf32>
    %1968 = arith.addf %1921, %1967 : vector<8x8xf32>
    %c26_1108 = arith.constant 26 : index
    %c1_1109 = arith.constant 1 : index
    %1969 = memref.load %arg11[%c26_1108, %c1_1109] : memref<32x2xf32, #tpu.memory_space<smem>>
    %1970 = vector.broadcast %1969 : f32 to vector<8x8xf32>
    %1971 = arith.mulf %1932, %1970 : vector<8x8xf32>
    %1972 = arith.addf %1925, %1971 : vector<8x8xf32>
    %c27_1110 = arith.constant 27 : index
    %c0_1111 = arith.constant 0 : index
    %c0_1112 = arith.constant 0 : index
    %c0_1113 = arith.constant 0 : index
    %1973 = vector.load %arg1[%c27_1110, %c0_1111, %c0_1112, %c0_1113] : memref<32x8x8x8xf32, #tpu.memory_space<vmem>>, vector<1x8x8x8xf32>
    %1974 = vector.shape_cast %1973 : vector<1x8x8x8xf32> to vector<8x8x8xf32>
    %1975 = arith.mulf %682, %1974 : vector<8x8x8xf32>
    %cst_1114 = arith.constant dense<0.000000e+00> : vector<8x8xf32>
    %1976 = vector.multi_reduction <add>, %1975, %cst_1114 [0] : vector<8x8x8xf32> to vector<8x8xf32>
    %c27_1115 = arith.constant 27 : index
    %c0_1116 = arith.constant 0 : index
    %c0_1117 = arith.constant 0 : index
    %1977 = vector.load %arg3[%c27_1115, %c0_1116, %c0_1117] : memref<32x8x8xf32, #tpu.memory_space<vmem>>, vector<1x8x8xf32>
    %1978 = vector.shape_cast %1977 : vector<1x8x8xf32> to vector<8x8xf32>
    %1979 = arith.select %685, %1978, %1976 : vector<8x8xi1>, vector<8x8xf32>
    %c27_1118 = arith.constant 27 : index
    %c0_1119 = arith.constant 0 : index
    %1980 = memref.load %arg7[%c27_1118, %c0_1119] : memref<32x8xf32, #tpu.memory_space<smem>>
    %1981 = vector.broadcast %1980 : f32 to vector<8x8xf32>
    %1982 = arith.mulf %1979, %1981 : vector<8x8xf32>
    %1983 = arith.addf %1936, %1982 : vector<8x8xf32>
    %c27_1120 = arith.constant 27 : index
    %c1_1121 = arith.constant 1 : index
    %1984 = memref.load %arg7[%c27_1120, %c1_1121] : memref<32x8xf32, #tpu.memory_space<smem>>
    %1985 = vector.broadcast %1984 : f32 to vector<8x8xf32>
    %1986 = arith.mulf %1979, %1985 : vector<8x8xf32>
    %1987 = arith.addf %1940, %1986 : vector<8x8xf32>
    %c27_1122 = arith.constant 27 : index
    %c2_1123 = arith.constant 2 : index
    %1988 = memref.load %arg7[%c27_1122, %c2_1123] : memref<32x8xf32, #tpu.memory_space<smem>>
    %1989 = vector.broadcast %1988 : f32 to vector<8x8xf32>
    %1990 = arith.mulf %1979, %1989 : vector<8x8xf32>
    %1991 = arith.addf %1944, %1990 : vector<8x8xf32>
    %c27_1124 = arith.constant 27 : index
    %c3_1125 = arith.constant 3 : index
    %1992 = memref.load %arg7[%c27_1124, %c3_1125] : memref<32x8xf32, #tpu.memory_space<smem>>
    %1993 = vector.broadcast %1992 : f32 to vector<8x8xf32>
    %1994 = arith.mulf %1979, %1993 : vector<8x8xf32>
    %1995 = arith.addf %1948, %1994 : vector<8x8xf32>
    %c27_1126 = arith.constant 27 : index
    %c4_1127 = arith.constant 4 : index
    %1996 = memref.load %arg7[%c27_1126, %c4_1127] : memref<32x8xf32, #tpu.memory_space<smem>>
    %1997 = vector.broadcast %1996 : f32 to vector<8x8xf32>
    %1998 = arith.mulf %1979, %1997 : vector<8x8xf32>
    %1999 = arith.addf %1952, %1998 : vector<8x8xf32>
    %c27_1128 = arith.constant 27 : index
    %c5_1129 = arith.constant 5 : index
    %2000 = memref.load %arg7[%c27_1128, %c5_1129] : memref<32x8xf32, #tpu.memory_space<smem>>
    %2001 = vector.broadcast %2000 : f32 to vector<8x8xf32>
    %2002 = arith.mulf %1979, %2001 : vector<8x8xf32>
    %2003 = arith.addf %1956, %2002 : vector<8x8xf32>
    %c27_1130 = arith.constant 27 : index
    %c6_1131 = arith.constant 6 : index
    %2004 = memref.load %arg7[%c27_1130, %c6_1131] : memref<32x8xf32, #tpu.memory_space<smem>>
    %2005 = vector.broadcast %2004 : f32 to vector<8x8xf32>
    %2006 = arith.mulf %1979, %2005 : vector<8x8xf32>
    %2007 = arith.addf %1960, %2006 : vector<8x8xf32>
    %c27_1132 = arith.constant 27 : index
    %c7_1133 = arith.constant 7 : index
    %2008 = memref.load %arg7[%c27_1132, %c7_1133] : memref<32x8xf32, #tpu.memory_space<smem>>
    %2009 = vector.broadcast %2008 : f32 to vector<8x8xf32>
    %2010 = arith.mulf %1979, %2009 : vector<8x8xf32>
    %2011 = arith.addf %1964, %2010 : vector<8x8xf32>
    %c27_1134 = arith.constant 27 : index
    %c0_1135 = arith.constant 0 : index
    %2012 = memref.load %arg11[%c27_1134, %c0_1135] : memref<32x2xf32, #tpu.memory_space<smem>>
    %2013 = vector.broadcast %2012 : f32 to vector<8x8xf32>
    %2014 = arith.mulf %1979, %2013 : vector<8x8xf32>
    %2015 = arith.addf %1968, %2014 : vector<8x8xf32>
    %c27_1136 = arith.constant 27 : index
    %c1_1137 = arith.constant 1 : index
    %2016 = memref.load %arg11[%c27_1136, %c1_1137] : memref<32x2xf32, #tpu.memory_space<smem>>
    %2017 = vector.broadcast %2016 : f32 to vector<8x8xf32>
    %2018 = arith.mulf %1979, %2017 : vector<8x8xf32>
    %2019 = arith.addf %1972, %2018 : vector<8x8xf32>
    %c28_1138 = arith.constant 28 : index
    %c0_1139 = arith.constant 0 : index
    %c0_1140 = arith.constant 0 : index
    %c0_1141 = arith.constant 0 : index
    %2020 = vector.load %arg1[%c28_1138, %c0_1139, %c0_1140, %c0_1141] : memref<32x8x8x8xf32, #tpu.memory_space<vmem>>, vector<1x8x8x8xf32>
    %2021 = vector.shape_cast %2020 : vector<1x8x8x8xf32> to vector<8x8x8xf32>
    %2022 = arith.mulf %682, %2021 : vector<8x8x8xf32>
    %cst_1142 = arith.constant dense<0.000000e+00> : vector<8x8xf32>
    %2023 = vector.multi_reduction <add>, %2022, %cst_1142 [0] : vector<8x8x8xf32> to vector<8x8xf32>
    %c28_1143 = arith.constant 28 : index
    %c0_1144 = arith.constant 0 : index
    %c0_1145 = arith.constant 0 : index
    %2024 = vector.load %arg3[%c28_1143, %c0_1144, %c0_1145] : memref<32x8x8xf32, #tpu.memory_space<vmem>>, vector<1x8x8xf32>
    %2025 = vector.shape_cast %2024 : vector<1x8x8xf32> to vector<8x8xf32>
    %2026 = arith.select %685, %2025, %2023 : vector<8x8xi1>, vector<8x8xf32>
    %c28_1146 = arith.constant 28 : index
    %c0_1147 = arith.constant 0 : index
    %2027 = memref.load %arg7[%c28_1146, %c0_1147] : memref<32x8xf32, #tpu.memory_space<smem>>
    %2028 = vector.broadcast %2027 : f32 to vector<8x8xf32>
    %2029 = arith.mulf %2026, %2028 : vector<8x8xf32>
    %2030 = arith.addf %1983, %2029 : vector<8x8xf32>
    %c28_1148 = arith.constant 28 : index
    %c1_1149 = arith.constant 1 : index
    %2031 = memref.load %arg7[%c28_1148, %c1_1149] : memref<32x8xf32, #tpu.memory_space<smem>>
    %2032 = vector.broadcast %2031 : f32 to vector<8x8xf32>
    %2033 = arith.mulf %2026, %2032 : vector<8x8xf32>
    %2034 = arith.addf %1987, %2033 : vector<8x8xf32>
    %c28_1150 = arith.constant 28 : index
    %c2_1151 = arith.constant 2 : index
    %2035 = memref.load %arg7[%c28_1150, %c2_1151] : memref<32x8xf32, #tpu.memory_space<smem>>
    %2036 = vector.broadcast %2035 : f32 to vector<8x8xf32>
    %2037 = arith.mulf %2026, %2036 : vector<8x8xf32>
    %2038 = arith.addf %1991, %2037 : vector<8x8xf32>
    %c28_1152 = arith.constant 28 : index
    %c3_1153 = arith.constant 3 : index
    %2039 = memref.load %arg7[%c28_1152, %c3_1153] : memref<32x8xf32, #tpu.memory_space<smem>>
    %2040 = vector.broadcast %2039 : f32 to vector<8x8xf32>
    %2041 = arith.mulf %2026, %2040 : vector<8x8xf32>
    %2042 = arith.addf %1995, %2041 : vector<8x8xf32>
    %c28_1154 = arith.constant 28 : index
    %c4_1155 = arith.constant 4 : index
    %2043 = memref.load %arg7[%c28_1154, %c4_1155] : memref<32x8xf32, #tpu.memory_space<smem>>
    %2044 = vector.broadcast %2043 : f32 to vector<8x8xf32>
    %2045 = arith.mulf %2026, %2044 : vector<8x8xf32>
    %2046 = arith.addf %1999, %2045 : vector<8x8xf32>
    %c28_1156 = arith.constant 28 : index
    %c5_1157 = arith.constant 5 : index
    %2047 = memref.load %arg7[%c28_1156, %c5_1157] : memref<32x8xf32, #tpu.memory_space<smem>>
    %2048 = vector.broadcast %2047 : f32 to vector<8x8xf32>
    %2049 = arith.mulf %2026, %2048 : vector<8x8xf32>
    %2050 = arith.addf %2003, %2049 : vector<8x8xf32>
    %c28_1158 = arith.constant 28 : index
    %c6_1159 = arith.constant 6 : index
    %2051 = memref.load %arg7[%c28_1158, %c6_1159] : memref<32x8xf32, #tpu.memory_space<smem>>
    %2052 = vector.broadcast %2051 : f32 to vector<8x8xf32>
    %2053 = arith.mulf %2026, %2052 : vector<8x8xf32>
    %2054 = arith.addf %2007, %2053 : vector<8x8xf32>
    %c28_1160 = arith.constant 28 : index
    %c7_1161 = arith.constant 7 : index
    %2055 = memref.load %arg7[%c28_1160, %c7_1161] : memref<32x8xf32, #tpu.memory_space<smem>>
    %2056 = vector.broadcast %2055 : f32 to vector<8x8xf32>
    %2057 = arith.mulf %2026, %2056 : vector<8x8xf32>
    %2058 = arith.addf %2011, %2057 : vector<8x8xf32>
    %c28_1162 = arith.constant 28 : index
    %c0_1163 = arith.constant 0 : index
    %2059 = memref.load %arg11[%c28_1162, %c0_1163] : memref<32x2xf32, #tpu.memory_space<smem>>
    %2060 = vector.broadcast %2059 : f32 to vector<8x8xf32>
    %2061 = arith.mulf %2026, %2060 : vector<8x8xf32>
    %2062 = arith.addf %2015, %2061 : vector<8x8xf32>
    %c28_1164 = arith.constant 28 : index
    %c1_1165 = arith.constant 1 : index
    %2063 = memref.load %arg11[%c28_1164, %c1_1165] : memref<32x2xf32, #tpu.memory_space<smem>>
    %2064 = vector.broadcast %2063 : f32 to vector<8x8xf32>
    %2065 = arith.mulf %2026, %2064 : vector<8x8xf32>
    %2066 = arith.addf %2019, %2065 : vector<8x8xf32>
    %c29_1166 = arith.constant 29 : index
    %c0_1167 = arith.constant 0 : index
    %c0_1168 = arith.constant 0 : index
    %c0_1169 = arith.constant 0 : index
    %2067 = vector.load %arg1[%c29_1166, %c0_1167, %c0_1168, %c0_1169] : memref<32x8x8x8xf32, #tpu.memory_space<vmem>>, vector<1x8x8x8xf32>
    %2068 = vector.shape_cast %2067 : vector<1x8x8x8xf32> to vector<8x8x8xf32>
    %2069 = arith.mulf %682, %2068 : vector<8x8x8xf32>
    %cst_1170 = arith.constant dense<0.000000e+00> : vector<8x8xf32>
    %2070 = vector.multi_reduction <add>, %2069, %cst_1170 [0] : vector<8x8x8xf32> to vector<8x8xf32>
    %c29_1171 = arith.constant 29 : index
    %c0_1172 = arith.constant 0 : index
    %c0_1173 = arith.constant 0 : index
    %2071 = vector.load %arg3[%c29_1171, %c0_1172, %c0_1173] : memref<32x8x8xf32, #tpu.memory_space<vmem>>, vector<1x8x8xf32>
    %2072 = vector.shape_cast %2071 : vector<1x8x8xf32> to vector<8x8xf32>
    %2073 = arith.select %685, %2072, %2070 : vector<8x8xi1>, vector<8x8xf32>
    %c29_1174 = arith.constant 29 : index
    %c0_1175 = arith.constant 0 : index
    %2074 = memref.load %arg7[%c29_1174, %c0_1175] : memref<32x8xf32, #tpu.memory_space<smem>>
    %2075 = vector.broadcast %2074 : f32 to vector<8x8xf32>
    %2076 = arith.mulf %2073, %2075 : vector<8x8xf32>
    %2077 = arith.addf %2030, %2076 : vector<8x8xf32>
    %c29_1176 = arith.constant 29 : index
    %c1_1177 = arith.constant 1 : index
    %2078 = memref.load %arg7[%c29_1176, %c1_1177] : memref<32x8xf32, #tpu.memory_space<smem>>
    %2079 = vector.broadcast %2078 : f32 to vector<8x8xf32>
    %2080 = arith.mulf %2073, %2079 : vector<8x8xf32>
    %2081 = arith.addf %2034, %2080 : vector<8x8xf32>
    %c29_1178 = arith.constant 29 : index
    %c2_1179 = arith.constant 2 : index
    %2082 = memref.load %arg7[%c29_1178, %c2_1179] : memref<32x8xf32, #tpu.memory_space<smem>>
    %2083 = vector.broadcast %2082 : f32 to vector<8x8xf32>
    %2084 = arith.mulf %2073, %2083 : vector<8x8xf32>
    %2085 = arith.addf %2038, %2084 : vector<8x8xf32>
    %c29_1180 = arith.constant 29 : index
    %c3_1181 = arith.constant 3 : index
    %2086 = memref.load %arg7[%c29_1180, %c3_1181] : memref<32x8xf32, #tpu.memory_space<smem>>
    %2087 = vector.broadcast %2086 : f32 to vector<8x8xf32>
    %2088 = arith.mulf %2073, %2087 : vector<8x8xf32>
    %2089 = arith.addf %2042, %2088 : vector<8x8xf32>
    %c29_1182 = arith.constant 29 : index
    %c4_1183 = arith.constant 4 : index
    %2090 = memref.load %arg7[%c29_1182, %c4_1183] : memref<32x8xf32, #tpu.memory_space<smem>>
    %2091 = vector.broadcast %2090 : f32 to vector<8x8xf32>
    %2092 = arith.mulf %2073, %2091 : vector<8x8xf32>
    %2093 = arith.addf %2046, %2092 : vector<8x8xf32>
    %c29_1184 = arith.constant 29 : index
    %c5_1185 = arith.constant 5 : index
    %2094 = memref.load %arg7[%c29_1184, %c5_1185] : memref<32x8xf32, #tpu.memory_space<smem>>
    %2095 = vector.broadcast %2094 : f32 to vector<8x8xf32>
    %2096 = arith.mulf %2073, %2095 : vector<8x8xf32>
    %2097 = arith.addf %2050, %2096 : vector<8x8xf32>
    %c29_1186 = arith.constant 29 : index
    %c6_1187 = arith.constant 6 : index
    %2098 = memref.load %arg7[%c29_1186, %c6_1187] : memref<32x8xf32, #tpu.memory_space<smem>>
    %2099 = vector.broadcast %2098 : f32 to vector<8x8xf32>
    %2100 = arith.mulf %2073, %2099 : vector<8x8xf32>
    %2101 = arith.addf %2054, %2100 : vector<8x8xf32>
    %c29_1188 = arith.constant 29 : index
    %c7_1189 = arith.constant 7 : index
    %2102 = memref.load %arg7[%c29_1188, %c7_1189] : memref<32x8xf32, #tpu.memory_space<smem>>
    %2103 = vector.broadcast %2102 : f32 to vector<8x8xf32>
    %2104 = arith.mulf %2073, %2103 : vector<8x8xf32>
    %2105 = arith.addf %2058, %2104 : vector<8x8xf32>
    %c29_1190 = arith.constant 29 : index
    %c0_1191 = arith.constant 0 : index
    %2106 = memref.load %arg11[%c29_1190, %c0_1191] : memref<32x2xf32, #tpu.memory_space<smem>>
    %2107 = vector.broadcast %2106 : f32 to vector<8x8xf32>
    %2108 = arith.mulf %2073, %2107 : vector<8x8xf32>
    %2109 = arith.addf %2062, %2108 : vector<8x8xf32>
    %c29_1192 = arith.constant 29 : index
    %c1_1193 = arith.constant 1 : index
    %2110 = memref.load %arg11[%c29_1192, %c1_1193] : memref<32x2xf32, #tpu.memory_space<smem>>
    %2111 = vector.broadcast %2110 : f32 to vector<8x8xf32>
    %2112 = arith.mulf %2073, %2111 : vector<8x8xf32>
    %2113 = arith.addf %2066, %2112 : vector<8x8xf32>
    %c30_1194 = arith.constant 30 : index
    %c0_1195 = arith.constant 0 : index
    %c0_1196 = arith.constant 0 : index
    %c0_1197 = arith.constant 0 : index
    %2114 = vector.load %arg1[%c30_1194, %c0_1195, %c0_1196, %c0_1197] : memref<32x8x8x8xf32, #tpu.memory_space<vmem>>, vector<1x8x8x8xf32>
    %2115 = vector.shape_cast %2114 : vector<1x8x8x8xf32> to vector<8x8x8xf32>
    %2116 = arith.mulf %682, %2115 : vector<8x8x8xf32>
    %cst_1198 = arith.constant dense<0.000000e+00> : vector<8x8xf32>
    %2117 = vector.multi_reduction <add>, %2116, %cst_1198 [0] : vector<8x8x8xf32> to vector<8x8xf32>
    %c30_1199 = arith.constant 30 : index
    %c0_1200 = arith.constant 0 : index
    %c0_1201 = arith.constant 0 : index
    %2118 = vector.load %arg3[%c30_1199, %c0_1200, %c0_1201] : memref<32x8x8xf32, #tpu.memory_space<vmem>>, vector<1x8x8xf32>
    %2119 = vector.shape_cast %2118 : vector<1x8x8xf32> to vector<8x8xf32>
    %2120 = arith.select %685, %2119, %2117 : vector<8x8xi1>, vector<8x8xf32>
    %c30_1202 = arith.constant 30 : index
    %c0_1203 = arith.constant 0 : index
    %2121 = memref.load %arg7[%c30_1202, %c0_1203] : memref<32x8xf32, #tpu.memory_space<smem>>
    %2122 = vector.broadcast %2121 : f32 to vector<8x8xf32>
    %2123 = arith.mulf %2120, %2122 : vector<8x8xf32>
    %2124 = arith.addf %2077, %2123 : vector<8x8xf32>
    %c30_1204 = arith.constant 30 : index
    %c1_1205 = arith.constant 1 : index
    %2125 = memref.load %arg7[%c30_1204, %c1_1205] : memref<32x8xf32, #tpu.memory_space<smem>>
    %2126 = vector.broadcast %2125 : f32 to vector<8x8xf32>
    %2127 = arith.mulf %2120, %2126 : vector<8x8xf32>
    %2128 = arith.addf %2081, %2127 : vector<8x8xf32>
    %c30_1206 = arith.constant 30 : index
    %c2_1207 = arith.constant 2 : index
    %2129 = memref.load %arg7[%c30_1206, %c2_1207] : memref<32x8xf32, #tpu.memory_space<smem>>
    %2130 = vector.broadcast %2129 : f32 to vector<8x8xf32>
    %2131 = arith.mulf %2120, %2130 : vector<8x8xf32>
    %2132 = arith.addf %2085, %2131 : vector<8x8xf32>
    %c30_1208 = arith.constant 30 : index
    %c3_1209 = arith.constant 3 : index
    %2133 = memref.load %arg7[%c30_1208, %c3_1209] : memref<32x8xf32, #tpu.memory_space<smem>>
    %2134 = vector.broadcast %2133 : f32 to vector<8x8xf32>
    %2135 = arith.mulf %2120, %2134 : vector<8x8xf32>
    %2136 = arith.addf %2089, %2135 : vector<8x8xf32>
    %c30_1210 = arith.constant 30 : index
    %c4_1211 = arith.constant 4 : index
    %2137 = memref.load %arg7[%c30_1210, %c4_1211] : memref<32x8xf32, #tpu.memory_space<smem>>
    %2138 = vector.broadcast %2137 : f32 to vector<8x8xf32>
    %2139 = arith.mulf %2120, %2138 : vector<8x8xf32>
    %2140 = arith.addf %2093, %2139 : vector<8x8xf32>
    %c30_1212 = arith.constant 30 : index
    %c5_1213 = arith.constant 5 : index
    %2141 = memref.load %arg7[%c30_1212, %c5_1213] : memref<32x8xf32, #tpu.memory_space<smem>>
    %2142 = vector.broadcast %2141 : f32 to vector<8x8xf32>
    %2143 = arith.mulf %2120, %2142 : vector<8x8xf32>
    %2144 = arith.addf %2097, %2143 : vector<8x8xf32>
    %c30_1214 = arith.constant 30 : index
    %c6_1215 = arith.constant 6 : index
    %2145 = memref.load %arg7[%c30_1214, %c6_1215] : memref<32x8xf32, #tpu.memory_space<smem>>
    %2146 = vector.broadcast %2145 : f32 to vector<8x8xf32>
    %2147 = arith.mulf %2120, %2146 : vector<8x8xf32>
    %2148 = arith.addf %2101, %2147 : vector<8x8xf32>
    %c30_1216 = arith.constant 30 : index
    %c7_1217 = arith.constant 7 : index
    %2149 = memref.load %arg7[%c30_1216, %c7_1217] : memref<32x8xf32, #tpu.memory_space<smem>>
    %2150 = vector.broadcast %2149 : f32 to vector<8x8xf32>
    %2151 = arith.mulf %2120, %2150 : vector<8x8xf32>
    %2152 = arith.addf %2105, %2151 : vector<8x8xf32>
    %c30_1218 = arith.constant 30 : index
    %c0_1219 = arith.constant 0 : index
    %2153 = memref.load %arg11[%c30_1218, %c0_1219] : memref<32x2xf32, #tpu.memory_space<smem>>
    %2154 = vector.broadcast %2153 : f32 to vector<8x8xf32>
    %2155 = arith.mulf %2120, %2154 : vector<8x8xf32>
    %2156 = arith.addf %2109, %2155 : vector<8x8xf32>
    %c30_1220 = arith.constant 30 : index
    %c1_1221 = arith.constant 1 : index
    %2157 = memref.load %arg11[%c30_1220, %c1_1221] : memref<32x2xf32, #tpu.memory_space<smem>>
    %2158 = vector.broadcast %2157 : f32 to vector<8x8xf32>
    %2159 = arith.mulf %2120, %2158 : vector<8x8xf32>
    %2160 = arith.addf %2113, %2159 : vector<8x8xf32>
    %c31_1222 = arith.constant 31 : index
    %c0_1223 = arith.constant 0 : index
    %c0_1224 = arith.constant 0 : index
    %c0_1225 = arith.constant 0 : index
    %2161 = vector.load %arg1[%c31_1222, %c0_1223, %c0_1224, %c0_1225] : memref<32x8x8x8xf32, #tpu.memory_space<vmem>>, vector<1x8x8x8xf32>
    %2162 = vector.shape_cast %2161 : vector<1x8x8x8xf32> to vector<8x8x8xf32>
    %2163 = arith.mulf %682, %2162 : vector<8x8x8xf32>
    %cst_1226 = arith.constant dense<0.000000e+00> : vector<8x8xf32>
    %2164 = vector.multi_reduction <add>, %2163, %cst_1226 [0] : vector<8x8x8xf32> to vector<8x8xf32>
    %c31_1227 = arith.constant 31 : index
    %c0_1228 = arith.constant 0 : index
    %c0_1229 = arith.constant 0 : index
    %2165 = vector.load %arg3[%c31_1227, %c0_1228, %c0_1229] : memref<32x8x8xf32, #tpu.memory_space<vmem>>, vector<1x8x8xf32>
    %2166 = vector.shape_cast %2165 : vector<1x8x8xf32> to vector<8x8xf32>
    %2167 = arith.select %685, %2166, %2164 : vector<8x8xi1>, vector<8x8xf32>
    %c31_1230 = arith.constant 31 : index
    %c0_1231 = arith.constant 0 : index
    %2168 = memref.load %arg7[%c31_1230, %c0_1231] : memref<32x8xf32, #tpu.memory_space<smem>>
    %2169 = vector.broadcast %2168 : f32 to vector<8x8xf32>
    %2170 = arith.mulf %2167, %2169 : vector<8x8xf32>
    %2171 = arith.addf %2124, %2170 : vector<8x8xf32>
    %c31_1232 = arith.constant 31 : index
    %c1_1233 = arith.constant 1 : index
    %2172 = memref.load %arg7[%c31_1232, %c1_1233] : memref<32x8xf32, #tpu.memory_space<smem>>
    %2173 = vector.broadcast %2172 : f32 to vector<8x8xf32>
    %2174 = arith.mulf %2167, %2173 : vector<8x8xf32>
    %2175 = arith.addf %2128, %2174 : vector<8x8xf32>
    %c31_1234 = arith.constant 31 : index
    %c2_1235 = arith.constant 2 : index
    %2176 = memref.load %arg7[%c31_1234, %c2_1235] : memref<32x8xf32, #tpu.memory_space<smem>>
    %2177 = vector.broadcast %2176 : f32 to vector<8x8xf32>
    %2178 = arith.mulf %2167, %2177 : vector<8x8xf32>
    %2179 = arith.addf %2132, %2178 : vector<8x8xf32>
    %c31_1236 = arith.constant 31 : index
    %c3_1237 = arith.constant 3 : index
    %2180 = memref.load %arg7[%c31_1236, %c3_1237] : memref<32x8xf32, #tpu.memory_space<smem>>
    %2181 = vector.broadcast %2180 : f32 to vector<8x8xf32>
    %2182 = arith.mulf %2167, %2181 : vector<8x8xf32>
    %2183 = arith.addf %2136, %2182 : vector<8x8xf32>
    %c31_1238 = arith.constant 31 : index
    %c4_1239 = arith.constant 4 : index
    %2184 = memref.load %arg7[%c31_1238, %c4_1239] : memref<32x8xf32, #tpu.memory_space<smem>>
    %2185 = vector.broadcast %2184 : f32 to vector<8x8xf32>
    %2186 = arith.mulf %2167, %2185 : vector<8x8xf32>
    %2187 = arith.addf %2140, %2186 : vector<8x8xf32>
    %c31_1240 = arith.constant 31 : index
    %c5_1241 = arith.constant 5 : index
    %2188 = memref.load %arg7[%c31_1240, %c5_1241] : memref<32x8xf32, #tpu.memory_space<smem>>
    %2189 = vector.broadcast %2188 : f32 to vector<8x8xf32>
    %2190 = arith.mulf %2167, %2189 : vector<8x8xf32>
    %2191 = arith.addf %2144, %2190 : vector<8x8xf32>
    %c31_1242 = arith.constant 31 : index
    %c6_1243 = arith.constant 6 : index
    %2192 = memref.load %arg7[%c31_1242, %c6_1243] : memref<32x8xf32, #tpu.memory_space<smem>>
    %2193 = vector.broadcast %2192 : f32 to vector<8x8xf32>
    %2194 = arith.mulf %2167, %2193 : vector<8x8xf32>
    %2195 = arith.addf %2148, %2194 : vector<8x8xf32>
    %c31_1244 = arith.constant 31 : index
    %c7_1245 = arith.constant 7 : index
    %2196 = memref.load %arg7[%c31_1244, %c7_1245] : memref<32x8xf32, #tpu.memory_space<smem>>
    %2197 = vector.broadcast %2196 : f32 to vector<8x8xf32>
    %2198 = arith.mulf %2167, %2197 : vector<8x8xf32>
    %2199 = arith.addf %2152, %2198 : vector<8x8xf32>
    %c31_1246 = arith.constant 31 : index
    %c0_1247 = arith.constant 0 : index
    %2200 = memref.load %arg11[%c31_1246, %c0_1247] : memref<32x2xf32, #tpu.memory_space<smem>>
    %2201 = vector.broadcast %2200 : f32 to vector<8x8xf32>
    %2202 = arith.mulf %2167, %2201 : vector<8x8xf32>
    %2203 = arith.addf %2156, %2202 : vector<8x8xf32>
    %c31_1248 = arith.constant 31 : index
    %c1_1249 = arith.constant 1 : index
    %2204 = memref.load %arg11[%c31_1248, %c1_1249] : memref<32x2xf32, #tpu.memory_space<smem>>
    %2205 = vector.broadcast %2204 : f32 to vector<8x8xf32>
    %2206 = arith.mulf %2167, %2205 : vector<8x8xf32>
    %2207 = arith.addf %2160, %2206 : vector<8x8xf32>
    %c0_1250 = arith.constant 0 : index
    %2208 = memref.load %arg10[%c0_1250] : memref<1xf32, #tpu.memory_space<smem>>
    %2209 = vector.broadcast %2208 : f32 to vector<8x8xf32>
    %cst_1251 = arith.constant 0.000000e+00 : f32
    %2210 = vector.broadcast %cst_1251 : f32 to vector<8x8xf32>
    %2211 = arith.maximumf %2171, %2210 : vector<8x8xf32>
    %c0_1252 = arith.constant 0 : index
    %2212 = memref.load %arg9[%c0_1252] : memref<8xf32, #tpu.memory_space<smem>>
    %2213 = vector.broadcast %2212 : f32 to vector<8x8xf32>
    %2214 = arith.mulf %2211, %2213 : vector<8x8xf32>
    %2215 = arith.addf %2209, %2214 : vector<8x8xf32>
    %cst_1253 = arith.constant 0.000000e+00 : f32
    %2216 = vector.broadcast %cst_1253 : f32 to vector<8x8xf32>
    %2217 = arith.maximumf %2175, %2216 : vector<8x8xf32>
    %c1_1254 = arith.constant 1 : index
    %2218 = memref.load %arg9[%c1_1254] : memref<8xf32, #tpu.memory_space<smem>>
    %2219 = vector.broadcast %2218 : f32 to vector<8x8xf32>
    %2220 = arith.mulf %2217, %2219 : vector<8x8xf32>
    %2221 = arith.addf %2215, %2220 : vector<8x8xf32>
    %cst_1255 = arith.constant 0.000000e+00 : f32
    %2222 = vector.broadcast %cst_1255 : f32 to vector<8x8xf32>
    %2223 = arith.maximumf %2179, %2222 : vector<8x8xf32>
    %c2_1256 = arith.constant 2 : index
    %2224 = memref.load %arg9[%c2_1256] : memref<8xf32, #tpu.memory_space<smem>>
    %2225 = vector.broadcast %2224 : f32 to vector<8x8xf32>
    %2226 = arith.mulf %2223, %2225 : vector<8x8xf32>
    %2227 = arith.addf %2221, %2226 : vector<8x8xf32>
    %cst_1257 = arith.constant 0.000000e+00 : f32
    %2228 = vector.broadcast %cst_1257 : f32 to vector<8x8xf32>
    %2229 = arith.maximumf %2183, %2228 : vector<8x8xf32>
    %c3_1258 = arith.constant 3 : index
    %2230 = memref.load %arg9[%c3_1258] : memref<8xf32, #tpu.memory_space<smem>>
    %2231 = vector.broadcast %2230 : f32 to vector<8x8xf32>
    %2232 = arith.mulf %2229, %2231 : vector<8x8xf32>
    %2233 = arith.addf %2227, %2232 : vector<8x8xf32>
    %cst_1259 = arith.constant 0.000000e+00 : f32
    %2234 = vector.broadcast %cst_1259 : f32 to vector<8x8xf32>
    %2235 = arith.maximumf %2187, %2234 : vector<8x8xf32>
    %c4_1260 = arith.constant 4 : index
    %2236 = memref.load %arg9[%c4_1260] : memref<8xf32, #tpu.memory_space<smem>>
    %2237 = vector.broadcast %2236 : f32 to vector<8x8xf32>
    %2238 = arith.mulf %2235, %2237 : vector<8x8xf32>
    %2239 = arith.addf %2233, %2238 : vector<8x8xf32>
    %cst_1261 = arith.constant 0.000000e+00 : f32
    %2240 = vector.broadcast %cst_1261 : f32 to vector<8x8xf32>
    %2241 = arith.maximumf %2191, %2240 : vector<8x8xf32>
    %c5_1262 = arith.constant 5 : index
    %2242 = memref.load %arg9[%c5_1262] : memref<8xf32, #tpu.memory_space<smem>>
    %2243 = vector.broadcast %2242 : f32 to vector<8x8xf32>
    %2244 = arith.mulf %2241, %2243 : vector<8x8xf32>
    %2245 = arith.addf %2239, %2244 : vector<8x8xf32>
    %cst_1263 = arith.constant 0.000000e+00 : f32
    %2246 = vector.broadcast %cst_1263 : f32 to vector<8x8xf32>
    %2247 = arith.maximumf %2195, %2246 : vector<8x8xf32>
    %c6_1264 = arith.constant 6 : index
    %2248 = memref.load %arg9[%c6_1264] : memref<8xf32, #tpu.memory_space<smem>>
    %2249 = vector.broadcast %2248 : f32 to vector<8x8xf32>
    %2250 = arith.mulf %2247, %2249 : vector<8x8xf32>
    %2251 = arith.addf %2245, %2250 : vector<8x8xf32>
    %cst_1265 = arith.constant 0.000000e+00 : f32
    %2252 = vector.broadcast %cst_1265 : f32 to vector<8x8xf32>
    %2253 = arith.maximumf %2199, %2252 : vector<8x8xf32>
    %c7_1266 = arith.constant 7 : index
    %2254 = memref.load %arg9[%c7_1266] : memref<8xf32, #tpu.memory_space<smem>>
    %2255 = vector.broadcast %2254 : f32 to vector<8x8xf32>
    %2256 = arith.mulf %2253, %2255 : vector<8x8xf32>
    %2257 = arith.addf %2251, %2256 : vector<8x8xf32>
    %c0_1267 = arith.constant 0 : index
    %c0_1268 = arith.constant 0 : index
    %2258 = vector.load %arg4[%c0_1267, %c0_1268] : memref<8x8xf32, #tpu.memory_space<vmem>>, vector<8x8xf32>
    %cst_1269 = arith.constant 5.000000e-01 : f32
    %2259 = vector.broadcast %cst_1269 : f32 to vector<8x8xf32>
    %2260 = arith.cmpf ogt, %2258, %2259 : vector<8x8xf32>
    %cst_1270 = arith.constant -1.000000e+30 : f32
    %2261 = vector.broadcast %cst_1270 : f32 to vector<8x8xf32>
    %2262 = arith.select %2260, %2257, %2261 : vector<8x8xi1>, vector<8x8xf32>
    %cst_1271 = arith.constant dense<0xFF800000> : vector<8xf32>
    %2263 = vector.multi_reduction <maximumf>, %2262, %cst_1271 [0] : vector<8x8xf32> to vector<8xf32>
    %2264 = vector.shape_cast %2263 : vector<8xf32> to vector<1x8xf32>
    %2265 = vector.broadcast %2264 : vector<1x8xf32> to vector<8x8xf32>
    %2266 = arith.subf %2257, %2265 : vector<8x8xf32>
    %cst_1272 = arith.constant -1.000000e+30 : f32
    %2267 = vector.broadcast %cst_1272 : f32 to vector<8x8xf32>
    %2268 = arith.select %2260, %2266, %2267 : vector<8x8xi1>, vector<8x8xf32>
    %2269 = math.exp %2268 : vector<8x8xf32>
    %cst_1273 = arith.constant dense<0.000000e+00> : vector<8xf32>
    %2270 = vector.multi_reduction <add>, %2269, %cst_1273 [0] : vector<8x8xf32> to vector<8xf32>
    %2271 = vector.shape_cast %2270 : vector<8xf32> to vector<1x8xf32>
    %cst_1274 = arith.constant 1.000000e-30 : f32
    %2272 = vector.broadcast %cst_1274 : f32 to vector<1x8xf32>
    %2273 = arith.maximumf %2271, %2272 : vector<1x8xf32>
    %2274 = arith.mulf %2269, %2203 : vector<8x8xf32>
    %cst_1275 = arith.constant dense<0.000000e+00> : vector<8xf32>
    %2275 = vector.multi_reduction <add>, %2274, %cst_1275 [0] : vector<8x8xf32> to vector<8xf32>
    %2276 = vector.shape_cast %2275 : vector<8xf32> to vector<1x8xf32>
    %2277 = arith.divf %2276, %2273 : vector<1x8xf32>
    %c0_1276 = arith.constant 0 : index
    %2278 = memref.load %arg12[%c0_1276] : memref<2xf32, #tpu.memory_space<smem>>
    %2279 = vector.broadcast %2278 : f32 to vector<1x8xf32>
    %2280 = arith.addf %2277, %2279 : vector<1x8xf32>
    %2281 = arith.mulf %2269, %2207 : vector<8x8xf32>
    %cst_1277 = arith.constant dense<0.000000e+00> : vector<8xf32>
    %2282 = vector.multi_reduction <add>, %2281, %cst_1277 [0] : vector<8x8xf32> to vector<8xf32>
    %2283 = vector.shape_cast %2282 : vector<8xf32> to vector<1x8xf32>
    %2284 = arith.divf %2283, %2273 : vector<1x8xf32>
    %c1_1278 = arith.constant 1 : index
    %2285 = memref.load %arg12[%c1_1278] : memref<2xf32, #tpu.memory_space<smem>>
    %2286 = vector.broadcast %2285 : f32 to vector<1x8xf32>
    %2287 = arith.addf %2284, %2286 : vector<1x8xf32>
    %2288 = arith.negf %2280 : vector<1x8xf32>
    %2289 = math.exp %2288 : vector<1x8xf32>
    %cst_1279 = arith.constant 1.000000e+00 : f32
    %2290 = vector.broadcast %cst_1279 : f32 to vector<1x8xf32>
    %2291 = arith.addf %2290, %2289 : vector<1x8xf32>
    %2292 = arith.divf %2290, %2291 : vector<1x8xf32>
    %c0_1280 = arith.constant 0 : index
    %c0_1281 = arith.constant 0 : index
    %2293 = vector.load %arg13[%c0_1280, %c0_1281] : memref<2x8xf32, #tpu.memory_space<vmem>>, vector<1x8xf32>
    tpu.vector_store %arg13[%c0_1280, %c0_1281], %2292 {strides = array<i32>} : memref<2x8xf32, #tpu.memory_space<vmem>>, vector<1x8xf32>,
    %2294 = arith.negf %2287 : vector<1x8xf32>
    %2295 = math.exp %2294 : vector<1x8xf32>
    %cst_1282 = arith.constant 1.000000e+00 : f32
    %2296 = vector.broadcast %cst_1282 : f32 to vector<1x8xf32>
    %2297 = arith.addf %2296, %2295 : vector<1x8xf32>
    %2298 = arith.divf %2296, %2297 : vector<1x8xf32>
    %c1_1283 = arith.constant 1 : index
    %c0_1284 = arith.constant 0 : index
    %2299 = vector.load %arg13[%c1_1283, %c0_1284] : memref<2x8xf32, #tpu.memory_space<vmem>>, vector<1x8xf32>
    tpu.vector_store %arg13[%c1_1283, %c0_1284], %2298 {strides = array<i32>} : memref<2x8xf32, #tpu.memory_space<vmem>>, vector<1x8xf32>,
    return
  }
  func.func @transform_0(%arg0: i32) -> (i32, i32, i32, i32) {
    %c0_i32 = arith.constant 0 : i32
    %c0_i32_0 = arith.constant 0 : i32
    %c0_i32_1 = arith.constant 0 : i32
    %c0_i32_2 = arith.constant 0 : i32
    return %c0_i32, %c0_i32_0, %c0_i32_1, %arg0 : i32, i32, i32, i32
  }
  func.func @transform_1(%arg0: i32) -> (i32, i32, i32) {
    %c0_i32 = arith.constant 0 : i32
    %c0_i32_0 = arith.constant 0 : i32
    %c0_i32_1 = arith.constant 0 : i32
    return %c0_i32, %c0_i32_0, %arg0 : i32, i32, i32
  }
  func.func @transform_2(%arg0: i32) -> (i32, i32, i32) {
    %c0_i32 = arith.constant 0 : i32
    %c0_i32_0 = arith.constant 0 : i32
    %c0_i32_1 = arith.constant 0 : i32
    return %c0_i32, %c0_i32_0, %arg0 : i32, i32, i32
  }
  func.func @transform_3(%arg0: i32) -> (i32, i32) {
    %c0_i32 = arith.constant 0 : i32
    %c0_i32_0 = arith.constant 0 : i32
    return %c0_i32, %arg0 : i32, i32
  }
  func.func @transform_4(%arg0: i32) -> (i32, i32) {
    %c0_i32 = arith.constant 0 : i32
    %c0_i32_0 = arith.constant 0 : i32
    %c0_i32_1 = arith.constant 0 : i32
    return %c0_i32, %c0_i32_0 : i32, i32
  }
  func.func @transform_5(%arg0: i32) -> i32 {
    %c0_i32 = arith.constant 0 : i32
    %c0_i32_0 = arith.constant 0 : i32
    return %c0_i32 : i32
  }
  func.func @transform_6(%arg0: i32) -> (i32, i32) {
    %c0_i32 = arith.constant 0 : i32
    %c0_i32_0 = arith.constant 0 : i32
    %c0_i32_1 = arith.constant 0 : i32
    return %c0_i32, %c0_i32_0 : i32, i32
  }
  func.func @transform_7(%arg0: i32) -> i32 {
    %c0_i32 = arith.constant 0 : i32
    %c0_i32_0 = arith.constant 0 : i32
    return %c0_i32 : i32
  }
  func.func @transform_8(%arg0: i32) -> i32 {
    %c0_i32 = arith.constant 0 : i32
    %c0_i32_0 = arith.constant 0 : i32
    return %c0_i32 : i32
  }
  func.func @transform_9(%arg0: i32) -> i32 {
    %c0_i32 = arith.constant 0 : i32
    %c0_i32_0 = arith.constant 0 : i32
    return %c0_i32 : i32
  }
  func.func @transform_10(%arg0: i32) -> (i32, i32) {
    %c0_i32 = arith.constant 0 : i32
    %c0_i32_0 = arith.constant 0 : i32
    %c0_i32_1 = arith.constant 0 : i32
    return %c0_i32, %c0_i32_0 : i32, i32
  }
  func.func @transform_11(%arg0: i32) -> i32 {
    %c0_i32 = arith.constant 0 : i32
    %c0_i32_0 = arith.constant 0 : i32
    return %c0_i32 : i32
  }
  func.func @transform_12(%arg0: i32) -> (i32, i32) {
    %c0_i32 = arith.constant 0 : i32
    %c0_i32_0 = arith.constant 0 : i32
    return %c0_i32, %arg0 : i32, i32
  }
}

</mosaic_0001>

<llo_original>
// kernel: tpu_custom_call.1
$region0: #{tpu_custom_call.1}
  #allocation0 [shape = 'u32[]', space=smem, size = 0x4, offset = 0x4, fixed_abs, tag = 'smem constant byte address 0x4 - core index']
  #allocation1 [shape = 'u32[72,128]{1,0:T(1,128)}', space=vmem, size = 0x9000, scoped, tag = 'internal scratch']
  #allocation2 [shape = 'f32[1]{0:T(128)S(6)}', space=smem, size = 0x200, scoped, tag = 'scoped memory for tpu_custom_call.1']
  %s0 = inlined_call_operand.vmem [shape: f32[32,8,8,8], index: 0, kind: input, shape index: {}]
  %s1 = inlined_call_operand.vmem [shape: f32[8,8,8], index: 1, kind: input, shape index: {}]
  %s2 = inlined_call_operand.vmem [shape: f32[32,8,8], index: 2, kind: input, shape index: {}]
  %s3 = inlined_call_operand.vmem [shape: f32[8,8], index: 3, kind: input, shape index: {}]
  %s4 = inlined_call_operand.vmem [shape: f32[3,32], index: 4, kind: input, shape index: {}]
  %s5 = inlined_call_operand.vmem [shape: f32[3], index: 5, kind: input, shape index: {}]
  %s6 = inlined_call_operand.vmem [shape: f32[32,8], index: 6, kind: input, shape index: {}]
  %s7 = inlined_call_operand.vmem [shape: f32[8], index: 7, kind: input, shape index: {}]
  %s8 = inlined_call_operand.vmem [shape: f32[8], index: 8, kind: input, shape index: {}]
  %s9 = inlined_call_operand.<no memory space> [shape: f32[1], index: 9, kind: input, shape index: {}]
  %s10 = inlined_call_operand.vmem [shape: f32[32,2], index: 10, kind: input, shape index: {}]
  %s11 = inlined_call_operand.vmem [shape: f32[2], index: 11, kind: input, shape index: {}]
  %s12 = inlined_call_operand.hbm [shape: f32[2,8], index: 12, kind: output, shape index: {}]
  %s13 = sld [smem:[#allocation0]]
  $region86: #{tpu_custom_call.1} parent=0
    _
  %s15 = ssub.s32 1, %s13
  %s16 = scalar_select 0, %s15, %s13
  %17 = sst [smem:[#allocation2]] %s9
  $region1: #{tpu_custom_call.1} parent=0
    #allocation3 [shape = 'u8[2048]{0}', space=smem, size = 0x800, scoped, tag = 'input window, operand 4, single buffered']
    #allocation4 [shape = 's32[1]{0}', space=sflag, size = 0x4, scoped, tag = 'scoped memory for tpu_custom_call.1']
    #allocation5 [shape = 's32[1]{0}', space=sflag, size = 0x4, scoped, tag = 'scoped memory for tpu_custom_call.1']
    #allocation6 [shape = 'u8[512]{0}', space=smem, size = 0x200, scoped, tag = 'input window, operand 5, single buffered']
    #allocation7 [shape = 's32[1]{0}', space=sflag, size = 0x4, scoped, tag = 'scoped memory for tpu_custom_call.1']
    #allocation8 [shape = 'u8[16384]{0}', space=smem, size = 0x4000, scoped, tag = 'input window, operand 6, single buffered']
    #allocation9 [shape = 'u8[512]{0}', space=smem, size = 0x200, scoped, tag = 'input window, operand 7, single buffered']
    #allocation10 [shape = 's32[1]{0}', space=sflag, size = 0x4, scoped, tag = 'scoped memory for tpu_custom_call.1']
    #allocation11 [shape = 'u8[512]{0}', space=smem, size = 0x200, scoped, tag = 'input window, operand 8, single buffered']
    #allocation12 [shape = 'u8[16384]{0}', space=smem, size = 0x4000, scoped, tag = 'input window, operand 10, single buffered']
    #allocation13 [shape = 's32[1]{0}', space=sflag, size = 0x4, scoped, tag = 'scoped memory for tpu_custom_call.1']
    #allocation14 [shape = 'u8[512]{0}', space=smem, size = 0x200, scoped, tag = 'input window, operand 11, single buffered']
    #allocation15 [shape = 'u8[1024]{0}', space=vmem, size = 0x400, scoped, tag = 'output window, operand 0, single buffered']
    %18 = vsyncpa [#allocation5], 0
    %19 = vsyncpa [#allocation7], 0
    %20 = vsyncpa [#allocation10], 0
    %21 = vsyncpa [#allocation13], 0
    %22 = vsyncpa [#allocation4], 0
    // Predicated region
    $region2: #{tpu_custom_call.1} parent=1 // pred_check
      _
    $region3: #{tpu_custom_call.1} parent=1 // pred_check_branch
      %24 = sbr.rel (0) target = $region5
    $region4: #{tpu_custom_call.1} parent=1 // pred_region
      _
    $region5: #{tpu_custom_call.1} parent=1 // pred_fallthru
      _
    // Predicated region
    $region6: #{tpu_custom_call.1} parent=1 // pred_check
      _
    $region7: #{tpu_custom_call.1} parent=1 // pred_check_branch
      %26 = sbr.rel (0) target = $region9
    $region8: #{tpu_custom_call.1} parent=1 // pred_region
      _
    $region9: #{tpu_custom_call.1} parent=1 // pred_fallthru
      _
    // Predicated region
    $region10: #{tpu_custom_call.1} parent=1 // pred_check
      _
    $region11: #{tpu_custom_call.1} parent=1 // pred_check_branch
      %28 = sbr.rel (0) target = $region13
    $region12: #{tpu_custom_call.1} parent=1 // pred_region
      _
    $region13: #{tpu_custom_call.1} parent=1 // pred_fallthru
      _
    // Predicated region
    $region14: #{tpu_custom_call.1} parent=1 // pred_check
      _
    $region15: #{tpu_custom_call.1} parent=1 // pred_check_branch
      %30 = sbr.rel (0) target = $region17
    $region16: #{tpu_custom_call.1} parent=1 // pred_region
      _
    $region17: #{tpu_custom_call.1} parent=1 // pred_fallthru
      _
    // Predicated region
    $region18: #{tpu_custom_call.1} parent=1 // pred_check
      _
    $region19: #{tpu_custom_call.1} parent=1 // pred_check_branch
      %32 = sbr.rel (0) target = $region21
    $region20: #{tpu_custom_call.1} parent=1 // pred_region
      %34 = vsyncadd [#allocation5], 0
      %s36 = sshll.u32 %s4, 4
      %s37 = int_to_ptr.vmem [resolvable:$true] %s36
      %39 = dma.vmem_to_smem %s37, 64, [#allocation3], [#allocation5]
    $region21: #{tpu_custom_call.1} parent=1 // pred_fallthru
      _
    // Predicated region
    $region22: #{tpu_custom_call.1} parent=1 // pred_check
      _
    $region23: #{tpu_custom_call.1} parent=1 // pred_check_branch
      %41 = sbr.rel (0) target = $region25
    $region24: #{tpu_custom_call.1} parent=1 // pred_region
      %43 = vsyncadd [#allocation7], 0
      %s45 = sshll.u32 %s5, 4
      %s46 = int_to_ptr.vmem [resolvable:$true] %s45
      %48 = dma.vmem_to_smem %s46, 16, [#allocation6], [#allocation7]
    $region25: #{tpu_custom_call.1} parent=1 // pred_fallthru
      _
    // Predicated region
    $region26: #{tpu_custom_call.1} parent=1 // pred_check
      _
    $region27: #{tpu_custom_call.1} parent=1 // pred_check_branch
      %50 = sbr.rel (0) target = $region29
    $region28: #{tpu_custom_call.1} parent=1 // pred_region
      %52 = vsyncadd [#allocation7], 0
      %s53 = sshll.u32 %s6, 4
      %s54 = int_to_ptr.vmem [resolvable:$true] %s53
      %59 = dma.vmem_to_smem %s54, 512, [#allocation8], [#allocation7], 128, 128, 8
    $region29: #{tpu_custom_call.1} parent=1 // pred_fallthru
      _
    // Predicated region
    $region30: #{tpu_custom_call.1} parent=1 // pred_check
      _
    $region31: #{tpu_custom_call.1} parent=1 // pred_check_branch
      %61 = sbr.rel (0) target = $region33
    $region32: #{tpu_custom_call.1} parent=1 // pred_region
      %63 = vsyncadd [#allocation10], 0
      %s65 = sshll.u32 %s7, 4
      %s66 = int_to_ptr.vmem [resolvable:$true] %s65
      %68 = dma.vmem_to_smem %s66, 16, [#allocation9], [#allocation10]
    $region33: #{tpu_custom_call.1} parent=1 // pred_fallthru
      _
    // Predicated region
    $region34: #{tpu_custom_call.1} parent=1 // pred_check
      _
    $region35: #{tpu_custom_call.1} parent=1 // pred_check_branch
      %70 = sbr.rel (0) target = $region37
    $region36: #{tpu_custom_call.1} parent=1 // pred_region
      %72 = vsyncadd [#allocation10], 0
      %s74 = sshll.u32 %s8, 4
      %s75 = int_to_ptr.vmem [resolvable:$true] %s74
      %77 = dma.vmem_to_smem %s75, 16, [#allocation11], [#allocation10]
    $region37: #{tpu_custom_call.1} parent=1 // pred_fallthru
      _
    // Predicated region
    $region38: #{tpu_custom_call.1} parent=1 // pred_check
      _
    $region39: #{tpu_custom_call.1} parent=1 // pred_check_branch
      %79 = sbr.rel (0) target = $region41
    $region40: #{tpu_custom_call.1} parent=1 // pred_region
      _
    $region41: #{tpu_custom_call.1} parent=1 // pred_fallthru
      _
    // Predicated region
    $region42: #{tpu_custom_call.1} parent=1 // pred_check
      _
    $region43: #{tpu_custom_call.1} parent=1 // pred_check_branch
      %81 = sbr.rel (0) target = $region45
    $region44: #{tpu_custom_call.1} parent=1 // pred_region
      %83 = vsyncadd [#allocation13], 0
      %s84 = sshll.u32 %s10, 4
      %s85 = int_to_ptr.vmem [resolvable:$true] %s84
      %90 = dma.vmem_to_smem %s85, 512, [#allocation12], [#allocation13], 128, 128, 8
    $region45: #{tpu_custom_call.1} parent=1 // pred_fallthru
      _
    // Predicated region
    $region46: #{tpu_custom_call.1} parent=1 // pred_check
      _
    $region47: #{tpu_custom_call.1} parent=1 // pred_check_branch
      %92 = sbr.rel (0) target = $region49
    $region48: #{tpu_custom_call.1} parent=1 // pred_region
      %94 = vsyncadd [#allocation13], 0
      %s96 = sshll.u32 %s11, 4
      %s97 = int_to_ptr.vmem [resolvable:$true] %s96
      %99 = dma.vmem_to_smem %s97, 16, [#allocation14], [#allocation13]
    $region49: #{tpu_custom_call.1} parent=1 // pred_fallthru
      _
    // Predicated region
    $region50: #{tpu_custom_call.1} parent=1 // pred_check
      _
    $region51: #{tpu_custom_call.1} parent=1 // pred_check_branch
      %101 = sbr.rel (0) target = $region53
    $region52: #{tpu_custom_call.1} parent=1 // pred_region
      %103 = dma.done [#allocation5], 64
    $region53: #{tpu_custom_call.1} parent=1 // pred_fallthru
      _
    // Predicated region
    $region54: #{tpu_custom_call.1} parent=1 // pred_check
      _
    $region55: #{tpu_custom_call.1} parent=1 // pred_check_branch
      %105 = sbr.rel (0) target = $region57
    $region56: #{tpu_custom_call.1} parent=1 // pred_region
      %107 = dma.done [#allocation7], 16
    $region57: #{tpu_custom_call.1} parent=1 // pred_fallthru
      _
    // Predicated region
    $region58: #{tpu_custom_call.1} parent=1 // pred_check
      _
    $region59: #{tpu_custom_call.1} parent=1 // pred_check_branch
      %109 = sbr.rel (0) target = $region61
    $region60: #{tpu_custom_call.1} parent=1 // pred_region
      %111 = dma.done [#allocation7], 512
    $region61: #{tpu_custom_call.1} parent=1 // pred_fallthru
      _
    // Predicated region
    $region62: #{tpu_custom_call.1} parent=1 // pred_check
      _
    $region63: #{tpu_custom_call.1} parent=1 // pred_check_branch
      %113 = sbr.rel (0) target = $region65
    $region64: #{tpu_custom_call.1} parent=1 // pred_region
      %115 = dma.done [#allocation10], 16
    $region65: #{tpu_custom_call.1} parent=1 // pred_fallthru
      _
    // Predicated region
    $region66: #{tpu_custom_call.1} parent=1 // pred_check
      _
    $region67: #{tpu_custom_call.1} parent=1 // pred_check_branch
      %117 = sbr.rel (0) target = $region69
    $region68: #{tpu_custom_call.1} parent=1 // pred_region
      %119 = dma.done [#allocation10], 16
    $region69: #{tpu_custom_call.1} parent=1 // pred_fallthru
      _
    // Predicated region
    $region70: #{tpu_custom_call.1} parent=1 // pred_check
      _
    $region71: #{tpu_custom_call.1} parent=1 // pred_check_branch
      %121 = sbr.rel (0) target = $region73
    $region72: #{tpu_custom_call.1} parent=1 // pred_region
      %123 = dma.done [#allocation13], 512
    $region73: #{tpu_custom_call.1} parent=1 // pred_fallthru
      _
    // Predicated region
    $region74: #{tpu_custom_call.1} parent=1 // pred_check
      _
    $region75: #{tpu_custom_call.1} parent=1 // pred_check_branch
      %125 = sbr.rel (0) target = $region77
    $region76: #{tpu_custom_call.1} parent=1 // pred_region
      %127 = dma.done [#allocation13], 16
    $region77: #{tpu_custom_call.1} parent=1 // pred_fallthru
      _
    %128 = sfence
    %v129 = vld [vmem:[%s1] sm:$0xff]
    %v130 = vld [vmem:[%s1 + $0x8] sm:$0xff]
    %v131 = vld [vmem:[%s1 + $0x10] sm:$0xff]
    %v132 = vld [vmem:[%s1 + $0x18] sm:$0xff]
    %v133 = vld [vmem:[%s1 + $0x20] sm:$0xff]
    %v134 = vld [vmem:[%s1 + $0x28] sm:$0xff]
    %v135 = vld [vmem:[%s1 + $0x30] sm:$0xff]
    %v136 = vld [vmem:[%s1 + $0x38] sm:$0xff]
    %vm137 = vcmp.gt.f32.partialorder %v129, 0.5
    %vm138 = vcmp.gt.f32.partialorder %v130, 0.5
    %vm139 = vcmp.gt.f32.partialorder %v131, 0.5
    %vm140 = vcmp.gt.f32.partialorder %v132, 0.5
    %vm141 = vcmp.gt.f32.partialorder %v133, 0.5
    %vm142 = vcmp.gt.f32.partialorder %v134, 0.5
    %vm143 = vcmp.gt.f32.partialorder %v135, 0.5
    %vm144 = vcmp.gt.f32.partialorder %v136, 0.5
    %s145 = sld [smem:[#allocation6]]
    %v146 = vstv %s145
    %s147 = sld [smem:[#allocation6 + $0x1]]
    %v148 = vstv %s147
    %s149 = sld [smem:[#allocation6 + $0x2]]
    %v150 = vstv %s149
    %v151 = vld [vmem:[%s0] sm:$0xff]
    %v152 = vld [vmem:[%s0 + $0x8] sm:$0xff]
    %v153 = vld [vmem:[%s0 + $0x10] sm:$0xff]
    %v154 = vld [vmem:[%s0 + $0x18] sm:$0xff]
    %v155 = vld [vmem:[%s0 + $0x20] sm:$0xff]
    %v156 = vld [vmem:[%s0 + $0x28] sm:$0xff]
    %v157 = vld [vmem:[%s0 + $0x30] sm:$0xff]
    %v158 = vld [vmem:[%s0 + $0x38] sm:$0xff]
    %s159 = sld [smem:[#allocation3]]
    %v160 = vstv %s159
    %v161 = vmul.f32 %v151, %v160
    %v162 = vmul.f32 %v152, %v160
    %v163 = vmul.f32 %v153, %v160
    %v164 = vmul.f32 %v154, %v160
    %v165 = vmul.f32 %v155, %v160
    %v166 = vmul.f32 %v156, %v160
    %v167 = vmul.f32 %v157, %v160
    %v168 = vmul.f32 %v158, %v160
    %v169 = vadd.f32 %v146, %v161
    %v170 = vadd.f32 %v146, %v162
    %v171 = vadd.f32 %v146, %v163
    %v172 = vadd.f32 %v146, %v164
    %v173 = vadd.f32 %v146, %v165
    %v174 = vadd.f32 %v146, %v166
    %v175 = vadd.f32 %v146, %v167
    %v176 = vadd.f32 %v146, %v168
    %s177 = sld [smem:[#allocation3 + $0x80]]
    %v178 = vstv %s177
    %v179 = vmul.f32 %v151, %v178
    %v180 = vmul.f32 %v152, %v178
    %v181 = vmul.f32 %v153, %v178
    %v182 = vmul.f32 %v154, %v178
    %v183 = vmul.f32 %v155, %v178
    %v184 = vmul.f32 %v156, %v178
    %v185 = vmul.f32 %v157, %v178
    %v186 = vmul.f32 %v158, %v178
    %v187 = vadd.f32 %v148, %v179
    %v188 = vadd.f32 %v148, %v180
    %v189 = vadd.f32 %v148, %v181
    %v190 = vadd.f32 %v148, %v182
    %v191 = vadd.f32 %v148, %v183
    %v192 = vadd.f32 %v148, %v184
    %v193 = vadd.f32 %v148, %v185
    %v194 = vadd.f32 %v148, %v186
    %s195 = sld [smem:[#allocation3 + $0x100]]
    %v196 = vstv %s195
    %v197 = vmul.f32 %v151, %v196
    %v198 = vmul.f32 %v152, %v196
    %v199 = vmul.f32 %v153, %v196
    %v200 = vmul.f32 %v154, %v196
    %v201 = vmul.f32 %v155, %v196
    %v202 = vmul.f32 %v156, %v196
    %v203 = vmul.f32 %v157, %v196
    %v204 = vmul.f32 %v158, %v196
    %v205 = vadd.f32 %v150, %v197
    %v206 = vadd.f32 %v150, %v198
    %v207 = vadd.f32 %v150, %v199
    %v208 = vadd.f32 %v150, %v200
    %v209 = vadd.f32 %v150, %v201
    %v210 = vadd.f32 %v150, %v202
    %v211 = vadd.f32 %v150, %v203
    %v212 = vadd.f32 %v150, %v204
    %s213 = scalar_lea.vmem %s0, 64
    %v214 = vld [vmem:[%s213] sm:$0xff]
    %v215 = vld [vmem:[%s213 + $0x8] sm:$0xff]
    %v216 = vld [vmem:[%s213 + $0x10] sm:$0xff]
    %v217 = vld [vmem:[%s213 + $0x18] sm:$0xff]
    %v218 = vld [vmem:[%s213 + $0x20] sm:$0xff]
    %v219 = vld [vmem:[%s213 + $0x28] sm:$0xff]
    %v220 = vld [vmem:[%s213 + $0x30] sm:$0xff]
    %v221 = vld [vmem:[%s213 + $0x38] sm:$0xff]
    %s222 = sld [smem:[#allocation3 + $0x1]]
    %v223 = vstv %s222
    %v224 = vmul.f32 %v214, %v223
    %v225 = vmul.f32 %v215, %v223
    %v226 = vmul.f32 %v216, %v223
    %v227 = vmul.f32 %v217, %v223
    %v228 = vmul.f32 %v218, %v223
    %v229 = vmul.f32 %v219, %v223
    %v230 = vmul.f32 %v220, %v223
    %v231 = vmul.f32 %v221, %v223
    %v232 = vadd.f32 %v169, %v224
    %v233 = vadd.f32 %v170, %v225
    %v234 = vadd.f32 %v171, %v226
    %v235 = vadd.f32 %v172, %v227
    %v236 = vadd.f32 %v173, %v228
    %v237 = vadd.f32 %v174, %v229
    %v238 = vadd.f32 %v175, %v230
    %v239 = vadd.f32 %v176, %v231
    %s240 = sld [smem:[#allocation3 + $0x81]]
    %v241 = vstv %s240
    %v242 = vmul.f32 %v214, %v241
    %v243 = vmul.f32 %v215, %v241
    %v244 = vmul.f32 %v216, %v241
    %v245 = vmul.f32 %v217, %v241
    %v246 = vmul.f32 %v218, %v241
    %v247 = vmul.f32 %v219, %v241
    %v248 = vmul.f32 %v220, %v241
    %v249 = vmul.f32 %v221, %v241
    %v250 = vadd.f32 %v187, %v242
    %v251 = vadd.f32 %v188, %v243
    %v252 = vadd.f32 %v189, %v244
    %v253 = vadd.f32 %v190, %v245
    %v254 = vadd.f32 %v191, %v246
    %v255 = vadd.f32 %v192, %v247
    %v256 = vadd.f32 %v193, %v248
    %v257 = vadd.f32 %v194, %v249
    %s258 = sld [smem:[#allocation3 + $0x101]]
    %v259 = vstv %s258
    %v260 = vmul.f32 %v214, %v259
    %v261 = vmul.f32 %v215, %v259
    %v262 = vmul.f32 %v216, %v259
    %v263 = vmul.f32 %v217, %v259
    %v264 = vmul.f32 %v218, %v259
    %v265 = vmul.f32 %v219, %v259
    %v266 = vmul.f32 %v220, %v259
    %v267 = vmul.f32 %v221, %v259
    %v268 = vadd.f32 %v205, %v260
    %v269 = vadd.f32 %v206, %v261
    %v270 = vadd.f32 %v207, %v262
    %v271 = vadd.f32 %v208, %v263
    %v272 = vadd.f32 %v209, %v264
    %v273 = vadd.f32 %v210, %v265
    %v274 = vadd.f32 %v211, %v266
    %v275 = vadd.f32 %v212, %v267
    %s276 = scalar_lea.vmem %s0, 128
    %v277 = vld [vmem:[%s276] sm:$0xff]
    %v278 = vld [vmem:[%s276 + $0x8] sm:$0xff]
    %v279 = vld [vmem:[%s276 + $0x10] sm:$0xff]
    %v280 = vld [vmem:[%s276 + $0x18] sm:$0xff]
    %v281 = vld [vmem:[%s276 + $0x20] sm:$0xff]
    %v282 = vld [vmem:[%s276 + $0x28] sm:$0xff]
    %v283 = vld [vmem:[%s276 + $0x30] sm:$0xff]
    %v284 = vld [vmem:[%s276 + $0x38] sm:$0xff]
    %s285 = sld [smem:[#allocation3 + $0x2]]
    %v286 = vstv %s285
    %v287 = vmul.f32 %v277, %v286
    %v288 = vmul.f32 %v278, %v286
    %v289 = vmul.f32 %v279, %v286
    %v290 = vmul.f32 %v280, %v286
    %v291 = vmul.f32 %v281, %v286
    %v292 = vmul.f32 %v282, %v286
    %v293 = vmul.f32 %v283, %v286
    %v294 = vmul.f32 %v284, %v286
    %v295 = vadd.f32 %v232, %v287
    %v296 = vadd.f32 %v233, %v288
    %v297 = vadd.f32 %v234, %v289
    %v298 = vadd.f32 %v235, %v290
    %v299 = vadd.f32 %v236, %v291
    %v300 = vadd.f32 %v237, %v292
    %v301 = vadd.f32 %v238, %v293
    %v302 = vadd.f32 %v239, %v294
    %s303 = sld [smem:[#allocation3 + $0x82]]
    %v304 = vstv %s303
    %v305 = vmul.f32 %v277, %v304
    %v306 = vmul.f32 %v278, %v304
    %v307 = vmul.f32 %v279, %v304
    %v308 = vmul.f32 %v280, %v304
    %v309 = vmul.f32 %v281, %v304
    %v310 = vmul.f32 %v282, %v304
    %v311 = vmul.f32 %v283, %v304
    %v312 = vmul.f32 %v284, %v304
    %v313 = vadd.f32 %v250, %v305
    %v314 = vadd.f32 %v251, %v306
    %v315 = vadd.f32 %v252, %v307
    %v316 = vadd.f32 %v253, %v308
    %v317 = vadd.f32 %v254, %v309
    %v318 = vadd.f32 %v255, %v310
    %v319 = vadd.f32 %v256, %v311
    %v320 = vadd.f32 %v257, %v312
    %s321 = sld [smem:[#allocation3 + $0x102]]
    %v322 = vstv %s321
    %v323 = vmul.f32 %v277, %v322
    %v324 = vmul.f32 %v278, %v322
    %v325 = vmul.f32 %v279, %v322
    %v326 = vmul.f32 %v280, %v322
    %v327 = vmul.f32 %v281, %v322
    %v328 = vmul.f32 %v282, %v322
    %v329 = vmul.f32 %v283, %v322
    %v330 = vmul.f32 %v284, %v322
    %v331 = vadd.f32 %v268, %v323
    %v332 = vadd.f32 %v269, %v324
    %v333 = vadd.f32 %v270, %v325
    %v334 = vadd.f32 %v271, %v326
    %v335 = vadd.f32 %v272, %v327
    %v336 = vadd.f32 %v273, %v328
    %v337 = vadd.f32 %v274, %v329
    %v338 = vadd.f32 %v275, %v330
    %s339 = scalar_lea.vmem %s0, 192
    %v340 = vld [vmem:[%s339] sm:$0xff]
    %v341 = vld [vmem:[%s339 + $0x8] sm:$0xff]
    %v342 = vld [vmem:[%s339 + $0x10] sm:$0xff]
    %v343 = vld [vmem:[%s339 + $0x18] sm:$0xff]
    %v344 = vld [vmem:[%s339 + $0x20] sm:$0xff]
    %v345 = vld [vmem:[%s339 + $0x28] sm:$0xff]
    %v346 = vld [vmem:[%s339 + $0x30] sm:$0xff]
    %v347 = vld [vmem:[%s339 + $0x38] sm:$0xff]
    %s348 = sld [smem:[#allocation3 + $0x3]]
    %v349 = vstv %s348
    %v350 = vmul.f32 %v340, %v349
    %v351 = vmul.f32 %v341, %v349
    %v352 = vmul.f32 %v342, %v349
    %v353 = vmul.f32 %v343, %v349
    %v354 = vmul.f32 %v344, %v349
    %v355 = vmul.f32 %v345, %v349
    %v356 = vmul.f32 %v346, %v349
    %v357 = vmul.f32 %v347, %v349
    %v358 = vadd.f32 %v295, %v350
    %v359 = vadd.f32 %v296, %v351
    %v360 = vadd.f32 %v297, %v352
    %v361 = vadd.f32 %v298, %v353
    %v362 = vadd.f32 %v299, %v354
    %v363 = vadd.f32 %v300, %v355
    %v364 = vadd.f32 %v301, %v356
    %v365 = vadd.f32 %v302, %v357
    %s366 = sld [smem:[#allocation3 + $0x83]]
    %v367 = vstv %s366
    %v368 = vmul.f32 %v340, %v367
    %v369 = vmul.f32 %v341, %v367
    %v370 = vmul.f32 %v342, %v367
    %v371 = vmul.f32 %v343, %v367
    %v372 = vmul.f32 %v344, %v367
    %v373 = vmul.f32 %v345, %v367
    %v374 = vmul.f32 %v346, %v367
    %v375 = vmul.f32 %v347, %v367
    %v376 = vadd.f32 %v313, %v368
    %v377 = vadd.f32 %v314, %v369
    %v378 = vadd.f32 %v315, %v370
    %v379 = vadd.f32 %v316, %v371
    %v380 = vadd.f32 %v317, %v372
    %v381 = vadd.f32 %v318, %v373
    %v382 = vadd.f32 %v319, %v374
    %v383 = vadd.f32 %v320, %v375
    %s384 = sld [smem:[#allocation3 + $0x103]]
    %v385 = vstv %s384
    %v386 = vmul.f32 %v340, %v385
    %v387 = vmul.f32 %v341, %v385
    %v388 = vmul.f32 %v342, %v385
    %v389 = vmul.f32 %v343, %v385
    %v390 = vmul.f32 %v344, %v385
    %v391 = vmul.f32 %v345, %v385
    %v392 = vmul.f32 %v346, %v385
    %v393 = vmul.f32 %v347, %v385
    %v394 = vadd.f32 %v331, %v386
    %v395 = vadd.f32 %v332, %v387
    %v396 = vadd.f32 %v333, %v388
    %v397 = vadd.f32 %v334, %v389
    %v398 = vadd.f32 %v335, %v390
    %v399 = vadd.f32 %v336, %v391
    %v400 = vadd.f32 %v337, %v392
    %v401 = vadd.f32 %v338, %v393
    %s402 = scalar_lea.vmem %s0, 256
    %v403 = vld [vmem:[%s402] sm:$0xff]
    %v404 = vld [vmem:[%s402 + $0x8] sm:$0xff]
    %v405 = vld [vmem:[%s402 + $0x10] sm:$0xff]
    %v406 = vld [vmem:[%s402 + $0x18] sm:$0xff]
    %v407 = vld [vmem:[%s402 + $0x20] sm:$0xff]
    %v408 = vld [vmem:[%s402 + $0x28] sm:$0xff]
    %v409 = vld [vmem:[%s402 + $0x30] sm:$0xff]
    %v410 = vld [vmem:[%s402 + $0x38] sm:$0xff]
    %s411 = sld [smem:[#allocation3 + $0x4]]
    %v412 = vstv %s411
    %v413 = vmul.f32 %v403, %v412
    %v414 = vmul.f32 %v404, %v412
    %v415 = vmul.f32 %v405, %v412
    %v416 = vmul.f32 %v406, %v412
    %v417 = vmul.f32 %v407, %v412
    %v418 = vmul.f32 %v408, %v412
    %v419 = vmul.f32 %v409, %v412
    %v420 = vmul.f32 %v410, %v412
    %v421 = vadd.f32 %v358, %v413
    %v422 = vadd.f32 %v359, %v414
    %v423 = vadd.f32 %v360, %v415
    %v424 = vadd.f32 %v361, %v416
    %v425 = vadd.f32 %v362, %v417
    %v426 = vadd.f32 %v363, %v418
    %v427 = vadd.f32 %v364, %v419
    %v428 = vadd.f32 %v365, %v420
    %s429 = sld [smem:[#allocation3 + $0x84]]
    %v430 = vstv %s429
    %v431 = vmul.f32 %v403, %v430
    %v432 = vmul.f32 %v404, %v430
    %v433 = vmul.f32 %v405, %v430
    %v434 = vmul.f32 %v406, %v430
    %v435 = vmul.f32 %v407, %v430
    %v436 = vmul.f32 %v408, %v430
    %v437 = vmul.f32 %v409, %v430
    %v438 = vmul.f32 %v410, %v430
    %v439 = vadd.f32 %v376, %v431
    %v440 = vadd.f32 %v377, %v432
    %v441 = vadd.f32 %v378, %v433
    %v442 = vadd.f32 %v379, %v434
    %v443 = vadd.f32 %v380, %v435
    %v444 = vadd.f32 %v381, %v436
    %v445 = vadd.f32 %v382, %v437
    %v446 = vadd.f32 %v383, %v438
    %s447 = sld [smem:[#allocation3 + $0x104]]
    %v448 = vstv %s447
    %v449 = vmul.f32 %v403, %v448
    %v450 = vmul.f32 %v404, %v448
    %v451 = vmul.f32 %v405, %v448
    %v452 = vmul.f32 %v406, %v448
    %v453 = vmul.f32 %v407, %v448
    %v454 = vmul.f32 %v408, %v448
    %v455 = vmul.f32 %v409, %v448
    %v456 = vmul.f32 %v410, %v448
    %v457 = vadd.f32 %v394, %v449
    %v458 = vadd.f32 %v395, %v450
    %v459 = vadd.f32 %v396, %v451
    %v460 = vadd.f32 %v397, %v452
    %v461 = vadd.f32 %v398, %v453
    %v462 = vadd.f32 %v399, %v454
    %v463 = vadd.f32 %v400, %v455
    %v464 = vadd.f32 %v401, %v456
    %s465 = scalar_lea.vmem %s0, 320
    %v466 = vld [vmem:[%s465] sm:$0xff]
    %v467 = vld [vmem:[%s465 + $0x8] sm:$0xff]
    %v468 = vld [vmem:[%s465 + $0x10] sm:$0xff]
    %v469 = vld [vmem:[%s465 + $0x18] sm:$0xff]
    %v470 = vld [vmem:[%s465 + $0x20] sm:$0xff]
    %v471 = vld [vmem:[%s465 + $0x28] sm:$0xff]
    %v472 = vld [vmem:[%s465 + $0x30] sm:$0xff]
    %v473 = vld [vmem:[%s465 + $0x38] sm:$0xff]
    %s474 = sld [smem:[#allocation3 + $0x5]]
    %v475 = vstv %s474
    %v476 = vmul.f32 %v466, %v475
    %v477 = vmul.f32 %v467, %v475
    %v478 = vmul.f32 %v468, %v475
    %v479 = vmul.f32 %v469, %v475
    %v480 = vmul.f32 %v470, %v475
    %v481 = vmul.f32 %v471, %v475
    %v482 = vmul.f32 %v472, %v475
    %v483 = vmul.f32 %v473, %v475
    %v484 = vadd.f32 %v421, %v476
    %v485 = vadd.f32 %v422, %v477
    %v486 = vadd.f32 %v423, %v478
    %v487 = vadd.f32 %v424, %v479
    %v488 = vadd.f32 %v425, %v480
    %v489 = vadd.f32 %v426, %v481
    %v490 = vadd.f32 %v427, %v482
    %v491 = vadd.f32 %v428, %v483
    %s492 = sld [smem:[#allocation3 + $0x85]]
    %v493 = vstv %s492
    %v494 = vmul.f32 %v466, %v493
    %v495 = vmul.f32 %v467, %v493
    %v496 = vmul.f32 %v468, %v493
    %v497 = vmul.f32 %v469, %v493
    %v498 = vmul.f32 %v470, %v493
    %v499 = vmul.f32 %v471, %v493
    %v500 = vmul.f32 %v472, %v493
    %v501 = vmul.f32 %v473, %v493
    %v502 = vadd.f32 %v439, %v494
    %v503 = vadd.f32 %v440, %v495
    %v504 = vadd.f32 %v441, %v496
    %v505 = vadd.f32 %v442, %v497
    %v506 = vadd.f32 %v443, %v498
    %v507 = vadd.f32 %v444, %v499
    %v508 = vadd.f32 %v445, %v500
    %v509 = vadd.f32 %v446, %v501
    %s510 = sld [smem:[#allocation3 + $0x105]]
    %v511 = vstv %s510
    %v512 = vmul.f32 %v466, %v511
    %v513 = vmul.f32 %v467, %v511
    %v514 = vmul.f32 %v468, %v511
    %v515 = vmul.f32 %v469, %v511
    %v516 = vmul.f32 %v470, %v511
    %v517 = vmul.f32 %v471, %v511
    %v518 = vmul.f32 %v472, %v511
    %v519 = vmul.f32 %v473, %v511
    %v520 = vadd.f32 %v457, %v512
    %v521 = vadd.f32 %v458, %v513
    %v522 = vadd.f32 %v459, %v514
    %v523 = vadd.f32 %v460, %v515
    %v524 = vadd.f32 %v461, %v516
    %v525 = vadd.f32 %v462, %v517
    %v526 = vadd.f32 %v463, %v518
    %v527 = vadd.f32 %v464, %v519
    %s528 = scalar_lea.vmem %s0, 384
    %v529 = vld [vmem:[%s528] sm:$0xff]
    %v530 = vld [vmem:[%s528 + $0x8] sm:$0xff]
    %v531 = vld [vmem:[%s528 + $0x10] sm:$0xff]
    %v532 = vld [vmem:[%s528 + $0x18] sm:$0xff]
    %v533 = vld [vmem:[%s528 + $0x20] sm:$0xff]
    %v534 = vld [vmem:[%s528 + $0x28] sm:$0xff]
    %v535 = vld [vmem:[%s528 + $0x30] sm:$0xff]
    %v536 = vld [vmem:[%s528 + $0x38] sm:$0xff]
    %s537 = sld [smem:[#allocation3 + $0x6]]
    %v538 = vstv %s537
    %v539 = vmul.f32 %v529, %v538
    %v540 = vmul.f32 %v530, %v538
    %v541 = vmul.f32 %v531, %v538
    %v542 = vmul.f32 %v532, %v538
    %v543 = vmul.f32 %v533, %v538
    %v544 = vmul.f32 %v534, %v538
    %v545 = vmul.f32 %v535, %v538
    %v546 = vmul.f32 %v536, %v538
    %v547 = vadd.f32 %v484, %v539
    %v548 = vadd.f32 %v485, %v540
    %v549 = vadd.f32 %v486, %v541
    %v550 = vadd.f32 %v487, %v542
    %v551 = vadd.f32 %v488, %v543
    %v552 = vadd.f32 %v489, %v544
    %v553 = vadd.f32 %v490, %v545
    %v554 = vadd.f32 %v491, %v546
    %s555 = sld [smem:[#allocation3 + $0x86]]
    %v556 = vstv %s555
    %v557 = vmul.f32 %v529, %v556
    %v558 = vmul.f32 %v530, %v556
    %v559 = vmul.f32 %v531, %v556
    %v560 = vmul.f32 %v532, %v556
    %v561 = vmul.f32 %v533, %v556
    %v562 = vmul.f32 %v534, %v556
    %v563 = vmul.f32 %v535, %v556
    %v564 = vmul.f32 %v536, %v556
    %v565 = vadd.f32 %v502, %v557
    %v566 = vadd.f32 %v503, %v558
    %v567 = vadd.f32 %v504, %v559
    %v568 = vadd.f32 %v505, %v560
    %v569 = vadd.f32 %v506, %v561
    %v570 = vadd.f32 %v507, %v562
    %v571 = vadd.f32 %v508, %v563
    %v572 = vadd.f32 %v509, %v564
    %s573 = sld [smem:[#allocation3 + $0x106]]
    %v574 = vstv %s573
    %v575 = vmul.f32 %v529, %v574
    %v576 = vmul.f32 %v530, %v574
    %v577 = vmul.f32 %v531, %v574
    %v578 = vmul.f32 %v532, %v574
    %v579 = vmul.f32 %v533, %v574
    %v580 = vmul.f32 %v534, %v574
    %v581 = vmul.f32 %v535, %v574
    %v582 = vmul.f32 %v536, %v574
    %v583 = vadd.f32 %v520, %v575
    %v584 = vadd.f32 %v521, %v576
    %v585 = vadd.f32 %v522, %v577
    %v586 = vadd.f32 %v523, %v578
    %v587 = vadd.f32 %v524, %v579
    %v588 = vadd.f32 %v525, %v580
    %v589 = vadd.f32 %v526, %v581
    %v590 = vadd.f32 %v527, %v582
    %s591 = scalar_lea.vmem %s0, 448
    %v592 = vld [vmem:[%s591] sm:$0xff]
    %v593 = vld [vmem:[%s591 + $0x8] sm:$0xff]
    %v594 = vld [vmem:[%s591 + $0x10] sm:$0xff]
    %v595 = vld [vmem:[%s591 + $0x18] sm:$0xff]
    %v596 = vld [vmem:[%s591 + $0x20] sm:$0xff]
    %v597 = vld [vmem:[%s591 + $0x28] sm:$0xff]
    %v598 = vld [vmem:[%s591 + $0x30] sm:$0xff]
    %v599 = vld [vmem:[%s591 + $0x38] sm:$0xff]
    %s600 = sld [smem:[#allocation3 + $0x7]]
    %v601 = vstv %s600
    %v602 = vmul.f32 %v592, %v601
    %v603 = vmul.f32 %v593, %v601
    %v604 = vmul.f32 %v594, %v601
    %v605 = vmul.f32 %v595, %v601
    %v606 = vmul.f32 %v596, %v601
    %v607 = vmul.f32 %v597, %v601
    %v608 = vmul.f32 %v598, %v601
    %v609 = vmul.f32 %v599, %v601
    %v610 = vadd.f32 %v547, %v602
    %v611 = vadd.f32 %v548, %v603
    %v612 = vadd.f32 %v549, %v604
    %v613 = vadd.f32 %v550, %v605
    %v614 = vadd.f32 %v551, %v606
    %v615 = vadd.f32 %v552, %v607
    %v616 = vadd.f32 %v553, %v608
    %v617 = vadd.f32 %v554, %v609
    %s618 = sld [smem:[#allocation3 + $0x87]]
    %v619 = vstv %s618
    %v620 = vmul.f32 %v592, %v619
    %v621 = vmul.f32 %v593, %v619
    %v622 = vmul.f32 %v594, %v619
    %v623 = vmul.f32 %v595, %v619
    %v624 = vmul.f32 %v596, %v619
    %v625 = vmul.f32 %v597, %v619
    %v626 = vmul.f32 %v598, %v619
    %v627 = vmul.f32 %v599, %v619
    %v628 = vadd.f32 %v565, %v620
    %v629 = vadd.f32 %v566, %v621
    %v630 = vadd.f32 %v567, %v622
    %v631 = vadd.f32 %v568, %v623
    %v632 = vadd.f32 %v569, %v624
    %v633 = vadd.f32 %v570, %v625
    %v634 = vadd.f32 %v571, %v626
    %v635 = vadd.f32 %v572, %v627
    %s636 = sld [smem:[#allocation3 + $0x107]]
    %v637 = vstv %s636
    %v638 = vmul.f32 %v592, %v637
    %v639 = vmul.f32 %v593, %v637
    %v640 = vmul.f32 %v594, %v637
    %v641 = vmul.f32 %v595, %v637
    %v642 = vmul.f32 %v596, %v637
    %v643 = vmul.f32 %v597, %v637
    %v644 = vmul.f32 %v598, %v637
    %v645 = vmul.f32 %v599, %v637
    %v646 = vadd.f32 %v583, %v638
    %v647 = vadd.f32 %v584, %v639
    %v648 = vadd.f32 %v585, %v640
    %v649 = vadd.f32 %v586, %v641
    %v650 = vadd.f32 %v587, %v642
    %v651 = vadd.f32 %v588, %v643
    %v652 = vadd.f32 %v589, %v644
    %v653 = vadd.f32 %v590, %v645
    %s654 = scalar_lea.vmem %s0, 512
    %v655 = vld [vmem:[%s654] sm:$0xff]
    %v656 = vld [vmem:[%s654 + $0x8] sm:$0xff]
    %v657 = vld [vmem:[%s654 + $0x10] sm:$0xff]
    %v658 = vld [vmem:[%s654 + $0x18] sm:$0xff]
    %v659 = vld [vmem:[%s654 + $0x20] sm:$0xff]
    %v660 = vld [vmem:[%s654 + $0x28] sm:$0xff]
    %v661 = vld [vmem:[%s654 + $0x30] sm:$0xff]
    %v662 = vld [vmem:[%s654 + $0x38] sm:$0xff]
    %s663 = sld [smem:[#allocation3 + $0x8]]
    %v664 = vstv %s663
    %v665 = vmul.f32 %v655, %v664
    %v666 = vmul.f32 %v656, %v664
    %v667 = vmul.f32 %v657, %v664
    %v668 = vmul.f32 %v658, %v664
    %v669 = vmul.f32 %v659, %v664
    %v670 = vmul.f32 %v660, %v664
    %v671 = vmul.f32 %v661, %v664
    %v672 = vmul.f32 %v662, %v664
    %v673 = vadd.f32 %v610, %v665
    %v674 = vadd.f32 %v611, %v666
    %v675 = vadd.f32 %v612, %v667
    %v676 = vadd.f32 %v613, %v668
    %v677 = vadd.f32 %v614, %v669
    %v678 = vadd.f32 %v615, %v670
    %v679 = vadd.f32 %v616, %v671
    %v680 = vadd.f32 %v617, %v672
    %s681 = sld [smem:[#allocation3 + $0x88]]
    %v682 = vstv %s681
    %v683 = vmul.f32 %v655, %v682
    %v684 = vmul.f32 %v656, %v682
    %v685 = vmul.f32 %v657, %v682
    %v686 = vmul.f32 %v658, %v682
    %v687 = vmul.f32 %v659, %v682
    %v688 = vmul.f32 %v660, %v682
    %v689 = vmul.f32 %v661, %v682
    %v690 = vmul.f32 %v662, %v682
    %v691 = vadd.f32 %v628, %v683
    %v692 = vadd.f32 %v629, %v684
    %v693 = vadd.f32 %v630, %v685
    %v694 = vadd.f32 %v631, %v686
    %v695 = vadd.f32 %v632, %v687
    %v696 = vadd.f32 %v633, %v688
    %v697 = vadd.f32 %v634, %v689
    %v698 = vadd.f32 %v635, %v690
    %s699 = sld [smem:[#allocation3 + $0x108]]
    %v700 = vstv %s699
    %v701 = vmul.f32 %v655, %v700
    %v702 = vmul.f32 %v656, %v700
    %v703 = vmul.f32 %v657, %v700
    %v704 = vmul.f32 %v658, %v700
    %v705 = vmul.f32 %v659, %v700
    %v706 = vmul.f32 %v660, %v700
    %v707 = vmul.f32 %v661, %v700
    %v708 = vmul.f32 %v662, %v700
    %v709 = vadd.f32 %v646, %v701
    %v710 = vadd.f32 %v647, %v702
    %v711 = vadd.f32 %v648, %v703
    %v712 = vadd.f32 %v649, %v704
    %v713 = vadd.f32 %v650, %v705
    %v714 = vadd.f32 %v651, %v706
    %v715 = vadd.f32 %v652, %v707
    %v716 = vadd.f32 %v653, %v708
    %s717 = scalar_lea.vmem %s0, 576
    %v718 = vld [vmem:[%s717] sm:$0xff]
    %v719 = vld [vmem:[%s717 + $0x8] sm:$0xff]
    %v720 = vld [vmem:[%s717 + $0x10] sm:$0xff]
    %v721 = vld [vmem:[%s717 + $0x18] sm:$0xff]
    %v722 = vld [vmem:[%s717 + $0x20] sm:$0xff]
    %v723 = vld [vmem:[%s717 + $0x28] sm:$0xff]
    %v724 = vld [vmem:[%s717 + $0x30] sm:$0xff]
    %v725 = vld [vmem:[%s717 + $0x38] sm:$0xff]
    %s726 = sld [smem:[#allocation3 + $0x9]]
    %v727 = vstv %s726
    %v728 = vmul.f32 %v718, %v727
    %v729 = vmul.f32 %v719, %v727
    %v730 = vmul.f32 %v720, %v727
    %v731 = vmul.f32 %v721, %v727
    %v732 = vmul.f32 %v722, %v727
    %v733 = vmul.f32 %v723, %v727
    %v734 = vmul.f32 %v724, %v727
    %v735 = vmul.f32 %v725, %v727
    %v736 = vadd.f32 %v673, %v728
    %v737 = vadd.f32 %v674, %v729
    %v738 = vadd.f32 %v675, %v730
    %v739 = vadd.f32 %v676, %v731
    %v740 = vadd.f32 %v677, %v732
    %v741 = vadd.f32 %v678, %v733
    %v742 = vadd.f32 %v679, %v734
    %v743 = vadd.f32 %v680, %v735
    %s744 = sld [smem:[#allocation3 + $0x89]]
    %v745 = vstv %s744
    %v746 = vmul.f32 %v718, %v745
    %v747 = vmul.f32 %v719, %v745
    %v748 = vmul.f32 %v720, %v745
    %v749 = vmul.f32 %v721, %v745
    %v750 = vmul.f32 %v722, %v745
    %v751 = vmul.f32 %v723, %v745
    %v752 = vmul.f32 %v724, %v745
    %v753 = vmul.f32 %v725, %v745
    %v754 = vadd.f32 %v691, %v746
    %v755 = vadd.f32 %v692, %v747
    %v756 = vadd.f32 %v693, %v748
    %v757 = vadd.f32 %v694, %v749
    %v758 = vadd.f32 %v695, %v750
    %v759 = vadd.f32 %v696, %v751
    %v760 = vadd.f32 %v697, %v752
    %v761 = vadd.f32 %v698, %v753
    %s762 = sld [smem:[#allocation3 + $0x109]]
    %v763 = vstv %s762
    %v764 = vmul.f32 %v718, %v763
    %v765 = vmul.f32 %v719, %v763
    %v766 = vmul.f32 %v720, %v763
    %v767 = vmul.f32 %v721, %v763
    %v768 = vmul.f32 %v722, %v763
    %v769 = vmul.f32 %v723, %v763
    %v770 = vmul.f32 %v724, %v763
    %v771 = vmul.f32 %v725, %v763
    %v772 = vadd.f32 %v709, %v764
    %v773 = vadd.f32 %v710, %v765
    %v774 = vadd.f32 %v711, %v766
    %v775 = vadd.f32 %v712, %v767
    %v776 = vadd.f32 %v713, %v768
    %v777 = vadd.f32 %v714, %v769
    %v778 = vadd.f32 %v715, %v770
    %v779 = vadd.f32 %v716, %v771
    %s780 = scalar_lea.vmem %s0, 640
    %v781 = vld [vmem:[%s780] sm:$0xff]
    %v782 = vld [vmem:[%s780 + $0x8] sm:$0xff]
    %v783 = vld [vmem:[%s780 + $0x10] sm:$0xff]
    %v784 = vld [vmem:[%s780 + $0x18] sm:$0xff]
    %v785 = vld [vmem:[%s780 + $0x20] sm:$0xff]
    %v786 = vld [vmem:[%s780 + $0x28] sm:$0xff]
    %v787 = vld [vmem:[%s780 + $0x30] sm:$0xff]
    %v788 = vld [vmem:[%s780 + $0x38] sm:$0xff]
    %s789 = sld [smem:[#allocation3 + $0xa]]
    %v790 = vstv %s789
    %v791 = vmul.f32 %v781, %v790
    %v792 = vmul.f32 %v782, %v790
    %v793 = vmul.f32 %v783, %v790
    %v794 = vmul.f32 %v784, %v790
    %v795 = vmul.f32 %v785, %v790
    %v796 = vmul.f32 %v786, %v790
    %v797 = vmul.f32 %v787, %v790
    %v798 = vmul.f32 %v788, %v790
    %v799 = vadd.f32 %v736, %v791
    %v800 = vadd.f32 %v737, %v792
    %v801 = vadd.f32 %v738, %v793
    %v802 = vadd.f32 %v739, %v794
    %v803 = vadd.f32 %v740, %v795
    %v804 = vadd.f32 %v741, %v796
    %v805 = vadd.f32 %v742, %v797
    %v806 = vadd.f32 %v743, %v798
    %s807 = sld [smem:[#allocation3 + $0x8a]]
    %v808 = vstv %s807
    %v809 = vmul.f32 %v781, %v808
    %v810 = vmul.f32 %v782, %v808
    %v811 = vmul.f32 %v783, %v808
    %v812 = vmul.f32 %v784, %v808
    %v813 = vmul.f32 %v785, %v808
    %v814 = vmul.f32 %v786, %v808
    %v815 = vmul.f32 %v787, %v808
    %v816 = vmul.f32 %v788, %v808
    %v817 = vadd.f32 %v754, %v809
    %v818 = vadd.f32 %v755, %v810
    %v819 = vadd.f32 %v756, %v811
    %v820 = vadd.f32 %v757, %v812
    %v821 = vadd.f32 %v758, %v813
    %v822 = vadd.f32 %v759, %v814
    %v823 = vadd.f32 %v760, %v815
    %v824 = vadd.f32 %v761, %v816
    %s825 = sld [smem:[#allocation3 + $0x10a]]
    %v826 = vstv %s825
    %v827 = vmul.f32 %v781, %v826
    %v828 = vmul.f32 %v782, %v826
    %v829 = vmul.f32 %v783, %v826
    %v830 = vmul.f32 %v784, %v826
    %v831 = vmul.f32 %v785, %v826
    %v832 = vmul.f32 %v786, %v826
    %v833 = vmul.f32 %v787, %v826
    %v834 = vmul.f32 %v788, %v826
    %v835 = vadd.f32 %v772, %v827
    %v836 = vadd.f32 %v773, %v828
    %v837 = vadd.f32 %v774, %v829
    %v838 = vadd.f32 %v775, %v830
    %v839 = vadd.f32 %v776, %v831
    %v840 = vadd.f32 %v777, %v832
    %v841 = vadd.f32 %v778, %v833
    %v842 = vadd.f32 %v779, %v834
    %s843 = scalar_lea.vmem %s0, 704
    %v844 = vld [vmem:[%s843] sm:$0xff]
    %v845 = vld [vmem:[%s843 + $0x8] sm:$0xff]
    %v846 = vld [vmem:[%s843 + $0x10] sm:$0xff]
    %v847 = vld [vmem:[%s843 + $0x18] sm:$0xff]
    %v848 = vld [vmem:[%s843 + $0x20] sm:$0xff]
    %v849 = vld [vmem:[%s843 + $0x28] sm:$0xff]
    %v850 = vld [vmem:[%s843 + $0x30] sm:$0xff]
    %v851 = vld [vmem:[%s843 + $0x38] sm:$0xff]
    %s852 = sld [smem:[#allocation3 + $0xb]]
    %v853 = vstv %s852
    %v854 = vmul.f32 %v844, %v853
    %v855 = vmul.f32 %v845, %v853
    %v856 = vmul.f32 %v846, %v853
    %v857 = vmul.f32 %v847, %v853
    %v858 = vmul.f32 %v848, %v853
    %v859 = vmul.f32 %v849, %v853
    %v860 = vmul.f32 %v850, %v853
    %v861 = vmul.f32 %v851, %v853
    %v862 = vadd.f32 %v799, %v854
    %v863 = vadd.f32 %v800, %v855
    %v864 = vadd.f32 %v801, %v856
    %v865 = vadd.f32 %v802, %v857
    %v866 = vadd.f32 %v803, %v858
    %v867 = vadd.f32 %v804, %v859
    %v868 = vadd.f32 %v805, %v860
    %v869 = vadd.f32 %v806, %v861
    %s870 = sld [smem:[#allocation3 + $0x8b]]
    %v871 = vstv %s870
    %v872 = vmul.f32 %v844, %v871
    %v873 = vmul.f32 %v845, %v871
    %v874 = vmul.f32 %v846, %v871
    %v875 = vmul.f32 %v847, %v871
    %v876 = vmul.f32 %v848, %v871
    %v877 = vmul.f32 %v849, %v871
    %v878 = vmul.f32 %v850, %v871
    %v879 = vmul.f32 %v851, %v871
    %v880 = vadd.f32 %v817, %v872
    %v881 = vadd.f32 %v818, %v873
    %v882 = vadd.f32 %v819, %v874
    %v883 = vadd.f32 %v820, %v875
    %v884 = vadd.f32 %v821, %v876
    %v885 = vadd.f32 %v822, %v877
    %v886 = vadd.f32 %v823, %v878
    %v887 = vadd.f32 %v824, %v879
    %s888 = sld [smem:[#allocation3 + $0x10b]]
    %v889 = vstv %s888
    %v890 = vmul.f32 %v844, %v889
    %v891 = vmul.f32 %v845, %v889
    %v892 = vmul.f32 %v846, %v889
    %v893 = vmul.f32 %v847, %v889
    %v894 = vmul.f32 %v848, %v889
    %v895 = vmul.f32 %v849, %v889
    %v896 = vmul.f32 %v850, %v889
    %v897 = vmul.f32 %v851, %v889
    %v898 = vadd.f32 %v835, %v890
    %v899 = vadd.f32 %v836, %v891
    %v900 = vadd.f32 %v837, %v892
    %v901 = vadd.f32 %v838, %v893
    %v902 = vadd.f32 %v839, %v894
    %v903 = vadd.f32 %v840, %v895
    %v904 = vadd.f32 %v841, %v896
    %v905 = vadd.f32 %v842, %v897
    %s906 = scalar_lea.vmem %s0, 768
    %v907 = vld [vmem:[%s906] sm:$0xff]
    %v908 = vld [vmem:[%s906 + $0x8] sm:$0xff]
    %v909 = vld [vmem:[%s906 + $0x10] sm:$0xff]
    %v910 = vld [vmem:[%s906 + $0x18] sm:$0xff]
    %v911 = vld [vmem:[%s906 + $0x20] sm:$0xff]
    %v912 = vld [vmem:[%s906 + $0x28] sm:$0xff]
    %v913 = vld [vmem:[%s906 + $0x30] sm:$0xff]
    %v914 = vld [vmem:[%s906 + $0x38] sm:$0xff]
    %s915 = sld [smem:[#allocation3 + $0xc]]
    %v916 = vstv %s915
    %v917 = vmul.f32 %v907, %v916
    %v918 = vmul.f32 %v908, %v916
    %v919 = vmul.f32 %v909, %v916
    %v920 = vmul.f32 %v910, %v916
    %v921 = vmul.f32 %v911, %v916
    %v922 = vmul.f32 %v912, %v916
    %v923 = vmul.f32 %v913, %v916
    %v924 = vmul.f32 %v914, %v916
    %v925 = vadd.f32 %v862, %v917
    %v926 = vadd.f32 %v863, %v918
    %v927 = vadd.f32 %v864, %v919
    %v928 = vadd.f32 %v865, %v920
    %v929 = vadd.f32 %v866, %v921
    %v930 = vadd.f32 %v867, %v922
    %v931 = vadd.f32 %v868, %v923
    %v932 = vadd.f32 %v869, %v924
    %s933 = sld [smem:[#allocation3 + $0x8c]]
    %v934 = vstv %s933
    %v935 = vmul.f32 %v907, %v934
    %v936 = vmul.f32 %v908, %v934
    %v937 = vmul.f32 %v909, %v934
    %v938 = vmul.f32 %v910, %v934
    %v939 = vmul.f32 %v911, %v934
    %v940 = vmul.f32 %v912, %v934
    %v941 = vmul.f32 %v913, %v934
    %v942 = vmul.f32 %v914, %v934
    %v943 = vadd.f32 %v880, %v935
    %v944 = vadd.f32 %v881, %v936
    %v945 = vadd.f32 %v882, %v937
    %v946 = vadd.f32 %v883, %v938
    %v947 = vadd.f32 %v884, %v939
    %v948 = vadd.f32 %v885, %v940
    %v949 = vadd.f32 %v886, %v941
    %v950 = vadd.f32 %v887, %v942
    %s951 = sld [smem:[#allocation3 + $0x10c]]
    %v952 = vstv %s951
    %v953 = vmul.f32 %v907, %v952
    %v954 = vmul.f32 %v908, %v952
    %v955 = vmul.f32 %v909, %v952
    %v956 = vmul.f32 %v910, %v952
    %v957 = vmul.f32 %v911, %v952
    %v958 = vmul.f32 %v912, %v952
    %v959 = vmul.f32 %v913, %v952
    %v960 = vmul.f32 %v914, %v952
    %v961 = vadd.f32 %v898, %v953
    %v962 = vadd.f32 %v899, %v954
    %v963 = vadd.f32 %v900, %v955
    %v964 = vadd.f32 %v901, %v956
    %v965 = vadd.f32 %v902, %v957
    %v966 = vadd.f32 %v903, %v958
    %v967 = vadd.f32 %v904, %v959
    %v968 = vadd.f32 %v905, %v960
    %s969 = scalar_lea.vmem %s0, 832
    %v970 = vld [vmem:[%s969] sm:$0xff]
    %v971 = vld [vmem:[%s969 + $0x8] sm:$0xff]
    %v972 = vld [vmem:[%s969 + $0x10] sm:$0xff]
    %v973 = vld [vmem:[%s969 + $0x18] sm:$0xff]
    %v974 = vld [vmem:[%s969 + $0x20] sm:$0xff]
    %v975 = vld [vmem:[%s969 + $0x28] sm:$0xff]
    %v976 = vld [vmem:[%s969 + $0x30] sm:$0xff]
    %v977 = vld [vmem:[%s969 + $0x38] sm:$0xff]
    %s978 = sld [smem:[#allocation3 + $0xd]]
    %v979 = vstv %s978
    %v980 = vmul.f32 %v970, %v979
    %v981 = vmul.f32 %v971, %v979
    %v982 = vmul.f32 %v972, %v979
    %v983 = vmul.f32 %v973, %v979
    %v984 = vmul.f32 %v974, %v979
    %v985 = vmul.f32 %v975, %v979
    %v986 = vmul.f32 %v976, %v979
    %v987 = vmul.f32 %v977, %v979
    %v988 = vadd.f32 %v925, %v980
    %v989 = vadd.f32 %v926, %v981
    %v990 = vadd.f32 %v927, %v982
    %v991 = vadd.f32 %v928, %v983
    %v992 = vadd.f32 %v929, %v984
    %v993 = vadd.f32 %v930, %v985
    %v994 = vadd.f32 %v931, %v986
    %v995 = vadd.f32 %v932, %v987
    %s996 = sld [smem:[#allocation3 + $0x8d]]
    %v997 = vstv %s996
    %v998 = vmul.f32 %v970, %v997
    %v999 = vmul.f32 %v971, %v997
    %v1000 = vmul.f32 %v972, %v997
    %v1001 = vmul.f32 %v973, %v997
    %v1002 = vmul.f32 %v974, %v997
    %v1003 = vmul.f32 %v975, %v997
    %v1004 = vmul.f32 %v976, %v997
    %v1005 = vmul.f32 %v977, %v997
    %v1006 = vadd.f32 %v943, %v998
    %v1007 = vadd.f32 %v944, %v999
    %v1008 = vadd.f32 %v945, %v1000
    %v1009 = vadd.f32 %v946, %v1001
    %v1010 = vadd.f32 %v947, %v1002
    %v1011 = vadd.f32 %v948, %v1003
    %v1012 = vadd.f32 %v949, %v1004
    %v1013 = vadd.f32 %v950, %v1005
    %s1014 = sld [smem:[#allocation3 + $0x10d]]
    %v1015 = vstv %s1014
    %v1016 = vmul.f32 %v970, %v1015
    %v1017 = vmul.f32 %v971, %v1015
    %v1018 = vmul.f32 %v972, %v1015
    %v1019 = vmul.f32 %v973, %v1015
    %v1020 = vmul.f32 %v974, %v1015
    %v1021 = vmul.f32 %v975, %v1015
    %v1022 = vmul.f32 %v976, %v1015
    %v1023 = vmul.f32 %v977, %v1015
    %v1024 = vadd.f32 %v961, %v1016
    %v1025 = vadd.f32 %v962, %v1017
    %v1026 = vadd.f32 %v963, %v1018
    %v1027 = vadd.f32 %v964, %v1019
    %v1028 = vadd.f32 %v965, %v1020
    %v1029 = vadd.f32 %v966, %v1021
    %v1030 = vadd.f32 %v967, %v1022
    %v1031 = vadd.f32 %v968, %v1023
    %s1032 = scalar_lea.vmem %s0, 896
    %v1033 = vld [vmem:[%s1032] sm:$0xff]
    %v1034 = vld [vmem:[%s1032 + $0x8] sm:$0xff]
    %v1035 = vld [vmem:[%s1032 + $0x10] sm:$0xff]
    %v1036 = vld [vmem:[%s1032 + $0x18] sm:$0xff]
    %v1037 = vld [vmem:[%s1032 + $0x20] sm:$0xff]
    %v1038 = vld [vmem:[%s1032 + $0x28] sm:$0xff]
    %v1039 = vld [vmem:[%s1032 + $0x30] sm:$0xff]
    %v1040 = vld [vmem:[%s1032 + $0x38] sm:$0xff]
    %s1041 = sld [smem:[#allocation3 + $0xe]]
    %v1042 = vstv %s1041
    %v1043 = vmul.f32 %v1033, %v1042
    %v1044 = vmul.f32 %v1034, %v1042
    %v1045 = vmul.f32 %v1035, %v1042
    %v1046 = vmul.f32 %v1036, %v1042
    %v1047 = vmul.f32 %v1037, %v1042
    %v1048 = vmul.f32 %v1038, %v1042
    %v1049 = vmul.f32 %v1039, %v1042
    %v1050 = vmul.f32 %v1040, %v1042
    %v1051 = vadd.f32 %v988, %v1043
    %v1052 = vadd.f32 %v989, %v1044
    %v1053 = vadd.f32 %v990, %v1045
    %v1054 = vadd.f32 %v991, %v1046
    %v1055 = vadd.f32 %v992, %v1047
    %v1056 = vadd.f32 %v993, %v1048
    %v1057 = vadd.f32 %v994, %v1049
    %v1058 = vadd.f32 %v995, %v1050
    %s1059 = sld [smem:[#allocation3 + $0x8e]]
    %v1060 = vstv %s1059
    %v1061 = vmul.f32 %v1033, %v1060
    %v1062 = vmul.f32 %v1034, %v1060
    %v1063 = vmul.f32 %v1035, %v1060
    %v1064 = vmul.f32 %v1036, %v1060
    %v1065 = vmul.f32 %v1037, %v1060
    %v1066 = vmul.f32 %v1038, %v1060
    %v1067 = vmul.f32 %v1039, %v1060
    %v1068 = vmul.f32 %v1040, %v1060
    %v1069 = vadd.f32 %v1006, %v1061
    %v1070 = vadd.f32 %v1007, %v1062
    %v1071 = vadd.f32 %v1008, %v1063
    %v1072 = vadd.f32 %v1009, %v1064
    %v1073 = vadd.f32 %v1010, %v1065
    %v1074 = vadd.f32 %v1011, %v1066
    %v1075 = vadd.f32 %v1012, %v1067
    %v1076 = vadd.f32 %v1013, %v1068
    %s1077 = sld [smem:[#allocation3 + $0x10e]]
    %v1078 = vstv %s1077
    %v1079 = vmul.f32 %v1033, %v1078
    %v1080 = vmul.f32 %v1034, %v1078
    %v1081 = vmul.f32 %v1035, %v1078
    %v1082 = vmul.f32 %v1036, %v1078
    %v1083 = vmul.f32 %v1037, %v1078
    %v1084 = vmul.f32 %v1038, %v1078
    %v1085 = vmul.f32 %v1039, %v1078
    %v1086 = vmul.f32 %v1040, %v1078
    %v1087 = vadd.f32 %v1024, %v1079
    %v1088 = vadd.f32 %v1025, %v1080
    %v1089 = vadd.f32 %v1026, %v1081
    %v1090 = vadd.f32 %v1027, %v1082
    %v1091 = vadd.f32 %v1028, %v1083
    %v1092 = vadd.f32 %v1029, %v1084
    %v1093 = vadd.f32 %v1030, %v1085
    %v1094 = vadd.f32 %v1031, %v1086
    %s1095 = scalar_lea.vmem %s0, 960
    %v1096 = vld [vmem:[%s1095] sm:$0xff]
    %v1097 = vld [vmem:[%s1095 + $0x8] sm:$0xff]
    %v1098 = vld [vmem:[%s1095 + $0x10] sm:$0xff]
    %v1099 = vld [vmem:[%s1095 + $0x18] sm:$0xff]
    %v1100 = vld [vmem:[%s1095 + $0x20] sm:$0xff]
    %v1101 = vld [vmem:[%s1095 + $0x28] sm:$0xff]
    %v1102 = vld [vmem:[%s1095 + $0x30] sm:$0xff]
    %v1103 = vld [vmem:[%s1095 + $0x38] sm:$0xff]
    %s1104 = sld [smem:[#allocation3 + $0xf]]
    %v1105 = vstv %s1104
    %v1106 = vmul.f32 %v1096, %v1105
    %v1107 = vmul.f32 %v1097, %v1105
    %v1108 = vmul.f32 %v1098, %v1105
    %v1109 = vmul.f32 %v1099, %v1105
    %v1110 = vmul.f32 %v1100, %v1105
    %v1111 = vmul.f32 %v1101, %v1105
    %v1112 = vmul.f32 %v1102, %v1105
    %v1113 = vmul.f32 %v1103, %v1105
    %v1114 = vadd.f32 %v1051, %v1106
    %v1115 = vadd.f32 %v1052, %v1107
    %v1116 = vadd.f32 %v1053, %v1108
    %v1117 = vadd.f32 %v1054, %v1109
    %v1118 = vadd.f32 %v1055, %v1110
    %v1119 = vadd.f32 %v1056, %v1111
    %v1120 = vadd.f32 %v1057, %v1112
    %v1121 = vadd.f32 %v1058, %v1113
    %s1122 = sld [smem:[#allocation3 + $0x8f]]
    %v1123 = vstv %s1122
    %v1124 = vmul.f32 %v1096, %v1123
    %v1125 = vmul.f32 %v1097, %v1123
    %v1126 = vmul.f32 %v1098, %v1123
    %v1127 = vmul.f32 %v1099, %v1123
    %v1128 = vmul.f32 %v1100, %v1123
    %v1129 = vmul.f32 %v1101, %v1123
    %v1130 = vmul.f32 %v1102, %v1123
    %v1131 = vmul.f32 %v1103, %v1123
    %v1132 = vadd.f32 %v1069, %v1124
    %v1133 = vadd.f32 %v1070, %v1125
    %v1134 = vadd.f32 %v1071, %v1126
    %v1135 = vadd.f32 %v1072, %v1127
    %v1136 = vadd.f32 %v1073, %v1128
    %v1137 = vadd.f32 %v1074, %v1129
    %v1138 = vadd.f32 %v1075, %v1130
    %v1139 = vadd.f32 %v1076, %v1131
    %s1140 = sld [smem:[#allocation3 + $0x10f]]
    %v1141 = vstv %s1140
    %v1142 = vmul.f32 %v1096, %v1141
    %v1143 = vmul.f32 %v1097, %v1141
    %v1144 = vmul.f32 %v1098, %v1141
    %v1145 = vmul.f32 %v1099, %v1141
    %v1146 = vmul.f32 %v1100, %v1141
    %v1147 = vmul.f32 %v1101, %v1141
    %v1148 = vmul.f32 %v1102, %v1141
    %v1149 = vmul.f32 %v1103, %v1141
    %v1150 = vadd.f32 %v1087, %v1142
    %v1151 = vadd.f32 %v1088, %v1143
    %v1152 = vadd.f32 %v1089, %v1144
    %v1153 = vadd.f32 %v1090, %v1145
    %v1154 = vadd.f32 %v1091, %v1146
    %v1155 = vadd.f32 %v1092, %v1147
    %v1156 = vadd.f32 %v1093, %v1148
    %v1157 = vadd.f32 %v1094, %v1149
    %s1158 = scalar_lea.vmem %s0, 1024
    %v1159 = vld [vmem:[%s1158] sm:$0xff]
    %v1160 = vld [vmem:[%s1158 + $0x8] sm:$0xff]
    %v1161 = vld [vmem:[%s1158 + $0x10] sm:$0xff]
    %v1162 = vld [vmem:[%s1158 + $0x18] sm:$0xff]
    %v1163 = vld [vmem:[%s1158 + $0x20] sm:$0xff]
    %v1164 = vld [vmem:[%s1158 + $0x28] sm:$0xff]
    %v1165 = vld [vmem:[%s1158 + $0x30] sm:$0xff]
    %v1166 = vld [vmem:[%s1158 + $0x38] sm:$0xff]
    %s1167 = sld [smem:[#allocation3 + $0x10]]
    %v1168 = vstv %s1167
    %v1169 = vmul.f32 %v1159, %v1168
    %v1170 = vmul.f32 %v1160, %v1168
    %v1171 = vmul.f32 %v1161, %v1168
    %v1172 = vmul.f32 %v1162, %v1168
    %v1173 = vmul.f32 %v1163, %v1168
    %v1174 = vmul.f32 %v1164, %v1168
    %v1175 = vmul.f32 %v1165, %v1168
    %v1176 = vmul.f32 %v1166, %v1168
    %v1177 = vadd.f32 %v1114, %v1169
    %v1178 = vadd.f32 %v1115, %v1170
    %v1179 = vadd.f32 %v1116, %v1171
    %v1180 = vadd.f32 %v1117, %v1172
    %v1181 = vadd.f32 %v1118, %v1173
    %v1182 = vadd.f32 %v1119, %v1174
    %v1183 = vadd.f32 %v1120, %v1175
    %v1184 = vadd.f32 %v1121, %v1176
    %s1185 = sld [smem:[#allocation3 + $0x90]]
    %v1186 = vstv %s1185
    %v1187 = vmul.f32 %v1159, %v1186
    %v1188 = vmul.f32 %v1160, %v1186
    %v1189 = vmul.f32 %v1161, %v1186
    %v1190 = vmul.f32 %v1162, %v1186
    %v1191 = vmul.f32 %v1163, %v1186
    %v1192 = vmul.f32 %v1164, %v1186
    %v1193 = vmul.f32 %v1165, %v1186
    %v1194 = vmul.f32 %v1166, %v1186
    %v1195 = vadd.f32 %v1132, %v1187
    %v1196 = vadd.f32 %v1133, %v1188
    %v1197 = vadd.f32 %v1134, %v1189
    %v1198 = vadd.f32 %v1135, %v1190
    %v1199 = vadd.f32 %v1136, %v1191
    %v1200 = vadd.f32 %v1137, %v1192
    %v1201 = vadd.f32 %v1138, %v1193
    %v1202 = vadd.f32 %v1139, %v1194
    %s1203 = sld [smem:[#allocation3 + $0x110]]
    %v1204 = vstv %s1203
    %v1205 = vmul.f32 %v1159, %v1204
    %v1206 = vmul.f32 %v1160, %v1204
    %v1207 = vmul.f32 %v1161, %v1204
    %v1208 = vmul.f32 %v1162, %v1204
    %v1209 = vmul.f32 %v1163, %v1204
    %v1210 = vmul.f32 %v1164, %v1204
    %v1211 = vmul.f32 %v1165, %v1204
    %v1212 = vmul.f32 %v1166, %v1204
    %v1213 = vadd.f32 %v1150, %v1205
    %v1214 = vadd.f32 %v1151, %v1206
    %v1215 = vadd.f32 %v1152, %v1207
    %v1216 = vadd.f32 %v1153, %v1208
    %v1217 = vadd.f32 %v1154, %v1209
    %v1218 = vadd.f32 %v1155, %v1210
    %v1219 = vadd.f32 %v1156, %v1211
    %v1220 = vadd.f32 %v1157, %v1212
    %s1221 = scalar_lea.vmem %s0, 1088
    %v1222 = vld [vmem:[%s1221] sm:$0xff]
    %v1223 = vld [vmem:[%s1221 + $0x8] sm:$0xff]
    %v1224 = vld [vmem:[%s1221 + $0x10] sm:$0xff]
    %v1225 = vld [vmem:[%s1221 + $0x18] sm:$0xff]
    %v1226 = vld [vmem:[%s1221 + $0x20] sm:$0xff]
    %v1227 = vld [vmem:[%s1221 + $0x28] sm:$0xff]
    %v1228 = vld [vmem:[%s1221 + $0x30] sm:$0xff]
    %v1229 = vld [vmem:[%s1221 + $0x38] sm:$0xff]
    %s1230 = sld [smem:[#allocation3 + $0x11]]
    %v1231 = vstv %s1230
    %v1232 = vmul.f32 %v1222, %v1231
    %v1233 = vmul.f32 %v1223, %v1231
    %v1234 = vmul.f32 %v1224, %v1231
    %v1235 = vmul.f32 %v1225, %v1231
    %v1236 = vmul.f32 %v1226, %v1231
    %v1237 = vmul.f32 %v1227, %v1231
    %v1238 = vmul.f32 %v1228, %v1231
    %v1239 = vmul.f32 %v1229, %v1231
    %v1240 = vadd.f32 %v1177, %v1232
    %v1241 = vadd.f32 %v1178, %v1233
    %v1242 = vadd.f32 %v1179, %v1234
    %v1243 = vadd.f32 %v1180, %v1235
    %v1244 = vadd.f32 %v1181, %v1236
    %v1245 = vadd.f32 %v1182, %v1237
    %v1246 = vadd.f32 %v1183, %v1238
    %v1247 = vadd.f32 %v1184, %v1239
    %s1248 = sld [smem:[#allocation3 + $0x91]]
    %v1249 = vstv %s1248
    %v1250 = vmul.f32 %v1222, %v1249
    %v1251 = vmul.f32 %v1223, %v1249
    %v1252 = vmul.f32 %v1224, %v1249
    %v1253 = vmul.f32 %v1225, %v1249
    %v1254 = vmul.f32 %v1226, %v1249
    %v1255 = vmul.f32 %v1227, %v1249
    %v1256 = vmul.f32 %v1228, %v1249
    %v1257 = vmul.f32 %v1229, %v1249
    %v1258 = vadd.f32 %v1195, %v1250
    %v1259 = vadd.f32 %v1196, %v1251
    %v1260 = vadd.f32 %v1197, %v1252
    %v1261 = vadd.f32 %v1198, %v1253
    %v1262 = vadd.f32 %v1199, %v1254
    %v1263 = vadd.f32 %v1200, %v1255
    %v1264 = vadd.f32 %v1201, %v1256
    %v1265 = vadd.f32 %v1202, %v1257
    %s1266 = sld [smem:[#allocation3 + $0x111]]
    %v1267 = vstv %s1266
    %v1268 = vmul.f32 %v1222, %v1267
    %v1269 = vmul.f32 %v1223, %v1267
    %v1270 = vmul.f32 %v1224, %v1267
    %v1271 = vmul.f32 %v1225, %v1267
    %v1272 = vmul.f32 %v1226, %v1267
    %v1273 = vmul.f32 %v1227, %v1267
    %v1274 = vmul.f32 %v1228, %v1267
    %v1275 = vmul.f32 %v1229, %v1267
    %v1276 = vadd.f32 %v1213, %v1268
    %v1277 = vadd.f32 %v1214, %v1269
    %v1278 = vadd.f32 %v1215, %v1270
    %v1279 = vadd.f32 %v1216, %v1271
    %v1280 = vadd.f32 %v1217, %v1272
    %v1281 = vadd.f32 %v1218, %v1273
    %v1282 = vadd.f32 %v1219, %v1274
    %v1283 = vadd.f32 %v1220, %v1275
    %s1284 = scalar_lea.vmem %s0, 1152
    %v1285 = vld [vmem:[%s1284] sm:$0xff]
    %v1286 = vld [vmem:[%s1284 + $0x8] sm:$0xff]
    %v1287 = vld [vmem:[%s1284 + $0x10] sm:$0xff]
    %v1288 = vld [vmem:[%s1284 + $0x18] sm:$0xff]
    %v1289 = vld [vmem:[%s1284 + $0x20] sm:$0xff]
    %v1290 = vld [vmem:[%s1284 + $0x28] sm:$0xff]
    %v1291 = vld [vmem:[%s1284 + $0x30] sm:$0xff]
    %v1292 = vld [vmem:[%s1284 + $0x38] sm:$0xff]
    %s1293 = sld [smem:[#allocation3 + $0x12]]
    %v1294 = vstv %s1293
    %v1295 = vmul.f32 %v1285, %v1294
    %v1296 = vmul.f32 %v1286, %v1294
    %v1297 = vmul.f32 %v1287, %v1294
    %v1298 = vmul.f32 %v1288, %v1294
    %v1299 = vmul.f32 %v1289, %v1294
    %v1300 = vmul.f32 %v1290, %v1294
    %v1301 = vmul.f32 %v1291, %v1294
    %v1302 = vmul.f32 %v1292, %v1294
    %v1303 = vadd.f32 %v1240, %v1295
    %v1304 = vadd.f32 %v1241, %v1296
    %v1305 = vadd.f32 %v1242, %v1297
    %v1306 = vadd.f32 %v1243, %v1298
    %v1307 = vadd.f32 %v1244, %v1299
    %v1308 = vadd.f32 %v1245, %v1300
    %v1309 = vadd.f32 %v1246, %v1301
    %v1310 = vadd.f32 %v1247, %v1302
    %s1311 = sld [smem:[#allocation3 + $0x92]]
    %v1312 = vstv %s1311
    %v1313 = vmul.f32 %v1285, %v1312
    %v1314 = vmul.f32 %v1286, %v1312
    %v1315 = vmul.f32 %v1287, %v1312
    %v1316 = vmul.f32 %v1288, %v1312
    %v1317 = vmul.f32 %v1289, %v1312
    %v1318 = vmul.f32 %v1290, %v1312
    %v1319 = vmul.f32 %v1291, %v1312
    %v1320 = vmul.f32 %v1292, %v1312
    %v1321 = vadd.f32 %v1258, %v1313
    %v1322 = vadd.f32 %v1259, %v1314
    %v1323 = vadd.f32 %v1260, %v1315
    %v1324 = vadd.f32 %v1261, %v1316
    %v1325 = vadd.f32 %v1262, %v1317
    %v1326 = vadd.f32 %v1263, %v1318
    %v1327 = vadd.f32 %v1264, %v1319
    %v1328 = vadd.f32 %v1265, %v1320
    %s1329 = sld [smem:[#allocation3 + $0x112]]
    %v1330 = vstv %s1329
    %v1331 = vmul.f32 %v1285, %v1330
    %v1332 = vmul.f32 %v1286, %v1330
    %v1333 = vmul.f32 %v1287, %v1330
    %v1334 = vmul.f32 %v1288, %v1330
    %v1335 = vmul.f32 %v1289, %v1330
    %v1336 = vmul.f32 %v1290, %v1330
    %v1337 = vmul.f32 %v1291, %v1330
    %v1338 = vmul.f32 %v1292, %v1330
    %v1339 = vadd.f32 %v1276, %v1331
    %v1340 = vadd.f32 %v1277, %v1332
    %v1341 = vadd.f32 %v1278, %v1333
    %v1342 = vadd.f32 %v1279, %v1334
    %v1343 = vadd.f32 %v1280, %v1335
    %v1344 = vadd.f32 %v1281, %v1336
    %v1345 = vadd.f32 %v1282, %v1337
    %v1346 = vadd.f32 %v1283, %v1338
    %s1347 = scalar_lea.vmem %s0, 1216
    %v1348 = vld [vmem:[%s1347] sm:$0xff]
    %v1349 = vld [vmem:[%s1347 + $0x8] sm:$0xff]
    %v1350 = vld [vmem:[%s1347 + $0x10] sm:$0xff]
    %v1351 = vld [vmem:[%s1347 + $0x18] sm:$0xff]
    %v1352 = vld [vmem:[%s1347 + $0x20] sm:$0xff]
    %v1353 = vld [vmem:[%s1347 + $0x28] sm:$0xff]
    %v1354 = vld [vmem:[%s1347 + $0x30] sm:$0xff]
    %v1355 = vld [vmem:[%s1347 + $0x38] sm:$0xff]
    %s1356 = sld [smem:[#allocation3 + $0x13]]
    %v1357 = vstv %s1356
    %v1358 = vmul.f32 %v1348, %v1357
    %v1359 = vmul.f32 %v1349, %v1357
    %v1360 = vmul.f32 %v1350, %v1357
    %v1361 = vmul.f32 %v1351, %v1357
    %v1362 = vmul.f32 %v1352, %v1357
    %v1363 = vmul.f32 %v1353, %v1357
    %v1364 = vmul.f32 %v1354, %v1357
    %v1365 = vmul.f32 %v1355, %v1357
    %v1366 = vadd.f32 %v1303, %v1358
    %v1367 = vadd.f32 %v1304, %v1359
    %v1368 = vadd.f32 %v1305, %v1360
    %v1369 = vadd.f32 %v1306, %v1361
    %v1370 = vadd.f32 %v1307, %v1362
    %v1371 = vadd.f32 %v1308, %v1363
    %v1372 = vadd.f32 %v1309, %v1364
    %v1373 = vadd.f32 %v1310, %v1365
    %s1374 = sld [smem:[#allocation3 + $0x93]]
    %v1375 = vstv %s1374
    %v1376 = vmul.f32 %v1348, %v1375
    %v1377 = vmul.f32 %v1349, %v1375
    %v1378 = vmul.f32 %v1350, %v1375
    %v1379 = vmul.f32 %v1351, %v1375
    %v1380 = vmul.f32 %v1352, %v1375
    %v1381 = vmul.f32 %v1353, %v1375
    %v1382 = vmul.f32 %v1354, %v1375
    %v1383 = vmul.f32 %v1355, %v1375
    %v1384 = vadd.f32 %v1321, %v1376
    %v1385 = vadd.f32 %v1322, %v1377
    %v1386 = vadd.f32 %v1323, %v1378
    %v1387 = vadd.f32 %v1324, %v1379
    %v1388 = vadd.f32 %v1325, %v1380
    %v1389 = vadd.f32 %v1326, %v1381
    %v1390 = vadd.f32 %v1327, %v1382
    %v1391 = vadd.f32 %v1328, %v1383
    %s1392 = sld [smem:[#allocation3 + $0x113]]
    %v1393 = vstv %s1392
    %v1394 = vmul.f32 %v1348, %v1393
    %v1395 = vmul.f32 %v1349, %v1393
    %v1396 = vmul.f32 %v1350, %v1393
    %v1397 = vmul.f32 %v1351, %v1393
    %v1398 = vmul.f32 %v1352, %v1393
    %v1399 = vmul.f32 %v1353, %v1393
    %v1400 = vmul.f32 %v1354, %v1393
    %v1401 = vmul.f32 %v1355, %v1393
    %v1402 = vadd.f32 %v1339, %v1394
    %v1403 = vadd.f32 %v1340, %v1395
    %v1404 = vadd.f32 %v1341, %v1396
    %v1405 = vadd.f32 %v1342, %v1397
    %v1406 = vadd.f32 %v1343, %v1398
    %v1407 = vadd.f32 %v1344, %v1399
    %v1408 = vadd.f32 %v1345, %v1400
    %v1409 = vadd.f32 %v1346, %v1401
    %s1410 = scalar_lea.vmem %s0, 1280
    %v1411 = vld [vmem:[%s1410] sm:$0xff]
    %v1412 = vld [vmem:[%s1410 + $0x8] sm:$0xff]
    %v1413 = vld [vmem:[%s1410 + $0x10] sm:$0xff]
    %v1414 = vld [vmem:[%s1410 + $0x18] sm:$0xff]
    %v1415 = vld [vmem:[%s1410 + $0x20] sm:$0xff]
    %v1416 = vld [vmem:[%s1410 + $0x28] sm:$0xff]
    %v1417 = vld [vmem:[%s1410 + $0x30] sm:$0xff]
    %v1418 = vld [vmem:[%s1410 + $0x38] sm:$0xff]
    %s1419 = sld [smem:[#allocation3 + $0x14]]
    %v1420 = vstv %s1419
    %v1421 = vmul.f32 %v1411, %v1420
    %v1422 = vmul.f32 %v1412, %v1420
    %v1423 = vmul.f32 %v1413, %v1420
    %v1424 = vmul.f32 %v1414, %v1420
    %v1425 = vmul.f32 %v1415, %v1420
    %v1426 = vmul.f32 %v1416, %v1420
    %v1427 = vmul.f32 %v1417, %v1420
    %v1428 = vmul.f32 %v1418, %v1420
    %v1429 = vadd.f32 %v1366, %v1421
    %v1430 = vadd.f32 %v1367, %v1422
    %v1431 = vadd.f32 %v1368, %v1423
    %v1432 = vadd.f32 %v1369, %v1424
    %v1433 = vadd.f32 %v1370, %v1425
    %v1434 = vadd.f32 %v1371, %v1426
    %v1435 = vadd.f32 %v1372, %v1427
    %v1436 = vadd.f32 %v1373, %v1428
    %s1437 = sld [smem:[#allocation3 + $0x94]]
    %v1438 = vstv %s1437
    %v1439 = vmul.f32 %v1411, %v1438
    %v1440 = vmul.f32 %v1412, %v1438
    %v1441 = vmul.f32 %v1413, %v1438
    %v1442 = vmul.f32 %v1414, %v1438
    %v1443 = vmul.f32 %v1415, %v1438
    %v1444 = vmul.f32 %v1416, %v1438
    %v1445 = vmul.f32 %v1417, %v1438
    %v1446 = vmul.f32 %v1418, %v1438
    %v1447 = vadd.f32 %v1384, %v1439
    %v1448 = vadd.f32 %v1385, %v1440
    %v1449 = vadd.f32 %v1386, %v1441
    %v1450 = vadd.f32 %v1387, %v1442
    %v1451 = vadd.f32 %v1388, %v1443
    %v1452 = vadd.f32 %v1389, %v1444
    %v1453 = vadd.f32 %v1390, %v1445
    %v1454 = vadd.f32 %v1391, %v1446
    %s1455 = sld [smem:[#allocation3 + $0x114]]
    %v1456 = vstv %s1455
    %v1457 = vmul.f32 %v1411, %v1456
    %v1458 = vmul.f32 %v1412, %v1456
    %v1459 = vmul.f32 %v1413, %v1456
    %v1460 = vmul.f32 %v1414, %v1456
    %v1461 = vmul.f32 %v1415, %v1456
    %v1462 = vmul.f32 %v1416, %v1456
    %v1463 = vmul.f32 %v1417, %v1456
    %v1464 = vmul.f32 %v1418, %v1456
    %v1465 = vadd.f32 %v1402, %v1457
    %v1466 = vadd.f32 %v1403, %v1458
    %v1467 = vadd.f32 %v1404, %v1459
    %v1468 = vadd.f32 %v1405, %v1460
    %v1469 = vadd.f32 %v1406, %v1461
    %v1470 = vadd.f32 %v1407, %v1462
    %v1471 = vadd.f32 %v1408, %v1463
    %v1472 = vadd.f32 %v1409, %v1464
    %s1473 = scalar_lea.vmem %s0, 1344
    %v1474 = vld [vmem:[%s1473] sm:$0xff]
    %v1475 = vld [vmem:[%s1473 + $0x8] sm:$0xff]
    %v1476 = vld [vmem:[%s1473 + $0x10] sm:$0xff]
    %v1477 = vld [vmem:[%s1473 + $0x18] sm:$0xff]
    %v1478 = vld [vmem:[%s1473 + $0x20] sm:$0xff]
    %v1479 = vld [vmem:[%s1473 + $0x28] sm:$0xff]
    %v1480 = vld [vmem:[%s1473 + $0x30] sm:$0xff]
    %v1481 = vld [vmem:[%s1473 + $0x38] sm:$0xff]
    %s1482 = sld [smem:[#allocation3 + $0x15]]
    %v1483 = vstv %s1482
    %v1484 = vmul.f32 %v1474, %v1483
    %v1485 = vmul.f32 %v1475, %v1483
    %v1486 = vmul.f32 %v1476, %v1483
    %v1487 = vmul.f32 %v1477, %v1483
    %v1488 = vmul.f32 %v1478, %v1483
    %v1489 = vmul.f32 %v1479, %v1483
    %v1490 = vmul.f32 %v1480, %v1483
    %v1491 = vmul.f32 %v1481, %v1483
    %v1492 = vadd.f32 %v1429, %v1484
    %v1493 = vadd.f32 %v1430, %v1485
    %v1494 = vadd.f32 %v1431, %v1486
    %v1495 = vadd.f32 %v1432, %v1487
    %v1496 = vadd.f32 %v1433, %v1488
    %v1497 = vadd.f32 %v1434, %v1489
    %v1498 = vadd.f32 %v1435, %v1490
    %v1499 = vadd.f32 %v1436, %v1491
    %s1500 = sld [smem:[#allocation3 + $0x95]]
    %v1501 = vstv %s1500
    %v1502 = vmul.f32 %v1474, %v1501
    %v1503 = vmul.f32 %v1475, %v1501
    %v1504 = vmul.f32 %v1476, %v1501
    %v1505 = vmul.f32 %v1477, %v1501
    %v1506 = vmul.f32 %v1478, %v1501
    %v1507 = vmul.f32 %v1479, %v1501
    %v1508 = vmul.f32 %v1480, %v1501
    %v1509 = vmul.f32 %v1481, %v1501
    %v1510 = vadd.f32 %v1447, %v1502
    %v1511 = vadd.f32 %v1448, %v1503
    %v1512 = vadd.f32 %v1449, %v1504
    %v1513 = vadd.f32 %v1450, %v1505
    %v1514 = vadd.f32 %v1451, %v1506
    %v1515 = vadd.f32 %v1452, %v1507
    %v1516 = vadd.f32 %v1453, %v1508
    %v1517 = vadd.f32 %v1454, %v1509
    %s1518 = sld [smem:[#allocation3 + $0x115]]
    %v1519 = vstv %s1518
    %v1520 = vmul.f32 %v1474, %v1519
    %v1521 = vmul.f32 %v1475, %v1519
    %v1522 = vmul.f32 %v1476, %v1519
    %v1523 = vmul.f32 %v1477, %v1519
    %v1524 = vmul.f32 %v1478, %v1519
    %v1525 = vmul.f32 %v1479, %v1519
    %v1526 = vmul.f32 %v1480, %v1519
    %v1527 = vmul.f32 %v1481, %v1519
    %v1528 = vadd.f32 %v1465, %v1520
    %v1529 = vadd.f32 %v1466, %v1521
    %v1530 = vadd.f32 %v1467, %v1522
    %v1531 = vadd.f32 %v1468, %v1523
    %v1532 = vadd.f32 %v1469, %v1524
    %v1533 = vadd.f32 %v1470, %v1525
    %v1534 = vadd.f32 %v1471, %v1526
    %v1535 = vadd.f32 %v1472, %v1527
    %s1536 = scalar_lea.vmem %s0, 1408
    %v1537 = vld [vmem:[%s1536] sm:$0xff]
    %v1538 = vld [vmem:[%s1536 + $0x8] sm:$0xff]
    %v1539 = vld [vmem:[%s1536 + $0x10] sm:$0xff]
    %v1540 = vld [vmem:[%s1536 + $0x18] sm:$0xff]
    %v1541 = vld [vmem:[%s1536 + $0x20] sm:$0xff]
    %v1542 = vld [vmem:[%s1536 + $0x28] sm:$0xff]
    %v1543 = vld [vmem:[%s1536 + $0x30] sm:$0xff]
    %v1544 = vld [vmem:[%s1536 + $0x38] sm:$0xff]
    %s1545 = sld [smem:[#allocation3 + $0x16]]
    %v1546 = vstv %s1545
    %v1547 = vmul.f32 %v1537, %v1546
    %v1548 = vmul.f32 %v1538, %v1546
    %v1549 = vmul.f32 %v1539, %v1546
    %v1550 = vmul.f32 %v1540, %v1546
    %v1551 = vmul.f32 %v1541, %v1546
    %v1552 = vmul.f32 %v1542, %v1546
    %v1553 = vmul.f32 %v1543, %v1546
    %v1554 = vmul.f32 %v1544, %v1546
    %v1555 = vadd.f32 %v1492, %v1547
    %v1556 = vadd.f32 %v1493, %v1548
    %v1557 = vadd.f32 %v1494, %v1549
    %v1558 = vadd.f32 %v1495, %v1550
    %v1559 = vadd.f32 %v1496, %v1551
    %v1560 = vadd.f32 %v1497, %v1552
    %v1561 = vadd.f32 %v1498, %v1553
    %v1562 = vadd.f32 %v1499, %v1554
    %s1563 = sld [smem:[#allocation3 + $0x96]]
    %v1564 = vstv %s1563
    %v1565 = vmul.f32 %v1537, %v1564
    %v1566 = vmul.f32 %v1538, %v1564
    %v1567 = vmul.f32 %v1539, %v1564
    %v1568 = vmul.f32 %v1540, %v1564
    %v1569 = vmul.f32 %v1541, %v1564
    %v1570 = vmul.f32 %v1542, %v1564
    %v1571 = vmul.f32 %v1543, %v1564
    %v1572 = vmul.f32 %v1544, %v1564
    %v1573 = vadd.f32 %v1510, %v1565
    %v1574 = vadd.f32 %v1511, %v1566
    %v1575 = vadd.f32 %v1512, %v1567
    %v1576 = vadd.f32 %v1513, %v1568
    %v1577 = vadd.f32 %v1514, %v1569
    %v1578 = vadd.f32 %v1515, %v1570
    %v1579 = vadd.f32 %v1516, %v1571
    %v1580 = vadd.f32 %v1517, %v1572
    %s1581 = sld [smem:[#allocation3 + $0x116]]
    %v1582 = vstv %s1581
    %v1583 = vmul.f32 %v1537, %v1582
    %v1584 = vmul.f32 %v1538, %v1582
    %v1585 = vmul.f32 %v1539, %v1582
    %v1586 = vmul.f32 %v1540, %v1582
    %v1587 = vmul.f32 %v1541, %v1582
    %v1588 = vmul.f32 %v1542, %v1582
    %v1589 = vmul.f32 %v1543, %v1582
    %v1590 = vmul.f32 %v1544, %v1582
    %v1591 = vadd.f32 %v1528, %v1583
    %v1592 = vadd.f32 %v1529, %v1584
    %v1593 = vadd.f32 %v1530, %v1585
    %v1594 = vadd.f32 %v1531, %v1586
    %v1595 = vadd.f32 %v1532, %v1587
    %v1596 = vadd.f32 %v1533, %v1588
    %v1597 = vadd.f32 %v1534, %v1589
    %v1598 = vadd.f32 %v1535, %v1590
    %s1599 = scalar_lea.vmem %s0, 1472
    %v1600 = vld [vmem:[%s1599] sm:$0xff]
    %v1601 = vld [vmem:[%s1599 + $0x8] sm:$0xff]
    %v1602 = vld [vmem:[%s1599 + $0x10] sm:$0xff]
    %v1603 = vld [vmem:[%s1599 + $0x18] sm:$0xff]
    %v1604 = vld [vmem:[%s1599 + $0x20] sm:$0xff]
    %v1605 = vld [vmem:[%s1599 + $0x28] sm:$0xff]
    %v1606 = vld [vmem:[%s1599 + $0x30] sm:$0xff]
    %v1607 = vld [vmem:[%s1599 + $0x38] sm:$0xff]
    %s1608 = sld [smem:[#allocation3 + $0x17]]
    %v1609 = vstv %s1608
    %v1610 = vmul.f32 %v1600, %v1609
    %v1611 = vmul.f32 %v1601, %v1609
    %v1612 = vmul.f32 %v1602, %v1609
    %v1613 = vmul.f32 %v1603, %v1609
    %v1614 = vmul.f32 %v1604, %v1609
    %v1615 = vmul.f32 %v1605, %v1609
    %v1616 = vmul.f32 %v1606, %v1609
    %v1617 = vmul.f32 %v1607, %v1609
    %v1618 = vadd.f32 %v1555, %v1610
    %v1619 = vadd.f32 %v1556, %v1611
    %v1620 = vadd.f32 %v1557, %v1612
    %v1621 = vadd.f32 %v1558, %v1613
    %v1622 = vadd.f32 %v1559, %v1614
    %v1623 = vadd.f32 %v1560, %v1615
    %v1624 = vadd.f32 %v1561, %v1616
    %v1625 = vadd.f32 %v1562, %v1617
    %s1626 = sld [smem:[#allocation3 + $0x97]]
    %v1627 = vstv %s1626
    %v1628 = vmul.f32 %v1600, %v1627
    %v1629 = vmul.f32 %v1601, %v1627
    %v1630 = vmul.f32 %v1602, %v1627
    %v1631 = vmul.f32 %v1603, %v1627
    %v1632 = vmul.f32 %v1604, %v1627
    %v1633 = vmul.f32 %v1605, %v1627
    %v1634 = vmul.f32 %v1606, %v1627
    %v1635 = vmul.f32 %v1607, %v1627
    %v1636 = vadd.f32 %v1573, %v1628
    %v1637 = vadd.f32 %v1574, %v1629
    %v1638 = vadd.f32 %v1575, %v1630
    %v1639 = vadd.f32 %v1576, %v1631
    %v1640 = vadd.f32 %v1577, %v1632
    %v1641 = vadd.f32 %v1578, %v1633
    %v1642 = vadd.f32 %v1579, %v1634
    %v1643 = vadd.f32 %v1580, %v1635
    %s1644 = sld [smem:[#allocation3 + $0x117]]
    %v1645 = vstv %s1644
    %v1646 = vmul.f32 %v1600, %v1645
    %v1647 = vmul.f32 %v1601, %v1645
    %v1648 = vmul.f32 %v1602, %v1645
    %v1649 = vmul.f32 %v1603, %v1645
    %v1650 = vmul.f32 %v1604, %v1645
    %v1651 = vmul.f32 %v1605, %v1645
    %v1652 = vmul.f32 %v1606, %v1645
    %v1653 = vmul.f32 %v1607, %v1645
    %v1654 = vadd.f32 %v1591, %v1646
    %v1655 = vadd.f32 %v1592, %v1647
    %v1656 = vadd.f32 %v1593, %v1648
    %v1657 = vadd.f32 %v1594, %v1649
    %v1658 = vadd.f32 %v1595, %v1650
    %v1659 = vadd.f32 %v1596, %v1651
    %v1660 = vadd.f32 %v1597, %v1652
    %v1661 = vadd.f32 %v1598, %v1653
    %s1662 = scalar_lea.vmem %s0, 1536
    %v1663 = vld [vmem:[%s1662] sm:$0xff]
    %v1664 = vld [vmem:[%s1662 + $0x8] sm:$0xff]
    %v1665 = vld [vmem:[%s1662 + $0x10] sm:$0xff]
    %v1666 = vld [vmem:[%s1662 + $0x18] sm:$0xff]
    %v1667 = vld [vmem:[%s1662 + $0x20] sm:$0xff]
    %v1668 = vld [vmem:[%s1662 + $0x28] sm:$0xff]
    %v1669 = vld [vmem:[%s1662 + $0x30] sm:$0xff]
    %v1670 = vld [vmem:[%s1662 + $0x38] sm:$0xff]
    %s1671 = sld [smem:[#allocation3 + $0x18]]
    %v1672 = vstv %s1671
    %v1673 = vmul.f32 %v1663, %v1672
    %v1674 = vmul.f32 %v1664, %v1672
    %v1675 = vmul.f32 %v1665, %v1672
    %v1676 = vmul.f32 %v1666, %v1672
    %v1677 = vmul.f32 %v1667, %v1672
    %v1678 = vmul.f32 %v1668, %v1672
    %v1679 = vmul.f32 %v1669, %v1672
    %v1680 = vmul.f32 %v1670, %v1672
    %v1681 = vadd.f32 %v1618, %v1673
    %v1682 = vadd.f32 %v1619, %v1674
    %v1683 = vadd.f32 %v1620, %v1675
    %v1684 = vadd.f32 %v1621, %v1676
    %v1685 = vadd.f32 %v1622, %v1677
    %v1686 = vadd.f32 %v1623, %v1678
    %v1687 = vadd.f32 %v1624, %v1679
    %v1688 = vadd.f32 %v1625, %v1680
    %s1689 = sld [smem:[#allocation3 + $0x98]]
    %v1690 = vstv %s1689
    %v1691 = vmul.f32 %v1663, %v1690
    %v1692 = vmul.f32 %v1664, %v1690
    %v1693 = vmul.f32 %v1665, %v1690
    %v1694 = vmul.f32 %v1666, %v1690
    %v1695 = vmul.f32 %v1667, %v1690
    %v1696 = vmul.f32 %v1668, %v1690
    %v1697 = vmul.f32 %v1669, %v1690
    %v1698 = vmul.f32 %v1670, %v1690
    %v1699 = vadd.f32 %v1636, %v1691
    %v1700 = vadd.f32 %v1637, %v1692
    %v1701 = vadd.f32 %v1638, %v1693
    %v1702 = vadd.f32 %v1639, %v1694
    %v1703 = vadd.f32 %v1640, %v1695
    %v1704 = vadd.f32 %v1641, %v1696
    %v1705 = vadd.f32 %v1642, %v1697
    %v1706 = vadd.f32 %v1643, %v1698
    %s1707 = sld [smem:[#allocation3 + $0x118]]
    %v1708 = vstv %s1707
    %v1709 = vmul.f32 %v1663, %v1708
    %v1710 = vmul.f32 %v1664, %v1708
    %v1711 = vmul.f32 %v1665, %v1708
    %v1712 = vmul.f32 %v1666, %v1708
    %v1713 = vmul.f32 %v1667, %v1708
    %v1714 = vmul.f32 %v1668, %v1708
    %v1715 = vmul.f32 %v1669, %v1708
    %v1716 = vmul.f32 %v1670, %v1708
    %v1717 = vadd.f32 %v1654, %v1709
    %v1718 = vadd.f32 %v1655, %v1710
    %v1719 = vadd.f32 %v1656, %v1711
    %v1720 = vadd.f32 %v1657, %v1712
    %v1721 = vadd.f32 %v1658, %v1713
    %v1722 = vadd.f32 %v1659, %v1714
    %v1723 = vadd.f32 %v1660, %v1715
    %v1724 = vadd.f32 %v1661, %v1716
    %s1725 = scalar_lea.vmem %s0, 1600
    %v1726 = vld [vmem:[%s1725] sm:$0xff]
    %v1727 = vld [vmem:[%s1725 + $0x8] sm:$0xff]
    %v1728 = vld [vmem:[%s1725 + $0x10] sm:$0xff]
    %v1729 = vld [vmem:[%s1725 + $0x18] sm:$0xff]
    %v1730 = vld [vmem:[%s1725 + $0x20] sm:$0xff]
    %v1731 = vld [vmem:[%s1725 + $0x28] sm:$0xff]
    %v1732 = vld [vmem:[%s1725 + $0x30] sm:$0xff]
    %v1733 = vld [vmem:[%s1725 + $0x38] sm:$0xff]
    %s1734 = sld [smem:[#allocation3 + $0x19]]
    %v1735 = vstv %s1734
    %v1736 = vmul.f32 %v1726, %v1735
    %v1737 = vmul.f32 %v1727, %v1735
    %v1738 = vmul.f32 %v1728, %v1735
    %v1739 = vmul.f32 %v1729, %v1735
    %v1740 = vmul.f32 %v1730, %v1735
    %v1741 = vmul.f32 %v1731, %v1735
    %v1742 = vmul.f32 %v1732, %v1735
    %v1743 = vmul.f32 %v1733, %v1735
    %v1744 = vadd.f32 %v1681, %v1736
    %v1745 = vadd.f32 %v1682, %v1737
    %v1746 = vadd.f32 %v1683, %v1738
    %v1747 = vadd.f32 %v1684, %v1739
    %v1748 = vadd.f32 %v1685, %v1740
    %v1749 = vadd.f32 %v1686, %v1741
    %v1750 = vadd.f32 %v1687, %v1742
    %v1751 = vadd.f32 %v1688, %v1743
    %s1752 = sld [smem:[#allocation3 + $0x99]]
    %v1753 = vstv %s1752
    %v1754 = vmul.f32 %v1726, %v1753
    %v1755 = vmul.f32 %v1727, %v1753
    %v1756 = vmul.f32 %v1728, %v1753
    %v1757 = vmul.f32 %v1729, %v1753
    %v1758 = vmul.f32 %v1730, %v1753
    %v1759 = vmul.f32 %v1731, %v1753
    %v1760 = vmul.f32 %v1732, %v1753
    %v1761 = vmul.f32 %v1733, %v1753
    %v1762 = vadd.f32 %v1699, %v1754
    %v1763 = vadd.f32 %v1700, %v1755
    %v1764 = vadd.f32 %v1701, %v1756
    %v1765 = vadd.f32 %v1702, %v1757
    %v1766 = vadd.f32 %v1703, %v1758
    %v1767 = vadd.f32 %v1704, %v1759
    %v1768 = vadd.f32 %v1705, %v1760
    %v1769 = vadd.f32 %v1706, %v1761
    %s1770 = sld [smem:[#allocation3 + $0x119]]
    %v1771 = vstv %s1770
    %v1772 = vmul.f32 %v1726, %v1771
    %v1773 = vmul.f32 %v1727, %v1771
    %v1774 = vmul.f32 %v1728, %v1771
    %v1775 = vmul.f32 %v1729, %v1771
    %v1776 = vmul.f32 %v1730, %v1771
    %v1777 = vmul.f32 %v1731, %v1771
    %v1778 = vmul.f32 %v1732, %v1771
    %v1779 = vmul.f32 %v1733, %v1771
    %v1780 = vadd.f32 %v1717, %v1772
    %v1781 = vadd.f32 %v1718, %v1773
    %v1782 = vadd.f32 %v1719, %v1774
    %v1783 = vadd.f32 %v1720, %v1775
    %v1784 = vadd.f32 %v1721, %v1776
    %v1785 = vadd.f32 %v1722, %v1777
    %v1786 = vadd.f32 %v1723, %v1778
    %v1787 = vadd.f32 %v1724, %v1779
    %s1788 = scalar_lea.vmem %s0, 1664
    %v1789 = vld [vmem:[%s1788] sm:$0xff]
    %v1790 = vld [vmem:[%s1788 + $0x8] sm:$0xff]
    %v1791 = vld [vmem:[%s1788 + $0x10] sm:$0xff]
    %v1792 = vld [vmem:[%s1788 + $0x18] sm:$0xff]
    %v1793 = vld [vmem:[%s1788 + $0x20] sm:$0xff]
    %v1794 = vld [vmem:[%s1788 + $0x28] sm:$0xff]
    %v1795 = vld [vmem:[%s1788 + $0x30] sm:$0xff]
    %v1796 = vld [vmem:[%s1788 + $0x38] sm:$0xff]
    %s1797 = sld [smem:[#allocation3 + $0x1a]]
    %v1798 = vstv %s1797
    %v1799 = vmul.f32 %v1789, %v1798
    %v1800 = vmul.f32 %v1790, %v1798
    %v1801 = vmul.f32 %v1791, %v1798
    %v1802 = vmul.f32 %v1792, %v1798
    %v1803 = vmul.f32 %v1793, %v1798
    %v1804 = vmul.f32 %v1794, %v1798
    %v1805 = vmul.f32 %v1795, %v1798
    %v1806 = vmul.f32 %v1796, %v1798
    %v1807 = vadd.f32 %v1744, %v1799
    %v1808 = vadd.f32 %v1745, %v1800
    %v1809 = vadd.f32 %v1746, %v1801
    %v1810 = vadd.f32 %v1747, %v1802
    %v1811 = vadd.f32 %v1748, %v1803
    %v1812 = vadd.f32 %v1749, %v1804
    %v1813 = vadd.f32 %v1750, %v1805
    %v1814 = vadd.f32 %v1751, %v1806
    %s1815 = sld [smem:[#allocation3 + $0x9a]]
    %v1816 = vstv %s1815
    %v1817 = vmul.f32 %v1789, %v1816
    %v1818 = vmul.f32 %v1790, %v1816
    %v1819 = vmul.f32 %v1791, %v1816
    %v1820 = vmul.f32 %v1792, %v1816
    %v1821 = vmul.f32 %v1793, %v1816
    %v1822 = vmul.f32 %v1794, %v1816
    %v1823 = vmul.f32 %v1795, %v1816
    %v1824 = vmul.f32 %v1796, %v1816
    %v1825 = vadd.f32 %v1762, %v1817
    %v1826 = vadd.f32 %v1763, %v1818
    %v1827 = vadd.f32 %v1764, %v1819
    %v1828 = vadd.f32 %v1765, %v1820
    %v1829 = vadd.f32 %v1766, %v1821
    %v1830 = vadd.f32 %v1767, %v1822
    %v1831 = vadd.f32 %v1768, %v1823
    %v1832 = vadd.f32 %v1769, %v1824
    %s1833 = sld [smem:[#allocation3 + $0x11a]]
    %v1834 = vstv %s1833
    %v1835 = vmul.f32 %v1789, %v1834
    %v1836 = vmul.f32 %v1790, %v1834
    %v1837 = vmul.f32 %v1791, %v1834
    %v1838 = vmul.f32 %v1792, %v1834
    %v1839 = vmul.f32 %v1793, %v1834
    %v1840 = vmul.f32 %v1794, %v1834
    %v1841 = vmul.f32 %v1795, %v1834
    %v1842 = vmul.f32 %v1796, %v1834
    %v1843 = vadd.f32 %v1780, %v1835
    %v1844 = vadd.f32 %v1781, %v1836
    %v1845 = vadd.f32 %v1782, %v1837
    %v1846 = vadd.f32 %v1783, %v1838
    %v1847 = vadd.f32 %v1784, %v1839
    %v1848 = vadd.f32 %v1785, %v1840
    %v1849 = vadd.f32 %v1786, %v1841
    %v1850 = vadd.f32 %v1787, %v1842
    %s1851 = scalar_lea.vmem %s0, 1728
    %v1852 = vld [vmem:[%s1851] sm:$0xff]
    %v1853 = vld [vmem:[%s1851 + $0x8] sm:$0xff]
    %v1854 = vld [vmem:[%s1851 + $0x10] sm:$0xff]
    %v1855 = vld [vmem:[%s1851 + $0x18] sm:$0xff]
    %v1856 = vld [vmem:[%s1851 + $0x20] sm:$0xff]
    %v1857 = vld [vmem:[%s1851 + $0x28] sm:$0xff]
    %v1858 = vld [vmem:[%s1851 + $0x30] sm:$0xff]
    %v1859 = vld [vmem:[%s1851 + $0x38] sm:$0xff]
    %s1860 = sld [smem:[#allocation3 + $0x1b]]
    %v1861 = vstv %s1860
    %v1862 = vmul.f32 %v1852, %v1861
    %v1863 = vmul.f32 %v1853, %v1861
    %v1864 = vmul.f32 %v1854, %v1861
    %v1865 = vmul.f32 %v1855, %v1861
    %v1866 = vmul.f32 %v1856, %v1861
    %v1867 = vmul.f32 %v1857, %v1861
    %v1868 = vmul.f32 %v1858, %v1861
    %v1869 = vmul.f32 %v1859, %v1861
    %v1870 = vadd.f32 %v1807, %v1862
    %v1871 = vadd.f32 %v1808, %v1863
    %v1872 = vadd.f32 %v1809, %v1864
    %v1873 = vadd.f32 %v1810, %v1865
    %v1874 = vadd.f32 %v1811, %v1866
    %v1875 = vadd.f32 %v1812, %v1867
    %v1876 = vadd.f32 %v1813, %v1868
    %v1877 = vadd.f32 %v1814, %v1869
    %s1878 = sld [smem:[#allocation3 + $0x9b]]
    %v1879 = vstv %s1878
    %v1880 = vmul.f32 %v1852, %v1879
    %v1881 = vmul.f32 %v1853, %v1879
    %v1882 = vmul.f32 %v1854, %v1879
    %v1883 = vmul.f32 %v1855, %v1879
    %v1884 = vmul.f32 %v1856, %v1879
    %v1885 = vmul.f32 %v1857, %v1879
    %v1886 = vmul.f32 %v1858, %v1879
    %v1887 = vmul.f32 %v1859, %v1879
    %v1888 = vadd.f32 %v1825, %v1880
    %v1889 = vadd.f32 %v1826, %v1881
    %v1890 = vadd.f32 %v1827, %v1882
    %v1891 = vadd.f32 %v1828, %v1883
    %v1892 = vadd.f32 %v1829, %v1884
    %v1893 = vadd.f32 %v1830, %v1885
    %v1894 = vadd.f32 %v1831, %v1886
    %v1895 = vadd.f32 %v1832, %v1887
    %s1896 = sld [smem:[#allocation3 + $0x11b]]
    %v1897 = vstv %s1896
    %v1898 = vmul.f32 %v1852, %v1897
    %v1899 = vmul.f32 %v1853, %v1897
    %v1900 = vmul.f32 %v1854, %v1897
    %v1901 = vmul.f32 %v1855, %v1897
    %v1902 = vmul.f32 %v1856, %v1897
    %v1903 = vmul.f32 %v1857, %v1897
    %v1904 = vmul.f32 %v1858, %v1897
    %v1905 = vmul.f32 %v1859, %v1897
    %v1906 = vadd.f32 %v1843, %v1898
    %v1907 = vadd.f32 %v1844, %v1899
    %v1908 = vadd.f32 %v1845, %v1900
    %v1909 = vadd.f32 %v1846, %v1901
    %v1910 = vadd.f32 %v1847, %v1902
    %v1911 = vadd.f32 %v1848, %v1903
    %v1912 = vadd.f32 %v1849, %v1904
    %v1913 = vadd.f32 %v1850, %v1905
    %s1914 = scalar_lea.vmem %s0, 1792
    %v1915 = vld [vmem:[%s1914] sm:$0xff]
    %v1916 = vld [vmem:[%s1914 + $0x8] sm:$0xff]
    %v1917 = vld [vmem:[%s1914 + $0x10] sm:$0xff]
    %v1918 = vld [vmem:[%s1914 + $0x18] sm:$0xff]
    %v1919 = vld [vmem:[%s1914 + $0x20] sm:$0xff]
    %v1920 = vld [vmem:[%s1914 + $0x28] sm:$0xff]
    %v1921 = vld [vmem:[%s1914 + $0x30] sm:$0xff]
    %v1922 = vld [vmem:[%s1914 + $0x38] sm:$0xff]
    %s1923 = sld [smem:[#allocation3 + $0x1c]]
    %v1924 = vstv %s1923
    %v1925 = vmul.f32 %v1915, %v1924
    %v1926 = vmul.f32 %v1916, %v1924
    %v1927 = vmul.f32 %v1917, %v1924
    %v1928 = vmul.f32 %v1918, %v1924
    %v1929 = vmul.f32 %v1919, %v1924
    %v1930 = vmul.f32 %v1920, %v1924
    %v1931 = vmul.f32 %v1921, %v1924
    %v1932 = vmul.f32 %v1922, %v1924
    %v1933 = vadd.f32 %v1870, %v1925
    %v1934 = vadd.f32 %v1871, %v1926
    %v1935 = vadd.f32 %v1872, %v1927
    %v1936 = vadd.f32 %v1873, %v1928
    %v1937 = vadd.f32 %v1874, %v1929
    %v1938 = vadd.f32 %v1875, %v1930
    %v1939 = vadd.f32 %v1876, %v1931
    %v1940 = vadd.f32 %v1877, %v1932
    %s1941 = sld [smem:[#allocation3 + $0x9c]]
    %v1942 = vstv %s1941
    %v1943 = vmul.f32 %v1915, %v1942
    %v1944 = vmul.f32 %v1916, %v1942
    %v1945 = vmul.f32 %v1917, %v1942
    %v1946 = vmul.f32 %v1918, %v1942
    %v1947 = vmul.f32 %v1919, %v1942
    %v1948 = vmul.f32 %v1920, %v1942
    %v1949 = vmul.f32 %v1921, %v1942
    %v1950 = vmul.f32 %v1922, %v1942
    %v1951 = vadd.f32 %v1888, %v1943
    %v1952 = vadd.f32 %v1889, %v1944
    %v1953 = vadd.f32 %v1890, %v1945
    %v1954 = vadd.f32 %v1891, %v1946
    %v1955 = vadd.f32 %v1892, %v1947
    %v1956 = vadd.f32 %v1893, %v1948
    %v1957 = vadd.f32 %v1894, %v1949
    %v1958 = vadd.f32 %v1895, %v1950
    %s1959 = sld [smem:[#allocation3 + $0x11c]]
    %v1960 = vstv %s1959
    %v1961 = vmul.f32 %v1915, %v1960
    %v1962 = vmul.f32 %v1916, %v1960
    %v1963 = vmul.f32 %v1917, %v1960
    %v1964 = vmul.f32 %v1918, %v1960
    %v1965 = vmul.f32 %v1919, %v1960
    %v1966 = vmul.f32 %v1920, %v1960
    %v1967 = vmul.f32 %v1921, %v1960
    %v1968 = vmul.f32 %v1922, %v1960
    %v1969 = vadd.f32 %v1906, %v1961
    %v1970 = vadd.f32 %v1907, %v1962
    %v1971 = vadd.f32 %v1908, %v1963
    %v1972 = vadd.f32 %v1909, %v1964
    %v1973 = vadd.f32 %v1910, %v1965
    %v1974 = vadd.f32 %v1911, %v1966
    %v1975 = vadd.f32 %v1912, %v1967
    %v1976 = vadd.f32 %v1913, %v1968
    %s1977 = scalar_lea.vmem %s0, 1856
    %v1978 = vld [vmem:[%s1977] sm:$0xff]
    %v1979 = vld [vmem:[%s1977 + $0x8] sm:$0xff]
    %v1980 = vld [vmem:[%s1977 + $0x10] sm:$0xff]
    %v1981 = vld [vmem:[%s1977 + $0x18] sm:$0xff]
    %v1982 = vld [vmem:[%s1977 + $0x20] sm:$0xff]
    %v1983 = vld [vmem:[%s1977 + $0x28] sm:$0xff]
    %v1984 = vld [vmem:[%s1977 + $0x30] sm:$0xff]
    %v1985 = vld [vmem:[%s1977 + $0x38] sm:$0xff]
    %s1986 = sld [smem:[#allocation3 + $0x1d]]
    %v1987 = vstv %s1986
    %v1988 = vmul.f32 %v1978, %v1987
    %v1989 = vmul.f32 %v1979, %v1987
    %v1990 = vmul.f32 %v1980, %v1987
    %v1991 = vmul.f32 %v1981, %v1987
    %v1992 = vmul.f32 %v1982, %v1987
    %v1993 = vmul.f32 %v1983, %v1987
    %v1994 = vmul.f32 %v1984, %v1987
    %v1995 = vmul.f32 %v1985, %v1987
    %v1996 = vadd.f32 %v1933, %v1988
    %v1997 = vadd.f32 %v1934, %v1989
    %v1998 = vadd.f32 %v1935, %v1990
    %v1999 = vadd.f32 %v1936, %v1991
    %v2000 = vadd.f32 %v1937, %v1992
    %v2001 = vadd.f32 %v1938, %v1993
    %v2002 = vadd.f32 %v1939, %v1994
    %v2003 = vadd.f32 %v1940, %v1995
    %s2004 = sld [smem:[#allocation3 + $0x9d]]
    %v2005 = vstv %s2004
    %v2006 = vmul.f32 %v1978, %v2005
    %v2007 = vmul.f32 %v1979, %v2005
    %v2008 = vmul.f32 %v1980, %v2005
    %v2009 = vmul.f32 %v1981, %v2005
    %v2010 = vmul.f32 %v1982, %v2005
    %v2011 = vmul.f32 %v1983, %v2005
    %v2012 = vmul.f32 %v1984, %v2005
    %v2013 = vmul.f32 %v1985, %v2005
    %v2014 = vadd.f32 %v1951, %v2006
    %v2015 = vadd.f32 %v1952, %v2007
    %v2016 = vadd.f32 %v1953, %v2008
    %v2017 = vadd.f32 %v1954, %v2009
    %v2018 = vadd.f32 %v1955, %v2010
    %v2019 = vadd.f32 %v1956, %v2011
    %v2020 = vadd.f32 %v1957, %v2012
    %v2021 = vadd.f32 %v1958, %v2013
    %s2022 = sld [smem:[#allocation3 + $0x11d]]
    %v2023 = vstv %s2022
    %v2024 = vmul.f32 %v1978, %v2023
    %v2025 = vmul.f32 %v1979, %v2023
    %v2026 = vmul.f32 %v1980, %v2023
    %v2027 = vmul.f32 %v1981, %v2023
    %v2028 = vmul.f32 %v1982, %v2023
    %v2029 = vmul.f32 %v1983, %v2023
    %v2030 = vmul.f32 %v1984, %v2023
    %v2031 = vmul.f32 %v1985, %v2023
    %v2032 = vadd.f32 %v1969, %v2024
    %v2033 = vadd.f32 %v1970, %v2025
    %v2034 = vadd.f32 %v1971, %v2026
    %v2035 = vadd.f32 %v1972, %v2027
    %v2036 = vadd.f32 %v1973, %v2028
    %v2037 = vadd.f32 %v1974, %v2029
    %v2038 = vadd.f32 %v1975, %v2030
    %v2039 = vadd.f32 %v1976, %v2031
    %s2040 = scalar_lea.vmem %s0, 1920
    %v2041 = vld [vmem:[%s2040] sm:$0xff]
    %v2042 = vld [vmem:[%s2040 + $0x8] sm:$0xff]
    %v2043 = vld [vmem:[%s2040 + $0x10] sm:$0xff]
    %v2044 = vld [vmem:[%s2040 + $0x18] sm:$0xff]
    %v2045 = vld [vmem:[%s2040 + $0x20] sm:$0xff]
    %v2046 = vld [vmem:[%s2040 + $0x28] sm:$0xff]
    %v2047 = vld [vmem:[%s2040 + $0x30] sm:$0xff]
    %v2048 = vld [vmem:[%s2040 + $0x38] sm:$0xff]
    %s2049 = sld [smem:[#allocation3 + $0x1e]]
    %v2050 = vstv %s2049
    %v2051 = vmul.f32 %v2041, %v2050
    %v2052 = vmul.f32 %v2042, %v2050
    %v2053 = vmul.f32 %v2043, %v2050
    %v2054 = vmul.f32 %v2044, %v2050
    %v2055 = vmul.f32 %v2045, %v2050
    %v2056 = vmul.f32 %v2046, %v2050
    %v2057 = vmul.f32 %v2047, %v2050
    %v2058 = vmul.f32 %v2048, %v2050
    %v2059 = vadd.f32 %v1996, %v2051
    %v2060 = vadd.f32 %v1997, %v2052
    %v2061 = vadd.f32 %v1998, %v2053
    %v2062 = vadd.f32 %v1999, %v2054
    %v2063 = vadd.f32 %v2000, %v2055
    %v2064 = vadd.f32 %v2001, %v2056
    %v2065 = vadd.f32 %v2002, %v2057
    %v2066 = vadd.f32 %v2003, %v2058
    %s2067 = sld [smem:[#allocation3 + $0x9e]]
    %v2068 = vstv %s2067
    %v2069 = vmul.f32 %v2041, %v2068
    %v2070 = vmul.f32 %v2042, %v2068
    %v2071 = vmul.f32 %v2043, %v2068
    %v2072 = vmul.f32 %v2044, %v2068
    %v2073 = vmul.f32 %v2045, %v2068
    %v2074 = vmul.f32 %v2046, %v2068
    %v2075 = vmul.f32 %v2047, %v2068
    %v2076 = vmul.f32 %v2048, %v2068
    %v2077 = vadd.f32 %v2014, %v2069
    %v2078 = vadd.f32 %v2015, %v2070
    %v2079 = vadd.f32 %v2016, %v2071
    %v2080 = vadd.f32 %v2017, %v2072
    %v2081 = vadd.f32 %v2018, %v2073
    %v2082 = vadd.f32 %v2019, %v2074
    %v2083 = vadd.f32 %v2020, %v2075
    %v2084 = vadd.f32 %v2021, %v2076
    %s2085 = sld [smem:[#allocation3 + $0x11e]]
    %v2086 = vstv %s2085
    %v2087 = vmul.f32 %v2041, %v2086
    %v2088 = vmul.f32 %v2042, %v2086
    %v2089 = vmul.f32 %v2043, %v2086
    %v2090 = vmul.f32 %v2044, %v2086
    %v2091 = vmul.f32 %v2045, %v2086
    %v2092 = vmul.f32 %v2046, %v2086
    %v2093 = vmul.f32 %v2047, %v2086
    %v2094 = vmul.f32 %v2048, %v2086
    %v2095 = vadd.f32 %v2032, %v2087
    %v2096 = vadd.f32 %v2033, %v2088
    %v2097 = vadd.f32 %v2034, %v2089
    %v2098 = vadd.f32 %v2035, %v2090
    %v2099 = vadd.f32 %v2036, %v2091
    %v2100 = vadd.f32 %v2037, %v2092
    %v2101 = vadd.f32 %v2038, %v2093
    %v2102 = vadd.f32 %v2039, %v2094
    %s2103 = scalar_lea.vmem %s0, 1984
    %v2104 = vld [vmem:[%s2103] sm:$0xff]
    %v2105 = vld [vmem:[%s2103 + $0x8] sm:$0xff]
    %v2106 = vld [vmem:[%s2103 + $0x10] sm:$0xff]
    %v2107 = vld [vmem:[%s2103 + $0x18] sm:$0xff]
    %v2108 = vld [vmem:[%s2103 + $0x20] sm:$0xff]
    %v2109 = vld [vmem:[%s2103 + $0x28] sm:$0xff]
    %v2110 = vld [vmem:[%s2103 + $0x30] sm:$0xff]
    %v2111 = vld [vmem:[%s2103 + $0x38] sm:$0xff]
    %s2112 = sld [smem:[#allocation3 + $0x1f]]
    %v2113 = vstv %s2112
    %v2114 = vmul.f32 %v2104, %v2113
    %v2115 = vmul.f32 %v2105, %v2113
    %v2116 = vmul.f32 %v2106, %v2113
    %v2117 = vmul.f32 %v2107, %v2113
    %v2118 = vmul.f32 %v2108, %v2113
    %v2119 = vmul.f32 %v2109, %v2113
    %v2120 = vmul.f32 %v2110, %v2113
    %v2121 = vmul.f32 %v2111, %v2113
    %v2122 = vadd.f32 %v2059, %v2114
    %v2123 = vadd.f32 %v2060, %v2115
    %v2124 = vadd.f32 %v2061, %v2116
    %v2125 = vadd.f32 %v2062, %v2117
    %v2126 = vadd.f32 %v2063, %v2118
    %v2127 = vadd.f32 %v2064, %v2119
    %v2128 = vadd.f32 %v2065, %v2120
    %v2129 = vadd.f32 %v2066, %v2121
    %s2130 = sld [smem:[#allocation3 + $0x9f]]
    %v2131 = vstv %s2130
    %v2132 = vmul.f32 %v2104, %v2131
    %v2133 = vmul.f32 %v2105, %v2131
    %v2134 = vmul.f32 %v2106, %v2131
    %v2135 = vmul.f32 %v2107, %v2131
    %v2136 = vmul.f32 %v2108, %v2131
    %v2137 = vmul.f32 %v2109, %v2131
    %v2138 = vmul.f32 %v2110, %v2131
    %v2139 = vmul.f32 %v2111, %v2131
    %v2140 = vadd.f32 %v2077, %v2132
    %v2141 = vadd.f32 %v2078, %v2133
    %v2142 = vadd.f32 %v2079, %v2134
    %v2143 = vadd.f32 %v2080, %v2135
    %v2144 = vadd.f32 %v2081, %v2136
    %v2145 = vadd.f32 %v2082, %v2137
    %v2146 = vadd.f32 %v2083, %v2138
    %v2147 = vadd.f32 %v2084, %v2139
    %s2148 = sld [smem:[#allocation3 + $0x11f]]
    %v2149 = vstv %s2148
    %v2150 = vmul.f32 %v2104, %v2149
    %v2151 = vmul.f32 %v2105, %v2149
    %v2152 = vmul.f32 %v2106, %v2149
    %v2153 = vmul.f32 %v2107, %v2149
    %v2154 = vmul.f32 %v2108, %v2149
    %v2155 = vmul.f32 %v2109, %v2149
    %v2156 = vmul.f32 %v2110, %v2149
    %v2157 = vmul.f32 %v2111, %v2149
    %v2158 = vadd.f32 %v2095, %v2150
    %v2159 = vadd.f32 %v2096, %v2151
    %v2160 = vadd.f32 %v2097, %v2152
    %v2161 = vadd.f32 %v2098, %v2153
    %v2162 = vadd.f32 %v2099, %v2154
    %v2163 = vadd.f32 %v2100, %v2155
    %v2164 = vadd.f32 %v2101, %v2156
    %v2165 = vadd.f32 %v2102, %v2157
    %vm2166 = vmand %vm137, 0
    %vm2167 = vmand %vm138, 1
    %vm2168 = vmand %vm139, 1
    %vm2169 = vmand %vm140, 1
    %vm2170 = vmand %vm141, 1
    %vm2171 = vmand %vm142, 1
    %vm2172 = vmand %vm143, 1
    %vm2173 = vmand %vm144, 1
    %v2174 = vmul.f32 %v2122, %v2140
    %v2175 = vmul.f32 %v2122, %v2141
    %v2176 = vmul.f32 %v2122, %v2142
    %v2177 = vmul.f32 %v2122, %v2143
    %v2178 = vmul.f32 %v2122, %v2144
    %v2179 = vmul.f32 %v2122, %v2145
    %v2180 = vmul.f32 %v2122, %v2146
    %v2181 = vmul.f32 %v2122, %v2147
    %v2182 = vsel %vm2166, %v2174, -1e+30
    %v2183 = vsel %vm2167, %v2175, -1e+30
    %v2184 = vsel %vm2168, %v2176, -1e+30
    %v2185 = vsel %vm2169, %v2177, -1e+30
    %v2186 = vsel %vm2170, %v2178, -1e+30
    %v2187 = vsel %vm2171, %v2179, -1e+30
    %v2188 = vsel %vm2172, %v2180, -1e+30
    %v2189 = vsel %vm2173, %v2181, -1e+30
    %vm2190 = vcmask 64512
    %v2191 = vsel %vm2190, %v2182, -inf
    %v2192 = vsel %vm2190, %v2183, -inf
    %v2193 = vsel %vm2190, %v2184, -inf
    %v2194 = vsel %vm2190, %v2185, -inf
    %v2195 = vsel %vm2190, %v2186, -inf
    %v2196 = vmax.f32 %v2191, %v2195
    %v2197 = vsel %vm2190, %v2187, -inf
    %v2198 = vmax.f32 %v2192, %v2197
    %v2199 = vsel %vm2190, %v2188, -inf
    %v2200 = vmax.f32 %v2193, %v2199
    %v2201 = vsel %vm2190, %v2189, -inf
    %v2202 = vmax.f32 %v2194, %v2201
    %v2203 = vmax.f32 %v2196, %v2198
    %v2204 = vmax.f32 %v2200, %v2202
    %v2205 = vmax.f32 %v2203, %v2204
    %v2206 = vsub.f32 %v2174, %v2205
    %v2207 = vsub.f32 %v2175, %v2205
    %v2208 = vsub.f32 %v2176, %v2205
    %v2209 = vsub.f32 %v2177, %v2205
    %v2210 = vsub.f32 %v2178, %v2205
    %v2211 = vsub.f32 %v2179, %v2205
    %v2212 = vsub.f32 %v2180, %v2205
    %v2213 = vsub.f32 %v2181, %v2205
    %v2214 = vsel %vm2166, %v2206, -1e+30
    %v2215 = vsel %vm2167, %v2207, -1e+30
    %v2216 = vsel %vm2168, %v2208, -1e+30
    %v2217 = vsel %vm2169, %v2209, -1e+30
    %v2218 = vsel %vm2170, %v2210, -1e+30
    %v2219 = vsel %vm2171, %v2211, -1e+30
    %v2220 = vsel %vm2172, %v2212, -1e+30
    %v2221 = vsel %vm2173, %v2213, -1e+30
    %v2222 = vmul.f32 %v2214, 1.442695
    %v2223 = vpow.pop %v2222
    %v2224 = vmul.f32 %v2215, 1.442695
    %v2225 = vpow.pop %v2224
    %v2226 = vmul.f32 %v2216, 1.442695
    %v2227 = vpow.pop %v2226
    %v2228 = vmul.f32 %v2217, 1.442695
    %v2229 = vpow.pop %v2228
    %v2230 = vmul.f32 %v2218, 1.442695
    %v2231 = vpow.pop %v2230
    %v2232 = vmul.f32 %v2219, 1.442695
    %v2233 = vpow.pop %v2232
    %v2234 = vmul.f32 %v2220, 1.442695
    %v2235 = vpow.pop %v2234
    %v2236 = vmul.f32 %v2221, 1.442695
    %v2237 = vpow.pop %v2236
    %v2238 = vsel %vm2190, %v2223, 0.0
    %v2239 = vsel %vm2190, %v2225, 0.0
    %v2240 = vadd.f32 %v2238, %v2239
    %v2241 = vsel %vm2190, %v2227, 0.0
    %v2242 = vadd.f32 %v2240, %v2241
    %v2243 = vsel %vm2190, %v2229, 0.0
    %v2244 = vadd.f32 %v2242, %v2243
    %v2245 = vsel %vm2190, %v2231, 0.0
    %v2246 = vadd.f32 %v2244, %v2245
    %v2247 = vsel %vm2190, %v2233, 0.0
    %v2248 = vadd.f32 %v2246, %v2247
    %v2249 = vsel %vm2190, %v2235, 0.0
    %v2250 = vadd.f32 %v2248, %v2249
    %v2251 = vsel %vm2190, %v2237, 0.0
    %v2252 = vadd.f32 %v2250, %v2251
    %v2253 = vmax.f32 %v2252, 1e-30
    %v2254 = vmul.f32 %v2223, %v2158
    %v2255 = vmul.f32 %v2225, %v2159
    %v2256 = vmul.f32 %v2227, %v2160
    %v2257 = vmul.f32 %v2229, %v2161
    %v2258 = vmul.f32 %v2231, %v2162
    %v2259 = vmul.f32 %v2233, %v2163
    %v2260 = vmul.f32 %v2235, %v2164
    %v2261 = vmul.f32 %v2237, %v2165
    %v2262 = vsel %vm2190, %v2254, 0.0
    %v2263 = vsel %vm2190, %v2255, 0.0
    %v2264 = vadd.f32 %v2262, %v2263
    %v2265 = vsel %vm2190, %v2256, 0.0
    %v2266 = vadd.f32 %v2264, %v2265
    %v2267 = vsel %vm2190, %v2257, 0.0
    %v2268 = vadd.f32 %v2266, %v2267
    %v2269 = vsel %vm2190, %v2258, 0.0
    %v2270 = vadd.f32 %v2268, %v2269
    %v2271 = vsel %vm2190, %v2259, 0.0
    %v2272 = vadd.f32 %v2270, %v2271
    %v2273 = vsel %vm2190, %v2260, 0.0
    %v2274 = vadd.f32 %v2272, %v2273
    %v2275 = vsel %vm2190, %v2261, 0.0
    %v2276 = vadd.f32 %v2274, %v2275
    %v2277 = vrcp.pop %v2253
    %v2278 = vmul.f32 %v2253, %v2277
    %v2279 = vsub.f32 1.0, %v2278
    %v2280 = vmul.f32 %v2277, %v2279
    %v2281 = vadd.f32 %v2277, %v2280
    %vm2282 = vweird.f32 %v2253
    %vm2283 = vweird.f32 %v2277
    %vm2284 = vmor %vm2282, %vm2283
    %v2285 = vsel %vm2284, %v2277, %v2281
    %v2286 = vand.u32 2147483647, %v2253
    %vm2287 = vcmp.eq.f32.partialorder %v2286, 8.507059e+37
    %v2288 = vand.u32 %v2253, 2147483648
    %v2289 = vor.u32 1.1754944e-38, %v2288
    %v2290 = vsel %vm2287, %v2289, %v2285
    %v2291 = vmul.f32 %v2276, %v2290
    %v2292 = vtanh.pop %v2291
    %v2293 = vmul.f32 %v129, %v2292
    %vm2294 = vmand %vm137, 1
    %vm2295 = vmand %vm138, 0
    %v2296 = vmul.f32 %v2123, %v2140
    %v2297 = vmul.f32 %v2123, %v2141
    %v2298 = vmul.f32 %v2123, %v2142
    %v2299 = vmul.f32 %v2123, %v2143
    %v2300 = vmul.f32 %v2123, %v2144
    %v2301 = vmul.f32 %v2123, %v2145
    %v2302 = vmul.f32 %v2123, %v2146
    %v2303 = vmul.f32 %v2123, %v2147
    %v2304 = vsel %vm2294, %v2296, -1e+30
    %v2305 = vsel %vm2295, %v2297, -1e+30
    %v2306 = vsel %vm2168, %v2298, -1e+30
    %v2307 = vsel %vm2169, %v2299, -1e+30
    %v2308 = vsel %vm2170, %v2300, -1e+30
    %v2309 = vsel %vm2171, %v2301, -1e+30
    %v2310 = vsel %vm2172, %v2302, -1e+30
    %v2311 = vsel %vm2173, %v2303, -1e+30
    %v2312 = vsel %vm2190, %v2304, -inf
    %v2313 = vsel %vm2190, %v2305, -inf
    %v2314 = vsel %vm2190, %v2306, -inf
    %v2315 = vsel %vm2190, %v2307, -inf
    %v2316 = vsel %vm2190, %v2308, -inf
    %v2317 = vmax.f32 %v2312, %v2316
    %v2318 = vsel %vm2190, %v2309, -inf
    %v2319 = vmax.f32 %v2313, %v2318
    %v2320 = vsel %vm2190, %v2310, -inf
    %v2321 = vmax.f32 %v2314, %v2320
    %v2322 = vsel %vm2190, %v2311, -inf
    %v2323 = vmax.f32 %v2315, %v2322
    %v2324 = vmax.f32 %v2317, %v2319
    %v2325 = vmax.f32 %v2321, %v2323
    %v2326 = vmax.f32 %v2324, %v2325
    %v2327 = vsub.f32 %v2296, %v2326
    %v2328 = vsub.f32 %v2297, %v2326
    %v2329 = vsub.f32 %v2298, %v2326
    %v2330 = vsub.f32 %v2299, %v2326
    %v2331 = vsub.f32 %v2300, %v2326
    %v2332 = vsub.f32 %v2301, %v2326
    %v2333 = vsub.f32 %v2302, %v2326
    %v2334 = vsub.f32 %v2303, %v2326
    %v2335 = vsel %vm2294, %v2327, -1e+30
    %v2336 = vsel %vm2295, %v2328, -1e+30
    %v2337 = vsel %vm2168, %v2329, -1e+30
    %v2338 = vsel %vm2169, %v2330, -1e+30
    %v2339 = vsel %vm2170, %v2331, -1e+30
    %v2340 = vsel %vm2171, %v2332, -1e+30
    %v2341 = vsel %vm2172, %v2333, -1e+30
    %v2342 = vsel %vm2173, %v2334, -1e+30
    %v2343 = vmul.f32 %v2335, 1.442695
    %v2344 = vpow.pop %v2343
    %v2345 = vmul.f32 %v2336, 1.442695
    %v2346 = vpow.pop %v2345
    %v2347 = vmul.f32 %v2337, 1.442695
    %v2348 = vpow.pop %v2347
    %v2349 = vmul.f32 %v2338, 1.442695
    %v2350 = vpow.pop %v2349
    %v2351 = vmul.f32 %v2339, 1.442695
    %v2352 = vpow.pop %v2351
    %v2353 = vmul.f32 %v2340, 1.442695
    %v2354 = vpow.pop %v2353
    %v2355 = vmul.f32 %v2341, 1.442695
    %v2356 = vpow.pop %v2355
    %v2357 = vmul.f32 %v2342, 1.442695
    %v2358 = vpow.pop %v2357
    %v2359 = vsel %vm2190, %v2344, 0.0
    %v2360 = vsel %vm2190, %v2346, 0.0
    %v2361 = vadd.f32 %v2359, %v2360
    %v2362 = vsel %vm2190, %v2348, 0.0
    %v2363 = vadd.f32 %v2361, %v2362
    %v2364 = vsel %vm2190, %v2350, 0.0
    %v2365 = vadd.f32 %v2363, %v2364
    %v2366 = vsel %vm2190, %v2352, 0.0
    %v2367 = vadd.f32 %v2365, %v2366
    %v2368 = vsel %vm2190, %v2354, 0.0
    %v2369 = vadd.f32 %v2367, %v2368
    %v2370 = vsel %vm2190, %v2356, 0.0
    %v2371 = vadd.f32 %v2369, %v2370
    %v2372 = vsel %vm2190, %v2358, 0.0
    %v2373 = vadd.f32 %v2371, %v2372
    %v2374 = vmax.f32 %v2373, 1e-30
    %v2375 = vmul.f32 %v2344, %v2158
    %v2376 = vmul.f32 %v2346, %v2159
    %v2377 = vmul.f32 %v2348, %v2160
    %v2378 = vmul.f32 %v2350, %v2161
    %v2379 = vmul.f32 %v2352, %v2162
    %v2380 = vmul.f32 %v2354, %v2163
    %v2381 = vmul.f32 %v2356, %v2164
    %v2382 = vmul.f32 %v2358, %v2165
    %v2383 = vsel %vm2190, %v2375, 0.0
    %v2384 = vsel %vm2190, %v2376, 0.0
    %v2385 = vadd.f32 %v2383, %v2384
    %v2386 = vsel %vm2190, %v2377, 0.0
    %v2387 = vadd.f32 %v2385, %v2386
    %v2388 = vsel %vm2190, %v2378, 0.0
    %v2389 = vadd.f32 %v2387, %v2388
    %v2390 = vsel %vm2190, %v2379, 0.0
    %v2391 = vadd.f32 %v2389, %v2390
    %v2392 = vsel %vm2190, %v2380, 0.0
    %v2393 = vadd.f32 %v2391, %v2392
    %v2394 = vsel %vm2190, %v2381, 0.0
    %v2395 = vadd.f32 %v2393, %v2394
    %v2396 = vsel %vm2190, %v2382, 0.0
    %v2397 = vadd.f32 %v2395, %v2396
    %v2398 = vrcp.pop %v2374
    %v2399 = vmul.f32 %v2374, %v2398
    %v2400 = vsub.f32 1.0, %v2399
    %v2401 = vmul.f32 %v2398, %v2400
    %v2402 = vadd.f32 %v2398, %v2401
    %vm2403 = vweird.f32 %v2374
    %vm2404 = vweird.f32 %v2398
    %vm2405 = vmor %vm2403, %vm2404
    %v2406 = vsel %vm2405, %v2398, %v2402
    %v2407 = vand.u32 2147483647, %v2374
    %vm2408 = vcmp.eq.f32.partialorder %v2407, 8.507059e+37
    %v2409 = vand.u32 %v2374, 2147483648
    %v2410 = vor.u32 1.1754944e-38, %v2409
    %v2411 = vsel %vm2408, %v2410, %v2406
    %v2412 = vmul.f32 %v2397, %v2411
    %v2413 = vtanh.pop %v2412
    %v2414 = vmul.f32 %v130, %v2413
    %vm2415 = vmand %vm139, 0
    %v2416 = vmul.f32 %v2124, %v2140
    %v2417 = vmul.f32 %v2124, %v2141
    %v2418 = vmul.f32 %v2124, %v2142
    %v2419 = vmul.f32 %v2124, %v2143
    %v2420 = vmul.f32 %v2124, %v2144
    %v2421 = vmul.f32 %v2124, %v2145
    %v2422 = vmul.f32 %v2124, %v2146
    %v2423 = vmul.f32 %v2124, %v2147
    %v2424 = vsel %vm2294, %v2416, -1e+30
    %v2425 = vsel %vm2167, %v2417, -1e+30
    %v2426 = vsel %vm2415, %v2418, -1e+30
    %v2427 = vsel %vm2169, %v2419, -1e+30
    %v2428 = vsel %vm2170, %v2420, -1e+30
    %v2429 = vsel %vm2171, %v2421, -1e+30
    %v2430 = vsel %vm2172, %v2422, -1e+30
    %v2431 = vsel %vm2173, %v2423, -1e+30
    %v2432 = vsel %vm2190, %v2424, -inf
    %v2433 = vsel %vm2190, %v2425, -inf
    %v2434 = vsel %vm2190, %v2426, -inf
    %v2435 = vsel %vm2190, %v2427, -inf
    %v2436 = vsel %vm2190, %v2428, -inf
    %v2437 = vmax.f32 %v2432, %v2436
    %v2438 = vsel %vm2190, %v2429, -inf
    %v2439 = vmax.f32 %v2433, %v2438
    %v2440 = vsel %vm2190, %v2430, -inf
    %v2441 = vmax.f32 %v2434, %v2440
    %v2442 = vsel %vm2190, %v2431, -inf
    %v2443 = vmax.f32 %v2435, %v2442
    %v2444 = vmax.f32 %v2437, %v2439
    %v2445 = vmax.f32 %v2441, %v2443
    %v2446 = vmax.f32 %v2444, %v2445
    %v2447 = vsub.f32 %v2416, %v2446
    %v2448 = vsub.f32 %v2417, %v2446
    %v2449 = vsub.f32 %v2418, %v2446
    %v2450 = vsub.f32 %v2419, %v2446
    %v2451 = vsub.f32 %v2420, %v2446
    %v2452 = vsub.f32 %v2421, %v2446
    %v2453 = vsub.f32 %v2422, %v2446
    %v2454 = vsub.f32 %v2423, %v2446
    %v2455 = vsel %vm2294, %v2447, -1e+30
    %v2456 = vsel %vm2167, %v2448, -1e+30
    %v2457 = vsel %vm2415, %v2449, -1e+30
    %v2458 = vsel %vm2169, %v2450, -1e+30
    %v2459 = vsel %vm2170, %v2451, -1e+30
    %v2460 = vsel %vm2171, %v2452, -1e+30
    %v2461 = vsel %vm2172, %v2453, -1e+30
    %v2462 = vsel %vm2173, %v2454, -1e+30
    %v2463 = vmul.f32 %v2455, 1.442695
    %v2464 = vpow.pop %v2463
    %v2465 = vmul.f32 %v2456, 1.442695
    %v2466 = vpow.pop %v2465
    %v2467 = vmul.f32 %v2457, 1.442695
    %v2468 = vpow.pop %v2467
    %v2469 = vmul.f32 %v2458, 1.442695
    %v2470 = vpow.pop %v2469
    %v2471 = vmul.f32 %v2459, 1.442695
    %v2472 = vpow.pop %v2471
    %v2473 = vmul.f32 %v2460, 1.442695
    %v2474 = vpow.pop %v2473
    %v2475 = vmul.f32 %v2461, 1.442695
    %v2476 = vpow.pop %v2475
    %v2477 = vmul.f32 %v2462, 1.442695
    %v2478 = vpow.pop %v2477
    %v2479 = vsel %vm2190, %v2464, 0.0
    %v2480 = vsel %vm2190, %v2466, 0.0
    %v2481 = vadd.f32 %v2479, %v2480
    %v2482 = vsel %vm2190, %v2468, 0.0
    %v2483 = vadd.f32 %v2481, %v2482
    %v2484 = vsel %vm2190, %v2470, 0.0
    %v2485 = vadd.f32 %v2483, %v2484
    %v2486 = vsel %vm2190, %v2472, 0.0
    %v2487 = vadd.f32 %v2485, %v2486
    %v2488 = vsel %vm2190, %v2474, 0.0
    %v2489 = vadd.f32 %v2487, %v2488
    %v2490 = vsel %vm2190, %v2476, 0.0
    %v2491 = vadd.f32 %v2489, %v2490
    %v2492 = vsel %vm2190, %v2478, 0.0
    %v2493 = vadd.f32 %v2491, %v2492
    %v2494 = vmax.f32 %v2493, 1e-30
    %v2495 = vmul.f32 %v2464, %v2158
    %v2496 = vmul.f32 %v2466, %v2159
    %v2497 = vmul.f32 %v2468, %v2160
    %v2498 = vmul.f32 %v2470, %v2161
    %v2499 = vmul.f32 %v2472, %v2162
    %v2500 = vmul.f32 %v2474, %v2163
    %v2501 = vmul.f32 %v2476, %v2164
    %v2502 = vmul.f32 %v2478, %v2165
    %v2503 = vsel %vm2190, %v2495, 0.0
    %v2504 = vsel %vm2190, %v2496, 0.0
    %v2505 = vadd.f32 %v2503, %v2504
    %v2506 = vsel %vm2190, %v2497, 0.0
    %v2507 = vadd.f32 %v2505, %v2506
    %v2508 = vsel %vm2190, %v2498, 0.0
    %v2509 = vadd.f32 %v2507, %v2508
    %v2510 = vsel %vm2190, %v2499, 0.0
    %v2511 = vadd.f32 %v2509, %v2510
    %v2512 = vsel %vm2190, %v2500, 0.0
    %v2513 = vadd.f32 %v2511, %v2512
    %v2514 = vsel %vm2190, %v2501, 0.0
    %v2515 = vadd.f32 %v2513, %v2514
    %v2516 = vsel %vm2190, %v2502, 0.0
    %v2517 = vadd.f32 %v2515, %v2516
    %v2518 = vrcp.pop %v2494
    %v2519 = vmul.f32 %v2494, %v2518
    %v2520 = vsub.f32 1.0, %v2519
    %v2521 = vmul.f32 %v2518, %v2520
    %v2522 = vadd.f32 %v2518, %v2521
    %vm2523 = vweird.f32 %v2494
    %vm2524 = vweird.f32 %v2518
    %vm2525 = vmor %vm2523, %vm2524
    %v2526 = vsel %vm2525, %v2518, %v2522
    %v2527 = vand.u32 2147483647, %v2494
    %vm2528 = vcmp.eq.f32.partialorder %v2527, 8.507059e+37
    %v2529 = vand.u32 %v2494, 2147483648
    %v2530 = vor.u32 1.1754944e-38, %v2529
    %v2531 = vsel %vm2528, %v2530, %v2526
    %v2532 = vmul.f32 %v2517, %v2531
    %v2533 = vtanh.pop %v2532
    %v2534 = vmul.f32 %v131, %v2533
    %vm2535 = vmand %vm140, 0
    %v2536 = vmul.f32 %v2125, %v2140
    %v2537 = vmul.f32 %v2125, %v2141
    %v2538 = vmul.f32 %v2125, %v2142
    %v2539 = vmul.f32 %v2125, %v2143
    %v2540 = vmul.f32 %v2125, %v2144
    %v2541 = vmul.f32 %v2125, %v2145
    %v2542 = vmul.f32 %v2125, %v2146
    %v2543 = vmul.f32 %v2125, %v2147
    %v2544 = vsel %vm2294, %v2536, -1e+30
    %v2545 = vsel %vm2167, %v2537, -1e+30
    %v2546 = vsel %vm2168, %v2538, -1e+30
    %v2547 = vsel %vm2535, %v2539, -1e+30
    %v2548 = vsel %vm2170, %v2540, -1e+30
    %v2549 = vsel %vm2171, %v2541, -1e+30
    %v2550 = vsel %vm2172, %v2542, -1e+30
    %v2551 = vsel %vm2173, %v2543, -1e+30
    %v2552 = vsel %vm2190, %v2544, -inf
    %v2553 = vsel %vm2190, %v2545, -inf
    %v2554 = vsel %vm2190, %v2546, -inf
    %v2555 = vsel %vm2190, %v2547, -inf
    %v2556 = vsel %vm2190, %v2548, -inf
    %v2557 = vmax.f32 %v2552, %v2556
    %v2558 = vsel %vm2190, %v2549, -inf
    %v2559 = vmax.f32 %v2553, %v2558
    %v2560 = vsel %vm2190, %v2550, -inf
    %v2561 = vmax.f32 %v2554, %v2560
    %v2562 = vsel %vm2190, %v2551, -inf
    %v2563 = vmax.f32 %v2555, %v2562
    %v2564 = vmax.f32 %v2557, %v2559
    %v2565 = vmax.f32 %v2561, %v2563
    %v2566 = vmax.f32 %v2564, %v2565
    %v2567 = vsub.f32 %v2536, %v2566
    %v2568 = vsub.f32 %v2537, %v2566
    %v2569 = vsub.f32 %v2538, %v2566
    %v2570 = vsub.f32 %v2539, %v2566
    %v2571 = vsub.f32 %v2540, %v2566
    %v2572 = vsub.f32 %v2541, %v2566
    %v2573 = vsub.f32 %v2542, %v2566
    %v2574 = vsub.f32 %v2543, %v2566
    %v2575 = vsel %vm2294, %v2567, -1e+30
    %v2576 = vsel %vm2167, %v2568, -1e+30
    %v2577 = vsel %vm2168, %v2569, -1e+30
    %v2578 = vsel %vm2535, %v2570, -1e+30
    %v2579 = vsel %vm2170, %v2571, -1e+30
    %v2580 = vsel %vm2171, %v2572, -1e+30
    %v2581 = vsel %vm2172, %v2573, -1e+30
    %v2582 = vsel %vm2173, %v2574, -1e+30
    %v2583 = vmul.f32 %v2575, 1.442695
    %v2584 = vpow.pop %v2583
    %v2585 = vmul.f32 %v2576, 1.442695
    %v2586 = vpow.pop %v2585
    %v2587 = vmul.f32 %v2577, 1.442695
    %v2588 = vpow.pop %v2587
    %v2589 = vmul.f32 %v2578, 1.442695
    %v2590 = vpow.pop %v2589
    %v2591 = vmul.f32 %v2579, 1.442695
    %v2592 = vpow.pop %v2591
    %v2593 = vmul.f32 %v2580, 1.442695
    %v2594 = vpow.pop %v2593
    %v2595 = vmul.f32 %v2581, 1.442695
    %v2596 = vpow.pop %v2595
    %v2597 = vmul.f32 %v2582, 1.442695
    %v2598 = vpow.pop %v2597
    %v2599 = vsel %vm2190, %v2584, 0.0
    %v2600 = vsel %vm2190, %v2586, 0.0
    %v2601 = vadd.f32 %v2599, %v2600
    %v2602 = vsel %vm2190, %v2588, 0.0
    %v2603 = vadd.f32 %v2601, %v2602
    %v2604 = vsel %vm2190, %v2590, 0.0
    %v2605 = vadd.f32 %v2603, %v2604
    %v2606 = vsel %vm2190, %v2592, 0.0
    %v2607 = vadd.f32 %v2605, %v2606
    %v2608 = vsel %vm2190, %v2594, 0.0
    %v2609 = vadd.f32 %v2607, %v2608
    %v2610 = vsel %vm2190, %v2596, 0.0
    %v2611 = vadd.f32 %v2609, %v2610
    %v2612 = vsel %vm2190, %v2598, 0.0
    %v2613 = vadd.f32 %v2611, %v2612
    %v2614 = vmax.f32 %v2613, 1e-30
    %v2615 = vmul.f32 %v2584, %v2158
    %v2616 = vmul.f32 %v2586, %v2159
    %v2617 = vmul.f32 %v2588, %v2160
    %v2618 = vmul.f32 %v2590, %v2161
    %v2619 = vmul.f32 %v2592, %v2162
    %v2620 = vmul.f32 %v2594, %v2163
    %v2621 = vmul.f32 %v2596, %v2164
    %v2622 = vmul.f32 %v2598, %v2165
    %v2623 = vsel %vm2190, %v2615, 0.0
    %v2624 = vsel %vm2190, %v2616, 0.0
    %v2625 = vadd.f32 %v2623, %v2624
    %v2626 = vsel %vm2190, %v2617, 0.0
    %v2627 = vadd.f32 %v2625, %v2626
    %v2628 = vsel %vm2190, %v2618, 0.0
    %v2629 = vadd.f32 %v2627, %v2628
    %v2630 = vsel %vm2190, %v2619, 0.0
    %v2631 = vadd.f32 %v2629, %v2630
    %v2632 = vsel %vm2190, %v2620, 0.0
    %v2633 = vadd.f32 %v2631, %v2632
    %v2634 = vsel %vm2190, %v2621, 0.0
    %v2635 = vadd.f32 %v2633, %v2634
    %v2636 = vsel %vm2190, %v2622, 0.0
    %v2637 = vadd.f32 %v2635, %v2636
    %v2638 = vrcp.pop %v2614
    %v2639 = vmul.f32 %v2614, %v2638
    %v2640 = vsub.f32 1.0, %v2639
    %v2641 = vmul.f32 %v2638, %v2640
    %v2642 = vadd.f32 %v2638, %v2641
    %vm2643 = vweird.f32 %v2614
    %vm2644 = vweird.f32 %v2638
    %vm2645 = vmor %vm2643, %vm2644
    %v2646 = vsel %vm2645, %v2638, %v2642
    %v2647 = vand.u32 2147483647, %v2614
    %vm2648 = vcmp.eq.f32.partialorder %v2647, 8.507059e+37
    %v2649 = vand.u32 %v2614, 2147483648
    %v2650 = vor.u32 1.1754944e-38, %v2649
    %v2651 = vsel %vm2648, %v2650, %v2646
    %v2652 = vmul.f32 %v2637, %v2651
    %v2653 = vtanh.pop %v2652
    %v2654 = vmul.f32 %v132, %v2653
    %vm2655 = vmand %vm141, 0
    %v2656 = vmul.f32 %v2126, %v2140
    %v2657 = vmul.f32 %v2126, %v2141
    %v2658 = vmul.f32 %v2126, %v2142
    %v2659 = vmul.f32 %v2126, %v2143
    %v2660 = vmul.f32 %v2126, %v2144
    %v2661 = vmul.f32 %v2126, %v2145
    %v2662 = vmul.f32 %v2126, %v2146
    %v2663 = vmul.f32 %v2126, %v2147
    %v2664 = vsel %vm2294, %v2656, -1e+30
    %v2665 = vsel %vm2167, %v2657, -1e+30
    %v2666 = vsel %vm2168, %v2658, -1e+30
    %v2667 = vsel %vm2169, %v2659, -1e+30
    %v2668 = vsel %vm2655, %v2660, -1e+30
    %v2669 = vsel %vm2171, %v2661, -1e+30
    %v2670 = vsel %vm2172, %v2662, -1e+30
    %v2671 = vsel %vm2173, %v2663, -1e+30
    %v2672 = vsel %vm2190, %v2664, -inf
    %v2673 = vsel %vm2190, %v2665, -inf
    %v2674 = vsel %vm2190, %v2666, -inf
    %v2675 = vsel %vm2190, %v2667, -inf
    %v2676 = vsel %vm2190, %v2668, -inf
    %v2677 = vmax.f32 %v2672, %v2676
    %v2678 = vsel %vm2190, %v2669, -inf
    %v2679 = vmax.f32 %v2673, %v2678
    %v2680 = vsel %vm2190, %v2670, -inf
    %v2681 = vmax.f32 %v2674, %v2680
    %v2682 = vsel %vm2190, %v2671, -inf
    %v2683 = vmax.f32 %v2675, %v2682
    %v2684 = vmax.f32 %v2677, %v2679
    %v2685 = vmax.f32 %v2681, %v2683
    %v2686 = vmax.f32 %v2684, %v2685
    %v2687 = vsub.f32 %v2656, %v2686
    %v2688 = vsub.f32 %v2657, %v2686
    %v2689 = vsub.f32 %v2658, %v2686
    %v2690 = vsub.f32 %v2659, %v2686
    %v2691 = vsub.f32 %v2660, %v2686
    %v2692 = vsub.f32 %v2661, %v2686
    %v2693 = vsub.f32 %v2662, %v2686
    %v2694 = vsub.f32 %v2663, %v2686
    %v2695 = vsel %vm2294, %v2687, -1e+30
    %v2696 = vsel %vm2167, %v2688, -1e+30
    %v2697 = vsel %vm2168, %v2689, -1e+30
    %v2698 = vsel %vm2169, %v2690, -1e+30
    %v2699 = vsel %vm2655, %v2691, -1e+30
    %v2700 = vsel %vm2171, %v2692, -1e+30
    %v2701 = vsel %vm2172, %v2693, -1e+30
    %v2702 = vsel %vm2173, %v2694, -1e+30
    %v2703 = vmul.f32 %v2695, 1.442695
    %v2704 = vpow.pop %v2703
    %v2705 = vmul.f32 %v2696, 1.442695
    %v2706 = vpow.pop %v2705
    %v2707 = vmul.f32 %v2697, 1.442695
    %v2708 = vpow.pop %v2707
    %v2709 = vmul.f32 %v2698, 1.442695
    %v2710 = vpow.pop %v2709
    %v2711 = vmul.f32 %v2699, 1.442695
    %v2712 = vpow.pop %v2711
    %v2713 = vmul.f32 %v2700, 1.442695
    %v2714 = vpow.pop %v2713
    %v2715 = vmul.f32 %v2701, 1.442695
    %v2716 = vpow.pop %v2715
    %v2717 = vmul.f32 %v2702, 1.442695
    %v2718 = vpow.pop %v2717
    %v2719 = vsel %vm2190, %v2704, 0.0
    %v2720 = vsel %vm2190, %v2706, 0.0
    %v2721 = vadd.f32 %v2719, %v2720
    %v2722 = vsel %vm2190, %v2708, 0.0
    %v2723 = vadd.f32 %v2721, %v2722
    %v2724 = vsel %vm2190, %v2710, 0.0
    %v2725 = vadd.f32 %v2723, %v2724
    %v2726 = vsel %vm2190, %v2712, 0.0
    %v2727 = vadd.f32 %v2725, %v2726
    %v2728 = vsel %vm2190, %v2714, 0.0
    %v2729 = vadd.f32 %v2727, %v2728
    %v2730 = vsel %vm2190, %v2716, 0.0
    %v2731 = vadd.f32 %v2729, %v2730
    %v2732 = vsel %vm2190, %v2718, 0.0
    %v2733 = vadd.f32 %v2731, %v2732
    %v2734 = vmax.f32 %v2733, 1e-30
    %v2735 = vmul.f32 %v2704, %v2158
    %v2736 = vmul.f32 %v2706, %v2159
    %v2737 = vmul.f32 %v2708, %v2160
    %v2738 = vmul.f32 %v2710, %v2161
    %v2739 = vmul.f32 %v2712, %v2162
    %v2740 = vmul.f32 %v2714, %v2163
    %v2741 = vmul.f32 %v2716, %v2164
    %v2742 = vmul.f32 %v2718, %v2165
    %v2743 = vsel %vm2190, %v2735, 0.0
    %v2744 = vsel %vm2190, %v2736, 0.0
    %v2745 = vadd.f32 %v2743, %v2744
    %v2746 = vsel %vm2190, %v2737, 0.0
    %v2747 = vadd.f32 %v2745, %v2746
    %v2748 = vsel %vm2190, %v2738, 0.0
    %v2749 = vadd.f32 %v2747, %v2748
    %v2750 = vsel %vm2190, %v2739, 0.0
    %v2751 = vadd.f32 %v2749, %v2750
    %v2752 = vsel %vm2190, %v2740, 0.0
    %v2753 = vadd.f32 %v2751, %v2752
    %v2754 = vsel %vm2190, %v2741, 0.0
    %v2755 = vadd.f32 %v2753, %v2754
    %v2756 = vsel %vm2190, %v2742, 0.0
    %v2757 = vadd.f32 %v2755, %v2756
    %v2758 = vrcp.pop %v2734
    %v2759 = vmul.f32 %v2734, %v2758
    %v2760 = vsub.f32 1.0, %v2759
    %v2761 = vmul.f32 %v2758, %v2760
    %v2762 = vadd.f32 %v2758, %v2761
    %vm2763 = vweird.f32 %v2734
    %vm2764 = vweird.f32 %v2758
    %vm2765 = vmor %vm2763, %vm2764
    %v2766 = vsel %vm2765, %v2758, %v2762
    %v2767 = vand.u32 2147483647, %v2734
    %vm2768 = vcmp.eq.f32.partialorder %v2767, 8.507059e+37
    %v2769 = vand.u32 %v2734, 2147483648
    %v2770 = vor.u32 1.1754944e-38, %v2769
    %v2771 = vsel %vm2768, %v2770, %v2766
    %v2772 = vmul.f32 %v2757, %v2771
    %v2773 = vtanh.pop %v2772
    %v2774 = vmul.f32 %v133, %v2773
    %vm2775 = vmand %vm142, 0
    %v2776 = vmul.f32 %v2127, %v2140
    %v2777 = vmul.f32 %v2127, %v2141
    %v2778 = vmul.f32 %v2127, %v2142
    %v2779 = vmul.f32 %v2127, %v2143
    %v2780 = vmul.f32 %v2127, %v2144
    %v2781 = vmul.f32 %v2127, %v2145
    %v2782 = vmul.f32 %v2127, %v2146
    %v2783 = vmul.f32 %v2127, %v2147
    %v2784 = vsel %vm2294, %v2776, -1e+30
    %v2785 = vsel %vm2167, %v2777, -1e+30
    %v2786 = vsel %vm2168, %v2778, -1e+30
    %v2787 = vsel %vm2169, %v2779, -1e+30
    %v2788 = vsel %vm2170, %v2780, -1e+30
    %v2789 = vsel %vm2775, %v2781, -1e+30
    %v2790 = vsel %vm2172, %v2782, -1e+30
    %v2791 = vsel %vm2173, %v2783, -1e+30
    %v2792 = vsel %vm2190, %v2784, -inf
    %v2793 = vsel %vm2190, %v2785, -inf
    %v2794 = vsel %vm2190, %v2786, -inf
    %v2795 = vsel %vm2190, %v2787, -inf
    %v2796 = vsel %vm2190, %v2788, -inf
    %v2797 = vmax.f32 %v2792, %v2796
    %v2798 = vsel %vm2190, %v2789, -inf
    %v2799 = vmax.f32 %v2793, %v2798
    %v2800 = vsel %vm2190, %v2790, -inf
    %v2801 = vmax.f32 %v2794, %v2800
    %v2802 = vsel %vm2190, %v2791, -inf
    %v2803 = vmax.f32 %v2795, %v2802
    %v2804 = vmax.f32 %v2797, %v2799
    %v2805 = vmax.f32 %v2801, %v2803
    %v2806 = vmax.f32 %v2804, %v2805
    %v2807 = vsub.f32 %v2776, %v2806
    %v2808 = vsub.f32 %v2777, %v2806
    %v2809 = vsub.f32 %v2778, %v2806
    %v2810 = vsub.f32 %v2779, %v2806
    %v2811 = vsub.f32 %v2780, %v2806
    %v2812 = vsub.f32 %v2781, %v2806
    %v2813 = vsub.f32 %v2782, %v2806
    %v2814 = vsub.f32 %v2783, %v2806
    %v2815 = vsel %vm2294, %v2807, -1e+30
    %v2816 = vsel %vm2167, %v2808, -1e+30
    %v2817 = vsel %vm2168, %v2809, -1e+30
    %v2818 = vsel %vm2169, %v2810, -1e+30
    %v2819 = vsel %vm2170, %v2811, -1e+30
    %v2820 = vsel %vm2775, %v2812, -1e+30
    %v2821 = vsel %vm2172, %v2813, -1e+30
    %v2822 = vsel %vm2173, %v2814, -1e+30
    %v2823 = vmul.f32 %v2815, 1.442695
    %v2824 = vpow.pop %v2823
    %v2825 = vmul.f32 %v2816, 1.442695
    %v2826 = vpow.pop %v2825
    %v2827 = vmul.f32 %v2817, 1.442695
    %v2828 = vpow.pop %v2827
    %v2829 = vmul.f32 %v2818, 1.442695
    %v2830 = vpow.pop %v2829
    %v2831 = vmul.f32 %v2819, 1.442695
    %v2832 = vpow.pop %v2831
    %v2833 = vmul.f32 %v2820, 1.442695
    %v2834 = vpow.pop %v2833
    %v2835 = vmul.f32 %v2821, 1.442695
    %v2836 = vpow.pop %v2835
    %v2837 = vmul.f32 %v2822, 1.442695
    %v2838 = vpow.pop %v2837
    %v2839 = vsel %vm2190, %v2824, 0.0
    %v2840 = vsel %vm2190, %v2826, 0.0
    %v2841 = vadd.f32 %v2839, %v2840
    %v2842 = vsel %vm2190, %v2828, 0.0
    %v2843 = vadd.f32 %v2841, %v2842
    %v2844 = vsel %vm2190, %v2830, 0.0
    %v2845 = vadd.f32 %v2843, %v2844
    %v2846 = vsel %vm2190, %v2832, 0.0
    %v2847 = vadd.f32 %v2845, %v2846
    %v2848 = vsel %vm2190, %v2834, 0.0
    %v2849 = vadd.f32 %v2847, %v2848
    %v2850 = vsel %vm2190, %v2836, 0.0
    %v2851 = vadd.f32 %v2849, %v2850
    %v2852 = vsel %vm2190, %v2838, 0.0
    %v2853 = vadd.f32 %v2851, %v2852
    %v2854 = vmax.f32 %v2853, 1e-30
    %v2855 = vmul.f32 %v2824, %v2158
    %v2856 = vmul.f32 %v2826, %v2159
    %v2857 = vmul.f32 %v2828, %v2160
    %v2858 = vmul.f32 %v2830, %v2161
    %v2859 = vmul.f32 %v2832, %v2162
    %v2860 = vmul.f32 %v2834, %v2163
    %v2861 = vmul.f32 %v2836, %v2164
    %v2862 = vmul.f32 %v2838, %v2165
    %v2863 = vsel %vm2190, %v2855, 0.0
    %v2864 = vsel %vm2190, %v2856, 0.0
    %v2865 = vadd.f32 %v2863, %v2864
    %v2866 = vsel %vm2190, %v2857, 0.0
    %v2867 = vadd.f32 %v2865, %v2866
    %v2868 = vsel %vm2190, %v2858, 0.0
    %v2869 = vadd.f32 %v2867, %v2868
    %v2870 = vsel %vm2190, %v2859, 0.0
    %v2871 = vadd.f32 %v2869, %v2870
    %v2872 = vsel %vm2190, %v2860, 0.0
    %v2873 = vadd.f32 %v2871, %v2872
    %v2874 = vsel %vm2190, %v2861, 0.0
    %v2875 = vadd.f32 %v2873, %v2874
    %v2876 = vsel %vm2190, %v2862, 0.0
    %v2877 = vadd.f32 %v2875, %v2876
    %v2878 = vrcp.pop %v2854
    %v2879 = vmul.f32 %v2854, %v2878
    %v2880 = vsub.f32 1.0, %v2879
    %v2881 = vmul.f32 %v2878, %v2880
    %v2882 = vadd.f32 %v2878, %v2881
    %vm2883 = vweird.f32 %v2854
    %vm2884 = vweird.f32 %v2878
    %vm2885 = vmor %vm2883, %vm2884
    %v2886 = vsel %vm2885, %v2878, %v2882
    %v2887 = vand.u32 2147483647, %v2854
    %vm2888 = vcmp.eq.f32.partialorder %v2887, 8.507059e+37
    %v2889 = vand.u32 %v2854, 2147483648
    %v2890 = vor.u32 1.1754944e-38, %v2889
    %v2891 = vsel %vm2888, %v2890, %v2886
    %v2892 = vmul.f32 %v2877, %v2891
    %v2893 = vtanh.pop %v2892
    %v2894 = vmul.f32 %v134, %v2893
    %vm2895 = vmand %vm143, 0
    %v2896 = vmul.f32 %v2128, %v2140
    %v2897 = vmul.f32 %v2128, %v2141
    %v2898 = vmul.f32 %v2128, %v2142
    %v2899 = vmul.f32 %v2128, %v2143
    %v2900 = vmul.f32 %v2128, %v2144
    %v2901 = vmul.f32 %v2128, %v2145
    %v2902 = vmul.f32 %v2128, %v2146
    %v2903 = vmul.f32 %v2128, %v2147
    %v2904 = vsel %vm2294, %v2896, -1e+30
    %v2905 = vsel %vm2167, %v2897, -1e+30
    %v2906 = vsel %vm2168, %v2898, -1e+30
    %v2907 = vsel %vm2169, %v2899, -1e+30
    %v2908 = vsel %vm2170, %v2900, -1e+30
    %v2909 = vsel %vm2171, %v2901, -1e+30
    %v2910 = vsel %vm2895, %v2902, -1e+30
    %v2911 = vsel %vm2173, %v2903, -1e+30
    %v2912 = vsel %vm2190, %v2904, -inf
    %v2913 = vsel %vm2190, %v2905, -inf
    %v2914 = vsel %vm2190, %v2906, -inf
    %v2915 = vsel %vm2190, %v2907, -inf
    %v2916 = vsel %vm2190, %v2908, -inf
    %v2917 = vmax.f32 %v2912, %v2916
    %v2918 = vsel %vm2190, %v2909, -inf
    %v2919 = vmax.f32 %v2913, %v2918
    %v2920 = vsel %vm2190, %v2910, -inf
    %v2921 = vmax.f32 %v2914, %v2920
    %v2922 = vsel %vm2190, %v2911, -inf
    %v2923 = vmax.f32 %v2915, %v2922
    %v2924 = vmax.f32 %v2917, %v2919
    %v2925 = vmax.f32 %v2921, %v2923
    %v2926 = vmax.f32 %v2924, %v2925
    %v2927 = vsub.f32 %v2896, %v2926
    %v2928 = vsub.f32 %v2897, %v2926
    %v2929 = vsub.f32 %v2898, %v2926
    %v2930 = vsub.f32 %v2899, %v2926
    %v2931 = vsub.f32 %v2900, %v2926
    %v2932 = vsub.f32 %v2901, %v2926
    %v2933 = vsub.f32 %v2902, %v2926
    %v2934 = vsub.f32 %v2903, %v2926
    %v2935 = vsel %vm2294, %v2927, -1e+30
    %v2936 = vsel %vm2167, %v2928, -1e+30
    %v2937 = vsel %vm2168, %v2929, -1e+30
    %v2938 = vsel %vm2169, %v2930, -1e+30
    %v2939 = vsel %vm2170, %v2931, -1e+30
    %v2940 = vsel %vm2171, %v2932, -1e+30
    %v2941 = vsel %vm2895, %v2933, -1e+30
    %v2942 = vsel %vm2173, %v2934, -1e+30
    %v2943 = vmul.f32 %v2935, 1.442695
    %v2944 = vpow.pop %v2943
    %v2945 = vmul.f32 %v2936, 1.442695
    %v2946 = vpow.pop %v2945
    %v2947 = vmul.f32 %v2937, 1.442695
    %v2948 = vpow.pop %v2947
    %v2949 = vmul.f32 %v2938, 1.442695
    %v2950 = vpow.pop %v2949
    %v2951 = vmul.f32 %v2939, 1.442695
    %v2952 = vpow.pop %v2951
    %v2953 = vmul.f32 %v2940, 1.442695
    %v2954 = vpow.pop %v2953
    %v2955 = vmul.f32 %v2941, 1.442695
    %v2956 = vpow.pop %v2955
    %v2957 = vmul.f32 %v2942, 1.442695
    %v2958 = vpow.pop %v2957
    %v2959 = vsel %vm2190, %v2944, 0.0
    %v2960 = vsel %vm2190, %v2946, 0.0
    %v2961 = vadd.f32 %v2959, %v2960
    %v2962 = vsel %vm2190, %v2948, 0.0
    %v2963 = vadd.f32 %v2961, %v2962
    %v2964 = vsel %vm2190, %v2950, 0.0
    %v2965 = vadd.f32 %v2963, %v2964
    %v2966 = vsel %vm2190, %v2952, 0.0
    %v2967 = vadd.f32 %v2965, %v2966
    %v2968 = vsel %vm2190, %v2954, 0.0
    %v2969 = vadd.f32 %v2967, %v2968
    %v2970 = vsel %vm2190, %v2956, 0.0
    %v2971 = vadd.f32 %v2969, %v2970
    %v2972 = vsel %vm2190, %v2958, 0.0
    %v2973 = vadd.f32 %v2971, %v2972
    %v2974 = vmax.f32 %v2973, 1e-30
    %v2975 = vmul.f32 %v2944, %v2158
    %v2976 = vmul.f32 %v2946, %v2159
    %v2977 = vmul.f32 %v2948, %v2160
    %v2978 = vmul.f32 %v2950, %v2161
    %v2979 = vmul.f32 %v2952, %v2162
    %v2980 = vmul.f32 %v2954, %v2163
    %v2981 = vmul.f32 %v2956, %v2164
    %v2982 = vmul.f32 %v2958, %v2165
    %v2983 = vsel %vm2190, %v2975, 0.0
    %v2984 = vsel %vm2190, %v2976, 0.0
    %v2985 = vadd.f32 %v2983, %v2984
    %v2986 = vsel %vm2190, %v2977, 0.0
    %v2987 = vadd.f32 %v2985, %v2986
    %v2988 = vsel %vm2190, %v2978, 0.0
    %v2989 = vadd.f32 %v2987, %v2988
    %v2990 = vsel %vm2190, %v2979, 0.0
    %v2991 = vadd.f32 %v2989, %v2990
    %v2992 = vsel %vm2190, %v2980, 0.0
    %v2993 = vadd.f32 %v2991, %v2992
    %v2994 = vsel %vm2190, %v2981, 0.0
    %v2995 = vadd.f32 %v2993, %v2994
    %v2996 = vsel %vm2190, %v2982, 0.0
    %v2997 = vadd.f32 %v2995, %v2996
    %v2998 = vrcp.pop %v2974
    %v2999 = vmul.f32 %v2974, %v2998
    %v3000 = vsub.f32 1.0, %v2999
    %v3001 = vmul.f32 %v2998, %v3000
    %v3002 = vadd.f32 %v2998, %v3001
    %vm3003 = vweird.f32 %v2974
    %vm3004 = vweird.f32 %v2998
    %vm3005 = vmor %vm3003, %vm3004
    %v3006 = vsel %vm3005, %v2998, %v3002
    %v3007 = vand.u32 2147483647, %v2974
    %vm3008 = vcmp.eq.f32.partialorder %v3007, 8.507059e+37
    %v3009 = vand.u32 %v2974, 2147483648
    %v3010 = vor.u32 1.1754944e-38, %v3009
    %v3011 = vsel %vm3008, %v3010, %v3006
    %v3012 = vmul.f32 %v2997, %v3011
    %v3013 = vtanh.pop %v3012
    %v3014 = vmul.f32 %v135, %v3013
    %vm3015 = vmand %vm144, 0
    %v3016 = vmul.f32 %v2129, %v2140
    %v3017 = vmul.f32 %v2129, %v2141
    %v3018 = vmul.f32 %v2129, %v2142
    %v3019 = vmul.f32 %v2129, %v2143
    %v3020 = vmul.f32 %v2129, %v2144
    %v3021 = vmul.f32 %v2129, %v2145
    %v3022 = vmul.f32 %v2129, %v2146
    %v3023 = vmul.f32 %v2129, %v2147
    %v3024 = vsel %vm2294, %v3016, -1e+30
    %v3025 = vsel %vm2167, %v3017, -1e+30
    %v3026 = vsel %vm2168, %v3018, -1e+30
    %v3027 = vsel %vm2169, %v3019, -1e+30
    %v3028 = vsel %vm2170, %v3020, -1e+30
    %v3029 = vsel %vm2171, %v3021, -1e+30
    %v3030 = vsel %vm2172, %v3022, -1e+30
    %v3031 = vsel %vm3015, %v3023, -1e+30
    %v3032 = vsel %vm2190, %v3024, -inf
    %v3033 = vsel %vm2190, %v3025, -inf
    %v3034 = vsel %vm2190, %v3026, -inf
    %v3035 = vsel %vm2190, %v3027, -inf
    %v3036 = vsel %vm2190, %v3028, -inf
    %v3037 = vmax.f32 %v3032, %v3036
    %v3038 = vsel %vm2190, %v3029, -inf
    %v3039 = vmax.f32 %v3033, %v3038
    %v3040 = vsel %vm2190, %v3030, -inf
    %v3041 = vmax.f32 %v3034, %v3040
    %v3042 = vsel %vm2190, %v3031, -inf
    %v3043 = vmax.f32 %v3035, %v3042
    %v3044 = vmax.f32 %v3037, %v3039
    %v3045 = vmax.f32 %v3041, %v3043
    %v3046 = vmax.f32 %v3044, %v3045
    %v3047 = vsub.f32 %v3016, %v3046
    %v3048 = vsub.f32 %v3017, %v3046
    %v3049 = vsub.f32 %v3018, %v3046
    %v3050 = vsub.f32 %v3019, %v3046
    %v3051 = vsub.f32 %v3020, %v3046
    %v3052 = vsub.f32 %v3021, %v3046
    %v3053 = vsub.f32 %v3022, %v3046
    %v3054 = vsub.f32 %v3023, %v3046
    %v3055 = vsel %vm2294, %v3047, -1e+30
    %v3056 = vsel %vm2167, %v3048, -1e+30
    %v3057 = vsel %vm2168, %v3049, -1e+30
    %v3058 = vsel %vm2169, %v3050, -1e+30
    %v3059 = vsel %vm2170, %v3051, -1e+30
    %v3060 = vsel %vm2171, %v3052, -1e+30
    %v3061 = vsel %vm2172, %v3053, -1e+30
    %v3062 = vsel %vm3015, %v3054, -1e+30
    %v3063 = vmul.f32 %v3055, 1.442695
    %v3064 = vpow.pop %v3063
    %v3065 = vmul.f32 %v3056, 1.442695
    %v3066 = vpow.pop %v3065
    %v3067 = vmul.f32 %v3057, 1.442695
    %v3068 = vpow.pop %v3067
    %v3069 = vmul.f32 %v3058, 1.442695
    %v3070 = vpow.pop %v3069
    %v3071 = vmul.f32 %v3059, 1.442695
    %v3072 = vpow.pop %v3071
    %v3073 = vmul.f32 %v3060, 1.442695
    %v3074 = vpow.pop %v3073
    %v3075 = vmul.f32 %v3061, 1.442695
    %v3076 = vpow.pop %v3075
    %v3077 = vmul.f32 %v3062, 1.442695
    %v3078 = vpow.pop %v3077
    %v3079 = vsel %vm2190, %v3064, 0.0
    %v3080 = vsel %vm2190, %v3066, 0.0
    %v3081 = vadd.f32 %v3079, %v3080
    %v3082 = vsel %vm2190, %v3068, 0.0
    %v3083 = vadd.f32 %v3081, %v3082
    %v3084 = vsel %vm2190, %v3070, 0.0
    %v3085 = vadd.f32 %v3083, %v3084
    %v3086 = vsel %vm2190, %v3072, 0.0
    %v3087 = vadd.f32 %v3085, %v3086
    %v3088 = vsel %vm2190, %v3074, 0.0
    %v3089 = vadd.f32 %v3087, %v3088
    %v3090 = vsel %vm2190, %v3076, 0.0
    %v3091 = vadd.f32 %v3089, %v3090
    %v3092 = vsel %vm2190, %v3078, 0.0
    %v3093 = vadd.f32 %v3091, %v3092
    %v3094 = vmax.f32 %v3093, 1e-30
    %v3095 = vmul.f32 %v3064, %v2158
    %v3096 = vmul.f32 %v3066, %v2159
    %v3097 = vmul.f32 %v3068, %v2160
    %v3098 = vmul.f32 %v3070, %v2161
    %v3099 = vmul.f32 %v3072, %v2162
    %v3100 = vmul.f32 %v3074, %v2163
    %v3101 = vmul.f32 %v3076, %v2164
    %v3102 = vmul.f32 %v3078, %v2165
    %v3103 = vsel %vm2190, %v3095, 0.0
    %v3104 = vsel %vm2190, %v3096, 0.0
    %v3105 = vadd.f32 %v3103, %v3104
    %v3106 = vsel %vm2190, %v3097, 0.0
    %v3107 = vadd.f32 %v3105, %v3106
    %v3108 = vsel %vm2190, %v3098, 0.0
    %v3109 = vadd.f32 %v3107, %v3108
    %v3110 = vsel %vm2190, %v3099, 0.0
    %v3111 = vadd.f32 %v3109, %v3110
    %v3112 = vsel %vm2190, %v3100, 0.0
    %v3113 = vadd.f32 %v3111, %v3112
    %v3114 = vsel %vm2190, %v3101, 0.0
    %v3115 = vadd.f32 %v3113, %v3114
    %v3116 = vsel %vm2190, %v3102, 0.0
    %v3117 = vadd.f32 %v3115, %v3116
    %v3118 = vrcp.pop %v3094
    %v3119 = vmul.f32 %v3094, %v3118
    %v3120 = vsub.f32 1.0, %v3119
    %v3121 = vmul.f32 %v3118, %v3120
    %v3122 = vadd.f32 %v3118, %v3121
    %vm3123 = vweird.f32 %v3094
    %vm3124 = vweird.f32 %v3118
    %vm3125 = vmor %vm3123, %vm3124
    %v3126 = vsel %vm3125, %v3118, %v3122
    %v3127 = vand.u32 2147483647, %v3094
    %vm3128 = vcmp.eq.f32.partialorder %v3127, 8.507059e+37
    %v3129 = vand.u32 %v3094, 2147483648
    %v3130 = vor.u32 1.1754944e-38, %v3129
    %v3131 = vsel %vm3128, %v3130, %v3126
    %v3132 = vmul.f32 %v3117, %v3131
    %v3133 = vtanh.pop %v3132
    %v3134 = vmul.f32 %v136, %v3133
    %v3135 = vsel %vm2190, %v129, 0.0
    %v3136 = vsel %vm2190, %v130, 0.0
    %v3137 = vadd.f32 %v3135, %v3136
    %v3138 = vsel %vm2190, %v131, 0.0
    %v3139 = vadd.f32 %v3137, %v3138
    %v3140 = vsel %vm2190, %v132, 0.0
    %v3141 = vadd.f32 %v3139, %v3140
    %v3142 = vsel %vm2190, %v133, 0.0
    %v3143 = vadd.f32 %v3141, %v3142
    %v3144 = vsel %vm2190, %v134, 0.0
    %v3145 = vadd.f32 %v3143, %v3144
    %v3146 = vsel %vm2190, %v135, 0.0
    %v3147 = vadd.f32 %v3145, %v3146
    %v3148 = vsel %vm2190, %v136, 0.0
    %v3149 = vadd.f32 %v3147, %v3148
    %vm3150 = vcmp.le.f32.partialorder %v3149, 1.5
    %s3151 = sld [smem:[#allocation9]]
    %v3152 = vstv %s3151
    %s3153 = sld [smem:[#allocation9 + $0x1]]
    %v3154 = vstv %s3153
    %s3155 = sld [smem:[#allocation9 + $0x2]]
    %v3156 = vstv %s3155
    %s3157 = sld [smem:[#allocation9 + $0x3]]
    %v3158 = vstv %s3157
    %s3159 = sld [smem:[#allocation9 + $0x4]]
    %v3160 = vstv %s3159
    %s3161 = sld [smem:[#allocation9 + $0x5]]
    %v3162 = vstv %s3161
    %s3163 = sld [smem:[#allocation9 + $0x6]]
    %v3164 = vstv %s3163
    %s3165 = sld [smem:[#allocation9 + $0x7]]
    %v3166 = vstv %s3165
    %v3167 = vmul.f32 %v2293, %v151
    %v3168 = vmul.f32 %v2414, %v152
    %v3169 = vmul.f32 %v2534, %v153
    %v3170 = vmul.f32 %v2654, %v154
    %v3171 = vmul.f32 %v2774, %v155
    %v3172 = vmul.f32 %v2894, %v156
    %v3173 = vmul.f32 %v3014, %v157
    %v3174 = vmul.f32 %v3134, %v158
    %v3175 = vsel %vm2190, %v3167, 0.0
    %v3176 = vsel %vm2190, %v3168, 0.0
    %v3177 = vadd.f32 %v3175, %v3176
    %v3178 = vsel %vm2190, %v3169, 0.0
    %v3179 = vadd.f32 %v3177, %v3178
    %v3180 = vsel %vm2190, %v3170, 0.0
    %v3181 = vadd.f32 %v3179, %v3180
    %v3182 = vsel %vm2190, %v3171, 0.0
    %v3183 = vadd.f32 %v3181, %v3182
    %v3184 = vsel %vm2190, %v3172, 0.0
    %v3185 = vadd.f32 %v3183, %v3184
    %v3186 = vsel %vm2190, %v3173, 0.0
    %v3187 = vadd.f32 %v3185, %v3186
    %v3188 = vsel %vm2190, %v3174, 0.0
    %v3189 = vadd.f32 %v3187, %v3188
    %v3190 = vld [vmem:[%s2] sm:$0xff]
    %v3191 = vsel %vm3150, %v3190, %v3189
    %s3192 = sld [smem:[#allocation8]]
    %v3193 = vstv %s3192
    %v3194 = vmul.f32 %v3191, %v3193
    %v3195 = vadd.f32 %v3152, %v3194
    %s3196 = sld [smem:[#allocation8 + $0x1]]
    %v3197 = vstv %s3196
    %v3198 = vmul.f32 %v3191, %v3197
    %v3199 = vadd.f32 %v3154, %v3198
    %s3200 = sld [smem:[#allocation8 + $0x2]]
    %v3201 = vstv %s3200
    %v3202 = vmul.f32 %v3191, %v3201
    %v3203 = vadd.f32 %v3156, %v3202
    %s3204 = sld [smem:[#allocation8 + $0x3]]
    %v3205 = vstv %s3204
    %v3206 = vmul.f32 %v3191, %v3205
    %v3207 = vadd.f32 %v3158, %v3206
    %s3208 = sld [smem:[#allocation8 + $0x4]]
    %v3209 = vstv %s3208
    %v3210 = vmul.f32 %v3191, %v3209
    %v3211 = vadd.f32 %v3160, %v3210
    %s3212 = sld [smem:[#allocation8 + $0x5]]
    %v3213 = vstv %s3212
    %v3214 = vmul.f32 %v3191, %v3213
    %v3215 = vadd.f32 %v3162, %v3214
    %s3216 = sld [smem:[#allocation8 + $0x6]]
    %v3217 = vstv %s3216
    %v3218 = vmul.f32 %v3191, %v3217
    %v3219 = vadd.f32 %v3164, %v3218
    %s3220 = sld [smem:[#allocation8 + $0x7]]
    %v3221 = vstv %s3220
    %v3222 = vmul.f32 %v3191, %v3221
    %v3223 = vadd.f32 %v3166, %v3222
    %s3224 = sld [smem:[#allocation12]]
    %v3225 = vstv %s3224
    %v3226 = vmul.f32 %v3191, %v3225
    %v3227 = vadd.f32 %v3226, 0.0
    %s3228 = sld [smem:[#allocation12 + $0x1]]
    %v3229 = vstv %s3228
    %v3230 = vmul.f32 %v3191, %v3229
    %v3231 = vadd.f32 %v3230, 0.0
    %v3232 = vmul.f32 %v2293, %v214
    %v3233 = vmul.f32 %v2414, %v215
    %v3234 = vmul.f32 %v2534, %v216
    %v3235 = vmul.f32 %v2654, %v217
    %v3236 = vmul.f32 %v2774, %v218
    %v3237 = vmul.f32 %v2894, %v219
    %v3238 = vmul.f32 %v3014, %v220
    %v3239 = vmul.f32 %v3134, %v221
    %v3240 = vsel %vm2190, %v3232, 0.0
    %v3241 = vsel %vm2190, %v3233, 0.0
    %v3242 = vadd.f32 %v3240, %v3241
    %v3243 = vsel %vm2190, %v3234, 0.0
    %v3244 = vadd.f32 %v3242, %v3243
    %v3245 = vsel %vm2190, %v3235, 0.0
    %v3246 = vadd.f32 %v3244, %v3245
    %v3247 = vsel %vm2190, %v3236, 0.0
    %v3248 = vadd.f32 %v3246, %v3247
    %v3249 = vsel %vm2190, %v3237, 0.0
    %v3250 = vadd.f32 %v3248, %v3249
    %v3251 = vsel %vm2190, %v3238, 0.0
    %v3252 = vadd.f32 %v3250, %v3251
    %v3253 = vsel %vm2190, %v3239, 0.0
    %v3254 = vadd.f32 %v3252, %v3253
    %s3255 = scalar_lea.vmem %s2, 8
    %v3256 = vld [vmem:[%s3255] sm:$0xff]
    %v3257 = vsel %vm3150, %v3256, %v3254
    %s3258 = sld [smem:[#allocation8 + $0x80]]
    %v3259 = vstv %s3258
    %v3260 = vmul.f32 %v3257, %v3259
    %v3261 = vadd.f32 %v3195, %v3260
    %s3262 = sld [smem:[#allocation8 + $0x81]]
    %v3263 = vstv %s3262
    %v3264 = vmul.f32 %v3257, %v3263
    %v3265 = vadd.f32 %v3199, %v3264
    %s3266 = sld [smem:[#allocation8 + $0x82]]
    %v3267 = vstv %s3266
    %v3268 = vmul.f32 %v3257, %v3267
    %v3269 = vadd.f32 %v3203, %v3268
    %s3270 = sld [smem:[#allocation8 + $0x83]]
    %v3271 = vstv %s3270
    %v3272 = vmul.f32 %v3257, %v3271
    %v3273 = vadd.f32 %v3207, %v3272
    %s3274 = sld [smem:[#allocation8 + $0x84]]
    %v3275 = vstv %s3274
    %v3276 = vmul.f32 %v3257, %v3275
    %v3277 = vadd.f32 %v3211, %v3276
    %s3278 = sld [smem:[#allocation8 + $0x85]]
    %v3279 = vstv %s3278
    %v3280 = vmul.f32 %v3257, %v3279
    %v3281 = vadd.f32 %v3215, %v3280
    %s3282 = sld [smem:[#allocation8 + $0x86]]
    %v3283 = vstv %s3282
    %v3284 = vmul.f32 %v3257, %v3283
    %v3285 = vadd.f32 %v3219, %v3284
    %s3286 = sld [smem:[#allocation8 + $0x87]]
    %v3287 = vstv %s3286
    %v3288 = vmul.f32 %v3257, %v3287
    %v3289 = vadd.f32 %v3223, %v3288
    %s3290 = sld [smem:[#allocation12 + $0x80]]
    %v3291 = vstv %s3290
    %v3292 = vmul.f32 %v3257, %v3291
    %v3293 = vadd.f32 %v3227, %v3292
    %s3294 = sld [smem:[#allocation12 + $0x81]]
    %v3295 = vstv %s3294
    %v3296 = vmul.f32 %v3257, %v3295
    %v3297 = vadd.f32 %v3231, %v3296
    %v3298 = vmul.f32 %v2293, %v277
    %v3299 = vmul.f32 %v2414, %v278
    %v3300 = vmul.f32 %v2534, %v279
    %v3301 = vmul.f32 %v2654, %v280
    %v3302 = vmul.f32 %v2774, %v281
    %v3303 = vmul.f32 %v2894, %v282
    %v3304 = vmul.f32 %v3014, %v283
    %v3305 = vmul.f32 %v3134, %v284
    %v3306 = vsel %vm2190, %v3298, 0.0
    %v3307 = vsel %vm2190, %v3299, 0.0
    %v3308 = vadd.f32 %v3306, %v3307
    %v3309 = vsel %vm2190, %v3300, 0.0
    %v3310 = vadd.f32 %v3308, %v3309
    %v3311 = vsel %vm2190, %v3301, 0.0
    %v3312 = vadd.f32 %v3310, %v3311
    %v3313 = vsel %vm2190, %v3302, 0.0
    %v3314 = vadd.f32 %v3312, %v3313
    %v3315 = vsel %vm2190, %v3303, 0.0
    %v3316 = vadd.f32 %v3314, %v3315
    %v3317 = vsel %vm2190, %v3304, 0.0
    %v3318 = vadd.f32 %v3316, %v3317
    %v3319 = vsel %vm2190, %v3305, 0.0
    %v3320 = vadd.f32 %v3318, %v3319
    %s3321 = scalar_lea.vmem %s2, 16
    %v3322 = vld [vmem:[%s3321] sm:$0xff]
    %v3323 = vsel %vm3150, %v3322, %v3320
    %s3324 = sld [smem:[#allocation8 + $0x100]]
    %v3325 = vstv %s3324
    %v3326 = vmul.f32 %v3323, %v3325
    %v3327 = vadd.f32 %v3261, %v3326
    %s3328 = sld [smem:[#allocation8 + $0x101]]
    %v3329 = vstv %s3328
    %v3330 = vmul.f32 %v3323, %v3329
    %v3331 = vadd.f32 %v3265, %v3330
    %s3332 = sld [smem:[#allocation8 + $0x102]]
    %v3333 = vstv %s3332
    %v3334 = vmul.f32 %v3323, %v3333
    %v3335 = vadd.f32 %v3269, %v3334
    %s3336 = sld [smem:[#allocation8 + $0x103]]
    %v3337 = vstv %s3336
    %v3338 = vmul.f32 %v3323, %v3337
    %v3339 = vadd.f32 %v3273, %v3338
    %s3340 = sld [smem:[#allocation8 + $0x104]]
    %v3341 = vstv %s3340
    %v3342 = vmul.f32 %v3323, %v3341
    %v3343 = vadd.f32 %v3277, %v3342
    %s3344 = sld [smem:[#allocation8 + $0x105]]
    %v3345 = vstv %s3344
    %v3346 = vmul.f32 %v3323, %v3345
    %v3347 = vadd.f32 %v3281, %v3346
    %s3348 = sld [smem:[#allocation8 + $0x106]]
    %v3349 = vstv %s3348
    %v3350 = vmul.f32 %v3323, %v3349
    %v3351 = vadd.f32 %v3285, %v3350
    %s3352 = sld [smem:[#allocation8 + $0x107]]
    %v3353 = vstv %s3352
    %v3354 = vmul.f32 %v3323, %v3353
    %v3355 = vadd.f32 %v3289, %v3354
    %s3356 = sld [smem:[#allocation12 + $0x100]]
    %v3357 = vstv %s3356
    %v3358 = vmul.f32 %v3323, %v3357
    %v3359 = vadd.f32 %v3293, %v3358
    %s3360 = sld [smem:[#allocation12 + $0x101]]
    %v3361 = vstv %s3360
    %v3362 = vmul.f32 %v3323, %v3361
    %v3363 = vadd.f32 %v3297, %v3362
    %v3364 = vmul.f32 %v2293, %v340
    %v3365 = vmul.f32 %v2414, %v341
    %v3366 = vmul.f32 %v2534, %v342
    %v3367 = vmul.f32 %v2654, %v343
    %v3368 = vmul.f32 %v2774, %v344
    %v3369 = vmul.f32 %v2894, %v345
    %v3370 = vmul.f32 %v3014, %v346
    %v3371 = vmul.f32 %v3134, %v347
    %v3372 = vsel %vm2190, %v3364, 0.0
    %v3373 = vsel %vm2190, %v3365, 0.0
    %v3374 = vadd.f32 %v3372, %v3373
    %v3375 = vsel %vm2190, %v3366, 0.0
    %v3376 = vadd.f32 %v3374, %v3375
    %v3377 = vsel %vm2190, %v3367, 0.0
    %v3378 = vadd.f32 %v3376, %v3377
    %v3379 = vsel %vm2190, %v3368, 0.0
    %v3380 = vadd.f32 %v3378, %v3379
    %v3381 = vsel %vm2190, %v3369, 0.0
    %v3382 = vadd.f32 %v3380, %v3381
    %v3383 = vsel %vm2190, %v3370, 0.0
    %v3384 = vadd.f32 %v3382, %v3383
    %v3385 = vsel %vm2190, %v3371, 0.0
    %v3386 = vadd.f32 %v3384, %v3385
    %s3387 = scalar_lea.vmem %s2, 24
    %v3388 = vld [vmem:[%s3387] sm:$0xff]
    %v3389 = vsel %vm3150, %v3388, %v3386
    %s3390 = sld [smem:[#allocation8 + $0x180]]
    %v3391 = vstv %s3390
    %v3392 = vmul.f32 %v3389, %v3391
    %v3393 = vadd.f32 %v3327, %v3392
    %s3394 = sld [smem:[#allocation8 + $0x181]]
    %v3395 = vstv %s3394
    %v3396 = vmul.f32 %v3389, %v3395
    %v3397 = vadd.f32 %v3331, %v3396
    %s3398 = sld [smem:[#allocation8 + $0x182]]
    %v3399 = vstv %s3398
    %v3400 = vmul.f32 %v3389, %v3399
    %v3401 = vadd.f32 %v3335, %v3400
    %s3402 = sld [smem:[#allocation8 + $0x183]]
    %v3403 = vstv %s3402
    %v3404 = vmul.f32 %v3389, %v3403
    %v3405 = vadd.f32 %v3339, %v3404
    %s3406 = sld [smem:[#allocation8 + $0x184]]
    %v3407 = vstv %s3406
    %v3408 = vmul.f32 %v3389, %v3407
    %v3409 = vadd.f32 %v3343, %v3408
    %s3410 = sld [smem:[#allocation8 + $0x185]]
    %v3411 = vstv %s3410
    %v3412 = vmul.f32 %v3389, %v3411
    %v3413 = vadd.f32 %v3347, %v3412
    %s3414 = sld [smem:[#allocation8 + $0x186]]
    %v3415 = vstv %s3414
    %v3416 = vmul.f32 %v3389, %v3415
    %v3417 = vadd.f32 %v3351, %v3416
    %s3418 = sld [smem:[#allocation8 + $0x187]]
    %v3419 = vstv %s3418
    %v3420 = vmul.f32 %v3389, %v3419
    %v3421 = vadd.f32 %v3355, %v3420
    %s3422 = sld [smem:[#allocation12 + $0x180]]
    %v3423 = vstv %s3422
    %v3424 = vmul.f32 %v3389, %v3423
    %v3425 = vadd.f32 %v3359, %v3424
    %s3426 = sld [smem:[#allocation12 + $0x181]]
    %v3427 = vstv %s3426
    %v3428 = vmul.f32 %v3389, %v3427
    %v3429 = vadd.f32 %v3363, %v3428
    %v3430 = vmul.f32 %v2293, %v403
    %v3431 = vmul.f32 %v2414, %v404
    %v3432 = vmul.f32 %v2534, %v405
    %v3433 = vmul.f32 %v2654, %v406
    %v3434 = vmul.f32 %v2774, %v407
    %v3435 = vmul.f32 %v2894, %v408
    %v3436 = vmul.f32 %v3014, %v409
    %v3437 = vmul.f32 %v3134, %v410
    %v3438 = vsel %vm2190, %v3430, 0.0
    %v3439 = vsel %vm2190, %v3431, 0.0
    %v3440 = vadd.f32 %v3438, %v3439
    %v3441 = vsel %vm2190, %v3432, 0.0
    %v3442 = vadd.f32 %v3440, %v3441
    %v3443 = vsel %vm2190, %v3433, 0.0
    %v3444 = vadd.f32 %v3442, %v3443
    %v3445 = vsel %vm2190, %v3434, 0.0
    %v3446 = vadd.f32 %v3444, %v3445
    %v3447 = vsel %vm2190, %v3435, 0.0
    %v3448 = vadd.f32 %v3446, %v3447
    %v3449 = vsel %vm2190, %v3436, 0.0
    %v3450 = vadd.f32 %v3448, %v3449
    %v3451 = vsel %vm2190, %v3437, 0.0
    %v3452 = vadd.f32 %v3450, %v3451
    %s3453 = scalar_lea.vmem %s2, 32
    %v3454 = vld [vmem:[%s3453] sm:$0xff]
    %v3455 = vsel %vm3150, %v3454, %v3452
    %s3456 = sld [smem:[#allocation8 + $0x200]]
    %v3457 = vstv %s3456
    %v3458 = vmul.f32 %v3455, %v3457
    %v3459 = vadd.f32 %v3393, %v3458
    %s3460 = sld [smem:[#allocation8 + $0x201]]
    %v3461 = vstv %s3460
    %v3462 = vmul.f32 %v3455, %v3461
    %v3463 = vadd.f32 %v3397, %v3462
    %s3464 = sld [smem:[#allocation8 + $0x202]]
    %v3465 = vstv %s3464
    %v3466 = vmul.f32 %v3455, %v3465
    %v3467 = vadd.f32 %v3401, %v3466
    %s3468 = sld [smem:[#allocation8 + $0x203]]
    %v3469 = vstv %s3468
    %v3470 = vmul.f32 %v3455, %v3469
    %v3471 = vadd.f32 %v3405, %v3470
    %s3472 = sld [smem:[#allocation8 + $0x204]]
    %v3473 = vstv %s3472
    %v3474 = vmul.f32 %v3455, %v3473
    %v3475 = vadd.f32 %v3409, %v3474
    %s3476 = sld [smem:[#allocation8 + $0x205]]
    %v3477 = vstv %s3476
    %v3478 = vmul.f32 %v3455, %v3477
    %v3479 = vadd.f32 %v3413, %v3478
    %s3480 = sld [smem:[#allocation8 + $0x206]]
    %v3481 = vstv %s3480
    %v3482 = vmul.f32 %v3455, %v3481
    %v3483 = vadd.f32 %v3417, %v3482
    %s3484 = sld [smem:[#allocation8 + $0x207]]
    %v3485 = vstv %s3484
    %v3486 = vmul.f32 %v3455, %v3485
    %v3487 = vadd.f32 %v3421, %v3486
    %s3488 = sld [smem:[#allocation12 + $0x200]]
    %v3489 = vstv %s3488
    %v3490 = vmul.f32 %v3455, %v3489
    %v3491 = vadd.f32 %v3425, %v3490
    %s3492 = sld [smem:[#allocation12 + $0x201]]
    %v3493 = vstv %s3492
    %v3494 = vmul.f32 %v3455, %v3493
    %v3495 = vadd.f32 %v3429, %v3494
    %v3496 = vmul.f32 %v2293, %v466
    %v3497 = vmul.f32 %v2414, %v467
    %v3498 = vmul.f32 %v2534, %v468
    %v3499 = vmul.f32 %v2654, %v469
    %v3500 = vmul.f32 %v2774, %v470
    %v3501 = vmul.f32 %v2894, %v471
    %v3502 = vmul.f32 %v3014, %v472
    %v3503 = vmul.f32 %v3134, %v473
    %v3504 = vsel %vm2190, %v3496, 0.0
    %v3505 = vsel %vm2190, %v3497, 0.0
    %v3506 = vadd.f32 %v3504, %v3505
    %v3507 = vsel %vm2190, %v3498, 0.0
    %v3508 = vadd.f32 %v3506, %v3507
    %v3509 = vsel %vm2190, %v3499, 0.0
    %v3510 = vadd.f32 %v3508, %v3509
    %v3511 = vsel %vm2190, %v3500, 0.0
    %v3512 = vadd.f32 %v3510, %v3511
    %v3513 = vsel %vm2190, %v3501, 0.0
    %v3514 = vadd.f32 %v3512, %v3513
    %v3515 = vsel %vm2190, %v3502, 0.0
    %v3516 = vadd.f32 %v3514, %v3515
    %v3517 = vsel %vm2190, %v3503, 0.0
    %v3518 = vadd.f32 %v3516, %v3517
    %s3519 = scalar_lea.vmem %s2, 40
    %v3520 = vld [vmem:[%s3519] sm:$0xff]
    %v3521 = vsel %vm3150, %v3520, %v3518
    %s3522 = sld [smem:[#allocation8 + $0x280]]
    %v3523 = vstv %s3522
    %v3524 = vmul.f32 %v3521, %v3523
    %v3525 = vadd.f32 %v3459, %v3524
    %s3526 = sld [smem:[#allocation8 + $0x281]]
    %v3527 = vstv %s3526
    %v3528 = vmul.f32 %v3521, %v3527
    %v3529 = vadd.f32 %v3463, %v3528
    %s3530 = sld [smem:[#allocation8 + $0x282]]
    %v3531 = vstv %s3530
    %v3532 = vmul.f32 %v3521, %v3531
    %v3533 = vadd.f32 %v3467, %v3532
    %s3534 = sld [smem:[#allocation8 + $0x283]]
    %v3535 = vstv %s3534
    %v3536 = vmul.f32 %v3521, %v3535
    %v3537 = vadd.f32 %v3471, %v3536
    %s3538 = sld [smem:[#allocation8 + $0x284]]
    %v3539 = vstv %s3538
    %v3540 = vmul.f32 %v3521, %v3539
    %v3541 = vadd.f32 %v3475, %v3540
    %s3542 = sld [smem:[#allocation8 + $0x285]]
    %v3543 = vstv %s3542
    %v3544 = vmul.f32 %v3521, %v3543
    %v3545 = vadd.f32 %v3479, %v3544
    %s3546 = sld [smem:[#allocation8 + $0x286]]
    %v3547 = vstv %s3546
    %v3548 = vmul.f32 %v3521, %v3547
    %v3549 = vadd.f32 %v3483, %v3548
    %s3550 = sld [smem:[#allocation8 + $0x287]]
    %v3551 = vstv %s3550
    %v3552 = vmul.f32 %v3521, %v3551
    %v3553 = vadd.f32 %v3487, %v3552
    %s3554 = sld [smem:[#allocation12 + $0x280]]
    %v3555 = vstv %s3554
    %v3556 = vmul.f32 %v3521, %v3555
    %v3557 = vadd.f32 %v3491, %v3556
    %s3558 = sld [smem:[#allocation12 + $0x281]]
    %v3559 = vstv %s3558
    %v3560 = vmul.f32 %v3521, %v3559
    %v3561 = vadd.f32 %v3495, %v3560
    %v3562 = vmul.f32 %v2293, %v529
    %v3563 = vmul.f32 %v2414, %v530
    %v3564 = vmul.f32 %v2534, %v531
    %v3565 = vmul.f32 %v2654, %v532
    %v3566 = vmul.f32 %v2774, %v533
    %v3567 = vmul.f32 %v2894, %v534
    %v3568 = vmul.f32 %v3014, %v535
    %v3569 = vmul.f32 %v3134, %v536
    %v3570 = vsel %vm2190, %v3562, 0.0
    %v3571 = vsel %vm2190, %v3563, 0.0
    %v3572 = vadd.f32 %v3570, %v3571
    %v3573 = vsel %vm2190, %v3564, 0.0
    %v3574 = vadd.f32 %v3572, %v3573
    %v3575 = vsel %vm2190, %v3565, 0.0
    %v3576 = vadd.f32 %v3574, %v3575
    %v3577 = vsel %vm2190, %v3566, 0.0
    %v3578 = vadd.f32 %v3576, %v3577
    %v3579 = vsel %vm2190, %v3567, 0.0
    %v3580 = vadd.f32 %v3578, %v3579
    %v3581 = vsel %vm2190, %v3568, 0.0
    %v3582 = vadd.f32 %v3580, %v3581
    %v3583 = vsel %vm2190, %v3569, 0.0
    %v3584 = vadd.f32 %v3582, %v3583
    %s3585 = scalar_lea.vmem %s2, 48
    %v3586 = vld [vmem:[%s3585] sm:$0xff]
    %v3587 = vsel %vm3150, %v3586, %v3584
    %s3588 = sld [smem:[#allocation8 + $0x300]]
    %v3589 = vstv %s3588
    %v3590 = vmul.f32 %v3587, %v3589
    %v3591 = vadd.f32 %v3525, %v3590
    %s3592 = sld [smem:[#allocation8 + $0x301]]
    %v3593 = vstv %s3592
    %v3594 = vmul.f32 %v3587, %v3593
    %v3595 = vadd.f32 %v3529, %v3594
    %s3596 = sld [smem:[#allocation8 + $0x302]]
    %v3597 = vstv %s3596
    %v3598 = vmul.f32 %v3587, %v3597
    %v3599 = vadd.f32 %v3533, %v3598
    %s3600 = sld [smem:[#allocation8 + $0x303]]
    %v3601 = vstv %s3600
    %v3602 = vmul.f32 %v3587, %v3601
    %v3603 = vadd.f32 %v3537, %v3602
    %s3604 = sld [smem:[#allocation8 + $0x304]]
    %v3605 = vstv %s3604
    %v3606 = vmul.f32 %v3587, %v3605
    %v3607 = vadd.f32 %v3541, %v3606
    %s3608 = sld [smem:[#allocation8 + $0x305]]
    %v3609 = vstv %s3608
    %v3610 = vmul.f32 %v3587, %v3609
    %v3611 = vadd.f32 %v3545, %v3610
    %s3612 = sld [smem:[#allocation8 + $0x306]]
    %v3613 = vstv %s3612
    %v3614 = vmul.f32 %v3587, %v3613
    %v3615 = vadd.f32 %v3549, %v3614
    %s3616 = sld [smem:[#allocation8 + $0x307]]
    %v3617 = vstv %s3616
    %v3618 = vmul.f32 %v3587, %v3617
    %v3619 = vadd.f32 %v3553, %v3618
    %s3620 = sld [smem:[#allocation12 + $0x300]]
    %v3621 = vstv %s3620
    %v3622 = vmul.f32 %v3587, %v3621
    %v3623 = vadd.f32 %v3557, %v3622
    %s3624 = sld [smem:[#allocation12 + $0x301]]
    %v3625 = vstv %s3624
    %v3626 = vmul.f32 %v3587, %v3625
    %v3627 = vadd.f32 %v3561, %v3626
    %v3628 = vmul.f32 %v2293, %v592
    %v3629 = vmul.f32 %v2414, %v593
    %v3630 = vmul.f32 %v2534, %v594
    %v3631 = vmul.f32 %v2654, %v595
    %v3632 = vmul.f32 %v2774, %v596
    %v3633 = vmul.f32 %v2894, %v597
    %v3634 = vmul.f32 %v3014, %v598
    %v3635 = vmul.f32 %v3134, %v599
    %v3636 = vsel %vm2190, %v3628, 0.0
    %v3637 = vsel %vm2190, %v3629, 0.0
    %v3638 = vadd.f32 %v3636, %v3637
    %v3639 = vsel %vm2190, %v3630, 0.0
    %v3640 = vadd.f32 %v3638, %v3639
    %v3641 = vsel %vm2190, %v3631, 0.0
    %v3642 = vadd.f32 %v3640, %v3641
    %v3643 = vsel %vm2190, %v3632, 0.0
    %v3644 = vadd.f32 %v3642, %v3643
    %v3645 = vsel %vm2190, %v3633, 0.0
    %v3646 = vadd.f32 %v3644, %v3645
    %v3647 = vsel %vm2190, %v3634, 0.0
    %v3648 = vadd.f32 %v3646, %v3647
    %v3649 = vsel %vm2190, %v3635, 0.0
    %v3650 = vadd.f32 %v3648, %v3649
    %s3651 = scalar_lea.vmem %s2, 56
    %v3652 = vld [vmem:[%s3651] sm:$0xff]
    %v3653 = vsel %vm3150, %v3652, %v3650
    %s3654 = sld [smem:[#allocation8 + $0x380]]
    %v3655 = vstv %s3654
    %v3656 = vmul.f32 %v3653, %v3655
    %v3657 = vadd.f32 %v3591, %v3656
    %s3658 = sld [smem:[#allocation8 + $0x381]]
    %v3659 = vstv %s3658
    %v3660 = vmul.f32 %v3653, %v3659
    %v3661 = vadd.f32 %v3595, %v3660
    %s3662 = sld [smem:[#allocation8 + $0x382]]
    %v3663 = vstv %s3662
    %v3664 = vmul.f32 %v3653, %v3663
    %v3665 = vadd.f32 %v3599, %v3664
    %s3666 = sld [smem:[#allocation8 + $0x383]]
    %v3667 = vstv %s3666
    %v3668 = vmul.f32 %v3653, %v3667
    %v3669 = vadd.f32 %v3603, %v3668
    %s3670 = sld [smem:[#allocation8 + $0x384]]
    %v3671 = vstv %s3670
    %v3672 = vmul.f32 %v3653, %v3671
    %v3673 = vadd.f32 %v3607, %v3672
    %s3674 = sld [smem:[#allocation8 + $0x385]]
    %v3675 = vstv %s3674
    %v3676 = vmul.f32 %v3653, %v3675
    %v3677 = vadd.f32 %v3611, %v3676
    %s3678 = sld [smem:[#allocation8 + $0x386]]
    %v3679 = vstv %s3678
    %v3680 = vmul.f32 %v3653, %v3679
    %v3681 = vadd.f32 %v3615, %v3680
    %s3682 = sld [smem:[#allocation8 + $0x387]]
    %v3683 = vstv %s3682
    %v3684 = vmul.f32 %v3653, %v3683
    %v3685 = vadd.f32 %v3619, %v3684
    %s3686 = sld [smem:[#allocation12 + $0x380]]
    %v3687 = vstv %s3686
    %v3688 = vmul.f32 %v3653, %v3687
    %v3689 = vadd.f32 %v3623, %v3688
    %s3690 = sld [smem:[#allocation12 + $0x381]]
    %v3691 = vstv %s3690
    %v3692 = vmul.f32 %v3653, %v3691
    %v3693 = vadd.f32 %v3627, %v3692
    %v3694 = vmul.f32 %v2293, %v655
    %v3695 = vmul.f32 %v2414, %v656
    %v3696 = vmul.f32 %v2534, %v657
    %v3697 = vmul.f32 %v2654, %v658
    %v3698 = vmul.f32 %v2774, %v659
    %v3699 = vmul.f32 %v2894, %v660
    %v3700 = vmul.f32 %v3014, %v661
    %v3701 = vmul.f32 %v3134, %v662
    %v3702 = vsel %vm2190, %v3694, 0.0
    %v3703 = vsel %vm2190, %v3695, 0.0
    %v3704 = vadd.f32 %v3702, %v3703
    %v3705 = vsel %vm2190, %v3696, 0.0
    %v3706 = vadd.f32 %v3704, %v3705
    %v3707 = vsel %vm2190, %v3697, 0.0
    %v3708 = vadd.f32 %v3706, %v3707
    %v3709 = vsel %vm2190, %v3698, 0.0
    %v3710 = vadd.f32 %v3708, %v3709
    %v3711 = vsel %vm2190, %v3699, 0.0
    %v3712 = vadd.f32 %v3710, %v3711
    %v3713 = vsel %vm2190, %v3700, 0.0
    %v3714 = vadd.f32 %v3712, %v3713
    %v3715 = vsel %vm2190, %v3701, 0.0
    %v3716 = vadd.f32 %v3714, %v3715
    %s3717 = scalar_lea.vmem %s2, 64
    %v3718 = vld [vmem:[%s3717] sm:$0xff]
    %v3719 = vsel %vm3150, %v3718, %v3716
    %s3720 = sld [smem:[#allocation8 + $0x400]]
    %v3721 = vstv %s3720
    %v3722 = vmul.f32 %v3719, %v3721
    %v3723 = vadd.f32 %v3657, %v3722
    %s3724 = sld [smem:[#allocation8 + $0x401]]
    %v3725 = vstv %s3724
    %v3726 = vmul.f32 %v3719, %v3725
    %v3727 = vadd.f32 %v3661, %v3726
    %s3728 = sld [smem:[#allocation8 + $0x402]]
    %v3729 = vstv %s3728
    %v3730 = vmul.f32 %v3719, %v3729
    %v3731 = vadd.f32 %v3665, %v3730
    %s3732 = sld [smem:[#allocation8 + $0x403]]
    %v3733 = vstv %s3732
    %v3734 = vmul.f32 %v3719, %v3733
    %v3735 = vadd.f32 %v3669, %v3734
    %s3736 = sld [smem:[#allocation8 + $0x404]]
    %v3737 = vstv %s3736
    %v3738 = vmul.f32 %v3719, %v3737
    %v3739 = vadd.f32 %v3673, %v3738
    %s3740 = sld [smem:[#allocation8 + $0x405]]
    %v3741 = vstv %s3740
    %v3742 = vmul.f32 %v3719, %v3741
    %v3743 = vadd.f32 %v3677, %v3742
    %s3744 = sld [smem:[#allocation8 + $0x406]]
    %v3745 = vstv %s3744
    %v3746 = vmul.f32 %v3719, %v3745
    %v3747 = vadd.f32 %v3681, %v3746
    %s3748 = sld [smem:[#allocation8 + $0x407]]
    %v3749 = vstv %s3748
    %v3750 = vmul.f32 %v3719, %v3749
    %v3751 = vadd.f32 %v3685, %v3750
    %s3752 = sld [smem:[#allocation12 + $0x400]]
    %v3753 = vstv %s3752
    %v3754 = vmul.f32 %v3719, %v3753
    %v3755 = vadd.f32 %v3689, %v3754
    %s3756 = sld [smem:[#allocation12 + $0x401]]
    %v3757 = vstv %s3756
    %v3758 = vmul.f32 %v3719, %v3757
    %v3759 = vadd.f32 %v3693, %v3758
    %v3760 = vmul.f32 %v2293, %v718
    %v3761 = vmul.f32 %v2414, %v719
    %v3762 = vmul.f32 %v2534, %v720
    %v3763 = vmul.f32 %v2654, %v721
    %v3764 = vmul.f32 %v2774, %v722
    %v3765 = vmul.f32 %v2894, %v723
    %v3766 = vmul.f32 %v3014, %v724
    %v3767 = vmul.f32 %v3134, %v725
    %v3768 = vsel %vm2190, %v3760, 0.0
    %v3769 = vsel %vm2190, %v3761, 0.0
    %v3770 = vadd.f32 %v3768, %v3769
    %v3771 = vsel %vm2190, %v3762, 0.0
    %v3772 = vadd.f32 %v3770, %v3771
    %v3773 = vsel %vm2190, %v3763, 0.0
    %v3774 = vadd.f32 %v3772, %v3773
    %v3775 = vsel %vm2190, %v3764, 0.0
    %v3776 = vadd.f32 %v3774, %v3775
    %v3777 = vsel %vm2190, %v3765, 0.0
    %v3778 = vadd.f32 %v3776, %v3777
    %v3779 = vsel %vm2190, %v3766, 0.0
    %v3780 = vadd.f32 %v3778, %v3779
    %v3781 = vsel %vm2190, %v3767, 0.0
    %v3782 = vadd.f32 %v3780, %v3781
    %s3783 = scalar_lea.vmem %s2, 72
    %v3784 = vld [vmem:[%s3783] sm:$0xff]
    %v3785 = vsel %vm3150, %v3784, %v3782
    %s3786 = sld [smem:[#allocation8 + $0x480]]
    %v3787 = vstv %s3786
    %v3788 = vmul.f32 %v3785, %v3787
    %v3789 = vadd.f32 %v3723, %v3788
    %s3790 = sld [smem:[#allocation8 + $0x481]]
    %v3791 = vstv %s3790
    %v3792 = vmul.f32 %v3785, %v3791
    %v3793 = vadd.f32 %v3727, %v3792
    %s3794 = sld [smem:[#allocation8 + $0x482]]
    %v3795 = vstv %s3794
    %v3796 = vmul.f32 %v3785, %v3795
    %v3797 = vadd.f32 %v3731, %v3796
    %s3798 = sld [smem:[#allocation8 + $0x483]]
    %v3799 = vstv %s3798
    %v3800 = vmul.f32 %v3785, %v3799
    %v3801 = vadd.f32 %v3735, %v3800
    %s3802 = sld [smem:[#allocation8 + $0x484]]
    %v3803 = vstv %s3802
    %v3804 = vmul.f32 %v3785, %v3803
    %v3805 = vadd.f32 %v3739, %v3804
    %s3806 = sld [smem:[#allocation8 + $0x485]]
    %v3807 = vstv %s3806
    %v3808 = vmul.f32 %v3785, %v3807
    %v3809 = vadd.f32 %v3743, %v3808
    %s3810 = sld [smem:[#allocation8 + $0x486]]
    %v3811 = vstv %s3810
    %v3812 = vmul.f32 %v3785, %v3811
    %v3813 = vadd.f32 %v3747, %v3812
    %s3814 = sld [smem:[#allocation8 + $0x487]]
    %v3815 = vstv %s3814
    %v3816 = vmul.f32 %v3785, %v3815
    %v3817 = vadd.f32 %v3751, %v3816
    %s3818 = sld [smem:[#allocation12 + $0x480]]
    %v3819 = vstv %s3818
    %v3820 = vmul.f32 %v3785, %v3819
    %v3821 = vadd.f32 %v3755, %v3820
    %s3822 = sld [smem:[#allocation12 + $0x481]]
    %v3823 = vstv %s3822
    %v3824 = vmul.f32 %v3785, %v3823
    %v3825 = vadd.f32 %v3759, %v3824
    %v3826 = vmul.f32 %v2293, %v781
    %v3827 = vmul.f32 %v2414, %v782
    %v3828 = vmul.f32 %v2534, %v783
    %v3829 = vmul.f32 %v2654, %v784
    %v3830 = vmul.f32 %v2774, %v785
    %v3831 = vmul.f32 %v2894, %v786
    %v3832 = vmul.f32 %v3014, %v787
    %v3833 = vmul.f32 %v3134, %v788
    %v3834 = vsel %vm2190, %v3826, 0.0
    %v3835 = vsel %vm2190, %v3827, 0.0
    %v3836 = vadd.f32 %v3834, %v3835
    %v3837 = vsel %vm2190, %v3828, 0.0
    %v3838 = vadd.f32 %v3836, %v3837
    %v3839 = vsel %vm2190, %v3829, 0.0
    %v3840 = vadd.f32 %v3838, %v3839
    %v3841 = vsel %vm2190, %v3830, 0.0
    %v3842 = vadd.f32 %v3840, %v3841
    %v3843 = vsel %vm2190, %v3831, 0.0
    %v3844 = vadd.f32 %v3842, %v3843
    %v3845 = vsel %vm2190, %v3832, 0.0
    %v3846 = vadd.f32 %v3844, %v3845
    %v3847 = vsel %vm2190, %v3833, 0.0
    %v3848 = vadd.f32 %v3846, %v3847
    %s3849 = scalar_lea.vmem %s2, 80
    %v3850 = vld [vmem:[%s3849] sm:$0xff]
    %v3851 = vsel %vm3150, %v3850, %v3848
    %s3852 = sld [smem:[#allocation8 + $0x500]]
    %v3853 = vstv %s3852
    %v3854 = vmul.f32 %v3851, %v3853
    %v3855 = vadd.f32 %v3789, %v3854
    %s3856 = sld [smem:[#allocation8 + $0x501]]
    %v3857 = vstv %s3856
    %v3858 = vmul.f32 %v3851, %v3857
    %v3859 = vadd.f32 %v3793, %v3858
    %s3860 = sld [smem:[#allocation8 + $0x502]]
    %v3861 = vstv %s3860
    %v3862 = vmul.f32 %v3851, %v3861
    %v3863 = vadd.f32 %v3797, %v3862
    %s3864 = sld [smem:[#allocation8 + $0x503]]
    %v3865 = vstv %s3864
    %v3866 = vmul.f32 %v3851, %v3865
    %v3867 = vadd.f32 %v3801, %v3866
    %s3868 = sld [smem:[#allocation8 + $0x504]]
    %v3869 = vstv %s3868
    %v3870 = vmul.f32 %v3851, %v3869
    %v3871 = vadd.f32 %v3805, %v3870
    %s3872 = sld [smem:[#allocation8 + $0x505]]
    %v3873 = vstv %s3872
    %v3874 = vmul.f32 %v3851, %v3873
    %v3875 = vadd.f32 %v3809, %v3874
    %s3876 = sld [smem:[#allocation8 + $0x506]]
    %v3877 = vstv %s3876
    %v3878 = vmul.f32 %v3851, %v3877
    %v3879 = vadd.f32 %v3813, %v3878
    %s3880 = sld [smem:[#allocation8 + $0x507]]
    %v3881 = vstv %s3880
    %v3882 = vmul.f32 %v3851, %v3881
    %v3883 = vadd.f32 %v3817, %v3882
    %s3884 = sld [smem:[#allocation12 + $0x500]]
    %v3885 = vstv %s3884
    %v3886 = vmul.f32 %v3851, %v3885
    %v3887 = vadd.f32 %v3821, %v3886
    %s3888 = sld [smem:[#allocation12 + $0x501]]
    %v3889 = vstv %s3888
    %v3890 = vmul.f32 %v3851, %v3889
    %v3891 = vadd.f32 %v3825, %v3890
    %v3892 = vmul.f32 %v2293, %v844
    %v3893 = vmul.f32 %v2414, %v845
    %v3894 = vmul.f32 %v2534, %v846
    %v3895 = vmul.f32 %v2654, %v847
    %v3896 = vmul.f32 %v2774, %v848
    %v3897 = vmul.f32 %v2894, %v849
    %v3898 = vmul.f32 %v3014, %v850
    %v3899 = vmul.f32 %v3134, %v851
    %v3900 = vsel %vm2190, %v3892, 0.0
    %v3901 = vsel %vm2190, %v3893, 0.0
    %v3902 = vadd.f32 %v3900, %v3901
    %v3903 = vsel %vm2190, %v3894, 0.0
    %v3904 = vadd.f32 %v3902, %v3903
    %v3905 = vsel %vm2190, %v3895, 0.0
    %v3906 = vadd.f32 %v3904, %v3905
    %v3907 = vsel %vm2190, %v3896, 0.0
    %v3908 = vadd.f32 %v3906, %v3907
    %v3909 = vsel %vm2190, %v3897, 0.0
    %v3910 = vadd.f32 %v3908, %v3909
    %v3911 = vsel %vm2190, %v3898, 0.0
    %v3912 = vadd.f32 %v3910, %v3911
    %v3913 = vsel %vm2190, %v3899, 0.0
    %v3914 = vadd.f32 %v3912, %v3913
    %s3915 = scalar_lea.vmem %s2, 88
    %v3916 = vld [vmem:[%s3915] sm:$0xff]
    %v3917 = vsel %vm3150, %v3916, %v3914
    %s3918 = sld [smem:[#allocation8 + $0x580]]
    %v3919 = vstv %s3918
    %v3920 = vmul.f32 %v3917, %v3919
    %v3921 = vadd.f32 %v3855, %v3920
    %s3922 = sld [smem:[#allocation8 + $0x581]]
    %v3923 = vstv %s3922
    %v3924 = vmul.f32 %v3917, %v3923
    %v3925 = vadd.f32 %v3859, %v3924
    %s3926 = sld [smem:[#allocation8 + $0x582]]
    %v3927 = vstv %s3926
    %v3928 = vmul.f32 %v3917, %v3927
    %v3929 = vadd.f32 %v3863, %v3928
    %s3930 = sld [smem:[#allocation8 + $0x583]]
    %v3931 = vstv %s3930
    %v3932 = vmul.f32 %v3917, %v3931
    %v3933 = vadd.f32 %v3867, %v3932
    %s3934 = sld [smem:[#allocation8 + $0x584]]
    %v3935 = vstv %s3934
    %v3936 = vmul.f32 %v3917, %v3935
    %v3937 = vadd.f32 %v3871, %v3936
    %s3938 = sld [smem:[#allocation8 + $0x585]]
    %v3939 = vstv %s3938
    %v3940 = vmul.f32 %v3917, %v3939
    %v3941 = vadd.f32 %v3875, %v3940
    %s3942 = sld [smem:[#allocation8 + $0x586]]
    %v3943 = vstv %s3942
    %v3944 = vmul.f32 %v3917, %v3943
    %v3945 = vadd.f32 %v3879, %v3944
    %s3946 = sld [smem:[#allocation8 + $0x587]]
    %v3947 = vstv %s3946
    %v3948 = vmul.f32 %v3917, %v3947
    %v3949 = vadd.f32 %v3883, %v3948
    %s3950 = sld [smem:[#allocation12 + $0x580]]
    %v3951 = vstv %s3950
    %v3952 = vmul.f32 %v3917, %v3951
    %v3953 = vadd.f32 %v3887, %v3952
    %s3954 = sld [smem:[#allocation12 + $0x581]]
    %v3955 = vstv %s3954
    %v3956 = vmul.f32 %v3917, %v3955
    %v3957 = vadd.f32 %v3891, %v3956
    %v3958 = vmul.f32 %v2293, %v907
    %v3959 = vmul.f32 %v2414, %v908
    %v3960 = vmul.f32 %v2534, %v909
    %v3961 = vmul.f32 %v2654, %v910
    %v3962 = vmul.f32 %v2774, %v911
    %v3963 = vmul.f32 %v2894, %v912
    %v3964 = vmul.f32 %v3014, %v913
    %v3965 = vmul.f32 %v3134, %v914
    %v3966 = vsel %vm2190, %v3958, 0.0
    %v3967 = vsel %vm2190, %v3959, 0.0
    %v3968 = vadd.f32 %v3966, %v3967
    %v3969 = vsel %vm2190, %v3960, 0.0
    %v3970 = vadd.f32 %v3968, %v3969
    %v3971 = vsel %vm2190, %v3961, 0.0
    %v3972 = vadd.f32 %v3970, %v3971
    %v3973 = vsel %vm2190, %v3962, 0.0
    %v3974 = vadd.f32 %v3972, %v3973
    %v3975 = vsel %vm2190, %v3963, 0.0
    %v3976 = vadd.f32 %v3974, %v3975
    %v3977 = vsel %vm2190, %v3964, 0.0
    %v3978 = vadd.f32 %v3976, %v3977
    %v3979 = vsel %vm2190, %v3965, 0.0
    %v3980 = vadd.f32 %v3978, %v3979
    %s3981 = scalar_lea.vmem %s2, 96
    %v3982 = vld [vmem:[%s3981] sm:$0xff]
    %v3983 = vsel %vm3150, %v3982, %v3980
    %s3984 = sld [smem:[#allocation8 + $0x600]]
    %v3985 = vstv %s3984
    %v3986 = vmul.f32 %v3983, %v3985
    %v3987 = vadd.f32 %v3921, %v3986
    %s3988 = sld [smem:[#allocation8 + $0x601]]
    %v3989 = vstv %s3988
    %v3990 = vmul.f32 %v3983, %v3989
    %v3991 = vadd.f32 %v3925, %v3990
    %s3992 = sld [smem:[#allocation8 + $0x602]]
    %v3993 = vstv %s3992
    %v3994 = vmul.f32 %v3983, %v3993
    %v3995 = vadd.f32 %v3929, %v3994
    %s3996 = sld [smem:[#allocation8 + $0x603]]
    %v3997 = vstv %s3996
    %v3998 = vmul.f32 %v3983, %v3997
    %v3999 = vadd.f32 %v3933, %v3998
    %s4000 = sld [smem:[#allocation8 + $0x604]]
    %v4001 = vstv %s4000
    %v4002 = vmul.f32 %v3983, %v4001
    %v4003 = vadd.f32 %v3937, %v4002
    %s4004 = sld [smem:[#allocation8 + $0x605]]
    %v4005 = vstv %s4004
    %v4006 = vmul.f32 %v3983, %v4005
    %v4007 = vadd.f32 %v3941, %v4006
    %s4008 = sld [smem:[#allocation8 + $0x606]]
    %v4009 = vstv %s4008
    %v4010 = vmul.f32 %v3983, %v4009
    %v4011 = vadd.f32 %v3945, %v4010
    %s4012 = sld [smem:[#allocation8 + $0x607]]
    %v4013 = vstv %s4012
    %v4014 = vmul.f32 %v3983, %v4013
    %v4015 = vadd.f32 %v3949, %v4014
    %s4016 = sld [smem:[#allocation12 + $0x600]]
    %v4017 = vstv %s4016
    %v4018 = vmul.f32 %v3983, %v4017
    %v4019 = vadd.f32 %v3953, %v4018
    %s4020 = sld [smem:[#allocation12 + $0x601]]
    %v4021 = vstv %s4020
    %v4022 = vmul.f32 %v3983, %v4021
    %v4023 = vadd.f32 %v3957, %v4022
    %v4024 = vmul.f32 %v2293, %v970
    %v4025 = vmul.f32 %v2414, %v971
    %v4026 = vmul.f32 %v2534, %v972
    %v4027 = vmul.f32 %v2654, %v973
    %v4028 = vmul.f32 %v2774, %v974
    %v4029 = vmul.f32 %v2894, %v975
    %v4030 = vmul.f32 %v3014, %v976
    %v4031 = vmul.f32 %v3134, %v977
    %v4032 = vsel %vm2190, %v4024, 0.0
    %v4033 = vsel %vm2190, %v4025, 0.0
    %v4034 = vadd.f32 %v4032, %v4033
    %v4035 = vsel %vm2190, %v4026, 0.0
    %v4036 = vadd.f32 %v4034, %v4035
    %v4037 = vsel %vm2190, %v4027, 0.0
    %v4038 = vadd.f32 %v4036, %v4037
    %v4039 = vsel %vm2190, %v4028, 0.0
    %v4040 = vadd.f32 %v4038, %v4039
    %v4041 = vsel %vm2190, %v4029, 0.0
    %v4042 = vadd.f32 %v4040, %v4041
    %v4043 = vsel %vm2190, %v4030, 0.0
    %v4044 = vadd.f32 %v4042, %v4043
    %v4045 = vsel %vm2190, %v4031, 0.0
    %v4046 = vadd.f32 %v4044, %v4045
    %s4047 = scalar_lea.vmem %s2, 104
    %v4048 = vld [vmem:[%s4047] sm:$0xff]
    %v4049 = vsel %vm3150, %v4048, %v4046
    %s4050 = sld [smem:[#allocation8 + $0x680]]
    %v4051 = vstv %s4050
    %v4052 = vmul.f32 %v4049, %v4051
    %v4053 = vadd.f32 %v3987, %v4052
    %s4054 = sld [smem:[#allocation8 + $0x681]]
    %v4055 = vstv %s4054
    %v4056 = vmul.f32 %v4049, %v4055
    %v4057 = vadd.f32 %v3991, %v4056
    %s4058 = sld [smem:[#allocation8 + $0x682]]
    %v4059 = vstv %s4058
    %v4060 = vmul.f32 %v4049, %v4059
    %v4061 = vadd.f32 %v3995, %v4060
    %s4062 = sld [smem:[#allocation8 + $0x683]]
    %v4063 = vstv %s4062
    %v4064 = vmul.f32 %v4049, %v4063
    %v4065 = vadd.f32 %v3999, %v4064
    %s4066 = sld [smem:[#allocation8 + $0x684]]
    %v4067 = vstv %s4066
    %v4068 = vmul.f32 %v4049, %v4067
    %v4069 = vadd.f32 %v4003, %v4068
    %s4070 = sld [smem:[#allocation8 + $0x685]]
    %v4071 = vstv %s4070
    %v4072 = vmul.f32 %v4049, %v4071
    %v4073 = vadd.f32 %v4007, %v4072
    %s4074 = sld [smem:[#allocation8 + $0x686]]
    %v4075 = vstv %s4074
    %v4076 = vmul.f32 %v4049, %v4075
    %v4077 = vadd.f32 %v4011, %v4076
    %s4078 = sld [smem:[#allocation8 + $0x687]]
    %v4079 = vstv %s4078
    %v4080 = vmul.f32 %v4049, %v4079
    %v4081 = vadd.f32 %v4015, %v4080
    %s4082 = sld [smem:[#allocation12 + $0x680]]
    %v4083 = vstv %s4082
    %v4084 = vmul.f32 %v4049, %v4083
    %v4085 = vadd.f32 %v4019, %v4084
    %s4086 = sld [smem:[#allocation12 + $0x681]]
    %v4087 = vstv %s4086
    %v4088 = vmul.f32 %v4049, %v4087
    %v4089 = vadd.f32 %v4023, %v4088
    %v4090 = vmul.f32 %v2293, %v1033
    %v4091 = vmul.f32 %v2414, %v1034
    %v4092 = vmul.f32 %v2534, %v1035
    %v4093 = vmul.f32 %v2654, %v1036
    %v4094 = vmul.f32 %v2774, %v1037
    %v4095 = vmul.f32 %v2894, %v1038
    %v4096 = vmul.f32 %v3014, %v1039
    %v4097 = vmul.f32 %v3134, %v1040
    %v4098 = vsel %vm2190, %v4090, 0.0
    %v4099 = vsel %vm2190, %v4091, 0.0
    %v4100 = vadd.f32 %v4098, %v4099
    %v4101 = vsel %vm2190, %v4092, 0.0
    %v4102 = vadd.f32 %v4100, %v4101
    %v4103 = vsel %vm2190, %v4093, 0.0
    %v4104 = vadd.f32 %v4102, %v4103
    %v4105 = vsel %vm2190, %v4094, 0.0
    %v4106 = vadd.f32 %v4104, %v4105
    %v4107 = vsel %vm2190, %v4095, 0.0
    %v4108 = vadd.f32 %v4106, %v4107
    %v4109 = vsel %vm2190, %v4096, 0.0
    %v4110 = vadd.f32 %v4108, %v4109
    %v4111 = vsel %vm2190, %v4097, 0.0
    %v4112 = vadd.f32 %v4110, %v4111
    %s4113 = scalar_lea.vmem %s2, 112
    %v4114 = vld [vmem:[%s4113] sm:$0xff]
    %v4115 = vsel %vm3150, %v4114, %v4112
    %s4116 = sld [smem:[#allocation8 + $0x700]]
    %v4117 = vstv %s4116
    %v4118 = vmul.f32 %v4115, %v4117
    %v4119 = vadd.f32 %v4053, %v4118
    %s4120 = sld [smem:[#allocation8 + $0x701]]
    %v4121 = vstv %s4120
    %v4122 = vmul.f32 %v4115, %v4121
    %v4123 = vadd.f32 %v4057, %v4122
    %s4124 = sld [smem:[#allocation8 + $0x702]]
    %v4125 = vstv %s4124
    %v4126 = vmul.f32 %v4115, %v4125
    %v4127 = vadd.f32 %v4061, %v4126
    %s4128 = sld [smem:[#allocation8 + $0x703]]
    %v4129 = vstv %s4128
    %v4130 = vmul.f32 %v4115, %v4129
    %v4131 = vadd.f32 %v4065, %v4130
    %s4132 = sld [smem:[#allocation8 + $0x704]]
    %v4133 = vstv %s4132
    %v4134 = vmul.f32 %v4115, %v4133
    %v4135 = vadd.f32 %v4069, %v4134
    %s4136 = sld [smem:[#allocation8 + $0x705]]
    %v4137 = vstv %s4136
    %v4138 = vmul.f32 %v4115, %v4137
    %v4139 = vadd.f32 %v4073, %v4138
    %s4140 = sld [smem:[#allocation8 + $0x706]]
    %v4141 = vstv %s4140
    %v4142 = vmul.f32 %v4115, %v4141
    %v4143 = vadd.f32 %v4077, %v4142
    %s4144 = sld [smem:[#allocation8 + $0x707]]
    %v4145 = vstv %s4144
    %v4146 = vmul.f32 %v4115, %v4145
    %v4147 = vadd.f32 %v4081, %v4146
    %s4148 = sld [smem:[#allocation12 + $0x700]]
    %v4149 = vstv %s4148
    %v4150 = vmul.f32 %v4115, %v4149
    %v4151 = vadd.f32 %v4085, %v4150
    %s4152 = sld [smem:[#allocation12 + $0x701]]
    %v4153 = vstv %s4152
    %v4154 = vmul.f32 %v4115, %v4153
    %v4155 = vadd.f32 %v4089, %v4154
    %v4156 = vmul.f32 %v2293, %v1096
    %v4157 = vmul.f32 %v2414, %v1097
    %v4158 = vmul.f32 %v2534, %v1098
    %v4159 = vmul.f32 %v2654, %v1099
    %v4160 = vmul.f32 %v2774, %v1100
    %v4161 = vmul.f32 %v2894, %v1101
    %v4162 = vmul.f32 %v3014, %v1102
    %v4163 = vmul.f32 %v3134, %v1103
    %v4164 = vsel %vm2190, %v4156, 0.0
    %v4165 = vsel %vm2190, %v4157, 0.0
    %v4166 = vadd.f32 %v4164, %v4165
    %v4167 = vsel %vm2190, %v4158, 0.0
    %v4168 = vadd.f32 %v4166, %v4167
    %v4169 = vsel %vm2190, %v4159, 0.0
    %v4170 = vadd.f32 %v4168, %v4169
    %v4171 = vsel %vm2190, %v4160, 0.0
    %v4172 = vadd.f32 %v4170, %v4171
    %v4173 = vsel %vm2190, %v4161, 0.0
    %v4174 = vadd.f32 %v4172, %v4173
    %v4175 = vsel %vm2190, %v4162, 0.0
    %v4176 = vadd.f32 %v4174, %v4175
    %v4177 = vsel %vm2190, %v4163, 0.0
    %v4178 = vadd.f32 %v4176, %v4177
    %s4179 = scalar_lea.vmem %s2, 120
    %v4180 = vld [vmem:[%s4179] sm:$0xff]
    %v4181 = vsel %vm3150, %v4180, %v4178
    %s4182 = sld [smem:[#allocation8 + $0x780]]
    %v4183 = vstv %s4182
    %v4184 = vmul.f32 %v4181, %v4183
    %v4185 = vadd.f32 %v4119, %v4184
    %s4186 = sld [smem:[#allocation8 + $0x781]]
    %v4187 = vstv %s4186
    %v4188 = vmul.f32 %v4181, %v4187
    %v4189 = vadd.f32 %v4123, %v4188
    %s4190 = sld [smem:[#allocation8 + $0x782]]
    %v4191 = vstv %s4190
    %v4192 = vmul.f32 %v4181, %v4191
    %v4193 = vadd.f32 %v4127, %v4192
    %s4194 = sld [smem:[#allocation8 + $0x783]]
    %v4195 = vstv %s4194
    %v4196 = vmul.f32 %v4181, %v4195
    %v4197 = vadd.f32 %v4131, %v4196
    %s4198 = sld [smem:[#allocation8 + $0x784]]
    %v4199 = vstv %s4198
    %v4200 = vmul.f32 %v4181, %v4199
    %v4201 = vadd.f32 %v4135, %v4200
    %s4202 = sld [smem:[#allocation8 + $0x785]]
    %v4203 = vstv %s4202
    %v4204 = vmul.f32 %v4181, %v4203
    %v4205 = vadd.f32 %v4139, %v4204
    %s4206 = sld [smem:[#allocation8 + $0x786]]
    %v4207 = vstv %s4206
    %v4208 = vmul.f32 %v4181, %v4207
    %v4209 = vadd.f32 %v4143, %v4208
    %s4210 = sld [smem:[#allocation8 + $0x787]]
    %v4211 = vstv %s4210
    %v4212 = vmul.f32 %v4181, %v4211
    %v4213 = vadd.f32 %v4147, %v4212
    %s4214 = sld [smem:[#allocation12 + $0x780]]
    %v4215 = vstv %s4214
    %v4216 = vmul.f32 %v4181, %v4215
    %v4217 = vadd.f32 %v4151, %v4216
    %s4218 = sld [smem:[#allocation12 + $0x781]]
    %v4219 = vstv %s4218
    %v4220 = vmul.f32 %v4181, %v4219
    %v4221 = vadd.f32 %v4155, %v4220
    %v4222 = vmul.f32 %v2293, %v1159
    %v4223 = vmul.f32 %v2414, %v1160
    %v4224 = vmul.f32 %v2534, %v1161
    %v4225 = vmul.f32 %v2654, %v1162
    %v4226 = vmul.f32 %v2774, %v1163
    %v4227 = vmul.f32 %v2894, %v1164
    %v4228 = vmul.f32 %v3014, %v1165
    %v4229 = vmul.f32 %v3134, %v1166
    %v4230 = vsel %vm2190, %v4222, 0.0
    %v4231 = vsel %vm2190, %v4223, 0.0
    %v4232 = vadd.f32 %v4230, %v4231
    %v4233 = vsel %vm2190, %v4224, 0.0
    %v4234 = vadd.f32 %v4232, %v4233
    %v4235 = vsel %vm2190, %v4225, 0.0
    %v4236 = vadd.f32 %v4234, %v4235
    %v4237 = vsel %vm2190, %v4226, 0.0
    %v4238 = vadd.f32 %v4236, %v4237
    %v4239 = vsel %vm2190, %v4227, 0.0
    %v4240 = vadd.f32 %v4238, %v4239
    %v4241 = vsel %vm2190, %v4228, 0.0
    %v4242 = vadd.f32 %v4240, %v4241
    %v4243 = vsel %vm2190, %v4229, 0.0
    %v4244 = vadd.f32 %v4242, %v4243
    %s4245 = scalar_lea.vmem %s2, 128
    %v4246 = vld [vmem:[%s4245] sm:$0xff]
    %v4247 = vsel %vm3150, %v4246, %v4244
    %s4248 = sld [smem:[#allocation8 + $0x800]]
    %v4249 = vstv %s4248
    %v4250 = vmul.f32 %v4247, %v4249
    %v4251 = vadd.f32 %v4185, %v4250
    %s4252 = sld [smem:[#allocation8 + $0x801]]
    %v4253 = vstv %s4252
    %v4254 = vmul.f32 %v4247, %v4253
    %v4255 = vadd.f32 %v4189, %v4254
    %s4256 = sld [smem:[#allocation8 + $0x802]]
    %v4257 = vstv %s4256
    %v4258 = vmul.f32 %v4247, %v4257
    %v4259 = vadd.f32 %v4193, %v4258
    %s4260 = sld [smem:[#allocation8 + $0x803]]
    %v4261 = vstv %s4260
    %v4262 = vmul.f32 %v4247, %v4261
    %v4263 = vadd.f32 %v4197, %v4262
    %s4264 = sld [smem:[#allocation8 + $0x804]]
    %v4265 = vstv %s4264
    %v4266 = vmul.f32 %v4247, %v4265
    %v4267 = vadd.f32 %v4201, %v4266
    %s4268 = sld [smem:[#allocation8 + $0x805]]
    %v4269 = vstv %s4268
    %v4270 = vmul.f32 %v4247, %v4269
    %v4271 = vadd.f32 %v4205, %v4270
    %s4272 = sld [smem:[#allocation8 + $0x806]]
    %v4273 = vstv %s4272
    %v4274 = vmul.f32 %v4247, %v4273
    %v4275 = vadd.f32 %v4209, %v4274
    %s4276 = sld [smem:[#allocation8 + $0x807]]
    %v4277 = vstv %s4276
    %v4278 = vmul.f32 %v4247, %v4277
    %v4279 = vadd.f32 %v4213, %v4278
    %s4280 = sld [smem:[#allocation12 + $0x800]]
    %v4281 = vstv %s4280
    %v4282 = vmul.f32 %v4247, %v4281
    %v4283 = vadd.f32 %v4217, %v4282
    %s4284 = sld [smem:[#allocation12 + $0x801]]
    %v4285 = vstv %s4284
    %v4286 = vmul.f32 %v4247, %v4285
    %v4287 = vadd.f32 %v4221, %v4286
    %v4288 = vmul.f32 %v2293, %v1222
    %v4289 = vmul.f32 %v2414, %v1223
    %v4290 = vmul.f32 %v2534, %v1224
    %v4291 = vmul.f32 %v2654, %v1225
    %v4292 = vmul.f32 %v2774, %v1226
    %v4293 = vmul.f32 %v2894, %v1227
    %v4294 = vmul.f32 %v3014, %v1228
    %v4295 = vmul.f32 %v3134, %v1229
    %v4296 = vsel %vm2190, %v4288, 0.0
    %v4297 = vsel %vm2190, %v4289, 0.0
    %v4298 = vadd.f32 %v4296, %v4297
    %v4299 = vsel %vm2190, %v4290, 0.0
    %v4300 = vadd.f32 %v4298, %v4299
    %v4301 = vsel %vm2190, %v4291, 0.0
    %v4302 = vadd.f32 %v4300, %v4301
    %v4303 = vsel %vm2190, %v4292, 0.0
    %v4304 = vadd.f32 %v4302, %v4303
    %v4305 = vsel %vm2190, %v4293, 0.0
    %v4306 = vadd.f32 %v4304, %v4305
    %v4307 = vsel %vm2190, %v4294, 0.0
    %v4308 = vadd.f32 %v4306, %v4307
    %v4309 = vsel %vm2190, %v4295, 0.0
    %v4310 = vadd.f32 %v4308, %v4309
    %s4311 = scalar_lea.vmem %s2, 136
    %v4312 = vld [vmem:[%s4311] sm:$0xff]
    %v4313 = vsel %vm3150, %v4312, %v4310
    %s4314 = sld [smem:[#allocation8 + $0x880]]
    %v4315 = vstv %s4314
    %v4316 = vmul.f32 %v4313, %v4315
    %v4317 = vadd.f32 %v4251, %v4316
    %s4318 = sld [smem:[#allocation8 + $0x881]]
    %v4319 = vstv %s4318
    %v4320 = vmul.f32 %v4313, %v4319
    %v4321 = vadd.f32 %v4255, %v4320
    %s4322 = sld [smem:[#allocation8 + $0x882]]
    %v4323 = vstv %s4322
    %v4324 = vmul.f32 %v4313, %v4323
    %v4325 = vadd.f32 %v4259, %v4324
    %s4326 = sld [smem:[#allocation8 + $0x883]]
    %v4327 = vstv %s4326
    %v4328 = vmul.f32 %v4313, %v4327
    %v4329 = vadd.f32 %v4263, %v4328
    %s4330 = sld [smem:[#allocation8 + $0x884]]
    %v4331 = vstv %s4330
    %v4332 = vmul.f32 %v4313, %v4331
    %v4333 = vadd.f32 %v4267, %v4332
    %s4334 = sld [smem:[#allocation8 + $0x885]]
    %v4335 = vstv %s4334
    %v4336 = vmul.f32 %v4313, %v4335
    %v4337 = vadd.f32 %v4271, %v4336
    %s4338 = sld [smem:[#allocation8 + $0x886]]
    %v4339 = vstv %s4338
    %v4340 = vmul.f32 %v4313, %v4339
    %v4341 = vadd.f32 %v4275, %v4340
    %s4342 = sld [smem:[#allocation8 + $0x887]]
    %v4343 = vstv %s4342
    %v4344 = vmul.f32 %v4313, %v4343
    %v4345 = vadd.f32 %v4279, %v4344
    %s4346 = sld [smem:[#allocation12 + $0x880]]
    %v4347 = vstv %s4346
    %v4348 = vmul.f32 %v4313, %v4347
    %v4349 = vadd.f32 %v4283, %v4348
    %s4350 = sld [smem:[#allocation12 + $0x881]]
    %v4351 = vstv %s4350
    %v4352 = vmul.f32 %v4313, %v4351
    %v4353 = vadd.f32 %v4287, %v4352
    %v4354 = vmul.f32 %v2293, %v1285
    %v4355 = vmul.f32 %v2414, %v1286
    %v4356 = vmul.f32 %v2534, %v1287
    %v4357 = vmul.f32 %v2654, %v1288
    %v4358 = vmul.f32 %v2774, %v1289
    %v4359 = vmul.f32 %v2894, %v1290
    %v4360 = vmul.f32 %v3014, %v1291
    %v4361 = vmul.f32 %v3134, %v1292
    %v4362 = vsel %vm2190, %v4354, 0.0
    %v4363 = vsel %vm2190, %v4355, 0.0
    %v4364 = vadd.f32 %v4362, %v4363
    %v4365 = vsel %vm2190, %v4356, 0.0
    %v4366 = vadd.f32 %v4364, %v4365
    %v4367 = vsel %vm2190, %v4357, 0.0
    %v4368 = vadd.f32 %v4366, %v4367
    %v4369 = vsel %vm2190, %v4358, 0.0
    %v4370 = vadd.f32 %v4368, %v4369
    %v4371 = vsel %vm2190, %v4359, 0.0
    %v4372 = vadd.f32 %v4370, %v4371
    %v4373 = vsel %vm2190, %v4360, 0.0
    %v4374 = vadd.f32 %v4372, %v4373
    %v4375 = vsel %vm2190, %v4361, 0.0
    %v4376 = vadd.f32 %v4374, %v4375
    %s4377 = scalar_lea.vmem %s2, 144
    %v4378 = vld [vmem:[%s4377] sm:$0xff]
    %v4379 = vsel %vm3150, %v4378, %v4376
    %s4380 = sld [smem:[#allocation8 + $0x900]]
    %v4381 = vstv %s4380
    %v4382 = vmul.f32 %v4379, %v4381
    %v4383 = vadd.f32 %v4317, %v4382
    %s4384 = sld [smem:[#allocation8 + $0x901]]
    %v4385 = vstv %s4384
    %v4386 = vmul.f32 %v4379, %v4385
    %v4387 = vadd.f32 %v4321, %v4386
    %s4388 = sld [smem:[#allocation8 + $0x902]]
    %v4389 = vstv %s4388
    %v4390 = vmul.f32 %v4379, %v4389
    %v4391 = vadd.f32 %v4325, %v4390
    %s4392 = sld [smem:[#allocation8 + $0x903]]
    %v4393 = vstv %s4392
    %v4394 = vmul.f32 %v4379, %v4393
    %v4395 = vadd.f32 %v4329, %v4394
    %s4396 = sld [smem:[#allocation8 + $0x904]]
    %v4397 = vstv %s4396
    %v4398 = vmul.f32 %v4379, %v4397
    %v4399 = vadd.f32 %v4333, %v4398
    %s4400 = sld [smem:[#allocation8 + $0x905]]
    %v4401 = vstv %s4400
    %v4402 = vmul.f32 %v4379, %v4401
    %v4403 = vadd.f32 %v4337, %v4402
    %s4404 = sld [smem:[#allocation8 + $0x906]]
    %v4405 = vstv %s4404
    %v4406 = vmul.f32 %v4379, %v4405
    %v4407 = vadd.f32 %v4341, %v4406
    %s4408 = sld [smem:[#allocation8 + $0x907]]
    %v4409 = vstv %s4408
    %v4410 = vmul.f32 %v4379, %v4409
    %v4411 = vadd.f32 %v4345, %v4410
    %s4412 = sld [smem:[#allocation12 + $0x900]]
    %v4413 = vstv %s4412
    %v4414 = vmul.f32 %v4379, %v4413
    %v4415 = vadd.f32 %v4349, %v4414
    %s4416 = sld [smem:[#allocation12 + $0x901]]
    %v4417 = vstv %s4416
    %v4418 = vmul.f32 %v4379, %v4417
    %v4419 = vadd.f32 %v4353, %v4418
    %v4420 = vmul.f32 %v2293, %v1348
    %v4421 = vmul.f32 %v2414, %v1349
    %v4422 = vmul.f32 %v2534, %v1350
    %v4423 = vmul.f32 %v2654, %v1351
    %v4424 = vmul.f32 %v2774, %v1352
    %v4425 = vmul.f32 %v2894, %v1353
    %v4426 = vmul.f32 %v3014, %v1354
    %v4427 = vmul.f32 %v3134, %v1355
    %v4428 = vsel %vm2190, %v4420, 0.0
    %v4429 = vsel %vm2190, %v4421, 0.0
    %v4430 = vadd.f32 %v4428, %v4429
    %v4431 = vsel %vm2190, %v4422, 0.0
    %v4432 = vadd.f32 %v4430, %v4431
    %v4433 = vsel %vm2190, %v4423, 0.0
    %v4434 = vadd.f32 %v4432, %v4433
    %v4435 = vsel %vm2190, %v4424, 0.0
    %v4436 = vadd.f32 %v4434, %v4435
    %v4437 = vsel %vm2190, %v4425, 0.0
    %v4438 = vadd.f32 %v4436, %v4437
    %v4439 = vsel %vm2190, %v4426, 0.0
    %v4440 = vadd.f32 %v4438, %v4439
    %v4441 = vsel %vm2190, %v4427, 0.0
    %v4442 = vadd.f32 %v4440, %v4441
    %s4443 = scalar_lea.vmem %s2, 152
    %v4444 = vld [vmem:[%s4443] sm:$0xff]
    %v4445 = vsel %vm3150, %v4444, %v4442
    %s4446 = sld [smem:[#allocation8 + $0x980]]
    %v4447 = vstv %s4446
    %v4448 = vmul.f32 %v4445, %v4447
    %v4449 = vadd.f32 %v4383, %v4448
    %s4450 = sld [smem:[#allocation8 + $0x981]]
    %v4451 = vstv %s4450
    %v4452 = vmul.f32 %v4445, %v4451
    %v4453 = vadd.f32 %v4387, %v4452
    %s4454 = sld [smem:[#allocation8 + $0x982]]
    %v4455 = vstv %s4454
    %v4456 = vmul.f32 %v4445, %v4455
    %v4457 = vadd.f32 %v4391, %v4456
    %s4458 = sld [smem:[#allocation8 + $0x983]]
    %v4459 = vstv %s4458
    %v4460 = vmul.f32 %v4445, %v4459
    %v4461 = vadd.f32 %v4395, %v4460
    %s4462 = sld [smem:[#allocation8 + $0x984]]
    %v4463 = vstv %s4462
    %v4464 = vmul.f32 %v4445, %v4463
    %v4465 = vadd.f32 %v4399, %v4464
    %s4466 = sld [smem:[#allocation8 + $0x985]]
    %v4467 = vstv %s4466
    %v4468 = vmul.f32 %v4445, %v4467
    %v4469 = vadd.f32 %v4403, %v4468
    %s4470 = sld [smem:[#allocation8 + $0x986]]
    %v4471 = vstv %s4470
    %v4472 = vmul.f32 %v4445, %v4471
    %v4473 = vadd.f32 %v4407, %v4472
    %s4474 = sld [smem:[#allocation8 + $0x987]]
    %v4475 = vstv %s4474
    %v4476 = vmul.f32 %v4445, %v4475
    %v4477 = vadd.f32 %v4411, %v4476
    %s4478 = sld [smem:[#allocation12 + $0x980]]
    %v4479 = vstv %s4478
    %v4480 = vmul.f32 %v4445, %v4479
    %v4481 = vadd.f32 %v4415, %v4480
    %s4482 = sld [smem:[#allocation12 + $0x981]]
    %v4483 = vstv %s4482
    %v4484 = vmul.f32 %v4445, %v4483
    %v4485 = vadd.f32 %v4419, %v4484
    %v4486 = vmul.f32 %v2293, %v1411
    %v4487 = vmul.f32 %v2414, %v1412
    %v4488 = vmul.f32 %v2534, %v1413
    %v4489 = vmul.f32 %v2654, %v1414
    %v4490 = vmul.f32 %v2774, %v1415
    %v4491 = vmul.f32 %v2894, %v1416
    %v4492 = vmul.f32 %v3014, %v1417
    %v4493 = vmul.f32 %v3134, %v1418
    %v4494 = vsel %vm2190, %v4486, 0.0
    %v4495 = vsel %vm2190, %v4487, 0.0
    %v4496 = vadd.f32 %v4494, %v4495
    %v4497 = vsel %vm2190, %v4488, 0.0
    %v4498 = vadd.f32 %v4496, %v4497
    %v4499 = vsel %vm2190, %v4489, 0.0
    %v4500 = vadd.f32 %v4498, %v4499
    %v4501 = vsel %vm2190, %v4490, 0.0
    %v4502 = vadd.f32 %v4500, %v4501
    %v4503 = vsel %vm2190, %v4491, 0.0
    %v4504 = vadd.f32 %v4502, %v4503
    %v4505 = vsel %vm2190, %v4492, 0.0
    %v4506 = vadd.f32 %v4504, %v4505
    %v4507 = vsel %vm2190, %v4493, 0.0
    %v4508 = vadd.f32 %v4506, %v4507
    %s4509 = scalar_lea.vmem %s2, 160
    %v4510 = vld [vmem:[%s4509] sm:$0xff]
    %v4511 = vsel %vm3150, %v4510, %v4508
    %s4512 = sld [smem:[#allocation8 + $0xa00]]
    %v4513 = vstv %s4512
    %v4514 = vmul.f32 %v4511, %v4513
    %v4515 = vadd.f32 %v4449, %v4514
    %s4516 = sld [smem:[#allocation8 + $0xa01]]
    %v4517 = vstv %s4516
    %v4518 = vmul.f32 %v4511, %v4517
    %v4519 = vadd.f32 %v4453, %v4518
    %s4520 = sld [smem:[#allocation8 + $0xa02]]
    %v4521 = vstv %s4520
    %v4522 = vmul.f32 %v4511, %v4521
    %v4523 = vadd.f32 %v4457, %v4522
    %s4524 = sld [smem:[#allocation8 + $0xa03]]
    %v4525 = vstv %s4524
    %v4526 = vmul.f32 %v4511, %v4525
    %v4527 = vadd.f32 %v4461, %v4526
    %s4528 = sld [smem:[#allocation8 + $0xa04]]
    %v4529 = vstv %s4528
    %v4530 = vmul.f32 %v4511, %v4529
    %v4531 = vadd.f32 %v4465, %v4530
    %s4532 = sld [smem:[#allocation8 + $0xa05]]
    %v4533 = vstv %s4532
    %v4534 = vmul.f32 %v4511, %v4533
    %v4535 = vadd.f32 %v4469, %v4534
    %s4536 = sld [smem:[#allocation8 + $0xa06]]
    %v4537 = vstv %s4536
    %v4538 = vmul.f32 %v4511, %v4537
    %v4539 = vadd.f32 %v4473, %v4538
    %s4540 = sld [smem:[#allocation8 + $0xa07]]
    %v4541 = vstv %s4540
    %v4542 = vmul.f32 %v4511, %v4541
    %v4543 = vadd.f32 %v4477, %v4542
    %s4544 = sld [smem:[#allocation12 + $0xa00]]
    %v4545 = vstv %s4544
    %v4546 = vmul.f32 %v4511, %v4545
    %v4547 = vadd.f32 %v4481, %v4546
    %s4548 = sld [smem:[#allocation12 + $0xa01]]
    %v4549 = vstv %s4548
    %v4550 = vmul.f32 %v4511, %v4549
    %v4551 = vadd.f32 %v4485, %v4550
    %v4552 = vmul.f32 %v2293, %v1474
    %v4553 = vmul.f32 %v2414, %v1475
    %v4554 = vmul.f32 %v2534, %v1476
    %v4555 = vmul.f32 %v2654, %v1477
    %v4556 = vmul.f32 %v2774, %v1478
    %v4557 = vmul.f32 %v2894, %v1479
    %v4558 = vmul.f32 %v3014, %v1480
    %v4559 = vmul.f32 %v3134, %v1481
    %v4560 = vsel %vm2190, %v4552, 0.0
    %v4561 = vsel %vm2190, %v4553, 0.0
    %v4562 = vadd.f32 %v4560, %v4561
    %v4563 = vsel %vm2190, %v4554, 0.0
    %v4564 = vadd.f32 %v4562, %v4563
    %v4565 = vsel %vm2190, %v4555, 0.0
    %v4566 = vadd.f32 %v4564, %v4565
    %v4567 = vsel %vm2190, %v4556, 0.0
    %v4568 = vadd.f32 %v4566, %v4567
    %v4569 = vsel %vm2190, %v4557, 0.0
    %v4570 = vadd.f32 %v4568, %v4569
    %v4571 = vsel %vm2190, %v4558, 0.0
    %v4572 = vadd.f32 %v4570, %v4571
    %v4573 = vsel %vm2190, %v4559, 0.0
    %v4574 = vadd.f32 %v4572, %v4573
    %s4575 = scalar_lea.vmem %s2, 168
    %v4576 = vld [vmem:[%s4575] sm:$0xff]
    %v4577 = vsel %vm3150, %v4576, %v4574
    %s4578 = sld [smem:[#allocation8 + $0xa80]]
    %v4579 = vstv %s4578
    %v4580 = vmul.f32 %v4577, %v4579
    %v4581 = vadd.f32 %v4515, %v4580
    %s4582 = sld [smem:[#allocation8 + $0xa81]]
    %v4583 = vstv %s4582
    %v4584 = vmul.f32 %v4577, %v4583
    %v4585 = vadd.f32 %v4519, %v4584
    %s4586 = sld [smem:[#allocation8 + $0xa82]]
    %v4587 = vstv %s4586
    %v4588 = vmul.f32 %v4577, %v4587
    %v4589 = vadd.f32 %v4523, %v4588
    %s4590 = sld [smem:[#allocation8 + $0xa83]]
    %v4591 = vstv %s4590
    %v4592 = vmul.f32 %v4577, %v4591
    %v4593 = vadd.f32 %v4527, %v4592
    %s4594 = sld [smem:[#allocation8 + $0xa84]]
    %v4595 = vstv %s4594
    %v4596 = vmul.f32 %v4577, %v4595
    %v4597 = vadd.f32 %v4531, %v4596
    %s4598 = sld [smem:[#allocation8 + $0xa85]]
    %v4599 = vstv %s4598
    %v4600 = vmul.f32 %v4577, %v4599
    %v4601 = vadd.f32 %v4535, %v4600
    %s4602 = sld [smem:[#allocation8 + $0xa86]]
    %v4603 = vstv %s4602
    %v4604 = vmul.f32 %v4577, %v4603
    %v4605 = vadd.f32 %v4539, %v4604
    %s4606 = sld [smem:[#allocation8 + $0xa87]]
    %v4607 = vstv %s4606
    %v4608 = vmul.f32 %v4577, %v4607
    %v4609 = vadd.f32 %v4543, %v4608
    %s4610 = sld [smem:[#allocation12 + $0xa80]]
    %v4611 = vstv %s4610
    %v4612 = vmul.f32 %v4577, %v4611
    %v4613 = vadd.f32 %v4547, %v4612
    %s4614 = sld [smem:[#allocation12 + $0xa81]]
    %v4615 = vstv %s4614
    %v4616 = vmul.f32 %v4577, %v4615
    %v4617 = vadd.f32 %v4551, %v4616
    %v4618 = vmul.f32 %v2293, %v1537
    %v4619 = vmul.f32 %v2414, %v1538
    %v4620 = vmul.f32 %v2534, %v1539
    %v4621 = vmul.f32 %v2654, %v1540
    %v4622 = vmul.f32 %v2774, %v1541
    %v4623 = vmul.f32 %v2894, %v1542
    %v4624 = vmul.f32 %v3014, %v1543
    %v4625 = vmul.f32 %v3134, %v1544
    %v4626 = vsel %vm2190, %v4618, 0.0
    %v4627 = vsel %vm2190, %v4619, 0.0
    %v4628 = vadd.f32 %v4626, %v4627
    %v4629 = vsel %vm2190, %v4620, 0.0
    %v4630 = vadd.f32 %v4628, %v4629
    %v4631 = vsel %vm2190, %v4621, 0.0
    %v4632 = vadd.f32 %v4630, %v4631
    %v4633 = vsel %vm2190, %v4622, 0.0
    %v4634 = vadd.f32 %v4632, %v4633
    %v4635 = vsel %vm2190, %v4623, 0.0
    %v4636 = vadd.f32 %v4634, %v4635
    %v4637 = vsel %vm2190, %v4624, 0.0
    %v4638 = vadd.f32 %v4636, %v4637
    %v4639 = vsel %vm2190, %v4625, 0.0
    %v4640 = vadd.f32 %v4638, %v4639
    %s4641 = scalar_lea.vmem %s2, 176
    %v4642 = vld [vmem:[%s4641] sm:$0xff]
    %v4643 = vsel %vm3150, %v4642, %v4640
    %s4644 = sld [smem:[#allocation8 + $0xb00]]
    %v4645 = vstv %s4644
    %v4646 = vmul.f32 %v4643, %v4645
    %v4647 = vadd.f32 %v4581, %v4646
    %s4648 = sld [smem:[#allocation8 + $0xb01]]
    %v4649 = vstv %s4648
    %v4650 = vmul.f32 %v4643, %v4649
    %v4651 = vadd.f32 %v4585, %v4650
    %s4652 = sld [smem:[#allocation8 + $0xb02]]
    %v4653 = vstv %s4652
    %v4654 = vmul.f32 %v4643, %v4653
    %v4655 = vadd.f32 %v4589, %v4654
    %s4656 = sld [smem:[#allocation8 + $0xb03]]
    %v4657 = vstv %s4656
    %v4658 = vmul.f32 %v4643, %v4657
    %v4659 = vadd.f32 %v4593, %v4658
    %s4660 = sld [smem:[#allocation8 + $0xb04]]
    %v4661 = vstv %s4660
    %v4662 = vmul.f32 %v4643, %v4661
    %v4663 = vadd.f32 %v4597, %v4662
    %s4664 = sld [smem:[#allocation8 + $0xb05]]
    %v4665 = vstv %s4664
    %v4666 = vmul.f32 %v4643, %v4665
    %v4667 = vadd.f32 %v4601, %v4666
    %s4668 = sld [smem:[#allocation8 + $0xb06]]
    %v4669 = vstv %s4668
    %v4670 = vmul.f32 %v4643, %v4669
    %v4671 = vadd.f32 %v4605, %v4670
    %s4672 = sld [smem:[#allocation8 + $0xb07]]
    %v4673 = vstv %s4672
    %v4674 = vmul.f32 %v4643, %v4673
    %v4675 = vadd.f32 %v4609, %v4674
    %s4676 = sld [smem:[#allocation12 + $0xb00]]
    %v4677 = vstv %s4676
    %v4678 = vmul.f32 %v4643, %v4677
    %v4679 = vadd.f32 %v4613, %v4678
    %s4680 = sld [smem:[#allocation12 + $0xb01]]
    %v4681 = vstv %s4680
    %v4682 = vmul.f32 %v4643, %v4681
    %v4683 = vadd.f32 %v4617, %v4682
    %v4684 = vmul.f32 %v2293, %v1600
    %v4685 = vmul.f32 %v2414, %v1601
    %v4686 = vmul.f32 %v2534, %v1602
    %v4687 = vmul.f32 %v2654, %v1603
    %v4688 = vmul.f32 %v2774, %v1604
    %v4689 = vmul.f32 %v2894, %v1605
    %v4690 = vmul.f32 %v3014, %v1606
    %v4691 = vmul.f32 %v3134, %v1607
    %v4692 = vsel %vm2190, %v4684, 0.0
    %v4693 = vsel %vm2190, %v4685, 0.0
    %v4694 = vadd.f32 %v4692, %v4693
    %v4695 = vsel %vm2190, %v4686, 0.0
    %v4696 = vadd.f32 %v4694, %v4695
    %v4697 = vsel %vm2190, %v4687, 0.0
    %v4698 = vadd.f32 %v4696, %v4697
    %v4699 = vsel %vm2190, %v4688, 0.0
    %v4700 = vadd.f32 %v4698, %v4699
    %v4701 = vsel %vm2190, %v4689, 0.0
    %v4702 = vadd.f32 %v4700, %v4701
    %v4703 = vsel %vm2190, %v4690, 0.0
    %v4704 = vadd.f32 %v4702, %v4703
    %v4705 = vsel %vm2190, %v4691, 0.0
    %v4706 = vadd.f32 %v4704, %v4705
    %s4707 = scalar_lea.vmem %s2, 184
    %v4708 = vld [vmem:[%s4707] sm:$0xff]
    %v4709 = vsel %vm3150, %v4708, %v4706
    %s4710 = sld [smem:[#allocation8 + $0xb80]]
    %v4711 = vstv %s4710
    %v4712 = vmul.f32 %v4709, %v4711
    %v4713 = vadd.f32 %v4647, %v4712
    %s4714 = sld [smem:[#allocation8 + $0xb81]]
    %v4715 = vstv %s4714
    %v4716 = vmul.f32 %v4709, %v4715
    %v4717 = vadd.f32 %v4651, %v4716
    %s4718 = sld [smem:[#allocation8 + $0xb82]]
    %v4719 = vstv %s4718
    %v4720 = vmul.f32 %v4709, %v4719
    %v4721 = vadd.f32 %v4655, %v4720
    %s4722 = sld [smem:[#allocation8 + $0xb83]]
    %v4723 = vstv %s4722
    %v4724 = vmul.f32 %v4709, %v4723
    %v4725 = vadd.f32 %v4659, %v4724
    %s4726 = sld [smem:[#allocation8 + $0xb84]]
    %v4727 = vstv %s4726
    %v4728 = vmul.f32 %v4709, %v4727
    %v4729 = vadd.f32 %v4663, %v4728
    %s4730 = sld [smem:[#allocation8 + $0xb85]]
    %v4731 = vstv %s4730
    %v4732 = vmul.f32 %v4709, %v4731
    %v4733 = vadd.f32 %v4667, %v4732
    %s4734 = sld [smem:[#allocation8 + $0xb86]]
    %v4735 = vstv %s4734
    %v4736 = vmul.f32 %v4709, %v4735
    %v4737 = vadd.f32 %v4671, %v4736
    %s4738 = sld [smem:[#allocation8 + $0xb87]]
    %v4739 = vstv %s4738
    %v4740 = vmul.f32 %v4709, %v4739
    %v4741 = vadd.f32 %v4675, %v4740
    %s4742 = sld [smem:[#allocation12 + $0xb80]]
    %v4743 = vstv %s4742
    %v4744 = vmul.f32 %v4709, %v4743
    %v4745 = vadd.f32 %v4679, %v4744
    %s4746 = sld [smem:[#allocation12 + $0xb81]]
    %v4747 = vstv %s4746
    %v4748 = vmul.f32 %v4709, %v4747
    %v4749 = vadd.f32 %v4683, %v4748
    %v4750 = vmul.f32 %v2293, %v1663
    %v4751 = vmul.f32 %v2414, %v1664
    %v4752 = vmul.f32 %v2534, %v1665
    %v4753 = vmul.f32 %v2654, %v1666
    %v4754 = vmul.f32 %v2774, %v1667
    %v4755 = vmul.f32 %v2894, %v1668
    %v4756 = vmul.f32 %v3014, %v1669
    %v4757 = vmul.f32 %v3134, %v1670
    %v4758 = vsel %vm2190, %v4750, 0.0
    %v4759 = vsel %vm2190, %v4751, 0.0
    %v4760 = vadd.f32 %v4758, %v4759
    %v4761 = vsel %vm2190, %v4752, 0.0
    %v4762 = vadd.f32 %v4760, %v4761
    %v4763 = vsel %vm2190, %v4753, 0.0
    %v4764 = vadd.f32 %v4762, %v4763
    %v4765 = vsel %vm2190, %v4754, 0.0
    %v4766 = vadd.f32 %v4764, %v4765
    %v4767 = vsel %vm2190, %v4755, 0.0
    %v4768 = vadd.f32 %v4766, %v4767
    %v4769 = vsel %vm2190, %v4756, 0.0
    %v4770 = vadd.f32 %v4768, %v4769
    %v4771 = vsel %vm2190, %v4757, 0.0
    %v4772 = vadd.f32 %v4770, %v4771
    %s4773 = scalar_lea.vmem %s2, 192
    %v4774 = vld [vmem:[%s4773] sm:$0xff]
    %v4775 = vsel %vm3150, %v4774, %v4772
    %s4776 = sld [smem:[#allocation8 + $0xc00]]
    %v4777 = vstv %s4776
    %v4778 = vmul.f32 %v4775, %v4777
    %v4779 = vadd.f32 %v4713, %v4778
    %s4780 = sld [smem:[#allocation8 + $0xc01]]
    %v4781 = vstv %s4780
    %v4782 = vmul.f32 %v4775, %v4781
    %v4783 = vadd.f32 %v4717, %v4782
    %s4784 = sld [smem:[#allocation8 + $0xc02]]
    %v4785 = vstv %s4784
    %v4786 = vmul.f32 %v4775, %v4785
    %v4787 = vadd.f32 %v4721, %v4786
    %s4788 = sld [smem:[#allocation8 + $0xc03]]
    %v4789 = vstv %s4788
    %v4790 = vmul.f32 %v4775, %v4789
    %v4791 = vadd.f32 %v4725, %v4790
    %s4792 = sld [smem:[#allocation8 + $0xc04]]
    %v4793 = vstv %s4792
    %v4794 = vmul.f32 %v4775, %v4793
    %v4795 = vadd.f32 %v4729, %v4794
    %s4796 = sld [smem:[#allocation8 + $0xc05]]
    %v4797 = vstv %s4796
    %v4798 = vmul.f32 %v4775, %v4797
    %v4799 = vadd.f32 %v4733, %v4798
    %s4800 = sld [smem:[#allocation8 + $0xc06]]
    %v4801 = vstv %s4800
    %v4802 = vmul.f32 %v4775, %v4801
    %v4803 = vadd.f32 %v4737, %v4802
    %s4804 = sld [smem:[#allocation8 + $0xc07]]
    %v4805 = vstv %s4804
    %v4806 = vmul.f32 %v4775, %v4805
    %v4807 = vadd.f32 %v4741, %v4806
    %s4808 = sld [smem:[#allocation12 + $0xc00]]
    %v4809 = vstv %s4808
    %v4810 = vmul.f32 %v4775, %v4809
    %v4811 = vadd.f32 %v4745, %v4810
    %s4812 = sld [smem:[#allocation12 + $0xc01]]
    %v4813 = vstv %s4812
    %v4814 = vmul.f32 %v4775, %v4813
    %v4815 = vadd.f32 %v4749, %v4814
    %v4816 = vmul.f32 %v2293, %v1726
    %v4817 = vmul.f32 %v2414, %v1727
    %v4818 = vmul.f32 %v2534, %v1728
    %v4819 = vmul.f32 %v2654, %v1729
    %v4820 = vmul.f32 %v2774, %v1730
    %v4821 = vmul.f32 %v2894, %v1731
    %v4822 = vmul.f32 %v3014, %v1732
    %v4823 = vmul.f32 %v3134, %v1733
    %v4824 = vsel %vm2190, %v4816, 0.0
    %v4825 = vsel %vm2190, %v4817, 0.0
    %v4826 = vadd.f32 %v4824, %v4825
    %v4827 = vsel %vm2190, %v4818, 0.0
    %v4828 = vadd.f32 %v4826, %v4827
    %v4829 = vsel %vm2190, %v4819, 0.0
    %v4830 = vadd.f32 %v4828, %v4829
    %v4831 = vsel %vm2190, %v4820, 0.0
    %v4832 = vadd.f32 %v4830, %v4831
    %v4833 = vsel %vm2190, %v4821, 0.0
    %v4834 = vadd.f32 %v4832, %v4833
    %v4835 = vsel %vm2190, %v4822, 0.0
    %v4836 = vadd.f32 %v4834, %v4835
    %v4837 = vsel %vm2190, %v4823, 0.0
    %v4838 = vadd.f32 %v4836, %v4837
    %s4839 = scalar_lea.vmem %s2, 200
    %v4840 = vld [vmem:[%s4839] sm:$0xff]
    %v4841 = vsel %vm3150, %v4840, %v4838
    %s4842 = sld [smem:[#allocation8 + $0xc80]]
    %v4843 = vstv %s4842
    %v4844 = vmul.f32 %v4841, %v4843
    %v4845 = vadd.f32 %v4779, %v4844
    %s4846 = sld [smem:[#allocation8 + $0xc81]]
    %v4847 = vstv %s4846
    %v4848 = vmul.f32 %v4841, %v4847
    %v4849 = vadd.f32 %v4783, %v4848
    %s4850 = sld [smem:[#allocation8 + $0xc82]]
    %v4851 = vstv %s4850
    %v4852 = vmul.f32 %v4841, %v4851
    %v4853 = vadd.f32 %v4787, %v4852
    %s4854 = sld [smem:[#allocation8 + $0xc83]]
    %v4855 = vstv %s4854
    %v4856 = vmul.f32 %v4841, %v4855
    %v4857 = vadd.f32 %v4791, %v4856
    %s4858 = sld [smem:[#allocation8 + $0xc84]]
    %v4859 = vstv %s4858
    %v4860 = vmul.f32 %v4841, %v4859
    %v4861 = vadd.f32 %v4795, %v4860
    %s4862 = sld [smem:[#allocation8 + $0xc85]]
    %v4863 = vstv %s4862
    %v4864 = vmul.f32 %v4841, %v4863
    %v4865 = vadd.f32 %v4799, %v4864
    %s4866 = sld [smem:[#allocation8 + $0xc86]]
    %v4867 = vstv %s4866
    %v4868 = vmul.f32 %v4841, %v4867
    %v4869 = vadd.f32 %v4803, %v4868
    %s4870 = sld [smem:[#allocation8 + $0xc87]]
    %v4871 = vstv %s4870
    %v4872 = vmul.f32 %v4841, %v4871
    %v4873 = vadd.f32 %v4807, %v4872
    %s4874 = sld [smem:[#allocation12 + $0xc80]]
    %v4875 = vstv %s4874
    %v4876 = vmul.f32 %v4841, %v4875
    %v4877 = vadd.f32 %v4811, %v4876
    %s4878 = sld [smem:[#allocation12 + $0xc81]]
    %v4879 = vstv %s4878
    %v4880 = vmul.f32 %v4841, %v4879
    %v4881 = vadd.f32 %v4815, %v4880
    %v4882 = vmul.f32 %v2293, %v1789
    %v4883 = vmul.f32 %v2414, %v1790
    %v4884 = vmul.f32 %v2534, %v1791
    %v4885 = vmul.f32 %v2654, %v1792
    %v4886 = vmul.f32 %v2774, %v1793
    %v4887 = vmul.f32 %v2894, %v1794
    %v4888 = vmul.f32 %v3014, %v1795
    %v4889 = vmul.f32 %v3134, %v1796
    %v4890 = vsel %vm2190, %v4882, 0.0
    %v4891 = vsel %vm2190, %v4883, 0.0
    %v4892 = vadd.f32 %v4890, %v4891
    %v4893 = vsel %vm2190, %v4884, 0.0
    %v4894 = vadd.f32 %v4892, %v4893
    %v4895 = vsel %vm2190, %v4885, 0.0
    %v4896 = vadd.f32 %v4894, %v4895
    %v4897 = vsel %vm2190, %v4886, 0.0
    %v4898 = vadd.f32 %v4896, %v4897
    %v4899 = vsel %vm2190, %v4887, 0.0
    %v4900 = vadd.f32 %v4898, %v4899
    %v4901 = vsel %vm2190, %v4888, 0.0
    %v4902 = vadd.f32 %v4900, %v4901
    %v4903 = vsel %vm2190, %v4889, 0.0
    %v4904 = vadd.f32 %v4902, %v4903
    %s4905 = scalar_lea.vmem %s2, 208
    %v4906 = vld [vmem:[%s4905] sm:$0xff]
    %v4907 = vsel %vm3150, %v4906, %v4904
    %s4908 = sld [smem:[#allocation8 + $0xd00]]
    %v4909 = vstv %s4908
    %v4910 = vmul.f32 %v4907, %v4909
    %v4911 = vadd.f32 %v4845, %v4910
    %s4912 = sld [smem:[#allocation8 + $0xd01]]
    %v4913 = vstv %s4912
    %v4914 = vmul.f32 %v4907, %v4913
    %v4915 = vadd.f32 %v4849, %v4914
    %s4916 = sld [smem:[#allocation8 + $0xd02]]
    %v4917 = vstv %s4916
    %v4918 = vmul.f32 %v4907, %v4917
    %v4919 = vadd.f32 %v4853, %v4918
    %s4920 = sld [smem:[#allocation8 + $0xd03]]
    %v4921 = vstv %s4920
    %v4922 = vmul.f32 %v4907, %v4921
    %v4923 = vadd.f32 %v4857, %v4922
    %s4924 = sld [smem:[#allocation8 + $0xd04]]
    %v4925 = vstv %s4924
    %v4926 = vmul.f32 %v4907, %v4925
    %v4927 = vadd.f32 %v4861, %v4926
    %s4928 = sld [smem:[#allocation8 + $0xd05]]
    %v4929 = vstv %s4928
    %v4930 = vmul.f32 %v4907, %v4929
    %v4931 = vadd.f32 %v4865, %v4930
    %s4932 = sld [smem:[#allocation8 + $0xd06]]
    %v4933 = vstv %s4932
    %v4934 = vmul.f32 %v4907, %v4933
    %v4935 = vadd.f32 %v4869, %v4934
    %s4936 = sld [smem:[#allocation8 + $0xd07]]
    %v4937 = vstv %s4936
    %v4938 = vmul.f32 %v4907, %v4937
    %v4939 = vadd.f32 %v4873, %v4938
    %s4940 = sld [smem:[#allocation12 + $0xd00]]
    %v4941 = vstv %s4940
    %v4942 = vmul.f32 %v4907, %v4941
    %v4943 = vadd.f32 %v4877, %v4942
    %s4944 = sld [smem:[#allocation12 + $0xd01]]
    %v4945 = vstv %s4944
    %v4946 = vmul.f32 %v4907, %v4945
    %v4947 = vadd.f32 %v4881, %v4946
    %v4948 = vmul.f32 %v2293, %v1852
    %v4949 = vmul.f32 %v2414, %v1853
    %v4950 = vmul.f32 %v2534, %v1854
    %v4951 = vmul.f32 %v2654, %v1855
    %v4952 = vmul.f32 %v2774, %v1856
    %v4953 = vmul.f32 %v2894, %v1857
    %v4954 = vmul.f32 %v3014, %v1858
    %v4955 = vmul.f32 %v3134, %v1859
    %v4956 = vsel %vm2190, %v4948, 0.0
    %v4957 = vsel %vm2190, %v4949, 0.0
    %v4958 = vadd.f32 %v4956, %v4957
    %v4959 = vsel %vm2190, %v4950, 0.0
    %v4960 = vadd.f32 %v4958, %v4959
    %v4961 = vsel %vm2190, %v4951, 0.0
    %v4962 = vadd.f32 %v4960, %v4961
    %v4963 = vsel %vm2190, %v4952, 0.0
    %v4964 = vadd.f32 %v4962, %v4963
    %v4965 = vsel %vm2190, %v4953, 0.0
    %v4966 = vadd.f32 %v4964, %v4965
    %v4967 = vsel %vm2190, %v4954, 0.0
    %v4968 = vadd.f32 %v4966, %v4967
    %v4969 = vsel %vm2190, %v4955, 0.0
    %v4970 = vadd.f32 %v4968, %v4969
    %s4971 = scalar_lea.vmem %s2, 216
    %v4972 = vld [vmem:[%s4971] sm:$0xff]
    %v4973 = vsel %vm3150, %v4972, %v4970
    %s4974 = sld [smem:[#allocation8 + $0xd80]]
    %v4975 = vstv %s4974
    %v4976 = vmul.f32 %v4973, %v4975
    %v4977 = vadd.f32 %v4911, %v4976
    %s4978 = sld [smem:[#allocation8 + $0xd81]]
    %v4979 = vstv %s4978
    %v4980 = vmul.f32 %v4973, %v4979
    %v4981 = vadd.f32 %v4915, %v4980
    %s4982 = sld [smem:[#allocation8 + $0xd82]]
    %v4983 = vstv %s4982
    %v4984 = vmul.f32 %v4973, %v4983
    %v4985 = vadd.f32 %v4919, %v4984
    %s4986 = sld [smem:[#allocation8 + $0xd83]]
    %v4987 = vstv %s4986
    %v4988 = vmul.f32 %v4973, %v4987
    %v4989 = vadd.f32 %v4923, %v4988
    %s4990 = sld [smem:[#allocation8 + $0xd84]]
    %v4991 = vstv %s4990
    %v4992 = vmul.f32 %v4973, %v4991
    %v4993 = vadd.f32 %v4927, %v4992
    %s4994 = sld [smem:[#allocation8 + $0xd85]]
    %v4995 = vstv %s4994
    %v4996 = vmul.f32 %v4973, %v4995
    %v4997 = vadd.f32 %v4931, %v4996
    %s4998 = sld [smem:[#allocation8 + $0xd86]]
    %v4999 = vstv %s4998
    %v5000 = vmul.f32 %v4973, %v4999
    %v5001 = vadd.f32 %v4935, %v5000
    %s5002 = sld [smem:[#allocation8 + $0xd87]]
    %v5003 = vstv %s5002
    %v5004 = vmul.f32 %v4973, %v5003
    %v5005 = vadd.f32 %v4939, %v5004
    %s5006 = sld [smem:[#allocation12 + $0xd80]]
    %v5007 = vstv %s5006
    %v5008 = vmul.f32 %v4973, %v5007
    %v5009 = vadd.f32 %v4943, %v5008
    %s5010 = sld [smem:[#allocation12 + $0xd81]]
    %v5011 = vstv %s5010
    %v5012 = vmul.f32 %v4973, %v5011
    %v5013 = vadd.f32 %v4947, %v5012
    %v5014 = vmul.f32 %v2293, %v1915
    %v5015 = vmul.f32 %v2414, %v1916
    %v5016 = vmul.f32 %v2534, %v1917
    %v5017 = vmul.f32 %v2654, %v1918
    %v5018 = vmul.f32 %v2774, %v1919
    %v5019 = vmul.f32 %v2894, %v1920
    %v5020 = vmul.f32 %v3014, %v1921
    %v5021 = vmul.f32 %v3134, %v1922
    %v5022 = vsel %vm2190, %v5014, 0.0
    %v5023 = vsel %vm2190, %v5015, 0.0
    %v5024 = vadd.f32 %v5022, %v5023
    %v5025 = vsel %vm2190, %v5016, 0.0
    %v5026 = vadd.f32 %v5024, %v5025
    %v5027 = vsel %vm2190, %v5017, 0.0
    %v5028 = vadd.f32 %v5026, %v5027
    %v5029 = vsel %vm2190, %v5018, 0.0
    %v5030 = vadd.f32 %v5028, %v5029
    %v5031 = vsel %vm2190, %v5019, 0.0
    %v5032 = vadd.f32 %v5030, %v5031
    %v5033 = vsel %vm2190, %v5020, 0.0
    %v5034 = vadd.f32 %v5032, %v5033
    %v5035 = vsel %vm2190, %v5021, 0.0
    %v5036 = vadd.f32 %v5034, %v5035
    %s5037 = scalar_lea.vmem %s2, 224
    %v5038 = vld [vmem:[%s5037] sm:$0xff]
    %v5039 = vsel %vm3150, %v5038, %v5036
    %s5040 = sld [smem:[#allocation8 + $0xe00]]
    %v5041 = vstv %s5040
    %v5042 = vmul.f32 %v5039, %v5041
    %v5043 = vadd.f32 %v4977, %v5042
    %s5044 = sld [smem:[#allocation8 + $0xe01]]
    %v5045 = vstv %s5044
    %v5046 = vmul.f32 %v5039, %v5045
    %v5047 = vadd.f32 %v4981, %v5046
    %s5048 = sld [smem:[#allocation8 + $0xe02]]
    %v5049 = vstv %s5048
    %v5050 = vmul.f32 %v5039, %v5049
    %v5051 = vadd.f32 %v4985, %v5050
    %s5052 = sld [smem:[#allocation8 + $0xe03]]
    %v5053 = vstv %s5052
    %v5054 = vmul.f32 %v5039, %v5053
    %v5055 = vadd.f32 %v4989, %v5054
    %s5056 = sld [smem:[#allocation8 + $0xe04]]
    %v5057 = vstv %s5056
    %v5058 = vmul.f32 %v5039, %v5057
    %v5059 = vadd.f32 %v4993, %v5058
    %s5060 = sld [smem:[#allocation8 + $0xe05]]
    %v5061 = vstv %s5060
    %v5062 = vmul.f32 %v5039, %v5061
    %v5063 = vadd.f32 %v4997, %v5062
    %s5064 = sld [smem:[#allocation8 + $0xe06]]
    %v5065 = vstv %s5064
    %v5066 = vmul.f32 %v5039, %v5065
    %v5067 = vadd.f32 %v5001, %v5066
    %s5068 = sld [smem:[#allocation8 + $0xe07]]
    %v5069 = vstv %s5068
    %v5070 = vmul.f32 %v5039, %v5069
    %v5071 = vadd.f32 %v5005, %v5070
    %s5072 = sld [smem:[#allocation12 + $0xe00]]
    %v5073 = vstv %s5072
    %v5074 = vmul.f32 %v5039, %v5073
    %v5075 = vadd.f32 %v5009, %v5074
    %s5076 = sld [smem:[#allocation12 + $0xe01]]
    %v5077 = vstv %s5076
    %v5078 = vmul.f32 %v5039, %v5077
    %v5079 = vadd.f32 %v5013, %v5078
    %v5080 = vmul.f32 %v2293, %v1978
    %v5081 = vmul.f32 %v2414, %v1979
    %v5082 = vmul.f32 %v2534, %v1980
    %v5083 = vmul.f32 %v2654, %v1981
    %v5084 = vmul.f32 %v2774, %v1982
    %v5085 = vmul.f32 %v2894, %v1983
    %v5086 = vmul.f32 %v3014, %v1984
    %v5087 = vmul.f32 %v3134, %v1985
    %v5088 = vsel %vm2190, %v5080, 0.0
    %v5089 = vsel %vm2190, %v5081, 0.0
    %v5090 = vadd.f32 %v5088, %v5089
    %v5091 = vsel %vm2190, %v5082, 0.0
    %v5092 = vadd.f32 %v5090, %v5091
    %v5093 = vsel %vm2190, %v5083, 0.0
    %v5094 = vadd.f32 %v5092, %v5093
    %v5095 = vsel %vm2190, %v5084, 0.0
    %v5096 = vadd.f32 %v5094, %v5095
    %v5097 = vsel %vm2190, %v5085, 0.0
    %v5098 = vadd.f32 %v5096, %v5097
    %v5099 = vsel %vm2190, %v5086, 0.0
    %v5100 = vadd.f32 %v5098, %v5099
    %v5101 = vsel %vm2190, %v5087, 0.0
    %v5102 = vadd.f32 %v5100, %v5101
    %s5103 = scalar_lea.vmem %s2, 232
    %v5104 = vld [vmem:[%s5103] sm:$0xff]
    %v5105 = vsel %vm3150, %v5104, %v5102
    %s5106 = sld [smem:[#allocation8 + $0xe80]]
    %v5107 = vstv %s5106
    %v5108 = vmul.f32 %v5105, %v5107
    %v5109 = vadd.f32 %v5043, %v5108
    %s5110 = sld [smem:[#allocation8 + $0xe81]]
    %v5111 = vstv %s5110
    %v5112 = vmul.f32 %v5105, %v5111
    %v5113 = vadd.f32 %v5047, %v5112
    %s5114 = sld [smem:[#allocation8 + $0xe82]]
    %v5115 = vstv %s5114
    %v5116 = vmul.f32 %v5105, %v5115
    %v5117 = vadd.f32 %v5051, %v5116
    %s5118 = sld [smem:[#allocation8 + $0xe83]]
    %v5119 = vstv %s5118
    %v5120 = vmul.f32 %v5105, %v5119
    %v5121 = vadd.f32 %v5055, %v5120
    %s5122 = sld [smem:[#allocation8 + $0xe84]]
    %v5123 = vstv %s5122
    %v5124 = vmul.f32 %v5105, %v5123
    %v5125 = vadd.f32 %v5059, %v5124
    %s5126 = sld [smem:[#allocation8 + $0xe85]]
    %v5127 = vstv %s5126
    %v5128 = vmul.f32 %v5105, %v5127
    %v5129 = vadd.f32 %v5063, %v5128
    %s5130 = sld [smem:[#allocation8 + $0xe86]]
    %v5131 = vstv %s5130
    %v5132 = vmul.f32 %v5105, %v5131
    %v5133 = vadd.f32 %v5067, %v5132
    %s5134 = sld [smem:[#allocation8 + $0xe87]]
    %v5135 = vstv %s5134
    %v5136 = vmul.f32 %v5105, %v5135
    %v5137 = vadd.f32 %v5071, %v5136
    %s5138 = sld [smem:[#allocation12 + $0xe80]]
    %v5139 = vstv %s5138
    %v5140 = vmul.f32 %v5105, %v5139
    %v5141 = vadd.f32 %v5075, %v5140
    %s5142 = sld [smem:[#allocation12 + $0xe81]]
    %v5143 = vstv %s5142
    %v5144 = vmul.f32 %v5105, %v5143
    %v5145 = vadd.f32 %v5079, %v5144
    %v5146 = vmul.f32 %v2293, %v2041
    %v5147 = vmul.f32 %v2414, %v2042
    %v5148 = vmul.f32 %v2534, %v2043
    %v5149 = vmul.f32 %v2654, %v2044
    %v5150 = vmul.f32 %v2774, %v2045
    %v5151 = vmul.f32 %v2894, %v2046
    %v5152 = vmul.f32 %v3014, %v2047
    %v5153 = vmul.f32 %v3134, %v2048
    %v5154 = vsel %vm2190, %v5146, 0.0
    %v5155 = vsel %vm2190, %v5147, 0.0
    %v5156 = vadd.f32 %v5154, %v5155
    %v5157 = vsel %vm2190, %v5148, 0.0
    %v5158 = vadd.f32 %v5156, %v5157
    %v5159 = vsel %vm2190, %v5149, 0.0
    %v5160 = vadd.f32 %v5158, %v5159
    %v5161 = vsel %vm2190, %v5150, 0.0
    %v5162 = vadd.f32 %v5160, %v5161
    %v5163 = vsel %vm2190, %v5151, 0.0
    %v5164 = vadd.f32 %v5162, %v5163
    %v5165 = vsel %vm2190, %v5152, 0.0
    %v5166 = vadd.f32 %v5164, %v5165
    %v5167 = vsel %vm2190, %v5153, 0.0
    %v5168 = vadd.f32 %v5166, %v5167
    %s5169 = scalar_lea.vmem %s2, 240
    %v5170 = vld [vmem:[%s5169] sm:$0xff]
    %v5171 = vsel %vm3150, %v5170, %v5168
    %s5172 = sld [smem:[#allocation8 + $0xf00]]
    %v5173 = vstv %s5172
    %v5174 = vmul.f32 %v5171, %v5173
    %v5175 = vadd.f32 %v5109, %v5174
    %s5176 = sld [smem:[#allocation8 + $0xf01]]
    %v5177 = vstv %s5176
    %v5178 = vmul.f32 %v5171, %v5177
    %v5179 = vadd.f32 %v5113, %v5178
    %s5180 = sld [smem:[#allocation8 + $0xf02]]
    %v5181 = vstv %s5180
    %v5182 = vmul.f32 %v5171, %v5181
    %v5183 = vadd.f32 %v5117, %v5182
    %s5184 = sld [smem:[#allocation8 + $0xf03]]
    %v5185 = vstv %s5184
    %v5186 = vmul.f32 %v5171, %v5185
    %v5187 = vadd.f32 %v5121, %v5186
    %s5188 = sld [smem:[#allocation8 + $0xf04]]
    %v5189 = vstv %s5188
    %v5190 = vmul.f32 %v5171, %v5189
    %v5191 = vadd.f32 %v5125, %v5190
    %s5192 = sld [smem:[#allocation8 + $0xf05]]
    %v5193 = vstv %s5192
    %v5194 = vmul.f32 %v5171, %v5193
    %v5195 = vadd.f32 %v5129, %v5194
    %s5196 = sld [smem:[#allocation8 + $0xf06]]
    %v5197 = vstv %s5196
    %v5198 = vmul.f32 %v5171, %v5197
    %v5199 = vadd.f32 %v5133, %v5198
    %s5200 = sld [smem:[#allocation8 + $0xf07]]
    %v5201 = vstv %s5200
    %v5202 = vmul.f32 %v5171, %v5201
    %v5203 = vadd.f32 %v5137, %v5202
    %s5204 = sld [smem:[#allocation12 + $0xf00]]
    %v5205 = vstv %s5204
    %v5206 = vmul.f32 %v5171, %v5205
    %v5207 = vadd.f32 %v5141, %v5206
    %s5208 = sld [smem:[#allocation12 + $0xf01]]
    %v5209 = vstv %s5208
    %v5210 = vmul.f32 %v5171, %v5209
    %v5211 = vadd.f32 %v5145, %v5210
    %v5212 = vmul.f32 %v2293, %v2104
    %v5213 = vmul.f32 %v2414, %v2105
    %v5214 = vmul.f32 %v2534, %v2106
    %v5215 = vmul.f32 %v2654, %v2107
    %v5216 = vmul.f32 %v2774, %v2108
    %v5217 = vmul.f32 %v2894, %v2109
    %v5218 = vmul.f32 %v3014, %v2110
    %v5219 = vmul.f32 %v3134, %v2111
    %v5220 = vsel %vm2190, %v5212, 0.0
    %v5221 = vsel %vm2190, %v5213, 0.0
    %v5222 = vadd.f32 %v5220, %v5221
    %v5223 = vsel %vm2190, %v5214, 0.0
    %v5224 = vadd.f32 %v5222, %v5223
    %v5225 = vsel %vm2190, %v5215, 0.0
    %v5226 = vadd.f32 %v5224, %v5225
    %v5227 = vsel %vm2190, %v5216, 0.0
    %v5228 = vadd.f32 %v5226, %v5227
    %v5229 = vsel %vm2190, %v5217, 0.0
    %v5230 = vadd.f32 %v5228, %v5229
    %v5231 = vsel %vm2190, %v5218, 0.0
    %v5232 = vadd.f32 %v5230, %v5231
    %v5233 = vsel %vm2190, %v5219, 0.0
    %v5234 = vadd.f32 %v5232, %v5233
    %s5235 = scalar_lea.vmem %s2, 248
    %v5236 = vld [vmem:[%s5235] sm:$0xff]
    %v5237 = vsel %vm3150, %v5236, %v5234
    %s5238 = sld [smem:[#allocation8 + $0xf80]]
    %v5239 = vstv %s5238
    %v5240 = vmul.f32 %v5237, %v5239
    %v5241 = vadd.f32 %v5175, %v5240
    %s5242 = sld [smem:[#allocation8 + $0xf81]]
    %v5243 = vstv %s5242
    %v5244 = vmul.f32 %v5237, %v5243
    %v5245 = vadd.f32 %v5179, %v5244
    %s5246 = sld [smem:[#allocation8 + $0xf82]]
    %v5247 = vstv %s5246
    %v5248 = vmul.f32 %v5237, %v5247
    %v5249 = vadd.f32 %v5183, %v5248
    %s5250 = sld [smem:[#allocation8 + $0xf83]]
    %v5251 = vstv %s5250
    %v5252 = vmul.f32 %v5237, %v5251
    %v5253 = vadd.f32 %v5187, %v5252
    %s5254 = sld [smem:[#allocation8 + $0xf84]]
    %v5255 = vstv %s5254
    %v5256 = vmul.f32 %v5237, %v5255
    %v5257 = vadd.f32 %v5191, %v5256
    %s5258 = sld [smem:[#allocation8 + $0xf85]]
    %v5259 = vstv %s5258
    %v5260 = vmul.f32 %v5237, %v5259
    %v5261 = vadd.f32 %v5195, %v5260
    %s5262 = sld [smem:[#allocation8 + $0xf86]]
    %v5263 = vstv %s5262
    %v5264 = vmul.f32 %v5237, %v5263
    %v5265 = vadd.f32 %v5199, %v5264
    %s5266 = sld [smem:[#allocation8 + $0xf87]]
    %v5267 = vstv %s5266
    %v5268 = vmul.f32 %v5237, %v5267
    %v5269 = vadd.f32 %v5203, %v5268
    %s5270 = sld [smem:[#allocation12 + $0xf80]]
    %v5271 = vstv %s5270
    %v5272 = vmul.f32 %v5237, %v5271
    %v5273 = vadd.f32 %v5207, %v5272
    %s5274 = sld [smem:[#allocation12 + $0xf81]]
    %v5275 = vstv %s5274
    %v5276 = vmul.f32 %v5237, %v5275
    %v5277 = vadd.f32 %v5211, %v5276
    %s5278 = sld [smem:[#allocation2]]
    %v5279 = vstv %s5278
    %v5280 = vmax.f32 %v5241, 0.0
    %s5281 = sld [smem:[#allocation11]]
    %v5282 = vstv %s5281
    %v5283 = vmul.f32 %v5280, %v5282
    %v5284 = vadd.f32 %v5279, %v5283
    %v5285 = vmax.f32 %v5245, 0.0
    %s5286 = sld [smem:[#allocation11 + $0x1]]
    %v5287 = vstv %s5286
    %v5288 = vmul.f32 %v5285, %v5287
    %v5289 = vadd.f32 %v5284, %v5288
    %v5290 = vmax.f32 %v5249, 0.0
    %s5291 = sld [smem:[#allocation11 + $0x2]]
    %v5292 = vstv %s5291
    %v5293 = vmul.f32 %v5290, %v5292
    %v5294 = vadd.f32 %v5289, %v5293
    %v5295 = vmax.f32 %v5253, 0.0
    %s5296 = sld [smem:[#allocation11 + $0x3]]
    %v5297 = vstv %s5296
    %v5298 = vmul.f32 %v5295, %v5297
    %v5299 = vadd.f32 %v5294, %v5298
    %v5300 = vmax.f32 %v5257, 0.0
    %s5301 = sld [smem:[#allocation11 + $0x4]]
    %v5302 = vstv %s5301
    %v5303 = vmul.f32 %v5300, %v5302
    %v5304 = vadd.f32 %v5299, %v5303
    %v5305 = vmax.f32 %v5261, 0.0
    %s5306 = sld [smem:[#allocation11 + $0x5]]
    %v5307 = vstv %s5306
    %v5308 = vmul.f32 %v5305, %v5307
    %v5309 = vadd.f32 %v5304, %v5308
    %v5310 = vmax.f32 %v5265, 0.0
    %s5311 = sld [smem:[#allocation11 + $0x6]]
    %v5312 = vstv %s5311
    %v5313 = vmul.f32 %v5310, %v5312
    %v5314 = vadd.f32 %v5309, %v5313
    %v5315 = vmax.f32 %v5269, 0.0
    %s5316 = sld [smem:[#allocation11 + $0x7]]
    %v5317 = vstv %s5316
    %v5318 = vmul.f32 %v5315, %v5317
    %v5319 = vadd.f32 %v5314, %v5318
    %v5320 = vld [vmem:[%s3] sm:$0xff]
    %vm5321 = vcmp.gt.f32.partialorder %v5320, 0.5
    %v5322 = vsel %vm5321, %v5319, -1e+30
    %v5323 = vsel %vm2190, %v5322, -inf
    %v5324 = vrot.slane %v5323, 4
    %v5325 = vmax.f32 %v5323, %v5324
    %v5326 = vrot.slane %v5325, 2
    %v5327 = vmax.f32 %v5325, %v5326
    %v5328 = vrot.slane %v5327, 1
    %v5329 = vmax.f32 %v5327, %v5328
    %v5330 = vsub.f32 %v5319, %v5329
    %v5331 = vsel %vm5321, %v5330, -1e+30
    %v5332 = vmul.f32 %v5331, 1.442695
    %v5333 = vpow.pop %v5332
    %v5334 = vsel %vm2190, %v5333, 0.0
    %v5335 = vrot.slane %v5334, 4
    %v5336 = vadd.f32 %v5334, %v5335
    %v5337 = vrot.slane %v5336, 2
    %v5338 = vadd.f32 %v5336, %v5337
    %v5339 = vrot.slane %v5338, 1
    %v5340 = vadd.f32 %v5338, %v5339
    %v5341 = vmax.f32 %v5340, 1e-30
    %v5342 = vmul.f32 %v5333, %v5273
    %v5343 = vsel %vm2190, %v5342, 0.0
    %v5344 = vrot.slane %v5343, 4
    %v5345 = vadd.f32 %v5343, %v5344
    %v5346 = vrot.slane %v5345, 2
    %v5347 = vadd.f32 %v5345, %v5346
    %v5348 = vrot.slane %v5347, 1
    %v5349 = vadd.f32 %v5347, %v5348
    %v5350 = vrcp.pop %v5341
    %v5351 = vmul.f32 %v5341, %v5350
    %v5352 = vsub.f32 1.0, %v5351
    %v5353 = vmul.f32 %v5350, %v5352
    %v5354 = vadd.f32 %v5350, %v5353
    %vm5355 = vweird.f32 %v5341
    %vm5356 = vweird.f32 %v5350
    %vm5357 = vmor %vm5355, %vm5356
    %v5358 = vsel %vm5357, %v5350, %v5354
    %v5359 = vand.u32 2147483647, %v5341
    %vm5360 = vcmp.eq.f32.partialorder %v5359, 8.507059e+37
    %v5361 = vand.u32 %v5341, 2147483648
    %v5362 = vor.u32 1.1754944e-38, %v5361
    %v5363 = vsel %vm5360, %v5362, %v5358
    %v5364 = vmul.f32 %v5349, %v5363
    %s5365 = sld [smem:[#allocation14]]
    %v5366 = vstv %s5365
    %v5367 = vadd.f32 %v5364, %v5366
    %v5368 = vmul.f32 %v5333, %v5277
    %v5369 = vsel %vm2190, %v5368, 0.0
    %v5370 = vrot.slane %v5369, 4
    %v5371 = vadd.f32 %v5369, %v5370
    %v5372 = vrot.slane %v5371, 2
    %v5373 = vadd.f32 %v5371, %v5372
    %v5374 = vrot.slane %v5373, 1
    %v5375 = vadd.f32 %v5373, %v5374
    %v5376 = vmul.f32 %v5375, %v5363
    %s5377 = sld [smem:[#allocation14 + $0x1]]
    %v5378 = vstv %s5377
    %v5379 = vadd.f32 %v5376, %v5378
    %v5380 = vxor.u32 %v5367, 2147483648
    %v5381 = vmul.f32 %v5380, 1.442695
    %v5382 = vpow.pop %v5381
    %v5383 = vadd.f32 %v5382, 1.0
    %v5384 = vrcp.pop %v5383
    %v5385 = vmul.f32 %v5383, %v5384
    %v5386 = vsub.f32 1.0, %v5385
    %v5387 = vmul.f32 %v5384, %v5386
    %v5388 = vadd.f32 %v5384, %v5387
    %vm5389 = vweird.f32 %v5383
    %vm5390 = vweird.f32 %v5384
    %vm5391 = vmor %vm5389, %vm5390
    %v5392 = vsel %vm5391, %v5384, %v5388
    %v5393 = vand.u32 2147483647, %v5383
    %vm5394 = vcmp.eq.f32.partialorder %v5393, 8.507059e+37
    %v5395 = vand.u32 %v5383, 2147483648
    %v5396 = vor.u32 1.1754944e-38, %v5395
    %v5397 = vsel %vm5394, %v5396, %v5392
    %v5398 = vmul.f32 1.0, %v5397
    %vm5399 = vcmask 57344
    %5400 = vst.msk [vmem:[#allocation15] sm:$0x1] %vm5399, %v5398
    %v5401 = vxor.u32 %v5379, 2147483648
    %v5402 = vmul.f32 %v5401, 1.442695
    %v5403 = vpow.pop %v5402
    %v5404 = vadd.f32 %v5403, 1.0
    %v5405 = vrcp.pop %v5404
    %v5406 = vmul.f32 %v5404, %v5405
    %v5407 = vsub.f32 1.0, %v5406
    %v5408 = vmul.f32 %v5405, %v5407
    %v5409 = vadd.f32 %v5405, %v5408
    %vm5410 = vweird.f32 %v5404
    %vm5411 = vweird.f32 %v5405
    %vm5412 = vmor %vm5410, %vm5411
    %v5413 = vsel %vm5412, %v5405, %v5409
    %v5414 = vand.u32 2147483647, %v5404
    %vm5415 = vcmp.eq.f32.partialorder %v5414, 8.507059e+37
    %v5416 = vand.u32 %v5404, 2147483648
    %v5417 = vor.u32 1.1754944e-38, %v5416
    %v5418 = vsel %vm5415, %v5417, %v5413
    %v5419 = vmul.f32 1.0, %v5418
    %5420 = vst.msk [vmem:[#allocation15 + $0x1] sm:$0x1] %vm5399, %v5419
    // Predicated region
    $region78: #{tpu_custom_call.1} parent=1 // pred_check
      _
    $region79: #{tpu_custom_call.1} parent=1 // pred_check_branch
      %5422 = sbr.rel (0) target = $region81
    $region80: #{tpu_custom_call.1} parent=1 // pred_region
      %5424 = vsyncadd [#allocation4], 0
      %s5426 = sshll.u32 [#allocation15], 4
      %s5427 = int_to_ptr.vmem [resolvable:$true] %s5426
      %s5428 = sshll.u32 %s12, 4
      %s5429 = int_to_ptr.hbm [resolvable:$true] %s5428
      %5431 = dma.vmem_to_hbm [thread:$0]  %s5427, 32, %s5429, [#allocation4]
    $region81: #{tpu_custom_call.1} parent=1 // pred_fallthru
      _
    // Predicated region
    $region82: #{tpu_custom_call.1} parent=1 // pred_check
      _
    $region83: #{tpu_custom_call.1} parent=1 // pred_check_branch
      %5433 = sbr.rel (0) target = $region85
    $region84: #{tpu_custom_call.1} parent=1 // pred_region
      %5435 = dma.done [#allocation4], 32
    $region85: #{tpu_custom_call.1} parent=1 // pred_fallthru
      _
    %5436 = vsyncpa [#allocation4], 1
    %5437 = vsyncpa [#allocation5], 1
    %5438 = vsyncpa [#allocation7], 1
    %5439 = vsyncpa [#allocation10], 1
    %5440 = vsyncpa [#allocation13], 1

</llo_original>
